<compile_context>
chip_gen: v5e
topology: v5e:2x2
jax: 0.10.0
libtpu: 0.0.40
codegen_flags: <defaults>
</compile_context>

<pallas_src>
import functools

import jax
import jax.numpy as jnp
from jax.experimental import pallas as pl
from jax.experimental.pallas import tpu as pltpu

# ----------------------------- configuration -------------------------------

USE_BF16_MATMUL = False      # halve patch/weight HBM bytes (v5e/v6e win); f32 default
_MM_DTYPE = jnp.bfloat16 if USE_BF16_MATMUL else jnp.float32

LANES = 128
HID = 64                     # LSTM hidden size
NCLASS = 10
K1_PAD = 32                  # conv1 im2col contraction: 25 -> 32   (was 128)
K2_PAD = 256                 # conv2 im2col contraction: 250 -> 256
C1_PAD = LANES               # conv1 out channels padded 10 -> 128 (lane-dense a1)
C2_PAD = 32                  # conv2 out channels padded 20 -> 32   (was 128)
NPOS = 16                    # 4x4 pooled spatial positions after conv2
FC_PAD = LANES               # FC-head logits padded 10 -> 128 (lane-dense store)
_NEG = -1e30                 # padded-logit bias: never contributes to softmax

_VMEM_LIMIT = 32 * 1024 * 1024     # explicit scoped-VMEM limit (safe on v7x 64 MiB)
_BLOCK_BUDGET = 8 * 1024 * 1024    # per-grid-step working-set target


# ----------------------------- Pallas kernels ------------------------------

def _conv_pool_relu_kernel(p_ref, w_ref, b_ref, o_ref):
    """im2col matmul for the 4 pooling phases, then maxpool2x2 + bias + ReLU.

    p_ref: (4, R, Kp)  patches, one leading slot per pooling phase (dh, dw)
    w_ref: (Kp, C)     zero-padded conv weights (columns = padded out channels)
    b_ref: (1, C)
    o_ref: (R, C)      pooled + ReLU output
    """
    nph, rows, kp = p_ref.shape
    y = jnp.dot(p_ref[...].reshape(nph * rows, kp), w_ref[...],
                preferred_element_type=jnp.float32)
    y = y.reshape(nph, rows, y.shape[-1])
    pooled = jnp.maximum(jnp.maximum(y[0], y[1]), jnp.maximum(y[2], y[3]))
    # bias AFTER the max (shared additive shift commutes with max), then ReLU
    o_ref[...] = jnp.maximum(pooled + b_ref[...], 0.0).astype(o_ref.dtype)


def _num_row_blocks(rows, in_bytes_per_row, out_bytes_per_row):
    """>=2 row blocks when divisible (v7x megacore); more only if VMEM requires."""
    per_row = 2 * (in_bytes_per_row + out_bytes_per_row)   # double-buffered

    def ok(nb):
        return rows % nb == 0 and (rows // nb) % 8 == 0

    nb = 2 if ok(2) else 1
    while per_row * (rows // nb) > _BLOCK_BUDGET and ok(nb * 2):
        nb *= 2
    return nb


def conv_pool_relu(patches, w, b):
    """(4, R, Kp) pooling-phase patches -> (R, C) pooled + ReLU activations."""
    nph, R, Kp = patches.shape
    C = w.shape[1]
    nb = _num_row_blocks(R, nph * Kp * patches.dtype.itemsize, C * 4)
    rt = R // nb
    return pl.pallas_call(
        _conv_pool_relu_kernel,
        out_shape=jax.ShapeDtypeStruct((R, C), jnp.float32),
        grid=(nb,),
        in_specs=[
            pl.BlockSpec((nph, rt, Kp), lambda i: (0, i, 0)),
            pl.BlockSpec((Kp, C), lambda i: (0, 0)),
            pl.BlockSpec((1, C), lambda i: (0, 0)),
        ],
        out_specs=pl.BlockSpec((rt, C), lambda i: (i, 0)),
        compiler_params=pltpu.CompilerParams(
            dimension_semantics=("parallel",),
            vmem_limit_bytes=_VMEM_LIMIT),
    )(patches, w, b)


def _lstm_head_kernel(x_ref, wih_ref, bg_ref, whh_ref, fcw_ref, fcb_ref,
                      o_ref, xp_ref):
    """Single grid step: LSTM input projection as ONE matmul, statically
    unrolled recurrence, then FC head + log_softmax (lane-dense 128 logits).

    x_ref:  (T*B, F)  flattened conv features, rows time-major (t*B + b)
    wih_ref:(F, 4H)   flattened W_ih (zero rows for padded channels)
    bg_ref: (1, 4H)   b_ih + b_hh
    whh_ref:(H, 4H)   W_hh^T (fused gates)
    fcw_ref:(H, 128)  fc weight, padded columns zero
    fcb_ref:(1, 128)  fc bias, padded lanes = -1e30
    o_ref:  (B, 128)  log_softmax logits (host slices [:, :10])
    xp_ref: (T*B, 4H) VMEM scratch for the precomputed gate inputs
    """
    m_rows = x_ref.shape[0]
    n_batch = o_ref.shape[0]
    seq = m_rows // n_batch
    hid = whh_ref.shape[0]

    # time-independent ~80% of the LSTM FLOPs: one (T*B, F) @ (F, 4H) matmul
    xp_ref[...] = (jnp.dot(x_ref[...], wih_ref[...],
                           preferred_element_type=jnp.float32) + bg_ref[...])

    h = jnp.zeros((n_batch, hid), jnp.float32)
    c = jnp.zeros((n_batch, hid), jnp.float32)
    for t in range(seq):                       # static unroll (T = 4)
        gates = (xp_ref[t * n_batch:(t + 1) * n_batch, :]
                 + jnp.dot(h, whh_ref[...], preferred_element_type=jnp.float32))
        # PyTorch gate order along the fused dim: i, f, g, o
        i_g = jax.nn.sigmoid(gates[:, 0 * hid:1 * hid])
        f_g = jax.nn.sigmoid(gates[:, 1 * hid:2 * hid])
        g_g = jnp.tanh(gates[:, 2 * hid:3 * hid])
        o_g = jax.nn.sigmoid(gates[:, 3 * hid:4 * hid])
        c = f_g * c + i_g * g_g
        h = o_g * jnp.tanh(c)

    logits = (jnp.dot(h, fcw_ref[...], preferred_element_type=jnp.float32)
              + fcb_ref[...])                  # padded lanes stay at -1e30
    mx = jnp.max(logits, axis=-1, keepdims=True)
    sh = logits - mx
    o_ref[...] = sh - jnp.log(jnp.sum(jnp.exp(sh), axis=-1, keepdims=True))


def lstm_head(xcat, wih, bg, whh, fcw, fcb, n_batch):
    M, _ = xcat.shape
    G = wih.shape[1]
    return pl.pallas_call(
        _lstm_head_kernel,
        out_shape=jax.ShapeDtypeStruct((n_batch, fcw.shape[1]), jnp.float32),
        scratch_shapes=[pltpu.VMEM((M, G), jnp.float32)],
        compiler_params=pltpu.CompilerParams(vmem_limit_bytes=_VMEM_LIMIT),
    )(xcat, wih, bg, whh, fcw, fcb)


# ------------------------------- host glue ----------------------------------

def pooled_im2col(x_nhwc, kh, kw, k_pad):
    """im2col for a valid stride-1 conv whose output goes through max_pool2d(2):
    one patch matrix per pooling phase (dh, dw), so the pool is a 4-way max on
    the matmul result while still in VMEM.

    Rows ordered (image, ph, pw); columns (kh, kw, cin), zero-padded to k_pad."""
    M, H, W, C = x_nhwc.shape
    OH, OW = H - kh + 1, W - kw + 1
    assert OH % 2 == 0 and OW % 2 == 0, "conv output H/W must be even for pool(2)"
    PH, PW = OH // 2, OW // 2
    K = kh * kw * C
    phases = []
    for dh in (0, 1):
        for dw in (0, 1):
            cols = []
            for i in range(kh):
                for j in range(kw):
                    si, sj = dh + i, dw + j
                    cols.append(x_nhwc[:, si:si + 2 * PH - 1:2,
                                       sj:sj + 2 * PW - 1:2, :])   # (M, PH, PW, C)
            pm = jnp.concatenate(cols, axis=-1)                     # (M, PH, PW, K)
            phases.append(pm.reshape(M * PH * PW, K))
    patches = jnp.stack(phases, axis=0)                             # (4, R, K)
    if k_pad > K:
        patches = jnp.pad(patches, ((0, 0), (0, 0), (0, k_pad - K)))
    return patches.astype(_MM_DTYPE), PH, PW


def combine_forward(x, params):
    B, T, C, H, W = x.shape
    # time-major image ordering (m = t*B + b): conv features drop straight into
    # the (T, B, feat) layout the LSTM consumes.
    imgs = x.transpose(1, 0, 2, 3, 4).reshape(T * B, C, H, W)
    x_nhwc = jnp.transpose(imgs, (0, 2, 3, 1))                      # (M, 28, 28, 1)
    M = T * B

    # conv1 (1->10, k5) + maxpool2 + ReLU
    p1, PH1, PW1 = pooled_im2col(x_nhwc, 5, 5, K1_PAD)
    a1 = conv_pool_relu(p1, params["w1"], params["b1"])             # (M*144, 128)
    a1_nhwc = a1.reshape(M, PH1, PW1, C1_PAD)[..., :10]

    # conv2 (10->20, k5) + maxpool2 + ReLU   (Dropout2d = identity, eval mode)
    p2, PH2, PW2 = pooled_im2col(a1_nhwc, 5, 5, K2_PAD)
    a2 = conv_pool_relu(p2, params["w2"], params["b2"])             # (M*16, 32)

    # flatten to the padded 320-feature layout: rows were ordered (image, pos),
    # so this reshape is contiguous (free) and needs no in-kernel transpose.
    xcat = a2.reshape(M, PH2 * PW2 * C2_PAD).astype(_MM_DTYPE)      # (M, 512)

    # LSTM input projection + unrolled recurrence + FC head + log_softmax
    out = lstm_head(xcat, params["wih"], params["bg"], params["whh"],
                    params["fcw"], params["fcb"], B)                # (B, 128)
    return out[:, :NCLASS]


# ------------------------------ parameters -----------------------------------

def init_params(key):
    ks = jax.random.split(key, 10)

    def u(k, shape, fan_in):
        bound = 1.0 / jnp.sqrt(float(fan_in))
        return jax.random.uniform(k, shape, jnp.float32, -bound, bound)

    FEAT = 320
    conv1_w = u(ks[0], (10, 1, 5, 5), 1 * 25)
    conv1_b = u(ks[1], (10,), 1 * 25)
    conv2_w = u(ks[2], (20, 10, 5, 5), 10 * 25)
    conv2_b = u(ks[3], (20,), 10 * 25)
    w_ih = u(ks[4], (4 * HID, FEAT), HID)      # PyTorch layout, gates (i,f,g,o)
    w_hh = u(ks[5], (4 * HID, HID), HID)
    b_ih = u(ks[6], (4 * HID,), HID)
    b_hh = u(ks[7], (4 * HID,), HID)
    fc_w = u(ks[8], (NCLASS, HID), HID)        # PyTorch (out, in)
    fc_b = u(ks[9], (NCLASS,), HID)

    # conv weights as (K_pad, C_pad) im2col matrices; rows ordered (kh, kw, cin)
    w1 = jnp.zeros((K1_PAD, C1_PAD), jnp.float32).at[:25, :10].set(
        conv1_w.transpose(2, 3, 1, 0).reshape(25, 10))
    b1 = jnp.zeros((1, C1_PAD), jnp.float32).at[0, :10].set(conv1_b)
    w2 = jnp.zeros((K2_PAD, C2_PAD), jnp.float32).at[:250, :20].set(
        conv2_w.transpose(2, 3, 1, 0).reshape(250, 20))
    b2 = jnp.zeros((1, C2_PAD), jnp.float32).at[0, :20].set(conv2_b)

    # LSTM input projection flattened to a single (NPOS*C2_PAD, 4H) matmul:
    # PyTorch's NCHW flatten gives feature f = c*16 + pos; our xcat column is
    # pos*32 + c, so wih[pos*32 + c, :] = W_ih[:, c*16 + pos]; padded channels
    # are zero rows.
    wih_pc = w_ih.T.reshape(20, NPOS, 4 * HID).transpose(1, 0, 2)   # (pos, c, 4H)
    wih = (jnp.zeros((NPOS, C2_PAD, 4 * HID), jnp.float32)
           .at[:, :20, :].set(wih_pc).reshape(NPOS * C2_PAD, 4 * HID))

    # lane-dense FC head: padded bias lanes = -1e30 so they never win softmax
    fcw = jnp.zeros((HID, FC_PAD), jnp.float32).at[:, :NCLASS].set(fc_w.T)
    fcb = jnp.full((1, FC_PAD), _NEG, jnp.float32).at[0, :NCLASS].set(fc_b)

    return {
        "w1": w1.astype(_MM_DTYPE), "b1": b1,
        "w2": w2.astype(_MM_DTYPE), "b2": b2,
        "wih": wih.astype(_MM_DTYPE),
        "bg": (b_ih + b_hh).reshape(1, 4 * HID),
        "whh": w_hh.T,                       # (HID, 4H) fused-gate recurrent weights
        "fcw": fcw,
        "fcb": fcb,
    }


# --------------------------------- main --------------------------------------

if __name__ == "__main__":
    key = jax.random.PRNGKey(0)
    pkey, xkey = jax.random.split(key)
    params = init_params(pkey)

    # Input consistent with the module: (batch, timesteps, C=1, H=28, W=28)
    # (28x28 is required so the CNN flatten produces 320 features = 20*4*4).
    B, T = 2, 4
    x = jax.random.normal(xkey, (B, T, 1, 28, 28), dtype=jnp.float32)

    fwd = jax.jit(functools.partial(combine_forward, params=params))
    out = jax.block_until_ready(fwd(x))

    assert out.shape == (B, 10)
    assert bool(jnp.all(jnp.isfinite(out)))
    # log_softmax rows must exponentiate-sum to 1
    assert bool(jnp.allclose(jnp.sum(jnp.exp(out), axis=1), 1.0, atol=1e-4))

    print("KERNEL_OK")
</pallas_src>

<mosaic_0001>
module attributes {stable_mosaic.version = 11 : i64} {
  func.func @_conv_pool_relu_kernel(%arg0: i32, %arg1: memref<4x576x32xf32, #tpu.memory_space<vmem>>, %arg2: memref<32x128xf32, #tpu.memory_space<vmem>>, %arg3: memref<1x128xf32, #tpu.memory_space<vmem>>, %arg4: memref<576x128xf32, #tpu.memory_space<vmem>>) attributes {dimension_semantics = [#tpu.dimension_semantics<parallel>], iteration_bounds = array<i64: 2>, scalar_prefetch = 0 : i64, scratch_operands = 0 : i64, tpu.core_type = #tpu.core_type<tc>, window_params = [{transform_indices = @transform_0, window_bounds = array<i64: 4, 576, 32>}, {pipeline_mode = #tpu.pipeline_mode<synchronous>, transform_indices = @transform_1, window_bounds = array<i64: 32, 128>}, {pipeline_mode = #tpu.pipeline_mode<synchronous>, transform_indices = @transform_2, window_bounds = array<i64: 1, 128>}, {transform_indices = @transform_3, window_bounds = array<i64: 576, 128>}]} {
    %c0 = arith.constant 0 : index
    %c0_0 = arith.constant 0 : index
    %c0_1 = arith.constant 0 : index
    %0 = vector.load %arg1[%c0, %c0_0, %c0_1] : memref<4x576x32xf32, #tpu.memory_space<vmem>>, vector<4x576x32xf32>
    %1 = vector.shape_cast %0 : vector<4x576x32xf32> to vector<2304x32xf32>
    %c0_2 = arith.constant 0 : index
    %c0_3 = arith.constant 0 : index
    %2 = vector.load %arg2[%c0_2, %c0_3] : memref<32x128xf32, #tpu.memory_space<vmem>>, vector<32x128xf32>
    %cst = arith.constant dense<0.000000e+00> : vector<2304x128xf32>
    %3 = tpu.matmul %1, %2, %cst {dimension_numbers = #tpu.dot_dimension_numbers<[1], [0], [0], [1], [0, 0, 1, 1], [], []>} : vector<2304x32xf32>, vector<32x128xf32>, vector<2304x128xf32> -> vector<2304x128xf32>
    %4 = vector.shape_cast %3 : vector<2304x128xf32> to vector<4x576x128xf32>
    %5 = vector.extract_strided_slice %4 {offsets = [0, 0, 0], sizes = [1, 576, 128], strides = [1, 1, 1]} : vector<4x576x128xf32> to vector<1x576x128xf32>
    %6 = vector.shape_cast %5 : vector<1x576x128xf32> to vector<576x128xf32>
    %7 = vector.extract_strided_slice %4 {offsets = [1, 0, 0], sizes = [1, 576, 128], strides = [1, 1, 1]} : vector<4x576x128xf32> to vector<1x576x128xf32>
    %8 = vector.shape_cast %7 : vector<1x576x128xf32> to vector<576x128xf32>
    %9 = arith.maximumf %6, %8 : vector<576x128xf32>
    %10 = vector.extract_strided_slice %4 {offsets = [2, 0, 0], sizes = [1, 576, 128], strides = [1, 1, 1]} : vector<4x576x128xf32> to vector<1x576x128xf32>
    %11 = vector.shape_cast %10 : vector<1x576x128xf32> to vector<576x128xf32>
    %12 = vector.extract_strided_slice %4 {offsets = [3, 0, 0], sizes = [1, 576, 128], strides = [1, 1, 1]} : vector<4x576x128xf32> to vector<1x576x128xf32>
    %13 = vector.shape_cast %12 : vector<1x576x128xf32> to vector<576x128xf32>
    %14 = arith.maximumf %11, %13 : vector<576x128xf32>
    %15 = arith.maximumf %9, %14 : vector<576x128xf32>
    %c0_4 = arith.constant 0 : index
    %c0_5 = arith.constant 0 : index
    %16 = vector.load %arg3[%c0_4, %c0_5] : memref<1x128xf32, #tpu.memory_space<vmem>>, vector<1x128xf32>
    %17 = vector.broadcast %16 : vector<1x128xf32> to vector<576x128xf32>
    %18 = arith.addf %15, %17 : vector<576x128xf32>
    %cst_6 = arith.constant 0.000000e+00 : f32
    %19 = vector.broadcast %cst_6 : f32 to vector<576x128xf32>
    %20 = arith.maximumf %18, %19 : vector<576x128xf32>
    %c0_7 = arith.constant 0 : index
    %c0_8 = arith.constant 0 : index
    %21 = vector.load %arg4[%c0_7, %c0_8] : memref<576x128xf32, #tpu.memory_space<vmem>>, vector<576x128xf32>
    tpu.vector_store %arg4[%c0_7, %c0_8], %20 {strides = array<i32>} : memref<576x128xf32, #tpu.memory_space<vmem>>, vector<576x128xf32>,
    return
  }
  func.func @transform_0(%arg0: i32) -> (i32, i32, i32) {
    %c0_i32 = arith.constant 0 : i32
    %c0_i32_0 = arith.constant 0 : i32
    %c0_i32_1 = arith.constant 0 : i32
    return %c0_i32, %arg0, %c0_i32_0 : i32, i32, i32
  }
  func.func @transform_1(%arg0: i32) -> (i32, i32) {
    %c0_i32 = arith.constant 0 : i32
    %c0_i32_0 = arith.constant 0 : i32
    %c0_i32_1 = arith.constant 0 : i32
    return %c0_i32, %c0_i32_0 : i32, i32
  }
  func.func @transform_2(%arg0: i32) -> (i32, i32) {
    %c0_i32 = arith.constant 0 : i32
    %c0_i32_0 = arith.constant 0 : i32
    %c0_i32_1 = arith.constant 0 : i32
    return %c0_i32, %c0_i32_0 : i32, i32
  }
  func.func @transform_3(%arg0: i32) -> (i32, i32) {
    %c0_i32 = arith.constant 0 : i32
    %c0_i32_0 = arith.constant 0 : i32
    return %arg0, %c0_i32 : i32, i32
  }
}

module attributes {stable_mosaic.version = 11 : i64} {
  func.func @_conv_pool_relu_kernel(%arg0: i32, %arg1: memref<4x64x256xf32, #tpu.memory_space<vmem>>, %arg2: memref<256x32xf32, #tpu.memory_space<vmem>>, %arg3: memref<1x32xf32, #tpu.memory_space<vmem>>, %arg4: memref<64x32xf32, #tpu.memory_space<vmem>>) attributes {dimension_semantics = [#tpu.dimension_semantics<parallel>], iteration_bounds = array<i64: 2>, scalar_prefetch = 0 : i64, scratch_operands = 0 : i64, tpu.core_type = #tpu.core_type<tc>, window_params = [{transform_indices = @transform_0, window_bounds = array<i64: 4, 64, 256>}, {pipeline_mode = #tpu.pipeline_mode<synchronous>, transform_indices = @transform_1, window_bounds = array<i64: 256, 32>}, {pipeline_mode = #tpu.pipeline_mode<synchronous>, transform_indices = @transform_2, window_bounds = array<i64: 1, 32>}, {transform_indices = @transform_3, window_bounds = array<i64: 64, 32>}]} {
    %c0 = arith.constant 0 : index
    %c0_0 = arith.constant 0 : index
    %c0_1 = arith.constant 0 : index
    %0 = vector.load %arg1[%c0, %c0_0, %c0_1] : memref<4x64x256xf32, #tpu.memory_space<vmem>>, vector<4x64x256xf32>
    %1 = vector.shape_cast %0 : vector<4x64x256xf32> to vector<256x256xf32>
    %c0_2 = arith.constant 0 : index
    %c0_3 = arith.constant 0 : index
    %2 = vector.load %arg2[%c0_2, %c0_3] : memref<256x32xf32, #tpu.memory_space<vmem>>, vector<256x32xf32>
    %cst = arith.constant dense<0.000000e+00> : vector<256x32xf32>
    %3 = tpu.matmul %1, %2, %cst {dimension_numbers = #tpu.dot_dimension_numbers<[1], [0], [0], [1], [0, 0, 1, 1], [], []>} : vector<256x256xf32>, vector<256x32xf32>, vector<256x32xf32> -> vector<256x32xf32>
    %4 = vector.shape_cast %3 : vector<256x32xf32> to vector<4x64x32xf32>
    %5 = vector.extract_strided_slice %4 {offsets = [0, 0, 0], sizes = [1, 64, 32], strides = [1, 1, 1]} : vector<4x64x32xf32> to vector<1x64x32xf32>
    %6 = vector.shape_cast %5 : vector<1x64x32xf32> to vector<64x32xf32>
    %7 = vector.extract_strided_slice %4 {offsets = [1, 0, 0], sizes = [1, 64, 32], strides = [1, 1, 1]} : vector<4x64x32xf32> to vector<1x64x32xf32>
    %8 = vector.shape_cast %7 : vector<1x64x32xf32> to vector<64x32xf32>
    %9 = arith.maximumf %6, %8 : vector<64x32xf32>
    %10 = vector.extract_strided_slice %4 {offsets = [2, 0, 0], sizes = [1, 64, 32], strides = [1, 1, 1]} : vector<4x64x32xf32> to vector<1x64x32xf32>
    %11 = vector.shape_cast %10 : vector<1x64x32xf32> to vector<64x32xf32>
    %12 = vector.extract_strided_slice %4 {offsets = [3, 0, 0], sizes = [1, 64, 32], strides = [1, 1, 1]} : vector<4x64x32xf32> to vector<1x64x32xf32>
    %13 = vector.shape_cast %12 : vector<1x64x32xf32> to vector<64x32xf32>
    %14 = arith.maximumf %11, %13 : vector<64x32xf32>
    %15 = arith.maximumf %9, %14 : vector<64x32xf32>
    %c0_4 = arith.constant 0 : index
    %c0_5 = arith.constant 0 : index
    %16 = vector.load %arg3[%c0_4, %c0_5] : memref<1x32xf32, #tpu.memory_space<vmem>>, vector<1x32xf32>
    %17 = vector.broadcast %16 : vector<1x32xf32> to vector<64x32xf32>
    %18 = arith.addf %15, %17 : vector<64x32xf32>
    %cst_6 = arith.constant 0.000000e+00 : f32
    %19 = vector.broadcast %cst_6 : f32 to vector<64x32xf32>
    %20 = arith.maximumf %18, %19 : vector<64x32xf32>
    %c0_7 = arith.constant 0 : index
    %c0_8 = arith.constant 0 : index
    %21 = vector.load %arg4[%c0_7, %c0_8] : memref<64x32xf32, #tpu.memory_space<vmem>>, vector<64x32xf32>
    tpu.vector_store %arg4[%c0_7, %c0_8], %20 {strides = array<i32>} : memref<64x32xf32, #tpu.memory_space<vmem>>, vector<64x32xf32>,
    return
  }
  func.func @transform_0(%arg0: i32) -> (i32, i32, i32) {
    %c0_i32 = arith.constant 0 : i32
    %c0_i32_0 = arith.constant 0 : i32
    %c0_i32_1 = arith.constant 0 : i32
    return %c0_i32, %arg0, %c0_i32_0 : i32, i32, i32
  }
  func.func @transform_1(%arg0: i32) -> (i32, i32) {
    %c0_i32 = arith.constant 0 : i32
    %c0_i32_0 = arith.constant 0 : i32
    %c0_i32_1 = arith.constant 0 : i32
    return %c0_i32, %c0_i32_0 : i32, i32
  }
  func.func @transform_2(%arg0: i32) -> (i32, i32) {
    %c0_i32 = arith.constant 0 : i32
    %c0_i32_0 = arith.constant 0 : i32
    %c0_i32_1 = arith.constant 0 : i32
    return %c0_i32, %c0_i32_0 : i32, i32
  }
  func.func @transform_3(%arg0: i32) -> (i32, i32) {
    %c0_i32 = arith.constant 0 : i32
    %c0_i32_0 = arith.constant 0 : i32
    return %arg0, %c0_i32 : i32, i32
  }
}

module attributes {stable_mosaic.version = 11 : i64} {
  func.func @_lstm_head_kernel(%arg0: memref<8x512xf32, #tpu.memory_space<vmem>>, %arg1: memref<512x256xf32, #tpu.memory_space<vmem>>, %arg2: memref<1x256xf32, #tpu.memory_space<vmem>>, %arg3: memref<64x256xf32, #tpu.memory_space<vmem>>, %arg4: memref<64x128xf32, #tpu.memory_space<vmem>>, %arg5: memref<1x128xf32, #tpu.memory_space<vmem>>, %arg6: memref<2x128xf32, #tpu.memory_space<vmem>>, %arg7: memref<8x256xf32, #tpu.memory_space<vmem>>) attributes {dimension_semantics = [], scalar_prefetch = 0 : i64, scratch_operands = 1 : i64, tpu.core_type = #tpu.core_type<tc>} {
    %c0 = arith.constant 0 : index
    %c0_0 = arith.constant 0 : index
    %0 = vector.load %arg0[%c0, %c0_0] : memref<8x512xf32, #tpu.memory_space<vmem>>, vector<8x512xf32>
    %c0_1 = arith.constant 0 : index
    %c0_2 = arith.constant 0 : index
    %1 = vector.load %arg1[%c0_1, %c0_2] : memref<512x256xf32, #tpu.memory_space<vmem>>, vector<512x256xf32>
    %cst = arith.constant dense<0.000000e+00> : vector<8x256xf32>
    %2 = tpu.matmul %0, %1, %cst {dimension_numbers = #tpu.dot_dimension_numbers<[1], [0], [0], [1], [0, 0, 1, 1], [], []>} : vector<8x512xf32>, vector<512x256xf32>, vector<8x256xf32> -> vector<8x256xf32>
    %c0_3 = arith.constant 0 : index
    %c0_4 = arith.constant 0 : index
    %3 = vector.load %arg2[%c0_3, %c0_4] : memref<1x256xf32, #tpu.memory_space<vmem>>, vector<1x256xf32>
    %4 = vector.broadcast %3 : vector<1x256xf32> to vector<8x256xf32>
    %5 = arith.addf %2, %4 : vector<8x256xf32>
    %c0_5 = arith.constant 0 : index
    %c0_6 = arith.constant 0 : index
    %6 = vector.load %arg7[%c0_5, %c0_6] : memref<8x256xf32, #tpu.memory_space<vmem>>, vector<8x256xf32>
    tpu.vector_store %arg7[%c0_5, %c0_6], %5 {strides = array<i32>} : memref<8x256xf32, #tpu.memory_space<vmem>>, vector<8x256xf32>,
    %cst_7 = arith.constant 0.000000e+00 : f32
    %7 = vector.broadcast %cst_7 : f32 to vector<2x64xf32>
    %cst_8 = arith.constant 0.000000e+00 : f32
    %8 = vector.broadcast %cst_8 : f32 to vector<2x64xf32>
    %c0_9 = arith.constant 0 : index
    %c0_10 = arith.constant 0 : index
    %9 = vector.load %arg7[%c0_9, %c0_10] : memref<8x256xf32, #tpu.memory_space<vmem>>, vector<2x256xf32>
    %c0_11 = arith.constant 0 : index
    %c0_12 = arith.constant 0 : index
    %10 = vector.load %arg3[%c0_11, %c0_12] : memref<64x256xf32, #tpu.memory_space<vmem>>, vector<64x256xf32>
    %cst_13 = arith.constant dense<0.000000e+00> : vector<2x256xf32>
    %11 = tpu.matmul %7, %10, %cst_13 {dimension_numbers = #tpu.dot_dimension_numbers<[1], [0], [0], [1], [0, 0, 1, 1], [], []>} : vector<2x64xf32>, vector<64x256xf32>, vector<2x256xf32> -> vector<2x256xf32>
    %12 = arith.addf %9, %11 : vector<2x256xf32>
    %13 = vector.extract_strided_slice %12 {offsets = [0, 0], sizes = [2, 64], strides = [1, 1]} : vector<2x256xf32> to vector<2x64xf32>
    %14 = arith.negf %13 : vector<2x64xf32>
    %15 = math.exp %14 : vector<2x64xf32>
    %cst_14 = arith.constant 1.000000e+00 : f32
    %16 = vector.broadcast %cst_14 : f32 to vector<2x64xf32>
    %17 = arith.addf %16, %15 : vector<2x64xf32>
    %18 = arith.divf %16, %17 : vector<2x64xf32>
    %19 = vector.extract_strided_slice %12 {offsets = [0, 64], sizes = [2, 64], strides = [1, 1]} : vector<2x256xf32> to vector<2x64xf32>
    %20 = arith.negf %19 : vector<2x64xf32>
    %21 = math.exp %20 : vector<2x64xf32>
    %cst_15 = arith.constant 1.000000e+00 : f32
    %22 = vector.broadcast %cst_15 : f32 to vector<2x64xf32>
    %23 = arith.addf %22, %21 : vector<2x64xf32>
    %24 = arith.divf %22, %23 : vector<2x64xf32>
    %25 = vector.extract_strided_slice %12 {offsets = [0, 128], sizes = [2, 64], strides = [1, 1]} : vector<2x256xf32> to vector<2x64xf32>
    %26 = math.tanh %25 : vector<2x64xf32>
    %27 = vector.extract_strided_slice %12 {offsets = [0, 192], sizes = [2, 64], strides = [1, 1]} : vector<2x256xf32> to vector<2x64xf32>
    %28 = arith.negf %27 : vector<2x64xf32>
    %29 = math.exp %28 : vector<2x64xf32>
    %cst_16 = arith.constant 1.000000e+00 : f32
    %30 = vector.broadcast %cst_16 : f32 to vector<2x64xf32>
    %31 = arith.addf %30, %29 : vector<2x64xf32>
    %32 = arith.divf %30, %31 : vector<2x64xf32>
    %33 = arith.mulf %24, %8 : vector<2x64xf32>
    %34 = arith.mulf %18, %26 : vector<2x64xf32>
    %35 = arith.addf %33, %34 : vector<2x64xf32>
    %36 = math.tanh %35 : vector<2x64xf32>
    %37 = arith.mulf %32, %36 : vector<2x64xf32>
    %c2 = arith.constant 2 : index
    %c0_17 = arith.constant 0 : index
    %38 = vector.load %arg7[%c2, %c0_17] : memref<8x256xf32, #tpu.memory_space<vmem>>, vector<2x256xf32>
    %c0_18 = arith.constant 0 : index
    %c0_19 = arith.constant 0 : index
    %39 = vector.load %arg3[%c0_18, %c0_19] : memref<64x256xf32, #tpu.memory_space<vmem>>, vector<64x256xf32>
    %cst_20 = arith.constant dense<0.000000e+00> : vector<2x256xf32>
    %40 = tpu.matmul %37, %39, %cst_20 {dimension_numbers = #tpu.dot_dimension_numbers<[1], [0], [0], [1], [0, 0, 1, 1], [], []>} : vector<2x64xf32>, vector<64x256xf32>, vector<2x256xf32> -> vector<2x256xf32>
    %41 = arith.addf %38, %40 : vector<2x256xf32>
    %42 = vector.extract_strided_slice %41 {offsets = [0, 0], sizes = [2, 64], strides = [1, 1]} : vector<2x256xf32> to vector<2x64xf32>
    %43 = arith.negf %42 : vector<2x64xf32>
    %44 = math.exp %43 : vector<2x64xf32>
    %cst_21 = arith.constant 1.000000e+00 : f32
    %45 = vector.broadcast %cst_21 : f32 to vector<2x64xf32>
    %46 = arith.addf %45, %44 : vector<2x64xf32>
    %47 = arith.divf %45, %46 : vector<2x64xf32>
    %48 = vector.extract_strided_slice %41 {offsets = [0, 64], sizes = [2, 64], strides = [1, 1]} : vector<2x256xf32> to vector<2x64xf32>
    %49 = arith.negf %48 : vector<2x64xf32>
    %50 = math.exp %49 : vector<2x64xf32>
    %cst_22 = arith.constant 1.000000e+00 : f32
    %51 = vector.broadcast %cst_22 : f32 to vector<2x64xf32>
    %52 = arith.addf %51, %50 : vector<2x64xf32>
    %53 = arith.divf %51, %52 : vector<2x64xf32>
    %54 = vector.extract_strided_slice %41 {offsets = [0, 128], sizes = [2, 64], strides = [1, 1]} : vector<2x256xf32> to vector<2x64xf32>
    %55 = math.tanh %54 : vector<2x64xf32>
    %56 = vector.extract_strided_slice %41 {offsets = [0, 192], sizes = [2, 64], strides = [1, 1]} : vector<2x256xf32> to vector<2x64xf32>
    %57 = arith.negf %56 : vector<2x64xf32>
    %58 = math.exp %57 : vector<2x64xf32>
    %cst_23 = arith.constant 1.000000e+00 : f32
    %59 = vector.broadcast %cst_23 : f32 to vector<2x64xf32>
    %60 = arith.addf %59, %58 : vector<2x64xf32>
    %61 = arith.divf %59, %60 : vector<2x64xf32>
    %62 = arith.mulf %53, %35 : vector<2x64xf32>
    %63 = arith.mulf %47, %55 : vector<2x64xf32>
    %64 = arith.addf %62, %63 : vector<2x64xf32>
    %65 = math.tanh %64 : vector<2x64xf32>
    %66 = arith.mulf %61, %65 : vector<2x64xf32>
    %c4 = arith.constant 4 : index
    %c0_24 = arith.constant 0 : index
    %67 = vector.load %arg7[%c4, %c0_24] : memref<8x256xf32, #tpu.memory_space<vmem>>, vector<2x256xf32>
    %c0_25 = arith.constant 0 : index
    %c0_26 = arith.constant 0 : index
    %68 = vector.load %arg3[%c0_25, %c0_26] : memref<64x256xf32, #tpu.memory_space<vmem>>, vector<64x256xf32>
    %cst_27 = arith.constant dense<0.000000e+00> : vector<2x256xf32>
    %69 = tpu.matmul %66, %68, %cst_27 {dimension_numbers = #tpu.dot_dimension_numbers<[1], [0], [0], [1], [0, 0, 1, 1], [], []>} : vector<2x64xf32>, vector<64x256xf32>, vector<2x256xf32> -> vector<2x256xf32>
    %70 = arith.addf %67, %69 : vector<2x256xf32>
    %71 = vector.extract_strided_slice %70 {offsets = [0, 0], sizes = [2, 64], strides = [1, 1]} : vector<2x256xf32> to vector<2x64xf32>
    %72 = arith.negf %71 : vector<2x64xf32>
    %73 = math.exp %72 : vector<2x64xf32>
    %cst_28 = arith.constant 1.000000e+00 : f32
    %74 = vector.broadcast %cst_28 : f32 to vector<2x64xf32>
    %75 = arith.addf %74, %73 : vector<2x64xf32>
    %76 = arith.divf %74, %75 : vector<2x64xf32>
    %77 = vector.extract_strided_slice %70 {offsets = [0, 64], sizes = [2, 64], strides = [1, 1]} : vector<2x256xf32> to vector<2x64xf32>
    %78 = arith.negf %77 : vector<2x64xf32>
    %79 = math.exp %78 : vector<2x64xf32>
    %cst_29 = arith.constant 1.000000e+00 : f32
    %80 = vector.broadcast %cst_29 : f32 to vector<2x64xf32>
    %81 = arith.addf %80, %79 : vector<2x64xf32>
    %82 = arith.divf %80, %81 : vector<2x64xf32>
    %83 = vector.extract_strided_slice %70 {offsets = [0, 128], sizes = [2, 64], strides = [1, 1]} : vector<2x256xf32> to vector<2x64xf32>
    %84 = math.tanh %83 : vector<2x64xf32>
    %85 = vector.extract_strided_slice %70 {offsets = [0, 192], sizes = [2, 64], strides = [1, 1]} : vector<2x256xf32> to vector<2x64xf32>
    %86 = arith.negf %85 : vector<2x64xf32>
    %87 = math.exp %86 : vector<2x64xf32>
    %cst_30 = arith.constant 1.000000e+00 : f32
    %88 = vector.broadcast %cst_30 : f32 to vector<2x64xf32>
    %89 = arith.addf %88, %87 : vector<2x64xf32>
    %90 = arith.divf %88, %89 : vector<2x64xf32>
    %91 = arith.mulf %82, %64 : vector<2x64xf32>
    %92 = arith.mulf %76, %84 : vector<2x64xf32>
    %93 = arith.addf %91, %92 : vector<2x64xf32>
    %94 = math.tanh %93 : vector<2x64xf32>
    %95 = arith.mulf %90, %94 : vector<2x64xf32>
    %c6 = arith.constant 6 : index
    %c0_31 = arith.constant 0 : index
    %96 = vector.load %arg7[%c6, %c0_31] : memref<8x256xf32, #tpu.memory_space<vmem>>, vector<2x256xf32>
    %c0_32 = arith.constant 0 : index
    %c0_33 = arith.constant 0 : index
    %97 = vector.load %arg3[%c0_32, %c0_33] : memref<64x256xf32, #tpu.memory_space<vmem>>, vector<64x256xf32>
    %cst_34 = arith.constant dense<0.000000e+00> : vector<2x256xf32>
    %98 = tpu.matmul %95, %97, %cst_34 {dimension_numbers = #tpu.dot_dimension_numbers<[1], [0], [0], [1], [0, 0, 1, 1], [], []>} : vector<2x64xf32>, vector<64x256xf32>, vector<2x256xf32> -> vector<2x256xf32>
    %99 = arith.addf %96, %98 : vector<2x256xf32>
    %100 = vector.extract_strided_slice %99 {offsets = [0, 0], sizes = [2, 64], strides = [1, 1]} : vector<2x256xf32> to vector<2x64xf32>
    %101 = arith.negf %100 : vector<2x64xf32>
    %102 = math.exp %101 : vector<2x64xf32>
    %cst_35 = arith.constant 1.000000e+00 : f32
    %103 = vector.broadcast %cst_35 : f32 to vector<2x64xf32>
    %104 = arith.addf %103, %102 : vector<2x64xf32>
    %105 = arith.divf %103, %104 : vector<2x64xf32>
    %106 = vector.extract_strided_slice %99 {offsets = [0, 64], sizes = [2, 64], strides = [1, 1]} : vector<2x256xf32> to vector<2x64xf32>
    %107 = arith.negf %106 : vector<2x64xf32>
    %108 = math.exp %107 : vector<2x64xf32>
    %cst_36 = arith.constant 1.000000e+00 : f32
    %109 = vector.broadcast %cst_36 : f32 to vector<2x64xf32>
    %110 = arith.addf %109, %108 : vector<2x64xf32>
    %111 = arith.divf %109, %110 : vector<2x64xf32>
    %112 = vector.extract_strided_slice %99 {offsets = [0, 128], sizes = [2, 64], strides = [1, 1]} : vector<2x256xf32> to vector<2x64xf32>
    %113 = math.tanh %112 : vector<2x64xf32>
    %114 = vector.extract_strided_slice %99 {offsets = [0, 192], sizes = [2, 64], strides = [1, 1]} : vector<2x256xf32> to vector<2x64xf32>
    %115 = arith.negf %114 : vector<2x64xf32>
    %116 = math.exp %115 : vector<2x64xf32>
    %cst_37 = arith.constant 1.000000e+00 : f32
    %117 = vector.broadcast %cst_37 : f32 to vector<2x64xf32>
    %118 = arith.addf %117, %116 : vector<2x64xf32>
    %119 = arith.divf %117, %118 : vector<2x64xf32>
    %120 = arith.mulf %111, %93 : vector<2x64xf32>
    %121 = arith.mulf %105, %113 : vector<2x64xf32>
    %122 = arith.addf %120, %121 : vector<2x64xf32>
    %123 = math.tanh %122 : vector<2x64xf32>
    %124 = arith.mulf %119, %123 : vector<2x64xf32>
    %c0_38 = arith.constant 0 : index
    %c0_39 = arith.constant 0 : index
    %125 = vector.load %arg4[%c0_38, %c0_39] : memref<64x128xf32, #tpu.memory_space<vmem>>, vector<64x128xf32>
    %cst_40 = arith.constant dense<0.000000e+00> : vector<2x128xf32>
    %126 = tpu.matmul %124, %125, %cst_40 {dimension_numbers = #tpu.dot_dimension_numbers<[1], [0], [0], [1], [0, 0, 1, 1], [], []>} : vector<2x64xf32>, vector<64x128xf32>, vector<2x128xf32> -> vector<2x128xf32>
    %c0_41 = arith.constant 0 : index
    %c0_42 = arith.constant 0 : index
    %127 = vector.load %arg5[%c0_41, %c0_42] : memref<1x128xf32, #tpu.memory_space<vmem>>, vector<1x128xf32>
    %128 = vector.broadcast %127 : vector<1x128xf32> to vector<2x128xf32>
    %129 = arith.addf %126, %128 : vector<2x128xf32>
    %cst_43 = arith.constant dense<0xFF800000> : vector<2xf32>
    %130 = vector.multi_reduction <maximumf>, %129, %cst_43 [1] : vector<2x128xf32> to vector<2xf32>
    %131 = vector.shape_cast %130 : vector<2xf32> to vector<2x1xf32>
    %132 = vector.broadcast %131 : vector<2x1xf32> to vector<2x128xf32>
    %133 = arith.subf %129, %132 : vector<2x128xf32>
    %134 = math.exp %133 : vector<2x128xf32>
    %cst_44 = arith.constant dense<0.000000e+00> : vector<2xf32>
    %135 = vector.multi_reduction <add>, %134, %cst_44 [1] : vector<2x128xf32> to vector<2xf32>
    %136 = vector.shape_cast %135 : vector<2xf32> to vector<2x1xf32>
    %137 = math.log %136 : vector<2x1xf32>
    %138 = vector.broadcast %137 : vector<2x1xf32> to vector<2x128xf32>
    %139 = arith.subf %133, %138 : vector<2x128xf32>
    %c0_45 = arith.constant 0 : index
    %c0_46 = arith.constant 0 : index
    %140 = vector.load %arg6[%c0_45, %c0_46] : memref<2x128xf32, #tpu.memory_space<vmem>>, vector<2x128xf32>
    tpu.vector_store %arg6[%c0_45, %c0_46], %139 {strides = array<i32>} : memref<2x128xf32, #tpu.memory_space<vmem>>, vector<2x128xf32>,
    return
  }
}

</mosaic_0001>

<llo_original>
// kernel: combine_forward.3
$region0: #{combine_forward.3}
  #allocation0 [shape = 'u32[]', space=smem, size = 0x4, offset = 0x4, fixed_abs, tag = 'smem constant byte address 0x4 - core index']
  #allocation1 [shape = 'u32[72,128]{1,0:T(1,128)}', space=vmem, size = 0x9000, scoped, tag = 'internal scratch']
  %s0 = inlined_call_operand.vmem [shape: f32[4,1152,32], index: 0, kind: input, shape index: {}]
  %s1 = inlined_call_operand.vmem [shape: f32[32,128], index: 1, kind: input, shape index: {}]
  %s2 = inlined_call_operand.vmem [shape: f32[1,128], index: 2, kind: input, shape index: {}]
  %s3 = inlined_call_operand.vmem [shape: f32[1152,128], index: 3, kind: output, shape index: {}]
  %s4 = sld [smem:[#allocation0]]
  $region97: #{combine_forward.3} parent=0
    _
  %s6 = ssub.s32 1, %s4
  %s7 = scalar_select 0, %s6, %s4
  $region1: #{combine_forward.3} parent=0
    #allocation2 [shape = 'u8[2359296]{0}', space=vmem, size = 0x240000, scoped, tag = 'input window, operand 0']
    loop: start=0, step=1, limit=4
    $region2: #{combine_forward.3} parent=1 // loop_pre_header
      _
    $region3: #{combine_forward.3} parent=1 // loop_header
      %s9 = sphi 0, %s13
      %p10 = scmp.ge.s32.totalorder %s9, 4
      %s19 = sphi 0, %s21
      %s22 = sphi 0, %s19
      %s23 = sphi 0, %s22
      %s39 = sphi 0, %s23
      %s43 = sphi 0, %s43
      %s45 = sphi 0, %s43
      %s46 = sphi 0, %s45
      %s60 = sphi 0, %s46
      %s64 = sphi 0, %s64
      %s66 = sphi 0, %s64
      %s67 = sphi 0, %s66
      %s81 = sphi 0, %s67
      %s87 = sphi 0, %s89
      %s90 = sphi 0, %s87
      %s91 = sphi 0, %s90
      %s107 = sphi 0, %s91
    $region4: #{combine_forward.3} parent=1 // loop_header_branch
      %12 = sbr.rel (%p10) target = $region8
    $region5: #{combine_forward.3} parent=1 // loop_body
      %s14 = ssub.s32 %s9, 1
      %s15 = ssub.s32 %s9, 2
      %s16 = sadd.s32 %s9, 1
      %s17 = ssub.s32 %s9, %s16
      %p18 = scmp.eq.s32.totalorder %s17, 0
      %s20 = sadd.s32 %s19, 1
      %s21 = scalar_select %p18, %s19, %s20
      %p24 = pneg %p18
      %p25 = scmp.eq.s32.totalorder %s9, 1
      %p26 = por %p24, %p25
      %p27 = scmp.ne.s32.totalorder %s19, %s22
      %p28 = scmp.eq.s32.totalorder %s9, 0
      %p29 = por %p27, %p28
      %p30 = scmp.ne.s32.totalorder %s19, %s22
      %p31 = scmp.eq.s32.totalorder %s14, 1
      %p32 = por %p30, %p31
      %p33 = scmp.ne.s32.totalorder %s22, %s23
      %p34 = scmp.eq.s32.totalorder %s14, 0
      %p35 = por %p33, %p34
      %p36 = scmp.ne.s32.totalorder %s22, %s23
      %p37 = scmp.eq.s32.totalorder %s15, 1
      %p38 = por %p36, %p37
      %p40 = scmp.ne.s32.totalorder %s23, %s39
      %p41 = scmp.eq.s32.totalorder %s15, 0
      %p42 = por %p40, %p41
      %s44 = sadd.s32 %s43, 1
      %p47 = scmp.eq.s32.totalorder %s9, 1
      %p48 = scmp.ne.s32.totalorder %s43, %s45
      %p49 = scmp.eq.s32.totalorder %s9, 0
      %p50 = por %p48, %p49
      %p51 = scmp.ne.s32.totalorder %s43, %s45
      %p52 = scmp.eq.s32.totalorder %s14, 1
      %p53 = por %p51, %p52
      %p54 = scmp.ne.s32.totalorder %s45, %s46
      %p55 = scmp.eq.s32.totalorder %s14, 0
      %p56 = por %p54, %p55
      %p57 = scmp.ne.s32.totalorder %s45, %s46
      %p58 = scmp.eq.s32.totalorder %s15, 1
      %p59 = por %p57, %p58
      %p61 = scmp.ne.s32.totalorder %s46, %s60
      %p62 = scmp.eq.s32.totalorder %s15, 0
      %p63 = por %p61, %p62
      %s65 = sadd.s32 %s64, 1
      %p68 = scmp.eq.s32.totalorder %s9, 1
      %p69 = scmp.ne.s32.totalorder %s64, %s66
      %p70 = scmp.eq.s32.totalorder %s9, 0
      %p71 = por %p69, %p70
      %p72 = scmp.ne.s32.totalorder %s64, %s66
      %p73 = scmp.eq.s32.totalorder %s14, 1
      %p74 = por %p72, %p73
      %p75 = scmp.ne.s32.totalorder %s66, %s67
      %p76 = scmp.eq.s32.totalorder %s14, 0
      %p77 = por %p75, %p76
      %p78 = scmp.ne.s32.totalorder %s66, %s67
      %p79 = scmp.eq.s32.totalorder %s15, 1
      %p80 = por %p78, %p79
      %p82 = scmp.ne.s32.totalorder %s67, %s81
      %p83 = scmp.eq.s32.totalorder %s15, 0
      %p84 = por %p82, %p83
      %s85 = ssub.s32 %s9, %s16
      %p86 = scmp.eq.s32.totalorder %s85, 0
      %s88 = sadd.s32 %s87, 1
      %s89 = scalar_select %p86, %s87, %s88
      %p92 = pneg %p86
      %p93 = scmp.eq.s32.totalorder %s9, 1
      %p94 = por %p92, %p93
      %p95 = scmp.ne.s32.totalorder %s87, %s90
      %p96 = scmp.eq.s32.totalorder %s9, 0
      %p97 = por %p95, %p96
      %p98 = scmp.ne.s32.totalorder %s87, %s90
      %p99 = scmp.eq.s32.totalorder %s14, 1
      %p100 = por %p98, %p99
      %p101 = scmp.ne.s32.totalorder %s90, %s91
      %p102 = scmp.eq.s32.totalorder %s14, 0
      %p103 = por %p101, %p102
      %p104 = scmp.ne.s32.totalorder %s90, %s91
      %p105 = scmp.eq.s32.totalorder %s15, 1
      %p106 = por %p104, %p105
      %p108 = scmp.ne.s32.totalorder %s91, %s107
      %p109 = scmp.eq.s32.totalorder %s15, 0
      %p110 = por %p108, %p109
      %p111 = scmp.le.s32.totalorder 1, %s9
      %p112 = scmp.lt.s32.totalorder %s9, 3
      %p113 = pnand %p111, %p112
      %p114 = pneg %p113
      // Predicated region
      $region9: #{combine_forward.3} parent=5 // pred_check
        _
      $region10: #{combine_forward.3} parent=5 // pred_check_branch
        %116 = sbr.rel (%p113) target = $region12
      $region11: #{combine_forward.3} parent=5 // pred_region
        %s117 = ssub.s32 %s9, 1
        // Predicated region
        $region13: #{combine_forward.3} parent=11 // pred_check
          %p118 = pneg %p56
        $region14: #{combine_forward.3} parent=11 // pred_check_branch
          %120 = sbr.rel (%p118) target = $region16
        $region15: #{combine_forward.3} parent=11 // pred_region
          _
        $region16: #{combine_forward.3} parent=11 // pred_fallthru
          _
        // Predicated region
        $region17: #{combine_forward.3} parent=11 // pred_check
          %p121 = pneg %p77
        $region18: #{combine_forward.3} parent=11 // pred_check_branch
          %123 = sbr.rel (%p121) target = $region20
        $region19: #{combine_forward.3} parent=11 // pred_region
          _
        $region20: #{combine_forward.3} parent=11 // pred_fallthru
          _
      $region12: #{combine_forward.3} parent=5 // pred_fallthru
        _
      %p124 = scmp.lt.s32.totalorder %s9, 2
      // Predicated region
      $region21: #{combine_forward.3} parent=5 // pred_check
        %p125 = pneg %p124
      $region22: #{combine_forward.3} parent=5 // pred_check_branch
        %127 = sbr.rel (%p125) target = $region24
      $region23: #{combine_forward.3} parent=5 // pred_region
        // Predicated region
        $region25: #{combine_forward.3} parent=23 // pred_check
          %p128 = pneg %p29
        $region26: #{combine_forward.3} parent=23 // pred_check_branch
          %130 = sbr.rel (%p128) target = $region28
        $region27: #{combine_forward.3} parent=23 // pred_region
          %s131 = sand.u32 %s19, 1
          %s132 = sand.u32 %s19, 1
          %s133 = smul.addr %s132, 2304
          %s134 = scalar_lea.vmem [#allocation2], %s133
          %s135 = smul.u32 72, %s9
          %s136 = smul.addr %s135, 8
          %s137 = scalar_lea.vmem %s0, %s136
          // Predicated region
          $region29: #{combine_forward.3} parent=27 // pred_check
            _
          $region30: #{combine_forward.3} parent=27 // pred_check_branch
            %139 = sbr.rel (0) target = $region32
          $region31: #{combine_forward.3} parent=27 // pred_region
            // Predicated region
            $region33: #{combine_forward.3} parent=31 // pred_check
              _
            $region34: #{combine_forward.3} parent=31 // pred_check_branch
              %141 = sbr.rel (0) target = $region36
            $region35: #{combine_forward.3} parent=31 // pred_region
              // Predicated region
              $region48: #{combine_forward.3} parent=35 // pred_check
                _
              $region49: #{combine_forward.3} parent=35 // pred_check_branch
                %731 = sbr.rel (0) target = $region51
              $region50: #{combine_forward.3} parent=35 // pred_region
                loop: start=0, step=1, limit=1
                $region52: #{combine_forward.3} parent=50 // loop_pre_header
                  _
                $region53: #{combine_forward.3} parent=50 // loop_header
                  %s733 = sphi 0, %s737
                  %p734 = scmp.ge.s32.totalorder %s733, 1
                  %s738 = sphi 0, %s1319
                  %s739 = sphi %s137, %s1322
                  %s740 = sphi %s134, %s1323
                $region54: #{combine_forward.3} parent=50 // loop_header_branch
                  %736 = sbr.rel (%p734) target = $region58
                $region55: #{combine_forward.3} parent=50 // loop_body
                  %v741 = vld [vmem:[%s739] sm:$0xff]
                  %742 = vst [vmem:[%s740] sm:$0xff] %v741
                  %v743 = vld [vmem:[%s739 + $0x8] sm:$0xff]
                  %744 = vst [vmem:[%s740 + $0x8] sm:$0xff] %v743
                  %v745 = vld [vmem:[%s739 + $0x10] sm:$0xff]
                  %746 = vst [vmem:[%s740 + $0x10] sm:$0xff] %v745
                  %v747 = vld [vmem:[%s739 + $0x18] sm:$0xff]
                  %748 = vst [vmem:[%s740 + $0x18] sm:$0xff] %v747
                  %v749 = vld [vmem:[%s739 + $0x20] sm:$0xff]
                  %750 = vst [vmem:[%s740 + $0x20] sm:$0xff] %v749
                  %v751 = vld [vmem:[%s739 + $0x28] sm:$0xff]
                  %752 = vst [vmem:[%s740 + $0x28] sm:$0xff] %v751
                  %v753 = vld [vmem:[%s739 + $0x30] sm:$0xff]
                  %754 = vst [vmem:[%s740 + $0x30] sm:$0xff] %v753
                  %v755 = vld [vmem:[%s739 + $0x38] sm:$0xff]
                  %756 = vst [vmem:[%s740 + $0x38] sm:$0xff] %v755
                  %v757 = vld [vmem:[%s739 + $0x40] sm:$0xff]
                  %758 = vst [vmem:[%s740 + $0x40] sm:$0xff] %v757
                  %v759 = vld [vmem:[%s739 + $0x48] sm:$0xff]
                  %760 = vst [vmem:[%s740 + $0x48] sm:$0xff] %v759
                  %v761 = vld [vmem:[%s739 + $0x50] sm:$0xff]
                  %762 = vst [vmem:[%s740 + $0x50] sm:$0xff] %v761
                  %v763 = vld [vmem:[%s739 + $0x58] sm:$0xff]
                  %764 = vst [vmem:[%s740 + $0x58] sm:$0xff] %v763
                  %v765 = vld [vmem:[%s739 + $0x60] sm:$0xff]
                  %766 = vst [vmem:[%s740 + $0x60] sm:$0xff] %v765
                  %v767 = vld [vmem:[%s739 + $0x68] sm:$0xff]
                  %768 = vst [vmem:[%s740 + $0x68] sm:$0xff] %v767
                  %v769 = vld [vmem:[%s739 + $0x70] sm:$0xff]
                  %770 = vst [vmem:[%s740 + $0x70] sm:$0xff] %v769
                  %v771 = vld [vmem:[%s739 + $0x78] sm:$0xff]
                  %772 = vst [vmem:[%s740 + $0x78] sm:$0xff] %v771
                  %v773 = vld [vmem:[%s739 + $0x80] sm:$0xff]
                  %774 = vst [vmem:[%s740 + $0x80] sm:$0xff] %v773
                  %v775 = vld [vmem:[%s739 + $0x88] sm:$0xff]
                  %776 = vst [vmem:[%s740 + $0x88] sm:$0xff] %v775
                  %v777 = vld [vmem:[%s739 + $0x90] sm:$0xff]
                  %778 = vst [vmem:[%s740 + $0x90] sm:$0xff] %v777
                  %v779 = vld [vmem:[%s739 + $0x98] sm:$0xff]
                  %780 = vst [vmem:[%s740 + $0x98] sm:$0xff] %v779
                  %v781 = vld [vmem:[%s739 + $0xa0] sm:$0xff]
                  %782 = vst [vmem:[%s740 + $0xa0] sm:$0xff] %v781
                  %v783 = vld [vmem:[%s739 + $0xa8] sm:$0xff]
                  %784 = vst [vmem:[%s740 + $0xa8] sm:$0xff] %v783
                  %v785 = vld [vmem:[%s739 + $0xb0] sm:$0xff]
                  %786 = vst [vmem:[%s740 + $0xb0] sm:$0xff] %v785
                  %v787 = vld [vmem:[%s739 + $0xb8] sm:$0xff]
                  %788 = vst [vmem:[%s740 + $0xb8] sm:$0xff] %v787
                  %v789 = vld [vmem:[%s739 + $0xc0] sm:$0xff]
                  %790 = vst [vmem:[%s740 + $0xc0] sm:$0xff] %v789
                  %v791 = vld [vmem:[%s739 + $0xc8] sm:$0xff]
                  %792 = vst [vmem:[%s740 + $0xc8] sm:$0xff] %v791
                  %v793 = vld [vmem:[%s739 + $0xd0] sm:$0xff]
                  %794 = vst [vmem:[%s740 + $0xd0] sm:$0xff] %v793
                  %v795 = vld [vmem:[%s739 + $0xd8] sm:$0xff]
                  %796 = vst [vmem:[%s740 + $0xd8] sm:$0xff] %v795
                  %v797 = vld [vmem:[%s739 + $0xe0] sm:$0xff]
                  %798 = vst [vmem:[%s740 + $0xe0] sm:$0xff] %v797
                  %v799 = vld [vmem:[%s739 + $0xe8] sm:$0xff]
                  %800 = vst [vmem:[%s740 + $0xe8] sm:$0xff] %v799
                  %v801 = vld [vmem:[%s739 + $0xf0] sm:$0xff]
                  %802 = vst [vmem:[%s740 + $0xf0] sm:$0xff] %v801
                  %v803 = vld [vmem:[%s739 + $0xf8] sm:$0xff]
                  %804 = vst [vmem:[%s740 + $0xf8] sm:$0xff] %v803
                  %v805 = vld [vmem:[%s739 + $0x100] sm:$0xff]
                  %806 = vst [vmem:[%s740 + $0x100] sm:$0xff] %v805
                  %v807 = vld [vmem:[%s739 + $0x108] sm:$0xff]
                  %808 = vst [vmem:[%s740 + $0x108] sm:$0xff] %v807
                  %v809 = vld [vmem:[%s739 + $0x110] sm:$0xff]
                  %810 = vst [vmem:[%s740 + $0x110] sm:$0xff] %v809
                  %v811 = vld [vmem:[%s739 + $0x118] sm:$0xff]
                  %812 = vst [vmem:[%s740 + $0x118] sm:$0xff] %v811
                  %v813 = vld [vmem:[%s739 + $0x120] sm:$0xff]
                  %814 = vst [vmem:[%s740 + $0x120] sm:$0xff] %v813
                  %v815 = vld [vmem:[%s739 + $0x128] sm:$0xff]
                  %816 = vst [vmem:[%s740 + $0x128] sm:$0xff] %v815
                  %v817 = vld [vmem:[%s739 + $0x130] sm:$0xff]
                  %818 = vst [vmem:[%s740 + $0x130] sm:$0xff] %v817
                  %v819 = vld [vmem:[%s739 + $0x138] sm:$0xff]
                  %820 = vst [vmem:[%s740 + $0x138] sm:$0xff] %v819
                  %v821 = vld [vmem:[%s739 + $0x140] sm:$0xff]
                  %822 = vst [vmem:[%s740 + $0x140] sm:$0xff] %v821
                  %v823 = vld [vmem:[%s739 + $0x148] sm:$0xff]
                  %824 = vst [vmem:[%s740 + $0x148] sm:$0xff] %v823
                  %v825 = vld [vmem:[%s739 + $0x150] sm:$0xff]
                  %826 = vst [vmem:[%s740 + $0x150] sm:$0xff] %v825
                  %v827 = vld [vmem:[%s739 + $0x158] sm:$0xff]
                  %828 = vst [vmem:[%s740 + $0x158] sm:$0xff] %v827
                  %v829 = vld [vmem:[%s739 + $0x160] sm:$0xff]
                  %830 = vst [vmem:[%s740 + $0x160] sm:$0xff] %v829
                  %v831 = vld [vmem:[%s739 + $0x168] sm:$0xff]
                  %832 = vst [vmem:[%s740 + $0x168] sm:$0xff] %v831
                  %v833 = vld [vmem:[%s739 + $0x170] sm:$0xff]
                  %834 = vst [vmem:[%s740 + $0x170] sm:$0xff] %v833
                  %v835 = vld [vmem:[%s739 + $0x178] sm:$0xff]
                  %836 = vst [vmem:[%s740 + $0x178] sm:$0xff] %v835
                  %v837 = vld [vmem:[%s739 + $0x180] sm:$0xff]
                  %838 = vst [vmem:[%s740 + $0x180] sm:$0xff] %v837
                  %v839 = vld [vmem:[%s739 + $0x188] sm:$0xff]
                  %840 = vst [vmem:[%s740 + $0x188] sm:$0xff] %v839
                  %v841 = vld [vmem:[%s739 + $0x190] sm:$0xff]
                  %842 = vst [vmem:[%s740 + $0x190] sm:$0xff] %v841
                  %v843 = vld [vmem:[%s739 + $0x198] sm:$0xff]
                  %844 = vst [vmem:[%s740 + $0x198] sm:$0xff] %v843
                  %v845 = vld [vmem:[%s739 + $0x1a0] sm:$0xff]
                  %846 = vst [vmem:[%s740 + $0x1a0] sm:$0xff] %v845
                  %v847 = vld [vmem:[%s739 + $0x1a8] sm:$0xff]
                  %848 = vst [vmem:[%s740 + $0x1a8] sm:$0xff] %v847
                  %v849 = vld [vmem:[%s739 + $0x1b0] sm:$0xff]
                  %850 = vst [vmem:[%s740 + $0x1b0] sm:$0xff] %v849
                  %v851 = vld [vmem:[%s739 + $0x1b8] sm:$0xff]
                  %852 = vst [vmem:[%s740 + $0x1b8] sm:$0xff] %v851
                  %v853 = vld [vmem:[%s739 + $0x1c0] sm:$0xff]
                  %854 = vst [vmem:[%s740 + $0x1c0] sm:$0xff] %v853
                  %v855 = vld [vmem:[%s739 + $0x1c8] sm:$0xff]
                  %856 = vst [vmem:[%s740 + $0x1c8] sm:$0xff] %v855
                  %v857 = vld [vmem:[%s739 + $0x1d0] sm:$0xff]
                  %858 = vst [vmem:[%s740 + $0x1d0] sm:$0xff] %v857
                  %v859 = vld [vmem:[%s739 + $0x1d8] sm:$0xff]
                  %860 = vst [vmem:[%s740 + $0x1d8] sm:$0xff] %v859
                  %v861 = vld [vmem:[%s739 + $0x1e0] sm:$0xff]
                  %862 = vst [vmem:[%s740 + $0x1e0] sm:$0xff] %v861
                  %v863 = vld [vmem:[%s739 + $0x1e8] sm:$0xff]
                  %864 = vst [vmem:[%s740 + $0x1e8] sm:$0xff] %v863
                  %v865 = vld [vmem:[%s739 + $0x1f0] sm:$0xff]
                  %866 = vst [vmem:[%s740 + $0x1f0] sm:$0xff] %v865
                  %v867 = vld [vmem:[%s739 + $0x1f8] sm:$0xff]
                  %868 = vst [vmem:[%s740 + $0x1f8] sm:$0xff] %v867
                  %v869 = vld [vmem:[%s739 + $0x200] sm:$0xff]
                  %870 = vst [vmem:[%s740 + $0x200] sm:$0xff] %v869
                  %v871 = vld [vmem:[%s739 + $0x208] sm:$0xff]
                  %872 = vst [vmem:[%s740 + $0x208] sm:$0xff] %v871
                  %v873 = vld [vmem:[%s739 + $0x210] sm:$0xff]
                  %874 = vst [vmem:[%s740 + $0x210] sm:$0xff] %v873
                  %v875 = vld [vmem:[%s739 + $0x218] sm:$0xff]
                  %876 = vst [vmem:[%s740 + $0x218] sm:$0xff] %v875
                  %v877 = vld [vmem:[%s739 + $0x220] sm:$0xff]
                  %878 = vst [vmem:[%s740 + $0x220] sm:$0xff] %v877
                  %v879 = vld [vmem:[%s739 + $0x228] sm:$0xff]
                  %880 = vst [vmem:[%s740 + $0x228] sm:$0xff] %v879
                  %v881 = vld [vmem:[%s739 + $0x230] sm:$0xff]
                  %882 = vst [vmem:[%s740 + $0x230] sm:$0xff] %v881
                  %v883 = vld [vmem:[%s739 + $0x238] sm:$0xff]
                  %884 = vst [vmem:[%s740 + $0x238] sm:$0xff] %v883
                  %v885 = vld [vmem:[%s739 + $0x480] sm:$0xff]
                  %886 = vst [vmem:[%s740 + $0x240] sm:$0xff] %v885
                  %v887 = vld [vmem:[%s739 + $0x488] sm:$0xff]
                  %888 = vst [vmem:[%s740 + $0x248] sm:$0xff] %v887
                  %v889 = vld [vmem:[%s739 + $0x490] sm:$0xff]
                  %890 = vst [vmem:[%s740 + $0x250] sm:$0xff] %v889
                  %v891 = vld [vmem:[%s739 + $0x498] sm:$0xff]
                  %892 = vst [vmem:[%s740 + $0x258] sm:$0xff] %v891
                  %v893 = vld [vmem:[%s739 + $0x4a0] sm:$0xff]
                  %894 = vst [vmem:[%s740 + $0x260] sm:$0xff] %v893
                  %v895 = vld [vmem:[%s739 + $0x4a8] sm:$0xff]
                  %896 = vst [vmem:[%s740 + $0x268] sm:$0xff] %v895
                  %v897 = vld [vmem:[%s739 + $0x4b0] sm:$0xff]
                  %898 = vst [vmem:[%s740 + $0x270] sm:$0xff] %v897
                  %v899 = vld [vmem:[%s739 + $0x4b8] sm:$0xff]
                  %900 = vst [vmem:[%s740 + $0x278] sm:$0xff] %v899
                  %v901 = vld [vmem:[%s739 + $0x4c0] sm:$0xff]
                  %902 = vst [vmem:[%s740 + $0x280] sm:$0xff] %v901
                  %v903 = vld [vmem:[%s739 + $0x4c8] sm:$0xff]
                  %904 = vst [vmem:[%s740 + $0x288] sm:$0xff] %v903
                  %v905 = vld [vmem:[%s739 + $0x4d0] sm:$0xff]
                  %906 = vst [vmem:[%s740 + $0x290] sm:$0xff] %v905
                  %v907 = vld [vmem:[%s739 + $0x4d8] sm:$0xff]
                  %908 = vst [vmem:[%s740 + $0x298] sm:$0xff] %v907
                  %v909 = vld [vmem:[%s739 + $0x4e0] sm:$0xff]
                  %910 = vst [vmem:[%s740 + $0x2a0] sm:$0xff] %v909
                  %v911 = vld [vmem:[%s739 + $0x4e8] sm:$0xff]
                  %912 = vst [vmem:[%s740 + $0x2a8] sm:$0xff] %v911
                  %v913 = vld [vmem:[%s739 + $0x4f0] sm:$0xff]
                  %914 = vst [vmem:[%s740 + $0x2b0] sm:$0xff] %v913
                  %v915 = vld [vmem:[%s739 + $0x4f8] sm:$0xff]
                  %916 = vst [vmem:[%s740 + $0x2b8] sm:$0xff] %v915
                  %v917 = vld [vmem:[%s739 + $0x500] sm:$0xff]
                  %918 = vst [vmem:[%s740 + $0x2c0] sm:$0xff] %v917
                  %v919 = vld [vmem:[%s739 + $0x508] sm:$0xff]
                  %920 = vst [vmem:[%s740 + $0x2c8] sm:$0xff] %v919
                  %v921 = vld [vmem:[%s739 + $0x510] sm:$0xff]
                  %922 = vst [vmem:[%s740 + $0x2d0] sm:$0xff] %v921
                  %v923 = vld [vmem:[%s739 + $0x518] sm:$0xff]
                  %924 = vst [vmem:[%s740 + $0x2d8] sm:$0xff] %v923
                  %v925 = vld [vmem:[%s739 + $0x520] sm:$0xff]
                  %926 = vst [vmem:[%s740 + $0x2e0] sm:$0xff] %v925
                  %v927 = vld [vmem:[%s739 + $0x528] sm:$0xff]
                  %928 = vst [vmem:[%s740 + $0x2e8] sm:$0xff] %v927
                  %v929 = vld [vmem:[%s739 + $0x530] sm:$0xff]
                  %930 = vst [vmem:[%s740 + $0x2f0] sm:$0xff] %v929
                  %v931 = vld [vmem:[%s739 + $0x538] sm:$0xff]
                  %932 = vst [vmem:[%s740 + $0x2f8] sm:$0xff] %v931
                  %v933 = vld [vmem:[%s739 + $0x540] sm:$0xff]
                  %934 = vst [vmem:[%s740 + $0x300] sm:$0xff] %v933
                  %v935 = vld [vmem:[%s739 + $0x548] sm:$0xff]
                  %936 = vst [vmem:[%s740 + $0x308] sm:$0xff] %v935
                  %v937 = vld [vmem:[%s739 + $0x550] sm:$0xff]
                  %938 = vst [vmem:[%s740 + $0x310] sm:$0xff] %v937
                  %v939 = vld [vmem:[%s739 + $0x558] sm:$0xff]
                  %940 = vst [vmem:[%s740 + $0x318] sm:$0xff] %v939
                  %v941 = vld [vmem:[%s739 + $0x560] sm:$0xff]
                  %942 = vst [vmem:[%s740 + $0x320] sm:$0xff] %v941
                  %v943 = vld [vmem:[%s739 + $0x568] sm:$0xff]
                  %944 = vst [vmem:[%s740 + $0x328] sm:$0xff] %v943
                  %v945 = vld [vmem:[%s739 + $0x570] sm:$0xff]
                  %946 = vst [vmem:[%s740 + $0x330] sm:$0xff] %v945
                  %v947 = vld [vmem:[%s739 + $0x578] sm:$0xff]
                  %948 = vst [vmem:[%s740 + $0x338] sm:$0xff] %v947
                  %v949 = vld [vmem:[%s739 + $0x580] sm:$0xff]
                  %950 = vst [vmem:[%s740 + $0x340] sm:$0xff] %v949
                  %v951 = vld [vmem:[%s739 + $0x588] sm:$0xff]
                  %952 = vst [vmem:[%s740 + $0x348] sm:$0xff] %v951
                  %v953 = vld [vmem:[%s739 + $0x590] sm:$0xff]
                  %954 = vst [vmem:[%s740 + $0x350] sm:$0xff] %v953
                  %v955 = vld [vmem:[%s739 + $0x598] sm:$0xff]
                  %956 = vst [vmem:[%s740 + $0x358] sm:$0xff] %v955
                  %v957 = vld [vmem:[%s739 + $0x5a0] sm:$0xff]
                  %958 = vst [vmem:[%s740 + $0x360] sm:$0xff] %v957
                  %v959 = vld [vmem:[%s739 + $0x5a8] sm:$0xff]
                  %960 = vst [vmem:[%s740 + $0x368] sm:$0xff] %v959
                  %v961 = vld [vmem:[%s739 + $0x5b0] sm:$0xff]
                  %962 = vst [vmem:[%s740 + $0x370] sm:$0xff] %v961
                  %v963 = vld [vmem:[%s739 + $0x5b8] sm:$0xff]
                  %964 = vst [vmem:[%s740 + $0x378] sm:$0xff] %v963
                  %v965 = vld [vmem:[%s739 + $0x5c0] sm:$0xff]
                  %966 = vst [vmem:[%s740 + $0x380] sm:$0xff] %v965
                  %v967 = vld [vmem:[%s739 + $0x5c8] sm:$0xff]
                  %968 = vst [vmem:[%s740 + $0x388] sm:$0xff] %v967
                  %v969 = vld [vmem:[%s739 + $0x5d0] sm:$0xff]
                  %970 = vst [vmem:[%s740 + $0x390] sm:$0xff] %v969
                  %v971 = vld [vmem:[%s739 + $0x5d8] sm:$0xff]
                  %972 = vst [vmem:[%s740 + $0x398] sm:$0xff] %v971
                  %v973 = vld [vmem:[%s739 + $0x5e0] sm:$0xff]
                  %974 = vst [vmem:[%s740 + $0x3a0] sm:$0xff] %v973
                  %v975 = vld [vmem:[%s739 + $0x5e8] sm:$0xff]
                  %976 = vst [vmem:[%s740 + $0x3a8] sm:$0xff] %v975
                  %v977 = vld [vmem:[%s739 + $0x5f0] sm:$0xff]
                  %978 = vst [vmem:[%s740 + $0x3b0] sm:$0xff] %v977
                  %v979 = vld [vmem:[%s739 + $0x5f8] sm:$0xff]
                  %980 = vst [vmem:[%s740 + $0x3b8] sm:$0xff] %v979
                  %v981 = vld [vmem:[%s739 + $0x600] sm:$0xff]
                  %982 = vst [vmem:[%s740 + $0x3c0] sm:$0xff] %v981
                  %v983 = vld [vmem:[%s739 + $0x608] sm:$0xff]
                  %984 = vst [vmem:[%s740 + $0x3c8] sm:$0xff] %v983
                  %v985 = vld [vmem:[%s739 + $0x610] sm:$0xff]
                  %986 = vst [vmem:[%s740 + $0x3d0] sm:$0xff] %v985
                  %v987 = vld [vmem:[%s739 + $0x618] sm:$0xff]
                  %988 = vst [vmem:[%s740 + $0x3d8] sm:$0xff] %v987
                  %v989 = vld [vmem:[%s739 + $0x620] sm:$0xff]
                  %990 = vst [vmem:[%s740 + $0x3e0] sm:$0xff] %v989
                  %v991 = vld [vmem:[%s739 + $0x628] sm:$0xff]
                  %992 = vst [vmem:[%s740 + $0x3e8] sm:$0xff] %v991
                  %v993 = vld [vmem:[%s739 + $0x630] sm:$0xff]
                  %994 = vst [vmem:[%s740 + $0x3f0] sm:$0xff] %v993
                  %v995 = vld [vmem:[%s739 + $0x638] sm:$0xff]
                  %996 = vst [vmem:[%s740 + $0x3f8] sm:$0xff] %v995
                  %v997 = vld [vmem:[%s739 + $0x640] sm:$0xff]
                  %998 = vst [vmem:[%s740 + $0x400] sm:$0xff] %v997
                  %v999 = vld [vmem:[%s739 + $0x648] sm:$0xff]
                  %1000 = vst [vmem:[%s740 + $0x408] sm:$0xff] %v999
                  %v1001 = vld [vmem:[%s739 + $0x650] sm:$0xff]
                  %1002 = vst [vmem:[%s740 + $0x410] sm:$0xff] %v1001
                  %v1003 = vld [vmem:[%s739 + $0x658] sm:$0xff]
                  %1004 = vst [vmem:[%s740 + $0x418] sm:$0xff] %v1003
                  %v1005 = vld [vmem:[%s739 + $0x660] sm:$0xff]
                  %1006 = vst [vmem:[%s740 + $0x420] sm:$0xff] %v1005
                  %v1007 = vld [vmem:[%s739 + $0x668] sm:$0xff]
                  %1008 = vst [vmem:[%s740 + $0x428] sm:$0xff] %v1007
                  %v1009 = vld [vmem:[%s739 + $0x670] sm:$0xff]
                  %1010 = vst [vmem:[%s740 + $0x430] sm:$0xff] %v1009
                  %v1011 = vld [vmem:[%s739 + $0x678] sm:$0xff]
                  %1012 = vst [vmem:[%s740 + $0x438] sm:$0xff] %v1011
                  %v1013 = vld [vmem:[%s739 + $0x680] sm:$0xff]
                  %1014 = vst [vmem:[%s740 + $0x440] sm:$0xff] %v1013
                  %v1015 = vld [vmem:[%s739 + $0x688] sm:$0xff]
                  %1016 = vst [vmem:[%s740 + $0x448] sm:$0xff] %v1015
                  %v1017 = vld [vmem:[%s739 + $0x690] sm:$0xff]
                  %1018 = vst [vmem:[%s740 + $0x450] sm:$0xff] %v1017
                  %v1019 = vld [vmem:[%s739 + $0x698] sm:$0xff]
                  %1020 = vst [vmem:[%s740 + $0x458] sm:$0xff] %v1019
                  %v1021 = vld [vmem:[%s739 + $0x6a0] sm:$0xff]
                  %1022 = vst [vmem:[%s740 + $0x460] sm:$0xff] %v1021
                  %v1023 = vld [vmem:[%s739 + $0x6a8] sm:$0xff]
                  %1024 = vst [vmem:[%s740 + $0x468] sm:$0xff] %v1023
                  %v1025 = vld [vmem:[%s739 + $0x6b0] sm:$0xff]
                  %1026 = vst [vmem:[%s740 + $0x470] sm:$0xff] %v1025
                  %v1027 = vld [vmem:[%s739 + $0x6b8] sm:$0xff]
                  %1028 = vst [vmem:[%s740 + $0x478] sm:$0xff] %v1027
                  %v1029 = vld [vmem:[%s739 + $0x900] sm:$0xff]
                  %1030 = vst [vmem:[%s740 + $0x480] sm:$0xff] %v1029
                  %v1031 = vld [vmem:[%s739 + $0x908] sm:$0xff]
                  %1032 = vst [vmem:[%s740 + $0x488] sm:$0xff] %v1031
                  %v1033 = vld [vmem:[%s739 + $0x910] sm:$0xff]
                  %1034 = vst [vmem:[%s740 + $0x490] sm:$0xff] %v1033
                  %v1035 = vld [vmem:[%s739 + $0x918] sm:$0xff]
                  %1036 = vst [vmem:[%s740 + $0x498] sm:$0xff] %v1035
                  %v1037 = vld [vmem:[%s739 + $0x920] sm:$0xff]
                  %1038 = vst [vmem:[%s740 + $0x4a0] sm:$0xff] %v1037
                  %v1039 = vld [vmem:[%s739 + $0x928] sm:$0xff]
                  %1040 = vst [vmem:[%s740 + $0x4a8] sm:$0xff] %v1039
                  %v1041 = vld [vmem:[%s739 + $0x930] sm:$0xff]
                  %1042 = vst [vmem:[%s740 + $0x4b0] sm:$0xff] %v1041
                  %v1043 = vld [vmem:[%s739 + $0x938] sm:$0xff]
                  %1044 = vst [vmem:[%s740 + $0x4b8] sm:$0xff] %v1043
                  %v1045 = vld [vmem:[%s739 + $0x940] sm:$0xff]
                  %1046 = vst [vmem:[%s740 + $0x4c0] sm:$0xff] %v1045
                  %v1047 = vld [vmem:[%s739 + $0x948] sm:$0xff]
                  %1048 = vst [vmem:[%s740 + $0x4c8] sm:$0xff] %v1047
                  %v1049 = vld [vmem:[%s739 + $0x950] sm:$0xff]
                  %1050 = vst [vmem:[%s740 + $0x4d0] sm:$0xff] %v1049
                  %v1051 = vld [vmem:[%s739 + $0x958] sm:$0xff]
                  %1052 = vst [vmem:[%s740 + $0x4d8] sm:$0xff] %v1051
                  %v1053 = vld [vmem:[%s739 + $0x960] sm:$0xff]
                  %1054 = vst [vmem:[%s740 + $0x4e0] sm:$0xff] %v1053
                  %v1055 = vld [vmem:[%s739 + $0x968] sm:$0xff]
                  %1056 = vst [vmem:[%s740 + $0x4e8] sm:$0xff] %v1055
                  %v1057 = vld [vmem:[%s739 + $0x970] sm:$0xff]
                  %1058 = vst [vmem:[%s740 + $0x4f0] sm:$0xff] %v1057
                  %v1059 = vld [vmem:[%s739 + $0x978] sm:$0xff]
                  %1060 = vst [vmem:[%s740 + $0x4f8] sm:$0xff] %v1059
                  %v1061 = vld [vmem:[%s739 + $0x980] sm:$0xff]
                  %1062 = vst [vmem:[%s740 + $0x500] sm:$0xff] %v1061
                  %v1063 = vld [vmem:[%s739 + $0x988] sm:$0xff]
                  %1064 = vst [vmem:[%s740 + $0x508] sm:$0xff] %v1063
                  %v1065 = vld [vmem:[%s739 + $0x990] sm:$0xff]
                  %1066 = vst [vmem:[%s740 + $0x510] sm:$0xff] %v1065
                  %v1067 = vld [vmem:[%s739 + $0x998] sm:$0xff]
                  %1068 = vst [vmem:[%s740 + $0x518] sm:$0xff] %v1067
                  %v1069 = vld [vmem:[%s739 + $0x9a0] sm:$0xff]
                  %1070 = vst [vmem:[%s740 + $0x520] sm:$0xff] %v1069
                  %v1071 = vld [vmem:[%s739 + $0x9a8] sm:$0xff]
                  %1072 = vst [vmem:[%s740 + $0x528] sm:$0xff] %v1071
                  %v1073 = vld [vmem:[%s739 + $0x9b0] sm:$0xff]
                  %1074 = vst [vmem:[%s740 + $0x530] sm:$0xff] %v1073
                  %v1075 = vld [vmem:[%s739 + $0x9b8] sm:$0xff]
                  %1076 = vst [vmem:[%s740 + $0x538] sm:$0xff] %v1075
                  %v1077 = vld [vmem:[%s739 + $0x9c0] sm:$0xff]
                  %1078 = vst [vmem:[%s740 + $0x540] sm:$0xff] %v1077
                  %v1079 = vld [vmem:[%s739 + $0x9c8] sm:$0xff]
                  %1080 = vst [vmem:[%s740 + $0x548] sm:$0xff] %v1079
                  %v1081 = vld [vmem:[%s739 + $0x9d0] sm:$0xff]
                  %1082 = vst [vmem:[%s740 + $0x550] sm:$0xff] %v1081
                  %v1083 = vld [vmem:[%s739 + $0x9d8] sm:$0xff]
                  %1084 = vst [vmem:[%s740 + $0x558] sm:$0xff] %v1083
                  %v1085 = vld [vmem:[%s739 + $0x9e0] sm:$0xff]
                  %1086 = vst [vmem:[%s740 + $0x560] sm:$0xff] %v1085
                  %v1087 = vld [vmem:[%s739 + $0x9e8] sm:$0xff]
                  %1088 = vst [vmem:[%s740 + $0x568] sm:$0xff] %v1087
                  %v1089 = vld [vmem:[%s739 + $0x9f0] sm:$0xff]
                  %1090 = vst [vmem:[%s740 + $0x570] sm:$0xff] %v1089
                  %v1091 = vld [vmem:[%s739 + $0x9f8] sm:$0xff]
                  %1092 = vst [vmem:[%s740 + $0x578] sm:$0xff] %v1091
                  %v1093 = vld [vmem:[%s739 + $0xa00] sm:$0xff]
                  %1094 = vst [vmem:[%s740 + $0x580] sm:$0xff] %v1093
                  %v1095 = vld [vmem:[%s739 + $0xa08] sm:$0xff]
                  %1096 = vst [vmem:[%s740 + $0x588] sm:$0xff] %v1095
                  %v1097 = vld [vmem:[%s739 + $0xa10] sm:$0xff]
                  %1098 = vst [vmem:[%s740 + $0x590] sm:$0xff] %v1097
                  %v1099 = vld [vmem:[%s739 + $0xa18] sm:$0xff]
                  %1100 = vst [vmem:[%s740 + $0x598] sm:$0xff] %v1099
                  %v1101 = vld [vmem:[%s739 + $0xa20] sm:$0xff]
                  %1102 = vst [vmem:[%s740 + $0x5a0] sm:$0xff] %v1101
                  %v1103 = vld [vmem:[%s739 + $0xa28] sm:$0xff]
                  %1104 = vst [vmem:[%s740 + $0x5a8] sm:$0xff] %v1103
                  %v1105 = vld [vmem:[%s739 + $0xa30] sm:$0xff]
                  %1106 = vst [vmem:[%s740 + $0x5b0] sm:$0xff] %v1105
                  %v1107 = vld [vmem:[%s739 + $0xa38] sm:$0xff]
                  %1108 = vst [vmem:[%s740 + $0x5b8] sm:$0xff] %v1107
                  %v1109 = vld [vmem:[%s739 + $0xa40] sm:$0xff]
                  %1110 = vst [vmem:[%s740 + $0x5c0] sm:$0xff] %v1109
                  %v1111 = vld [vmem:[%s739 + $0xa48] sm:$0xff]
                  %1112 = vst [vmem:[%s740 + $0x5c8] sm:$0xff] %v1111
                  %v1113 = vld [vmem:[%s739 + $0xa50] sm:$0xff]
                  %1114 = vst [vmem:[%s740 + $0x5d0] sm:$0xff] %v1113
                  %v1115 = vld [vmem:[%s739 + $0xa58] sm:$0xff]
                  %1116 = vst [vmem:[%s740 + $0x5d8] sm:$0xff] %v1115
                  %v1117 = vld [vmem:[%s739 + $0xa60] sm:$0xff]
                  %1118 = vst [vmem:[%s740 + $0x5e0] sm:$0xff] %v1117
                  %v1119 = vld [vmem:[%s739 + $0xa68] sm:$0xff]
                  %1120 = vst [vmem:[%s740 + $0x5e8] sm:$0xff] %v1119
                  %v1121 = vld [vmem:[%s739 + $0xa70] sm:$0xff]
                  %1122 = vst [vmem:[%s740 + $0x5f0] sm:$0xff] %v1121
                  %v1123 = vld [vmem:[%s739 + $0xa78] sm:$0xff]
                  %1124 = vst [vmem:[%s740 + $0x5f8] sm:$0xff] %v1123
                  %v1125 = vld [vmem:[%s739 + $0xa80] sm:$0xff]
                  %1126 = vst [vmem:[%s740 + $0x600] sm:$0xff] %v1125
                  %v1127 = vld [vmem:[%s739 + $0xa88] sm:$0xff]
                  %1128 = vst [vmem:[%s740 + $0x608] sm:$0xff] %v1127
                  %v1129 = vld [vmem:[%s739 + $0xa90] sm:$0xff]
                  %1130 = vst [vmem:[%s740 + $0x610] sm:$0xff] %v1129
                  %v1131 = vld [vmem:[%s739 + $0xa98] sm:$0xff]
                  %1132 = vst [vmem:[%s740 + $0x618] sm:$0xff] %v1131
                  %v1133 = vld [vmem:[%s739 + $0xaa0] sm:$0xff]
                  %1134 = vst [vmem:[%s740 + $0x620] sm:$0xff] %v1133
                  %v1135 = vld [vmem:[%s739 + $0xaa8] sm:$0xff]
                  %1136 = vst [vmem:[%s740 + $0x628] sm:$0xff] %v1135
                  %v1137 = vld [vmem:[%s739 + $0xab0] sm:$0xff]
                  %1138 = vst [vmem:[%s740 + $0x630] sm:$0xff] %v1137
                  %v1139 = vld [vmem:[%s739 + $0xab8] sm:$0xff]
                  %1140 = vst [vmem:[%s740 + $0x638] sm:$0xff] %v1139
                  %v1141 = vld [vmem:[%s739 + $0xac0] sm:$0xff]
                  %1142 = vst [vmem:[%s740 + $0x640] sm:$0xff] %v1141
                  %v1143 = vld [vmem:[%s739 + $0xac8] sm:$0xff]
                  %1144 = vst [vmem:[%s740 + $0x648] sm:$0xff] %v1143
                  %v1145 = vld [vmem:[%s739 + $0xad0] sm:$0xff]
                  %1146 = vst [vmem:[%s740 + $0x650] sm:$0xff] %v1145
                  %v1147 = vld [vmem:[%s739 + $0xad8] sm:$0xff]
                  %1148 = vst [vmem:[%s740 + $0x658] sm:$0xff] %v1147
                  %v1149 = vld [vmem:[%s739 + $0xae0] sm:$0xff]
                  %1150 = vst [vmem:[%s740 + $0x660] sm:$0xff] %v1149
                  %v1151 = vld [vmem:[%s739 + $0xae8] sm:$0xff]
                  %1152 = vst [vmem:[%s740 + $0x668] sm:$0xff] %v1151
                  %v1153 = vld [vmem:[%s739 + $0xaf0] sm:$0xff]
                  %1154 = vst [vmem:[%s740 + $0x670] sm:$0xff] %v1153
                  %v1155 = vld [vmem:[%s739 + $0xaf8] sm:$0xff]
                  %1156 = vst [vmem:[%s740 + $0x678] sm:$0xff] %v1155
                  %v1157 = vld [vmem:[%s739 + $0xb00] sm:$0xff]
                  %1158 = vst [vmem:[%s740 + $0x680] sm:$0xff] %v1157
                  %v1159 = vld [vmem:[%s739 + $0xb08] sm:$0xff]
                  %1160 = vst [vmem:[%s740 + $0x688] sm:$0xff] %v1159
                  %v1161 = vld [vmem:[%s739 + $0xb10] sm:$0xff]
                  %1162 = vst [vmem:[%s740 + $0x690] sm:$0xff] %v1161
                  %v1163 = vld [vmem:[%s739 + $0xb18] sm:$0xff]
                  %1164 = vst [vmem:[%s740 + $0x698] sm:$0xff] %v1163
                  %v1165 = vld [vmem:[%s739 + $0xb20] sm:$0xff]
                  %1166 = vst [vmem:[%s740 + $0x6a0] sm:$0xff] %v1165
                  %v1167 = vld [vmem:[%s739 + $0xb28] sm:$0xff]
                  %1168 = vst [vmem:[%s740 + $0x6a8] sm:$0xff] %v1167
                  %v1169 = vld [vmem:[%s739 + $0xb30] sm:$0xff]
                  %1170 = vst [vmem:[%s740 + $0x6b0] sm:$0xff] %v1169
                  %v1171 = vld [vmem:[%s739 + $0xb38] sm:$0xff]
                  %1172 = vst [vmem:[%s740 + $0x6b8] sm:$0xff] %v1171
                  %v1173 = vld [vmem:[%s739 + $0xd80] sm:$0xff]
                  %1174 = vst [vmem:[%s740 + $0x6c0] sm:$0xff] %v1173
                  %v1175 = vld [vmem:[%s739 + $0xd88] sm:$0xff]
                  %1176 = vst [vmem:[%s740 + $0x6c8] sm:$0xff] %v1175
                  %v1177 = vld [vmem:[%s739 + $0xd90] sm:$0xff]
                  %1178 = vst [vmem:[%s740 + $0x6d0] sm:$0xff] %v1177
                  %v1179 = vld [vmem:[%s739 + $0xd98] sm:$0xff]
                  %1180 = vst [vmem:[%s740 + $0x6d8] sm:$0xff] %v1179
                  %v1181 = vld [vmem:[%s739 + $0xda0] sm:$0xff]
                  %1182 = vst [vmem:[%s740 + $0x6e0] sm:$0xff] %v1181
                  %v1183 = vld [vmem:[%s739 + $0xda8] sm:$0xff]
                  %1184 = vst [vmem:[%s740 + $0x6e8] sm:$0xff] %v1183
                  %v1185 = vld [vmem:[%s739 + $0xdb0] sm:$0xff]
                  %1186 = vst [vmem:[%s740 + $0x6f0] sm:$0xff] %v1185
                  %v1187 = vld [vmem:[%s739 + $0xdb8] sm:$0xff]
                  %1188 = vst [vmem:[%s740 + $0x6f8] sm:$0xff] %v1187
                  %v1189 = vld [vmem:[%s739 + $0xdc0] sm:$0xff]
                  %1190 = vst [vmem:[%s740 + $0x700] sm:$0xff] %v1189
                  %v1191 = vld [vmem:[%s739 + $0xdc8] sm:$0xff]
                  %1192 = vst [vmem:[%s740 + $0x708] sm:$0xff] %v1191
                  %v1193 = vld [vmem:[%s739 + $0xdd0] sm:$0xff]
                  %1194 = vst [vmem:[%s740 + $0x710] sm:$0xff] %v1193
                  %v1195 = vld [vmem:[%s739 + $0xdd8] sm:$0xff]
                  %1196 = vst [vmem:[%s740 + $0x718] sm:$0xff] %v1195
                  %v1197 = vld [vmem:[%s739 + $0xde0] sm:$0xff]
                  %1198 = vst [vmem:[%s740 + $0x720] sm:$0xff] %v1197
                  %v1199 = vld [vmem:[%s739 + $0xde8] sm:$0xff]
                  %1200 = vst [vmem:[%s740 + $0x728] sm:$0xff] %v1199
                  %v1201 = vld [vmem:[%s739 + $0xdf0] sm:$0xff]
                  %1202 = vst [vmem:[%s740 + $0x730] sm:$0xff] %v1201
                  %v1203 = vld [vmem:[%s739 + $0xdf8] sm:$0xff]
                  %1204 = vst [vmem:[%s740 + $0x738] sm:$0xff] %v1203
                  %v1205 = vld [vmem:[%s739 + $0xe00] sm:$0xff]
                  %1206 = vst [vmem:[%s740 + $0x740] sm:$0xff] %v1205
                  %v1207 = vld [vmem:[%s739 + $0xe08] sm:$0xff]
                  %1208 = vst [vmem:[%s740 + $0x748] sm:$0xff] %v1207
                  %v1209 = vld [vmem:[%s739 + $0xe10] sm:$0xff]
                  %1210 = vst [vmem:[%s740 + $0x750] sm:$0xff] %v1209
                  %v1211 = vld [vmem:[%s739 + $0xe18] sm:$0xff]
                  %1212 = vst [vmem:[%s740 + $0x758] sm:$0xff] %v1211
                  %v1213 = vld [vmem:[%s739 + $0xe20] sm:$0xff]
                  %1214 = vst [vmem:[%s740 + $0x760] sm:$0xff] %v1213
                  %v1215 = vld [vmem:[%s739 + $0xe28] sm:$0xff]
                  %1216 = vst [vmem:[%s740 + $0x768] sm:$0xff] %v1215
                  %v1217 = vld [vmem:[%s739 + $0xe30] sm:$0xff]
                  %1218 = vst [vmem:[%s740 + $0x770] sm:$0xff] %v1217
                  %v1219 = vld [vmem:[%s739 + $0xe38] sm:$0xff]
                  %1220 = vst [vmem:[%s740 + $0x778] sm:$0xff] %v1219
                  %v1221 = vld [vmem:[%s739 + $0xe40] sm:$0xff]
                  %1222 = vst [vmem:[%s740 + $0x780] sm:$0xff] %v1221
                  %v1223 = vld [vmem:[%s739 + $0xe48] sm:$0xff]
                  %1224 = vst [vmem:[%s740 + $0x788] sm:$0xff] %v1223
                  %v1225 = vld [vmem:[%s739 + $0xe50] sm:$0xff]
                  %1226 = vst [vmem:[%s740 + $0x790] sm:$0xff] %v1225
                  %v1227 = vld [vmem:[%s739 + $0xe58] sm:$0xff]
                  %1228 = vst [vmem:[%s740 + $0x798] sm:$0xff] %v1227
                  %v1229 = vld [vmem:[%s739 + $0xe60] sm:$0xff]
                  %1230 = vst [vmem:[%s740 + $0x7a0] sm:$0xff] %v1229
                  %v1231 = vld [vmem:[%s739 + $0xe68] sm:$0xff]
                  %1232 = vst [vmem:[%s740 + $0x7a8] sm:$0xff] %v1231
                  %v1233 = vld [vmem:[%s739 + $0xe70] sm:$0xff]
                  %1234 = vst [vmem:[%s740 + $0x7b0] sm:$0xff] %v1233
                  %v1235 = vld [vmem:[%s739 + $0xe78] sm:$0xff]
                  %1236 = vst [vmem:[%s740 + $0x7b8] sm:$0xff] %v1235
                  %v1237 = vld [vmem:[%s739 + $0xe80] sm:$0xff]
                  %1238 = vst [vmem:[%s740 + $0x7c0] sm:$0xff] %v1237
                  %v1239 = vld [vmem:[%s739 + $0xe88] sm:$0xff]
                  %1240 = vst [vmem:[%s740 + $0x7c8] sm:$0xff] %v1239
                  %v1241 = vld [vmem:[%s739 + $0xe90] sm:$0xff]
                  %1242 = vst [vmem:[%s740 + $0x7d0] sm:$0xff] %v1241
                  %v1243 = vld [vmem:[%s739 + $0xe98] sm:$0xff]
                  %1244 = vst [vmem:[%s740 + $0x7d8] sm:$0xff] %v1243
                  %v1245 = vld [vmem:[%s739 + $0xea0] sm:$0xff]
                  %1246 = vst [vmem:[%s740 + $0x7e0] sm:$0xff] %v1245
                  %v1247 = vld [vmem:[%s739 + $0xea8] sm:$0xff]
                  %1248 = vst [vmem:[%s740 + $0x7e8] sm:$0xff] %v1247
                  %v1249 = vld [vmem:[%s739 + $0xeb0] sm:$0xff]
                  %1250 = vst [vmem:[%s740 + $0x7f0] sm:$0xff] %v1249
                  %v1251 = vld [vmem:[%s739 + $0xeb8] sm:$0xff]
                  %1252 = vst [vmem:[%s740 + $0x7f8] sm:$0xff] %v1251
                  %v1253 = vld [vmem:[%s739 + $0xec0] sm:$0xff]
                  %1254 = vst [vmem:[%s740 + $0x800] sm:$0xff] %v1253
                  %v1255 = vld [vmem:[%s739 + $0xec8] sm:$0xff]
                  %1256 = vst [vmem:[%s740 + $0x808] sm:$0xff] %v1255
                  %v1257 = vld [vmem:[%s739 + $0xed0] sm:$0xff]
                  %1258 = vst [vmem:[%s740 + $0x810] sm:$0xff] %v1257
                  %v1259 = vld [vmem:[%s739 + $0xed8] sm:$0xff]
                  %1260 = vst [vmem:[%s740 + $0x818] sm:$0xff] %v1259
                  %v1261 = vld [vmem:[%s739 + $0xee0] sm:$0xff]
                  %1262 = vst [vmem:[%s740 + $0x820] sm:$0xff] %v1261
                  %v1263 = vld [vmem:[%s739 + $0xee8] sm:$0xff]
                  %1264 = vst [vmem:[%s740 + $0x828] sm:$0xff] %v1263
                  %v1265 = vld [vmem:[%s739 + $0xef0] sm:$0xff]
                  %1266 = vst [vmem:[%s740 + $0x830] sm:$0xff] %v1265
                  %v1267 = vld [vmem:[%s739 + $0xef8] sm:$0xff]
                  %1268 = vst [vmem:[%s740 + $0x838] sm:$0xff] %v1267
                  %v1269 = vld [vmem:[%s739 + $0xf00] sm:$0xff]
                  %1270 = vst [vmem:[%s740 + $0x840] sm:$0xff] %v1269
                  %v1271 = vld [vmem:[%s739 + $0xf08] sm:$0xff]
                  %1272 = vst [vmem:[%s740 + $0x848] sm:$0xff] %v1271
                  %v1273 = vld [vmem:[%s739 + $0xf10] sm:$0xff]
                  %1274 = vst [vmem:[%s740 + $0x850] sm:$0xff] %v1273
                  %v1275 = vld [vmem:[%s739 + $0xf18] sm:$0xff]
                  %1276 = vst [vmem:[%s740 + $0x858] sm:$0xff] %v1275
                  %v1277 = vld [vmem:[%s739 + $0xf20] sm:$0xff]
                  %1278 = vst [vmem:[%s740 + $0x860] sm:$0xff] %v1277
                  %v1279 = vld [vmem:[%s739 + $0xf28] sm:$0xff]
                  %1280 = vst [vmem:[%s740 + $0x868] sm:$0xff] %v1279
                  %v1281 = vld [vmem:[%s739 + $0xf30] sm:$0xff]
                  %1282 = vst [vmem:[%s740 + $0x870] sm:$0xff] %v1281
                  %v1283 = vld [vmem:[%s739 + $0xf38] sm:$0xff]
                  %1284 = vst [vmem:[%s740 + $0x878] sm:$0xff] %v1283
                  %v1285 = vld [vmem:[%s739 + $0xf40] sm:$0xff]
                  %1286 = vst [vmem:[%s740 + $0x880] sm:$0xff] %v1285
                  %v1287 = vld [vmem:[%s739 + $0xf48] sm:$0xff]
                  %1288 = vst [vmem:[%s740 + $0x888] sm:$0xff] %v1287
                  %v1289 = vld [vmem:[%s739 + $0xf50] sm:$0xff]
                  %1290 = vst [vmem:[%s740 + $0x890] sm:$0xff] %v1289
                  %v1291 = vld [vmem:[%s739 + $0xf58] sm:$0xff]
                  %1292 = vst [vmem:[%s740 + $0x898] sm:$0xff] %v1291
                  %v1293 = vld [vmem:[%s739 + $0xf60] sm:$0xff]
                  %1294 = vst [vmem:[%s740 + $0x8a0] sm:$0xff] %v1293
                  %v1295 = vld [vmem:[%s739 + $0xf68] sm:$0xff]
                  %1296 = vst [vmem:[%s740 + $0x8a8] sm:$0xff] %v1295
                  %v1297 = vld [vmem:[%s739 + $0xf70] sm:$0xff]
                  %1298 = vst [vmem:[%s740 + $0x8b0] sm:$0xff] %v1297
                  %v1299 = vld [vmem:[%s739 + $0xf78] sm:$0xff]
                  %1300 = vst [vmem:[%s740 + $0x8b8] sm:$0xff] %v1299
                  %v1301 = vld [vmem:[%s739 + $0xf80] sm:$0xff]
                  %1302 = vst [vmem:[%s740 + $0x8c0] sm:$0xff] %v1301
                  %v1303 = vld [vmem:[%s739 + $0xf88] sm:$0xff]
                  %1304 = vst [vmem:[%s740 + $0x8c8] sm:$0xff] %v1303
                  %v1305 = vld [vmem:[%s739 + $0xf90] sm:$0xff]
                  %1306 = vst [vmem:[%s740 + $0x8d0] sm:$0xff] %v1305
                  %v1307 = vld [vmem:[%s739 + $0xf98] sm:$0xff]
                  %1308 = vst [vmem:[%s740 + $0x8d8] sm:$0xff] %v1307
                  %v1309 = vld [vmem:[%s739 + $0xfa0] sm:$0xff]
                  %1310 = vst [vmem:[%s740 + $0x8e0] sm:$0xff] %v1309
                  %v1311 = vld [vmem:[%s739 + $0xfa8] sm:$0xff]
                  %1312 = vst [vmem:[%s740 + $0x8e8] sm:$0xff] %v1311
                  %v1313 = vld [vmem:[%s739 + $0xfb0] sm:$0xff]
                  %1314 = vst [vmem:[%s740 + $0x8f0] sm:$0xff] %v1313
                  %v1315 = vld [vmem:[%s739 + $0xfb8] sm:$0xff]
                  %1316 = vst [vmem:[%s740 + $0x8f8] sm:$0xff] %v1315
                  %s1317 = sadd.s32 1, %s738
                  %p1318 = scmp.ge.s32.totalorder %s1317, 1
                  %s1319 = scalar_select %p1318, 0, %s1317
                  %s1320 = smul.u32 %s1319, 8
                  %s1321 = smul.u32 %s1319, 8
                  %s1322 = scalar_lea.vmem %s137, %s1320
                  %s1323 = scalar_lea.vmem %s134, %s1321 [#allocation2]
                $region56: #{combine_forward.3} parent=50 // loop_footer
                  %s737 = sadd.s32 1, %s733
                $region57: #{combine_forward.3} parent=50 // loop_footer_branch
                  %732 = sbr.rel target = $region53
                $region58: #{combine_forward.3} parent=50 // loop_exit
                  _
              $region51: #{combine_forward.3} parent=35 // pred_fallthru
                _
              // Predicated region
              $region59: #{combine_forward.3} parent=35 // pred_check
                _
              $region60: #{combine_forward.3} parent=35 // pred_check_branch
                %1325 = sbr.rel target = $region62
              $region61: #{combine_forward.3} parent=35 // pred_region
                %s1326 = scalar_lea.vmem %s137, 8
                %s1327 = scalar_lea.vmem %s134, 8 [#allocation2]
                loop: start=0, step=1, limit=1
                $region63: #{combine_forward.3} parent=61 // loop_pre_header
                  _
                $region64: #{combine_forward.3} parent=61 // loop_header
                  %s1329 = sphi 0, %s1333
                  %p1330 = scmp.ge.s32.totalorder %s1329, 1
                  %s1334 = sphi 0, %s1915
                  %s1335 = sphi %s137, %s1918
                  %s1336 = sphi %s134, %s1919
                $region65: #{combine_forward.3} parent=61 // loop_header_branch
                  %1332 = sbr.rel (%p1330) target = $region69
                $region66: #{combine_forward.3} parent=61 // loop_body
                  %v1337 = vld [vmem:[%s1335] sm:$0xff]
                  %1338 = vst [vmem:[%s1336] sm:$0xff] %v1337
                  %v1339 = vld [vmem:[%s1335 + $0x8] sm:$0xff]
                  %1340 = vst [vmem:[%s1336 + $0x8] sm:$0xff] %v1339
                  %v1341 = vld [vmem:[%s1335 + $0x10] sm:$0xff]
                  %1342 = vst [vmem:[%s1336 + $0x10] sm:$0xff] %v1341
                  %v1343 = vld [vmem:[%s1335 + $0x18] sm:$0xff]
                  %1344 = vst [vmem:[%s1336 + $0x18] sm:$0xff] %v1343
                  %v1345 = vld [vmem:[%s1335 + $0x20] sm:$0xff]
                  %1346 = vst [vmem:[%s1336 + $0x20] sm:$0xff] %v1345
                  %v1347 = vld [vmem:[%s1335 + $0x28] sm:$0xff]
                  %1348 = vst [vmem:[%s1336 + $0x28] sm:$0xff] %v1347
                  %v1349 = vld [vmem:[%s1335 + $0x30] sm:$0xff]
                  %1350 = vst [vmem:[%s1336 + $0x30] sm:$0xff] %v1349
                  %v1351 = vld [vmem:[%s1335 + $0x38] sm:$0xff]
                  %1352 = vst [vmem:[%s1336 + $0x38] sm:$0xff] %v1351
                  %v1353 = vld [vmem:[%s1335 + $0x40] sm:$0xff]
                  %1354 = vst [vmem:[%s1336 + $0x40] sm:$0xff] %v1353
                  %v1355 = vld [vmem:[%s1335 + $0x48] sm:$0xff]
                  %1356 = vst [vmem:[%s1336 + $0x48] sm:$0xff] %v1355
                  %v1357 = vld [vmem:[%s1335 + $0x50] sm:$0xff]
                  %1358 = vst [vmem:[%s1336 + $0x50] sm:$0xff] %v1357
                  %v1359 = vld [vmem:[%s1335 + $0x58] sm:$0xff]
                  %1360 = vst [vmem:[%s1336 + $0x58] sm:$0xff] %v1359
                  %v1361 = vld [vmem:[%s1335 + $0x60] sm:$0xff]
                  %1362 = vst [vmem:[%s1336 + $0x60] sm:$0xff] %v1361
                  %v1363 = vld [vmem:[%s1335 + $0x68] sm:$0xff]
                  %1364 = vst [vmem:[%s1336 + $0x68] sm:$0xff] %v1363
                  %v1365 = vld [vmem:[%s1335 + $0x70] sm:$0xff]
                  %1366 = vst [vmem:[%s1336 + $0x70] sm:$0xff] %v1365
                  %v1367 = vld [vmem:[%s1335 + $0x78] sm:$0xff]
                  %1368 = vst [vmem:[%s1336 + $0x78] sm:$0xff] %v1367
                  %v1369 = vld [vmem:[%s1335 + $0x80] sm:$0xff]
                  %1370 = vst [vmem:[%s1336 + $0x80] sm:$0xff] %v1369
                  %v1371 = vld [vmem:[%s1335 + $0x88] sm:$0xff]
                  %1372 = vst [vmem:[%s1336 + $0x88] sm:$0xff] %v1371
                  %v1373 = vld [vmem:[%s1335 + $0x90] sm:$0xff]
                  %1374 = vst [vmem:[%s1336 + $0x90] sm:$0xff] %v1373
                  %v1375 = vld [vmem:[%s1335 + $0x98] sm:$0xff]
                  %1376 = vst [vmem:[%s1336 + $0x98] sm:$0xff] %v1375
                  %v1377 = vld [vmem:[%s1335 + $0xa0] sm:$0xff]
                  %1378 = vst [vmem:[%s1336 + $0xa0] sm:$0xff] %v1377
                  %v1379 = vld [vmem:[%s1335 + $0xa8] sm:$0xff]
                  %1380 = vst [vmem:[%s1336 + $0xa8] sm:$0xff] %v1379
                  %v1381 = vld [vmem:[%s1335 + $0xb0] sm:$0xff]
                  %1382 = vst [vmem:[%s1336 + $0xb0] sm:$0xff] %v1381
                  %v1383 = vld [vmem:[%s1335 + $0xb8] sm:$0xff]
                  %1384 = vst [vmem:[%s1336 + $0xb8] sm:$0xff] %v1383
                  %v1385 = vld [vmem:[%s1335 + $0xc0] sm:$0xff]
                  %1386 = vst [vmem:[%s1336 + $0xc0] sm:$0xff] %v1385
                  %v1387 = vld [vmem:[%s1335 + $0xc8] sm:$0xff]
                  %1388 = vst [vmem:[%s1336 + $0xc8] sm:$0xff] %v1387
                  %v1389 = vld [vmem:[%s1335 + $0xd0] sm:$0xff]
                  %1390 = vst [vmem:[%s1336 + $0xd0] sm:$0xff] %v1389
                  %v1391 = vld [vmem:[%s1335 + $0xd8] sm:$0xff]
                  %1392 = vst [vmem:[%s1336 + $0xd8] sm:$0xff] %v1391
                  %v1393 = vld [vmem:[%s1335 + $0xe0] sm:$0xff]
                  %1394 = vst [vmem:[%s1336 + $0xe0] sm:$0xff] %v1393
                  %v1395 = vld [vmem:[%s1335 + $0xe8] sm:$0xff]
                  %1396 = vst [vmem:[%s1336 + $0xe8] sm:$0xff] %v1395
                  %v1397 = vld [vmem:[%s1335 + $0xf0] sm:$0xff]
                  %1398 = vst [vmem:[%s1336 + $0xf0] sm:$0xff] %v1397
                  %v1399 = vld [vmem:[%s1335 + $0xf8] sm:$0xff]
                  %1400 = vst [vmem:[%s1336 + $0xf8] sm:$0xff] %v1399
                  %v1401 = vld [vmem:[%s1335 + $0x100] sm:$0xff]
                  %1402 = vst [vmem:[%s1336 + $0x100] sm:$0xff] %v1401
                  %v1403 = vld [vmem:[%s1335 + $0x108] sm:$0xff]
                  %1404 = vst [vmem:[%s1336 + $0x108] sm:$0xff] %v1403
                  %v1405 = vld [vmem:[%s1335 + $0x110] sm:$0xff]
                  %1406 = vst [vmem:[%s1336 + $0x110] sm:$0xff] %v1405
                  %v1407 = vld [vmem:[%s1335 + $0x118] sm:$0xff]
                  %1408 = vst [vmem:[%s1336 + $0x118] sm:$0xff] %v1407
                  %v1409 = vld [vmem:[%s1335 + $0x120] sm:$0xff]
                  %1410 = vst [vmem:[%s1336 + $0x120] sm:$0xff] %v1409
                  %v1411 = vld [vmem:[%s1335 + $0x128] sm:$0xff]
                  %1412 = vst [vmem:[%s1336 + $0x128] sm:$0xff] %v1411
                  %v1413 = vld [vmem:[%s1335 + $0x130] sm:$0xff]
                  %1414 = vst [vmem:[%s1336 + $0x130] sm:$0xff] %v1413
                  %v1415 = vld [vmem:[%s1335 + $0x138] sm:$0xff]
                  %1416 = vst [vmem:[%s1336 + $0x138] sm:$0xff] %v1415
                  %v1417 = vld [vmem:[%s1335 + $0x140] sm:$0xff]
                  %1418 = vst [vmem:[%s1336 + $0x140] sm:$0xff] %v1417
                  %v1419 = vld [vmem:[%s1335 + $0x148] sm:$0xff]
                  %1420 = vst [vmem:[%s1336 + $0x148] sm:$0xff] %v1419
                  %v1421 = vld [vmem:[%s1335 + $0x150] sm:$0xff]
                  %1422 = vst [vmem:[%s1336 + $0x150] sm:$0xff] %v1421
                  %v1423 = vld [vmem:[%s1335 + $0x158] sm:$0xff]
                  %1424 = vst [vmem:[%s1336 + $0x158] sm:$0xff] %v1423
                  %v1425 = vld [vmem:[%s1335 + $0x160] sm:$0xff]
                  %1426 = vst [vmem:[%s1336 + $0x160] sm:$0xff] %v1425
                  %v1427 = vld [vmem:[%s1335 + $0x168] sm:$0xff]
                  %1428 = vst [vmem:[%s1336 + $0x168] sm:$0xff] %v1427
                  %v1429 = vld [vmem:[%s1335 + $0x170] sm:$0xff]
                  %1430 = vst [vmem:[%s1336 + $0x170] sm:$0xff] %v1429
                  %v1431 = vld [vmem:[%s1335 + $0x178] sm:$0xff]
                  %1432 = vst [vmem:[%s1336 + $0x178] sm:$0xff] %v1431
                  %v1433 = vld [vmem:[%s1335 + $0x180] sm:$0xff]
                  %1434 = vst [vmem:[%s1336 + $0x180] sm:$0xff] %v1433
                  %v1435 = vld [vmem:[%s1335 + $0x188] sm:$0xff]
                  %1436 = vst [vmem:[%s1336 + $0x188] sm:$0xff] %v1435
                  %v1437 = vld [vmem:[%s1335 + $0x190] sm:$0xff]
                  %1438 = vst [vmem:[%s1336 + $0x190] sm:$0xff] %v1437
                  %v1439 = vld [vmem:[%s1335 + $0x198] sm:$0xff]
                  %1440 = vst [vmem:[%s1336 + $0x198] sm:$0xff] %v1439
                  %v1441 = vld [vmem:[%s1335 + $0x1a0] sm:$0xff]
                  %1442 = vst [vmem:[%s1336 + $0x1a0] sm:$0xff] %v1441
                  %v1443 = vld [vmem:[%s1335 + $0x1a8] sm:$0xff]
                  %1444 = vst [vmem:[%s1336 + $0x1a8] sm:$0xff] %v1443
                  %v1445 = vld [vmem:[%s1335 + $0x1b0] sm:$0xff]
                  %1446 = vst [vmem:[%s1336 + $0x1b0] sm:$0xff] %v1445
                  %v1447 = vld [vmem:[%s1335 + $0x1b8] sm:$0xff]
                  %1448 = vst [vmem:[%s1336 + $0x1b8] sm:$0xff] %v1447
                  %v1449 = vld [vmem:[%s1335 + $0x1c0] sm:$0xff]
                  %1450 = vst [vmem:[%s1336 + $0x1c0] sm:$0xff] %v1449
                  %v1451 = vld [vmem:[%s1335 + $0x1c8] sm:$0xff]
                  %1452 = vst [vmem:[%s1336 + $0x1c8] sm:$0xff] %v1451
                  %v1453 = vld [vmem:[%s1335 + $0x1d0] sm:$0xff]
                  %1454 = vst [vmem:[%s1336 + $0x1d0] sm:$0xff] %v1453
                  %v1455 = vld [vmem:[%s1335 + $0x1d8] sm:$0xff]
                  %1456 = vst [vmem:[%s1336 + $0x1d8] sm:$0xff] %v1455
                  %v1457 = vld [vmem:[%s1335 + $0x1e0] sm:$0xff]
                  %1458 = vst [vmem:[%s1336 + $0x1e0] sm:$0xff] %v1457
                  %v1459 = vld [vmem:[%s1335 + $0x1e8] sm:$0xff]
                  %1460 = vst [vmem:[%s1336 + $0x1e8] sm:$0xff] %v1459
                  %v1461 = vld [vmem:[%s1335 + $0x1f0] sm:$0xff]
                  %1462 = vst [vmem:[%s1336 + $0x1f0] sm:$0xff] %v1461
                  %v1463 = vld [vmem:[%s1335 + $0x1f8] sm:$0xff]
                  %1464 = vst [vmem:[%s1336 + $0x1f8] sm:$0xff] %v1463
                  %v1465 = vld [vmem:[%s1335 + $0x200] sm:$0xff]
                  %1466 = vst [vmem:[%s1336 + $0x200] sm:$0xff] %v1465
                  %v1467 = vld [vmem:[%s1335 + $0x208] sm:$0xff]
                  %1468 = vst [vmem:[%s1336 + $0x208] sm:$0xff] %v1467
                  %v1469 = vld [vmem:[%s1335 + $0x210] sm:$0xff]
                  %1470 = vst [vmem:[%s1336 + $0x210] sm:$0xff] %v1469
                  %v1471 = vld [vmem:[%s1335 + $0x218] sm:$0xff]
                  %1472 = vst [vmem:[%s1336 + $0x218] sm:$0xff] %v1471
                  %v1473 = vld [vmem:[%s1335 + $0x220] sm:$0xff]
                  %1474 = vst [vmem:[%s1336 + $0x220] sm:$0xff] %v1473
                  %v1475 = vld [vmem:[%s1335 + $0x228] sm:$0xff]
                  %1476 = vst [vmem:[%s1336 + $0x228] sm:$0xff] %v1475
                  %v1477 = vld [vmem:[%s1335 + $0x230] sm:$0xff]
                  %1478 = vst [vmem:[%s1336 + $0x230] sm:$0xff] %v1477
                  %v1479 = vld [vmem:[%s1335 + $0x238] sm:$0xff]
                  %1480 = vst [vmem:[%s1336 + $0x238] sm:$0xff] %v1479
                  %v1481 = vld [vmem:[%s1335 + $0x480] sm:$0xff]
                  %1482 = vst [vmem:[%s1336 + $0x240] sm:$0xff] %v1481
                  %v1483 = vld [vmem:[%s1335 + $0x488] sm:$0xff]
                  %1484 = vst [vmem:[%s1336 + $0x248] sm:$0xff] %v1483
                  %v1485 = vld [vmem:[%s1335 + $0x490] sm:$0xff]
                  %1486 = vst [vmem:[%s1336 + $0x250] sm:$0xff] %v1485
                  %v1487 = vld [vmem:[%s1335 + $0x498] sm:$0xff]
                  %1488 = vst [vmem:[%s1336 + $0x258] sm:$0xff] %v1487
                  %v1489 = vld [vmem:[%s1335 + $0x4a0] sm:$0xff]
                  %1490 = vst [vmem:[%s1336 + $0x260] sm:$0xff] %v1489
                  %v1491 = vld [vmem:[%s1335 + $0x4a8] sm:$0xff]
                  %1492 = vst [vmem:[%s1336 + $0x268] sm:$0xff] %v1491
                  %v1493 = vld [vmem:[%s1335 + $0x4b0] sm:$0xff]
                  %1494 = vst [vmem:[%s1336 + $0x270] sm:$0xff] %v1493
                  %v1495 = vld [vmem:[%s1335 + $0x4b8] sm:$0xff]
                  %1496 = vst [vmem:[%s1336 + $0x278] sm:$0xff] %v1495
                  %v1497 = vld [vmem:[%s1335 + $0x4c0] sm:$0xff]
                  %1498 = vst [vmem:[%s1336 + $0x280] sm:$0xff] %v1497
                  %v1499 = vld [vmem:[%s1335 + $0x4c8] sm:$0xff]
                  %1500 = vst [vmem:[%s1336 + $0x288] sm:$0xff] %v1499
                  %v1501 = vld [vmem:[%s1335 + $0x4d0] sm:$0xff]
                  %1502 = vst [vmem:[%s1336 + $0x290] sm:$0xff] %v1501
                  %v1503 = vld [vmem:[%s1335 + $0x4d8] sm:$0xff]
                  %1504 = vst [vmem:[%s1336 + $0x298] sm:$0xff] %v1503
                  %v1505 = vld [vmem:[%s1335 + $0x4e0] sm:$0xff]
                  %1506 = vst [vmem:[%s1336 + $0x2a0] sm:$0xff] %v1505
                  %v1507 = vld [vmem:[%s1335 + $0x4e8] sm:$0xff]
                  %1508 = vst [vmem:[%s1336 + $0x2a8] sm:$0xff] %v1507
                  %v1509 = vld [vmem:[%s1335 + $0x4f0] sm:$0xff]
                  %1510 = vst [vmem:[%s1336 + $0x2b0] sm:$0xff] %v1509
                  %v1511 = vld [vmem:[%s1335 + $0x4f8] sm:$0xff]
                  %1512 = vst [vmem:[%s1336 + $0x2b8] sm:$0xff] %v1511
                  %v1513 = vld [vmem:[%s1335 + $0x500] sm:$0xff]
                  %1514 = vst [vmem:[%s1336 + $0x2c0] sm:$0xff] %v1513
                  %v1515 = vld [vmem:[%s1335 + $0x508] sm:$0xff]
                  %1516 = vst [vmem:[%s1336 + $0x2c8] sm:$0xff] %v1515
                  %v1517 = vld [vmem:[%s1335 + $0x510] sm:$0xff]
                  %1518 = vst [vmem:[%s1336 + $0x2d0] sm:$0xff] %v1517
                  %v1519 = vld [vmem:[%s1335 + $0x518] sm:$0xff]
                  %1520 = vst [vmem:[%s1336 + $0x2d8] sm:$0xff] %v1519
                  %v1521 = vld [vmem:[%s1335 + $0x520] sm:$0xff]
                  %1522 = vst [vmem:[%s1336 + $0x2e0] sm:$0xff] %v1521
                  %v1523 = vld [vmem:[%s1335 + $0x528] sm:$0xff]
                  %1524 = vst [vmem:[%s1336 + $0x2e8] sm:$0xff] %v1523
                  %v1525 = vld [vmem:[%s1335 + $0x530] sm:$0xff]
                  %1526 = vst [vmem:[%s1336 + $0x2f0] sm:$0xff] %v1525
                  %v1527 = vld [vmem:[%s1335 + $0x538] sm:$0xff]
                  %1528 = vst [vmem:[%s1336 + $0x2f8] sm:$0xff] %v1527
                  %v1529 = vld [vmem:[%s1335 + $0x540] sm:$0xff]
                  %1530 = vst [vmem:[%s1336 + $0x300] sm:$0xff] %v1529
                  %v1531 = vld [vmem:[%s1335 + $0x548] sm:$0xff]
                  %1532 = vst [vmem:[%s1336 + $0x308] sm:$0xff] %v1531
                  %v1533 = vld [vmem:[%s1335 + $0x550] sm:$0xff]
                  %1534 = vst [vmem:[%s1336 + $0x310] sm:$0xff] %v1533
                  %v1535 = vld [vmem:[%s1335 + $0x558] sm:$0xff]
                  %1536 = vst [vmem:[%s1336 + $0x318] sm:$0xff] %v1535
                  %v1537 = vld [vmem:[%s1335 + $0x560] sm:$0xff]
                  %1538 = vst [vmem:[%s1336 + $0x320] sm:$0xff] %v1537
                  %v1539 = vld [vmem:[%s1335 + $0x568] sm:$0xff]
                  %1540 = vst [vmem:[%s1336 + $0x328] sm:$0xff] %v1539
                  %v1541 = vld [vmem:[%s1335 + $0x570] sm:$0xff]
                  %1542 = vst [vmem:[%s1336 + $0x330] sm:$0xff] %v1541
                  %v1543 = vld [vmem:[%s1335 + $0x578] sm:$0xff]
                  %1544 = vst [vmem:[%s1336 + $0x338] sm:$0xff] %v1543
                  %v1545 = vld [vmem:[%s1335 + $0x580] sm:$0xff]
                  %1546 = vst [vmem:[%s1336 + $0x340] sm:$0xff] %v1545
                  %v1547 = vld [vmem:[%s1335 + $0x588] sm:$0xff]
                  %1548 = vst [vmem:[%s1336 + $0x348] sm:$0xff] %v1547
                  %v1549 = vld [vmem:[%s1335 + $0x590] sm:$0xff]
                  %1550 = vst [vmem:[%s1336 + $0x350] sm:$0xff] %v1549
                  %v1551 = vld [vmem:[%s1335 + $0x598] sm:$0xff]
                  %1552 = vst [vmem:[%s1336 + $0x358] sm:$0xff] %v1551
                  %v1553 = vld [vmem:[%s1335 + $0x5a0] sm:$0xff]
                  %1554 = vst [vmem:[%s1336 + $0x360] sm:$0xff] %v1553
                  %v1555 = vld [vmem:[%s1335 + $0x5a8] sm:$0xff]
                  %1556 = vst [vmem:[%s1336 + $0x368] sm:$0xff] %v1555
                  %v1557 = vld [vmem:[%s1335 + $0x5b0] sm:$0xff]
                  %1558 = vst [vmem:[%s1336 + $0x370] sm:$0xff] %v1557
                  %v1559 = vld [vmem:[%s1335 + $0x5b8] sm:$0xff]
                  %1560 = vst [vmem:[%s1336 + $0x378] sm:$0xff] %v1559
                  %v1561 = vld [vmem:[%s1335 + $0x5c0] sm:$0xff]
                  %1562 = vst [vmem:[%s1336 + $0x380] sm:$0xff] %v1561
                  %v1563 = vld [vmem:[%s1335 + $0x5c8] sm:$0xff]
                  %1564 = vst [vmem:[%s1336 + $0x388] sm:$0xff] %v1563
                  %v1565 = vld [vmem:[%s1335 + $0x5d0] sm:$0xff]
                  %1566 = vst [vmem:[%s1336 + $0x390] sm:$0xff] %v1565
                  %v1567 = vld [vmem:[%s1335 + $0x5d8] sm:$0xff]
                  %1568 = vst [vmem:[%s1336 + $0x398] sm:$0xff] %v1567
                  %v1569 = vld [vmem:[%s1335 + $0x5e0] sm:$0xff]
                  %1570 = vst [vmem:[%s1336 + $0x3a0] sm:$0xff] %v1569
                  %v1571 = vld [vmem:[%s1335 + $0x5e8] sm:$0xff]
                  %1572 = vst [vmem:[%s1336 + $0x3a8] sm:$0xff] %v1571
                  %v1573 = vld [vmem:[%s1335 + $0x5f0] sm:$0xff]
                  %1574 = vst [vmem:[%s1336 + $0x3b0] sm:$0xff] %v1573
                  %v1575 = vld [vmem:[%s1335 + $0x5f8] sm:$0xff]
                  %1576 = vst [vmem:[%s1336 + $0x3b8] sm:$0xff] %v1575
                  %v1577 = vld [vmem:[%s1335 + $0x600] sm:$0xff]
                  %1578 = vst [vmem:[%s1336 + $0x3c0] sm:$0xff] %v1577
                  %v1579 = vld [vmem:[%s1335 + $0x608] sm:$0xff]
                  %1580 = vst [vmem:[%s1336 + $0x3c8] sm:$0xff] %v1579
                  %v1581 = vld [vmem:[%s1335 + $0x610] sm:$0xff]
                  %1582 = vst [vmem:[%s1336 + $0x3d0] sm:$0xff] %v1581
                  %v1583 = vld [vmem:[%s1335 + $0x618] sm:$0xff]
                  %1584 = vst [vmem:[%s1336 + $0x3d8] sm:$0xff] %v1583
                  %v1585 = vld [vmem:[%s1335 + $0x620] sm:$0xff]
                  %1586 = vst [vmem:[%s1336 + $0x3e0] sm:$0xff] %v1585
                  %v1587 = vld [vmem:[%s1335 + $0x628] sm:$0xff]
                  %1588 = vst [vmem:[%s1336 + $0x3e8] sm:$0xff] %v1587
                  %v1589 = vld [vmem:[%s1335 + $0x630] sm:$0xff]
                  %1590 = vst [vmem:[%s1336 + $0x3f0] sm:$0xff] %v1589
                  %v1591 = vld [vmem:[%s1335 + $0x638] sm:$0xff]
                  %1592 = vst [vmem:[%s1336 + $0x3f8] sm:$0xff] %v1591
                  %v1593 = vld [vmem:[%s1335 + $0x640] sm:$0xff]
                  %1594 = vst [vmem:[%s1336 + $0x400] sm:$0xff] %v1593
                  %v1595 = vld [vmem:[%s1335 + $0x648] sm:$0xff]
                  %1596 = vst [vmem:[%s1336 + $0x408] sm:$0xff] %v1595
                  %v1597 = vld [vmem:[%s1335 + $0x650] sm:$0xff]
                  %1598 = vst [vmem:[%s1336 + $0x410] sm:$0xff] %v1597
                  %v1599 = vld [vmem:[%s1335 + $0x658] sm:$0xff]
                  %1600 = vst [vmem:[%s1336 + $0x418] sm:$0xff] %v1599
                  %v1601 = vld [vmem:[%s1335 + $0x660] sm:$0xff]
                  %1602 = vst [vmem:[%s1336 + $0x420] sm:$0xff] %v1601
                  %v1603 = vld [vmem:[%s1335 + $0x668] sm:$0xff]
                  %1604 = vst [vmem:[%s1336 + $0x428] sm:$0xff] %v1603
                  %v1605 = vld [vmem:[%s1335 + $0x670] sm:$0xff]
                  %1606 = vst [vmem:[%s1336 + $0x430] sm:$0xff] %v1605
                  %v1607 = vld [vmem:[%s1335 + $0x678] sm:$0xff]
                  %1608 = vst [vmem:[%s1336 + $0x438] sm:$0xff] %v1607
                  %v1609 = vld [vmem:[%s1335 + $0x680] sm:$0xff]
                  %1610 = vst [vmem:[%s1336 + $0x440] sm:$0xff] %v1609
                  %v1611 = vld [vmem:[%s1335 + $0x688] sm:$0xff]
                  %1612 = vst [vmem:[%s1336 + $0x448] sm:$0xff] %v1611
                  %v1613 = vld [vmem:[%s1335 + $0x690] sm:$0xff]
                  %1614 = vst [vmem:[%s1336 + $0x450] sm:$0xff] %v1613
                  %v1615 = vld [vmem:[%s1335 + $0x698] sm:$0xff]
                  %1616 = vst [vmem:[%s1336 + $0x458] sm:$0xff] %v1615
                  %v1617 = vld [vmem:[%s1335 + $0x6a0] sm:$0xff]
                  %1618 = vst [vmem:[%s1336 + $0x460] sm:$0xff] %v1617
                  %v1619 = vld [vmem:[%s1335 + $0x6a8] sm:$0xff]
                  %1620 = vst [vmem:[%s1336 + $0x468] sm:$0xff] %v1619
                  %v1621 = vld [vmem:[%s1335 + $0x6b0] sm:$0xff]
                  %1622 = vst [vmem:[%s1336 + $0x470] sm:$0xff] %v1621
                  %v1623 = vld [vmem:[%s1335 + $0x6b8] sm:$0xff]
                  %1624 = vst [vmem:[%s1336 + $0x478] sm:$0xff] %v1623
                  %v1625 = vld [vmem:[%s1335 + $0x900] sm:$0xff]
                  %1626 = vst [vmem:[%s1336 + $0x480] sm:$0xff] %v1625
                  %v1627 = vld [vmem:[%s1335 + $0x908] sm:$0xff]
                  %1628 = vst [vmem:[%s1336 + $0x488] sm:$0xff] %v1627
                  %v1629 = vld [vmem:[%s1335 + $0x910] sm:$0xff]
                  %1630 = vst [vmem:[%s1336 + $0x490] sm:$0xff] %v1629
                  %v1631 = vld [vmem:[%s1335 + $0x918] sm:$0xff]
                  %1632 = vst [vmem:[%s1336 + $0x498] sm:$0xff] %v1631
                  %v1633 = vld [vmem:[%s1335 + $0x920] sm:$0xff]
                  %1634 = vst [vmem:[%s1336 + $0x4a0] sm:$0xff] %v1633
                  %v1635 = vld [vmem:[%s1335 + $0x928] sm:$0xff]
                  %1636 = vst [vmem:[%s1336 + $0x4a8] sm:$0xff] %v1635
                  %v1637 = vld [vmem:[%s1335 + $0x930] sm:$0xff]
                  %1638 = vst [vmem:[%s1336 + $0x4b0] sm:$0xff] %v1637
                  %v1639 = vld [vmem:[%s1335 + $0x938] sm:$0xff]
                  %1640 = vst [vmem:[%s1336 + $0x4b8] sm:$0xff] %v1639
                  %v1641 = vld [vmem:[%s1335 + $0x940] sm:$0xff]
                  %1642 = vst [vmem:[%s1336 + $0x4c0] sm:$0xff] %v1641
                  %v1643 = vld [vmem:[%s1335 + $0x948] sm:$0xff]
                  %1644 = vst [vmem:[%s1336 + $0x4c8] sm:$0xff] %v1643
                  %v1645 = vld [vmem:[%s1335 + $0x950] sm:$0xff]
                  %1646 = vst [vmem:[%s1336 + $0x4d0] sm:$0xff] %v1645
                  %v1647 = vld [vmem:[%s1335 + $0x958] sm:$0xff]
                  %1648 = vst [vmem:[%s1336 + $0x4d8] sm:$0xff] %v1647
                  %v1649 = vld [vmem:[%s1335 + $0x960] sm:$0xff]
                  %1650 = vst [vmem:[%s1336 + $0x4e0] sm:$0xff] %v1649
                  %v1651 = vld [vmem:[%s1335 + $0x968] sm:$0xff]
                  %1652 = vst [vmem:[%s1336 + $0x4e8] sm:$0xff] %v1651
                  %v1653 = vld [vmem:[%s1335 + $0x970] sm:$0xff]
                  %1654 = vst [vmem:[%s1336 + $0x4f0] sm:$0xff] %v1653
                  %v1655 = vld [vmem:[%s1335 + $0x978] sm:$0xff]
                  %1656 = vst [vmem:[%s1336 + $0x4f8] sm:$0xff] %v1655
                  %v1657 = vld [vmem:[%s1335 + $0x980] sm:$0xff]
                  %1658 = vst [vmem:[%s1336 + $0x500] sm:$0xff] %v1657
                  %v1659 = vld [vmem:[%s1335 + $0x988] sm:$0xff]
                  %1660 = vst [vmem:[%s1336 + $0x508] sm:$0xff] %v1659
                  %v1661 = vld [vmem:[%s1335 + $0x990] sm:$0xff]
                  %1662 = vst [vmem:[%s1336 + $0x510] sm:$0xff] %v1661
                  %v1663 = vld [vmem:[%s1335 + $0x998] sm:$0xff]
                  %1664 = vst [vmem:[%s1336 + $0x518] sm:$0xff] %v1663
                  %v1665 = vld [vmem:[%s1335 + $0x9a0] sm:$0xff]
                  %1666 = vst [vmem:[%s1336 + $0x520] sm:$0xff] %v1665
                  %v1667 = vld [vmem:[%s1335 + $0x9a8] sm:$0xff]
                  %1668 = vst [vmem:[%s1336 + $0x528] sm:$0xff] %v1667
                  %v1669 = vld [vmem:[%s1335 + $0x9b0] sm:$0xff]
                  %1670 = vst [vmem:[%s1336 + $0x530] sm:$0xff] %v1669
                  %v1671 = vld [vmem:[%s1335 + $0x9b8] sm:$0xff]
                  %1672 = vst [vmem:[%s1336 + $0x538] sm:$0xff] %v1671
                  %v1673 = vld [vmem:[%s1335 + $0x9c0] sm:$0xff]
                  %1674 = vst [vmem:[%s1336 + $0x540] sm:$0xff] %v1673
                  %v1675 = vld [vmem:[%s1335 + $0x9c8] sm:$0xff]
                  %1676 = vst [vmem:[%s1336 + $0x548] sm:$0xff] %v1675
                  %v1677 = vld [vmem:[%s1335 + $0x9d0] sm:$0xff]
                  %1678 = vst [vmem:[%s1336 + $0x550] sm:$0xff] %v1677
                  %v1679 = vld [vmem:[%s1335 + $0x9d8] sm:$0xff]
                  %1680 = vst [vmem:[%s1336 + $0x558] sm:$0xff] %v1679
                  %v1681 = vld [vmem:[%s1335 + $0x9e0] sm:$0xff]
                  %1682 = vst [vmem:[%s1336 + $0x560] sm:$0xff] %v1681
                  %v1683 = vld [vmem:[%s1335 + $0x9e8] sm:$0xff]
                  %1684 = vst [vmem:[%s1336 + $0x568] sm:$0xff] %v1683
                  %v1685 = vld [vmem:[%s1335 + $0x9f0] sm:$0xff]
                  %1686 = vst [vmem:[%s1336 + $0x570] sm:$0xff] %v1685
                  %v1687 = vld [vmem:[%s1335 + $0x9f8] sm:$0xff]
                  %1688 = vst [vmem:[%s1336 + $0x578] sm:$0xff] %v1687
                  %v1689 = vld [vmem:[%s1335 + $0xa00] sm:$0xff]
                  %1690 = vst [vmem:[%s1336 + $0x580] sm:$0xff] %v1689
                  %v1691 = vld [vmem:[%s1335 + $0xa08] sm:$0xff]
                  %1692 = vst [vmem:[%s1336 + $0x588] sm:$0xff] %v1691
                  %v1693 = vld [vmem:[%s1335 + $0xa10] sm:$0xff]
                  %1694 = vst [vmem:[%s1336 + $0x590] sm:$0xff] %v1693
                  %v1695 = vld [vmem:[%s1335 + $0xa18] sm:$0xff]
                  %1696 = vst [vmem:[%s1336 + $0x598] sm:$0xff] %v1695
                  %v1697 = vld [vmem:[%s1335 + $0xa20] sm:$0xff]
                  %1698 = vst [vmem:[%s1336 + $0x5a0] sm:$0xff] %v1697
                  %v1699 = vld [vmem:[%s1335 + $0xa28] sm:$0xff]
                  %1700 = vst [vmem:[%s1336 + $0x5a8] sm:$0xff] %v1699
                  %v1701 = vld [vmem:[%s1335 + $0xa30] sm:$0xff]
                  %1702 = vst [vmem:[%s1336 + $0x5b0] sm:$0xff] %v1701
                  %v1703 = vld [vmem:[%s1335 + $0xa38] sm:$0xff]
                  %1704 = vst [vmem:[%s1336 + $0x5b8] sm:$0xff] %v1703
                  %v1705 = vld [vmem:[%s1335 + $0xa40] sm:$0xff]
                  %1706 = vst [vmem:[%s1336 + $0x5c0] sm:$0xff] %v1705
                  %v1707 = vld [vmem:[%s1335 + $0xa48] sm:$0xff]
                  %1708 = vst [vmem:[%s1336 + $0x5c8] sm:$0xff] %v1707
                  %v1709 = vld [vmem:[%s1335 + $0xa50] sm:$0xff]
                  %1710 = vst [vmem:[%s1336 + $0x5d0] sm:$0xff] %v1709
                  %v1711 = vld [vmem:[%s1335 + $0xa58] sm:$0xff]
                  %1712 = vst [vmem:[%s1336 + $0x5d8] sm:$0xff] %v1711
                  %v1713 = vld [vmem:[%s1335 + $0xa60] sm:$0xff]
                  %1714 = vst [vmem:[%s1336 + $0x5e0] sm:$0xff] %v1713
                  %v1715 = vld [vmem:[%s1335 + $0xa68] sm:$0xff]
                  %1716 = vst [vmem:[%s1336 + $0x5e8] sm:$0xff] %v1715
                  %v1717 = vld [vmem:[%s1335 + $0xa70] sm:$0xff]
                  %1718 = vst [vmem:[%s1336 + $0x5f0] sm:$0xff] %v1717
                  %v1719 = vld [vmem:[%s1335 + $0xa78] sm:$0xff]
                  %1720 = vst [vmem:[%s1336 + $0x5f8] sm:$0xff] %v1719
                  %v1721 = vld [vmem:[%s1335 + $0xa80] sm:$0xff]
                  %1722 = vst [vmem:[%s1336 + $0x600] sm:$0xff] %v1721
                  %v1723 = vld [vmem:[%s1335 + $0xa88] sm:$0xff]
                  %1724 = vst [vmem:[%s1336 + $0x608] sm:$0xff] %v1723
                  %v1725 = vld [vmem:[%s1335 + $0xa90] sm:$0xff]
                  %1726 = vst [vmem:[%s1336 + $0x610] sm:$0xff] %v1725
                  %v1727 = vld [vmem:[%s1335 + $0xa98] sm:$0xff]
                  %1728 = vst [vmem:[%s1336 + $0x618] sm:$0xff] %v1727
                  %v1729 = vld [vmem:[%s1335 + $0xaa0] sm:$0xff]
                  %1730 = vst [vmem:[%s1336 + $0x620] sm:$0xff] %v1729
                  %v1731 = vld [vmem:[%s1335 + $0xaa8] sm:$0xff]
                  %1732 = vst [vmem:[%s1336 + $0x628] sm:$0xff] %v1731
                  %v1733 = vld [vmem:[%s1335 + $0xab0] sm:$0xff]
                  %1734 = vst [vmem:[%s1336 + $0x630] sm:$0xff] %v1733
                  %v1735 = vld [vmem:[%s1335 + $0xab8] sm:$0xff]
                  %1736 = vst [vmem:[%s1336 + $0x638] sm:$0xff] %v1735
                  %v1737 = vld [vmem:[%s1335 + $0xac0] sm:$0xff]
                  %1738 = vst [vmem:[%s1336 + $0x640] sm:$0xff] %v1737
                  %v1739 = vld [vmem:[%s1335 + $0xac8] sm:$0xff]
                  %1740 = vst [vmem:[%s1336 + $0x648] sm:$0xff] %v1739
                  %v1741 = vld [vmem:[%s1335 + $0xad0] sm:$0xff]
                  %1742 = vst [vmem:[%s1336 + $0x650] sm:$0xff] %v1741
                  %v1743 = vld [vmem:[%s1335 + $0xad8] sm:$0xff]
                  %1744 = vst [vmem:[%s1336 + $0x658] sm:$0xff] %v1743
                  %v1745 = vld [vmem:[%s1335 + $0xae0] sm:$0xff]
                  %1746 = vst [vmem:[%s1336 + $0x660] sm:$0xff] %v1745
                  %v1747 = vld [vmem:[%s1335 + $0xae8] sm:$0xff]
                  %1748 = vst [vmem:[%s1336 + $0x668] sm:$0xff] %v1747
                  %v1749 = vld [vmem:[%s1335 + $0xaf0] sm:$0xff]
                  %1750 = vst [vmem:[%s1336 + $0x670] sm:$0xff] %v1749
                  %v1751 = vld [vmem:[%s1335 + $0xaf8] sm:$0xff]
                  %1752 = vst [vmem:[%s1336 + $0x678] sm:$0xff] %v1751
                  %v1753 = vld [vmem:[%s1335 + $0xb00] sm:$0xff]
                  %1754 = vst [vmem:[%s1336 + $0x680] sm:$0xff] %v1753
                  %v1755 = vld [vmem:[%s1335 + $0xb08] sm:$0xff]
                  %1756 = vst [vmem:[%s1336 + $0x688] sm:$0xff] %v1755
                  %v1757 = vld [vmem:[%s1335 + $0xb10] sm:$0xff]
                  %1758 = vst [vmem:[%s1336 + $0x690] sm:$0xff] %v1757
                  %v1759 = vld [vmem:[%s1335 + $0xb18] sm:$0xff]
                  %1760 = vst [vmem:[%s1336 + $0x698] sm:$0xff] %v1759
                  %v1761 = vld [vmem:[%s1335 + $0xb20] sm:$0xff]
                  %1762 = vst [vmem:[%s1336 + $0x6a0] sm:$0xff] %v1761
                  %v1763 = vld [vmem:[%s1335 + $0xb28] sm:$0xff]
                  %1764 = vst [vmem:[%s1336 + $0x6a8] sm:$0xff] %v1763
                  %v1765 = vld [vmem:[%s1335 + $0xb30] sm:$0xff]
                  %1766 = vst [vmem:[%s1336 + $0x6b0] sm:$0xff] %v1765
                  %v1767 = vld [vmem:[%s1335 + $0xb38] sm:$0xff]
                  %1768 = vst [vmem:[%s1336 + $0x6b8] sm:$0xff] %v1767
                  %v1769 = vld [vmem:[%s1335 + $0xd80] sm:$0xff]
                  %1770 = vst [vmem:[%s1336 + $0x6c0] sm:$0xff] %v1769
                  %v1771 = vld [vmem:[%s1335 + $0xd88] sm:$0xff]
                  %1772 = vst [vmem:[%s1336 + $0x6c8] sm:$0xff] %v1771
                  %v1773 = vld [vmem:[%s1335 + $0xd90] sm:$0xff]
                  %1774 = vst [vmem:[%s1336 + $0x6d0] sm:$0xff] %v1773
                  %v1775 = vld [vmem:[%s1335 + $0xd98] sm:$0xff]
                  %1776 = vst [vmem:[%s1336 + $0x6d8] sm:$0xff] %v1775
                  %v1777 = vld [vmem:[%s1335 + $0xda0] sm:$0xff]
                  %1778 = vst [vmem:[%s1336 + $0x6e0] sm:$0xff] %v1777
                  %v1779 = vld [vmem:[%s1335 + $0xda8] sm:$0xff]
                  %1780 = vst [vmem:[%s1336 + $0x6e8] sm:$0xff] %v1779
                  %v1781 = vld [vmem:[%s1335 + $0xdb0] sm:$0xff]
                  %1782 = vst [vmem:[%s1336 + $0x6f0] sm:$0xff] %v1781
                  %v1783 = vld [vmem:[%s1335 + $0xdb8] sm:$0xff]
                  %1784 = vst [vmem:[%s1336 + $0x6f8] sm:$0xff] %v1783
                  %v1785 = vld [vmem:[%s1335 + $0xdc0] sm:$0xff]
                  %1786 = vst [vmem:[%s1336 + $0x700] sm:$0xff] %v1785
                  %v1787 = vld [vmem:[%s1335 + $0xdc8] sm:$0xff]
                  %1788 = vst [vmem:[%s1336 + $0x708] sm:$0xff] %v1787
                  %v1789 = vld [vmem:[%s1335 + $0xdd0] sm:$0xff]
                  %1790 = vst [vmem:[%s1336 + $0x710] sm:$0xff] %v1789
                  %v1791 = vld [vmem:[%s1335 + $0xdd8] sm:$0xff]
                  %1792 = vst [vmem:[%s1336 + $0x718] sm:$0xff] %v1791
                  %v1793 = vld [vmem:[%s1335 + $0xde0] sm:$0xff]
                  %1794 = vst [vmem:[%s1336 + $0x720] sm:$0xff] %v1793
                  %v1795 = vld [vmem:[%s1335 + $0xde8] sm:$0xff]
                  %1796 = vst [vmem:[%s1336 + $0x728] sm:$0xff] %v1795
                  %v1797 = vld [vmem:[%s1335 + $0xdf0] sm:$0xff]
                  %1798 = vst [vmem:[%s1336 + $0x730] sm:$0xff] %v1797
                  %v1799 = vld [vmem:[%s1335 + $0xdf8] sm:$0xff]
                  %1800 = vst [vmem:[%s1336 + $0x738] sm:$0xff] %v1799
                  %v1801 = vld [vmem:[%s1335 + $0xe00] sm:$0xff]
                  %1802 = vst [vmem:[%s1336 + $0x740] sm:$0xff] %v1801
                  %v1803 = vld [vmem:[%s1335 + $0xe08] sm:$0xff]
                  %1804 = vst [vmem:[%s1336 + $0x748] sm:$0xff] %v1803
                  %v1805 = vld [vmem:[%s1335 + $0xe10] sm:$0xff]
                  %1806 = vst [vmem:[%s1336 + $0x750] sm:$0xff] %v1805
                  %v1807 = vld [vmem:[%s1335 + $0xe18] sm:$0xff]
                  %1808 = vst [vmem:[%s1336 + $0x758] sm:$0xff] %v1807
                  %v1809 = vld [vmem:[%s1335 + $0xe20] sm:$0xff]
                  %1810 = vst [vmem:[%s1336 + $0x760] sm:$0xff] %v1809
                  %v1811 = vld [vmem:[%s1335 + $0xe28] sm:$0xff]
                  %1812 = vst [vmem:[%s1336 + $0x768] sm:$0xff] %v1811
                  %v1813 = vld [vmem:[%s1335 + $0xe30] sm:$0xff]
                  %1814 = vst [vmem:[%s1336 + $0x770] sm:$0xff] %v1813
                  %v1815 = vld [vmem:[%s1335 + $0xe38] sm:$0xff]
                  %1816 = vst [vmem:[%s1336 + $0x778] sm:$0xff] %v1815
                  %v1817 = vld [vmem:[%s1335 + $0xe40] sm:$0xff]
                  %1818 = vst [vmem:[%s1336 + $0x780] sm:$0xff] %v1817
                  %v1819 = vld [vmem:[%s1335 + $0xe48] sm:$0xff]
                  %1820 = vst [vmem:[%s1336 + $0x788] sm:$0xff] %v1819
                  %v1821 = vld [vmem:[%s1335 + $0xe50] sm:$0xff]
                  %1822 = vst [vmem:[%s1336 + $0x790] sm:$0xff] %v1821
                  %v1823 = vld [vmem:[%s1335 + $0xe58] sm:$0xff]
                  %1824 = vst [vmem:[%s1336 + $0x798] sm:$0xff] %v1823
                  %v1825 = vld [vmem:[%s1335 + $0xe60] sm:$0xff]
                  %1826 = vst [vmem:[%s1336 + $0x7a0] sm:$0xff] %v1825
                  %v1827 = vld [vmem:[%s1335 + $0xe68] sm:$0xff]
                  %1828 = vst [vmem:[%s1336 + $0x7a8] sm:$0xff] %v1827
                  %v1829 = vld [vmem:[%s1335 + $0xe70] sm:$0xff]
                  %1830 = vst [vmem:[%s1336 + $0x7b0] sm:$0xff] %v1829
                  %v1831 = vld [vmem:[%s1335 + $0xe78] sm:$0xff]
                  %1832 = vst [vmem:[%s1336 + $0x7b8] sm:$0xff] %v1831
                  %v1833 = vld [vmem:[%s1335 + $0xe80] sm:$0xff]
                  %1834 = vst [vmem:[%s1336 + $0x7c0] sm:$0xff] %v1833
                  %v1835 = vld [vmem:[%s1335 + $0xe88] sm:$0xff]
                  %1836 = vst [vmem:[%s1336 + $0x7c8] sm:$0xff] %v1835
                  %v1837 = vld [vmem:[%s1335 + $0xe90] sm:$0xff]
                  %1838 = vst [vmem:[%s1336 + $0x7d0] sm:$0xff] %v1837
                  %v1839 = vld [vmem:[%s1335 + $0xe98] sm:$0xff]
                  %1840 = vst [vmem:[%s1336 + $0x7d8] sm:$0xff] %v1839
                  %v1841 = vld [vmem:[%s1335 + $0xea0] sm:$0xff]
                  %1842 = vst [vmem:[%s1336 + $0x7e0] sm:$0xff] %v1841
                  %v1843 = vld [vmem:[%s1335 + $0xea8] sm:$0xff]
                  %1844 = vst [vmem:[%s1336 + $0x7e8] sm:$0xff] %v1843
                  %v1845 = vld [vmem:[%s1335 + $0xeb0] sm:$0xff]
                  %1846 = vst [vmem:[%s1336 + $0x7f0] sm:$0xff] %v1845
                  %v1847 = vld [vmem:[%s1335 + $0xeb8] sm:$0xff]
                  %1848 = vst [vmem:[%s1336 + $0x7f8] sm:$0xff] %v1847
                  %v1849 = vld [vmem:[%s1335 + $0xec0] sm:$0xff]
                  %1850 = vst [vmem:[%s1336 + $0x800] sm:$0xff] %v1849
                  %v1851 = vld [vmem:[%s1335 + $0xec8] sm:$0xff]
                  %1852 = vst [vmem:[%s1336 + $0x808] sm:$0xff] %v1851
                  %v1853 = vld [vmem:[%s1335 + $0xed0] sm:$0xff]
                  %1854 = vst [vmem:[%s1336 + $0x810] sm:$0xff] %v1853
                  %v1855 = vld [vmem:[%s1335 + $0xed8] sm:$0xff]
                  %1856 = vst [vmem:[%s1336 + $0x818] sm:$0xff] %v1855
                  %v1857 = vld [vmem:[%s1335 + $0xee0] sm:$0xff]
                  %1858 = vst [vmem:[%s1336 + $0x820] sm:$0xff] %v1857
                  %v1859 = vld [vmem:[%s1335 + $0xee8] sm:$0xff]
                  %1860 = vst [vmem:[%s1336 + $0x828] sm:$0xff] %v1859
                  %v1861 = vld [vmem:[%s1335 + $0xef0] sm:$0xff]
                  %1862 = vst [vmem:[%s1336 + $0x830] sm:$0xff] %v1861
                  %v1863 = vld [vmem:[%s1335 + $0xef8] sm:$0xff]
                  %1864 = vst [vmem:[%s1336 + $0x838] sm:$0xff] %v1863
                  %v1865 = vld [vmem:[%s1335 + $0xf00] sm:$0xff]
                  %1866 = vst [vmem:[%s1336 + $0x840] sm:$0xff] %v1865
                  %v1867 = vld [vmem:[%s1335 + $0xf08] sm:$0xff]
                  %1868 = vst [vmem:[%s1336 + $0x848] sm:$0xff] %v1867
                  %v1869 = vld [vmem:[%s1335 + $0xf10] sm:$0xff]
                  %1870 = vst [vmem:[%s1336 + $0x850] sm:$0xff] %v1869
                  %v1871 = vld [vmem:[%s1335 + $0xf18] sm:$0xff]
                  %1872 = vst [vmem:[%s1336 + $0x858] sm:$0xff] %v1871
                  %v1873 = vld [vmem:[%s1335 + $0xf20] sm:$0xff]
                  %1874 = vst [vmem:[%s1336 + $0x860] sm:$0xff] %v1873
                  %v1875 = vld [vmem:[%s1335 + $0xf28] sm:$0xff]
                  %1876 = vst [vmem:[%s1336 + $0x868] sm:$0xff] %v1875
                  %v1877 = vld [vmem:[%s1335 + $0xf30] sm:$0xff]
                  %1878 = vst [vmem:[%s1336 + $0x870] sm:$0xff] %v1877
                  %v1879 = vld [vmem:[%s1335 + $0xf38] sm:$0xff]
                  %1880 = vst [vmem:[%s1336 + $0x878] sm:$0xff] %v1879
                  %v1881 = vld [vmem:[%s1335 + $0xf40] sm:$0xff]
                  %1882 = vst [vmem:[%s1336 + $0x880] sm:$0xff] %v1881
                  %v1883 = vld [vmem:[%s1335 + $0xf48] sm:$0xff]
                  %1884 = vst [vmem:[%s1336 + $0x888] sm:$0xff] %v1883
                  %v1885 = vld [vmem:[%s1335 + $0xf50] sm:$0xff]
                  %1886 = vst [vmem:[%s1336 + $0x890] sm:$0xff] %v1885
                  %v1887 = vld [vmem:[%s1335 + $0xf58] sm:$0xff]
                  %1888 = vst [vmem:[%s1336 + $0x898] sm:$0xff] %v1887
                  %v1889 = vld [vmem:[%s1335 + $0xf60] sm:$0xff]
                  %1890 = vst [vmem:[%s1336 + $0x8a0] sm:$0xff] %v1889
                  %v1891 = vld [vmem:[%s1335 + $0xf68] sm:$0xff]
                  %1892 = vst [vmem:[%s1336 + $0x8a8] sm:$0xff] %v1891
                  %v1893 = vld [vmem:[%s1335 + $0xf70] sm:$0xff]
                  %1894 = vst [vmem:[%s1336 + $0x8b0] sm:$0xff] %v1893
                  %v1895 = vld [vmem:[%s1335 + $0xf78] sm:$0xff]
                  %1896 = vst [vmem:[%s1336 + $0x8b8] sm:$0xff] %v1895
                  %v1897 = vld [vmem:[%s1335 + $0xf80] sm:$0xff]
                  %1898 = vst [vmem:[%s1336 + $0x8c0] sm:$0xff] %v1897
                  %v1899 = vld [vmem:[%s1335 + $0xf88] sm:$0xff]
                  %1900 = vst [vmem:[%s1336 + $0x8c8] sm:$0xff] %v1899
                  %v1901 = vld [vmem:[%s1335 + $0xf90] sm:$0xff]
                  %1902 = vst [vmem:[%s1336 + $0x8d0] sm:$0xff] %v1901
                  %v1903 = vld [vmem:[%s1335 + $0xf98] sm:$0xff]
                  %1904 = vst [vmem:[%s1336 + $0x8d8] sm:$0xff] %v1903
                  %v1905 = vld [vmem:[%s1335 + $0xfa0] sm:$0xff]
                  %1906 = vst [vmem:[%s1336 + $0x8e0] sm:$0xff] %v1905
                  %v1907 = vld [vmem:[%s1335 + $0xfa8] sm:$0xff]
                  %1908 = vst [vmem:[%s1336 + $0x8e8] sm:$0xff] %v1907
                  %v1909 = vld [vmem:[%s1335 + $0xfb0] sm:$0xff]
                  %1910 = vst [vmem:[%s1336 + $0x8f0] sm:$0xff] %v1909
                  %v1911 = vld [vmem:[%s1335 + $0xfb8] sm:$0xff]
                  %1912 = vst [vmem:[%s1336 + $0x8f8] sm:$0xff] %v1911
                  %s1913 = sadd.s32 1, %s1334
                  %p1914 = scmp.ge.s32.totalorder %s1913, 1
                  %s1915 = scalar_select %p1914, 0, %s1913
                  %s1916 = smul.u32 %s1915, 8
                  %s1917 = smul.u32 %s1915, 8
                  %s1918 = scalar_lea.vmem %s137, %s1916
                  %s1919 = scalar_lea.vmem %s134, %s1917 [#allocation2]
                $region67: #{combine_forward.3} parent=61 // loop_footer
                  %s1333 = sadd.s32 1, %s1329
                $region68: #{combine_forward.3} parent=61 // loop_footer_branch
                  %1328 = sbr.rel target = $region64
                $region69: #{combine_forward.3} parent=61 // loop_exit
                  _
                %s1921 = ssub.s32 1, 1
                loop: start=0, step=1, limit=1
                $region70: #{combine_forward.3} parent=61 // loop_pre_header
                  _
                $region71: #{combine_forward.3} parent=61 // loop_header
                  %s1923 = sphi 0, %s1927
                  %p1924 = scmp.ge.s32.totalorder %s1923, 1
                  %s1928 = sphi %s1326, %s1326
                  %s1929 = sphi %s1327, %s1327
                $region72: #{combine_forward.3} parent=61 // loop_header_branch
                  %1926 = sbr.rel (%p1924) target = $region76
                $region73: #{combine_forward.3} parent=61 // loop_body
                  %v1930 = vld [vmem:[%s1928] sm:%s1921]
                  %1931 = vst [vmem:[%s1929] sm:%s1921] %v1930
                  %v1932 = vld [vmem:[%s1928 + $0x8] sm:%s1921]
                  %1933 = vst [vmem:[%s1929 + $0x8] sm:%s1921] %v1932
                  %v1934 = vld [vmem:[%s1928 + $0x10] sm:%s1921]
                  %1935 = vst [vmem:[%s1929 + $0x10] sm:%s1921] %v1934
                  %v1936 = vld [vmem:[%s1928 + $0x18] sm:%s1921]
                  %1937 = vst [vmem:[%s1929 + $0x18] sm:%s1921] %v1936
                  %v1938 = vld [vmem:[%s1928 + $0x20] sm:%s1921]
                  %1939 = vst [vmem:[%s1929 + $0x20] sm:%s1921] %v1938
                  %v1940 = vld [vmem:[%s1928 + $0x28] sm:%s1921]
                  %1941 = vst [vmem:[%s1929 + $0x28] sm:%s1921] %v1940
                  %v1942 = vld [vmem:[%s1928 + $0x30] sm:%s1921]
                  %1943 = vst [vmem:[%s1929 + $0x30] sm:%s1921] %v1942
                  %v1944 = vld [vmem:[%s1928 + $0x38] sm:%s1921]
                  %1945 = vst [vmem:[%s1929 + $0x38] sm:%s1921] %v1944
                  %v1946 = vld [vmem:[%s1928 + $0x40] sm:%s1921]
                  %1947 = vst [vmem:[%s1929 + $0x40] sm:%s1921] %v1946
                  %v1948 = vld [vmem:[%s1928 + $0x48] sm:%s1921]
                  %1949 = vst [vmem:[%s1929 + $0x48] sm:%s1921] %v1948
                  %v1950 = vld [vmem:[%s1928 + $0x50] sm:%s1921]
                  %1951 = vst [vmem:[%s1929 + $0x50] sm:%s1921] %v1950
                  %v1952 = vld [vmem:[%s1928 + $0x58] sm:%s1921]
                  %1953 = vst [vmem:[%s1929 + $0x58] sm:%s1921] %v1952
                  %v1954 = vld [vmem:[%s1928 + $0x60] sm:%s1921]
                  %1955 = vst [vmem:[%s1929 + $0x60] sm:%s1921] %v1954
                  %v1956 = vld [vmem:[%s1928 + $0x68] sm:%s1921]
                  %1957 = vst [vmem:[%s1929 + $0x68] sm:%s1921] %v1956
                  %v1958 = vld [vmem:[%s1928 + $0x70] sm:%s1921]
                  %1959 = vst [vmem:[%s1929 + $0x70] sm:%s1921] %v1958
                  %v1960 = vld [vmem:[%s1928 + $0x78] sm:%s1921]
                  %1961 = vst [vmem:[%s1929 + $0x78] sm:%s1921] %v1960
                  %v1962 = vld [vmem:[%s1928 + $0x80] sm:%s1921]
                  %1963 = vst [vmem:[%s1929 + $0x80] sm:%s1921] %v1962
                  %v1964 = vld [vmem:[%s1928 + $0x88] sm:%s1921]
                  %1965 = vst [vmem:[%s1929 + $0x88] sm:%s1921] %v1964
                  %v1966 = vld [vmem:[%s1928 + $0x90] sm:%s1921]
                  %1967 = vst [vmem:[%s1929 + $0x90] sm:%s1921] %v1966
                  %v1968 = vld [vmem:[%s1928 + $0x98] sm:%s1921]
                  %1969 = vst [vmem:[%s1929 + $0x98] sm:%s1921] %v1968
                  %v1970 = vld [vmem:[%s1928 + $0xa0] sm:%s1921]
                  %1971 = vst [vmem:[%s1929 + $0xa0] sm:%s1921] %v1970
                  %v1972 = vld [vmem:[%s1928 + $0xa8] sm:%s1921]
                  %1973 = vst [vmem:[%s1929 + $0xa8] sm:%s1921] %v1972
                  %v1974 = vld [vmem:[%s1928 + $0xb0] sm:%s1921]
                  %1975 = vst [vmem:[%s1929 + $0xb0] sm:%s1921] %v1974
                  %v1976 = vld [vmem:[%s1928 + $0xb8] sm:%s1921]
                  %1977 = vst [vmem:[%s1929 + $0xb8] sm:%s1921] %v1976
                  %v1978 = vld [vmem:[%s1928 + $0xc0] sm:%s1921]
                  %1979 = vst [vmem:[%s1929 + $0xc0] sm:%s1921] %v1978
                  %v1980 = vld [vmem:[%s1928 + $0xc8] sm:%s1921]
                  %1981 = vst [vmem:[%s1929 + $0xc8] sm:%s1921] %v1980
                  %v1982 = vld [vmem:[%s1928 + $0xd0] sm:%s1921]
                  %1983 = vst [vmem:[%s1929 + $0xd0] sm:%s1921] %v1982
                  %v1984 = vld [vmem:[%s1928 + $0xd8] sm:%s1921]
                  %1985 = vst [vmem:[%s1929 + $0xd8] sm:%s1921] %v1984
                  %v1986 = vld [vmem:[%s1928 + $0xe0] sm:%s1921]
                  %1987 = vst [vmem:[%s1929 + $0xe0] sm:%s1921] %v1986
                  %v1988 = vld [vmem:[%s1928 + $0xe8] sm:%s1921]
                  %1989 = vst [vmem:[%s1929 + $0xe8] sm:%s1921] %v1988
                  %v1990 = vld [vmem:[%s1928 + $0xf0] sm:%s1921]
                  %1991 = vst [vmem:[%s1929 + $0xf0] sm:%s1921] %v1990
                  %v1992 = vld [vmem:[%s1928 + $0xf8] sm:%s1921]
                  %1993 = vst [vmem:[%s1929 + $0xf8] sm:%s1921] %v1992
                  %v1994 = vld [vmem:[%s1928 + $0x100] sm:%s1921]
                  %1995 = vst [vmem:[%s1929 + $0x100] sm:%s1921] %v1994
                  %v1996 = vld [vmem:[%s1928 + $0x108] sm:%s1921]
                  %1997 = vst [vmem:[%s1929 + $0x108] sm:%s1921] %v1996
                  %v1998 = vld [vmem:[%s1928 + $0x110] sm:%s1921]
                  %1999 = vst [vmem:[%s1929 + $0x110] sm:%s1921] %v1998
                  %v2000 = vld [vmem:[%s1928 + $0x118] sm:%s1921]
                  %2001 = vst [vmem:[%s1929 + $0x118] sm:%s1921] %v2000
                  %v2002 = vld [vmem:[%s1928 + $0x120] sm:%s1921]
                  %2003 = vst [vmem:[%s1929 + $0x120] sm:%s1921] %v2002
                  %v2004 = vld [vmem:[%s1928 + $0x128] sm:%s1921]
                  %2005 = vst [vmem:[%s1929 + $0x128] sm:%s1921] %v2004
                  %v2006 = vld [vmem:[%s1928 + $0x130] sm:%s1921]
                  %2007 = vst [vmem:[%s1929 + $0x130] sm:%s1921] %v2006
                  %v2008 = vld [vmem:[%s1928 + $0x138] sm:%s1921]
                  %2009 = vst [vmem:[%s1929 + $0x138] sm:%s1921] %v2008
                  %v2010 = vld [vmem:[%s1928 + $0x140] sm:%s1921]
                  %2011 = vst [vmem:[%s1929 + $0x140] sm:%s1921] %v2010
                  %v2012 = vld [vmem:[%s1928 + $0x148] sm:%s1921]
                  %2013 = vst [vmem:[%s1929 + $0x148] sm:%s1921] %v2012
                  %v2014 = vld [vmem:[%s1928 + $0x150] sm:%s1921]
                  %2015 = vst [vmem:[%s1929 + $0x150] sm:%s1921] %v2014
                  %v2016 = vld [vmem:[%s1928 + $0x158] sm:%s1921]
                  %2017 = vst [vmem:[%s1929 + $0x158] sm:%s1921] %v2016
                  %v2018 = vld [vmem:[%s1928 + $0x160] sm:%s1921]
                  %2019 = vst [vmem:[%s1929 + $0x160] sm:%s1921] %v2018
                  %v2020 = vld [vmem:[%s1928 + $0x168] sm:%s1921]
                  %2021 = vst [vmem:[%s1929 + $0x168] sm:%s1921] %v2020
                  %v2022 = vld [vmem:[%s1928 + $0x170] sm:%s1921]
                  %2023 = vst [vmem:[%s1929 + $0x170] sm:%s1921] %v2022
                  %v2024 = vld [vmem:[%s1928 + $0x178] sm:%s1921]
                  %2025 = vst [vmem:[%s1929 + $0x178] sm:%s1921] %v2024
                  %v2026 = vld [vmem:[%s1928 + $0x180] sm:%s1921]
                  %2027 = vst [vmem:[%s1929 + $0x180] sm:%s1921] %v2026
                  %v2028 = vld [vmem:[%s1928 + $0x188] sm:%s1921]
                  %2029 = vst [vmem:[%s1929 + $0x188] sm:%s1921] %v2028
                  %v2030 = vld [vmem:[%s1928 + $0x190] sm:%s1921]
                  %2031 = vst [vmem:[%s1929 + $0x190] sm:%s1921] %v2030
                  %v2032 = vld [vmem:[%s1928 + $0x198] sm:%s1921]
                  %2033 = vst [vmem:[%s1929 + $0x198] sm:%s1921] %v2032
                  %v2034 = vld [vmem:[%s1928 + $0x1a0] sm:%s1921]
                  %2035 = vst [vmem:[%s1929 + $0x1a0] sm:%s1921] %v2034
                  %v2036 = vld [vmem:[%s1928 + $0x1a8] sm:%s1921]
                  %2037 = vst [vmem:[%s1929 + $0x1a8] sm:%s1921] %v2036
                  %v2038 = vld [vmem:[%s1928 + $0x1b0] sm:%s1921]
                  %2039 = vst [vmem:[%s1929 + $0x1b0] sm:%s1921] %v2038
                  %v2040 = vld [vmem:[%s1928 + $0x1b8] sm:%s1921]
                  %2041 = vst [vmem:[%s1929 + $0x1b8] sm:%s1921] %v2040
                  %v2042 = vld [vmem:[%s1928 + $0x1c0] sm:%s1921]
                  %2043 = vst [vmem:[%s1929 + $0x1c0] sm:%s1921] %v2042
                  %v2044 = vld [vmem:[%s1928 + $0x1c8] sm:%s1921]
                  %2045 = vst [vmem:[%s1929 + $0x1c8] sm:%s1921] %v2044
                  %v2046 = vld [vmem:[%s1928 + $0x1d0] sm:%s1921]
                  %2047 = vst [vmem:[%s1929 + $0x1d0] sm:%s1921] %v2046
                  %v2048 = vld [vmem:[%s1928 + $0x1d8] sm:%s1921]
                  %2049 = vst [vmem:[%s1929 + $0x1d8] sm:%s1921] %v2048
                  %v2050 = vld [vmem:[%s1928 + $0x1e0] sm:%s1921]
                  %2051 = vst [vmem:[%s1929 + $0x1e0] sm:%s1921] %v2050
                  %v2052 = vld [vmem:[%s1928 + $0x1e8] sm:%s1921]
                  %2053 = vst [vmem:[%s1929 + $0x1e8] sm:%s1921] %v2052
                  %v2054 = vld [vmem:[%s1928 + $0x1f0] sm:%s1921]
                  %2055 = vst [vmem:[%s1929 + $0x1f0] sm:%s1921] %v2054
                  %v2056 = vld [vmem:[%s1928 + $0x1f8] sm:%s1921]
                  %2057 = vst [vmem:[%s1929 + $0x1f8] sm:%s1921] %v2056
                  %v2058 = vld [vmem:[%s1928 + $0x200] sm:%s1921]
                  %2059 = vst [vmem:[%s1929 + $0x200] sm:%s1921] %v2058
                  %v2060 = vld [vmem:[%s1928 + $0x208] sm:%s1921]
                  %2061 = vst [vmem:[%s1929 + $0x208] sm:%s1921] %v2060
                  %v2062 = vld [vmem:[%s1928 + $0x210] sm:%s1921]
                  %2063 = vst [vmem:[%s1929 + $0x210] sm:%s1921] %v2062
                  %v2064 = vld [vmem:[%s1928 + $0x218] sm:%s1921]
                  %2065 = vst [vmem:[%s1929 + $0x218] sm:%s1921] %v2064
                  %v2066 = vld [vmem:[%s1928 + $0x220] sm:%s1921]
                  %2067 = vst [vmem:[%s1929 + $0x220] sm:%s1921] %v2066
                  %v2068 = vld [vmem:[%s1928 + $0x228] sm:%s1921]
                  %2069 = vst [vmem:[%s1929 + $0x228] sm:%s1921] %v2068
                  %v2070 = vld [vmem:[%s1928 + $0x230] sm:%s1921]
                  %2071 = vst [vmem:[%s1929 + $0x230] sm:%s1921] %v2070
                  %v2072 = vld [vmem:[%s1928 + $0x238] sm:%s1921]
                  %2073 = vst [vmem:[%s1929 + $0x238] sm:%s1921] %v2072
                  %v2074 = vld [vmem:[%s1928 + $0x480] sm:%s1921]
                  %2075 = vst [vmem:[%s1929 + $0x240] sm:%s1921] %v2074
                  %v2076 = vld [vmem:[%s1928 + $0x488] sm:%s1921]
                  %2077 = vst [vmem:[%s1929 + $0x248] sm:%s1921] %v2076
                  %v2078 = vld [vmem:[%s1928 + $0x490] sm:%s1921]
                  %2079 = vst [vmem:[%s1929 + $0x250] sm:%s1921] %v2078
                  %v2080 = vld [vmem:[%s1928 + $0x498] sm:%s1921]
                  %2081 = vst [vmem:[%s1929 + $0x258] sm:%s1921] %v2080
                  %v2082 = vld [vmem:[%s1928 + $0x4a0] sm:%s1921]
                  %2083 = vst [vmem:[%s1929 + $0x260] sm:%s1921] %v2082
                  %v2084 = vld [vmem:[%s1928 + $0x4a8] sm:%s1921]
                  %2085 = vst [vmem:[%s1929 + $0x268] sm:%s1921] %v2084
                  %v2086 = vld [vmem:[%s1928 + $0x4b0] sm:%s1921]
                  %2087 = vst [vmem:[%s1929 + $0x270] sm:%s1921] %v2086
                  %v2088 = vld [vmem:[%s1928 + $0x4b8] sm:%s1921]
                  %2089 = vst [vmem:[%s1929 + $0x278] sm:%s1921] %v2088
                  %v2090 = vld [vmem:[%s1928 + $0x4c0] sm:%s1921]
                  %2091 = vst [vmem:[%s1929 + $0x280] sm:%s1921] %v2090
                  %v2092 = vld [vmem:[%s1928 + $0x4c8] sm:%s1921]
                  %2093 = vst [vmem:[%s1929 + $0x288] sm:%s1921] %v2092
                  %v2094 = vld [vmem:[%s1928 + $0x4d0] sm:%s1921]
                  %2095 = vst [vmem:[%s1929 + $0x290] sm:%s1921] %v2094
                  %v2096 = vld [vmem:[%s1928 + $0x4d8] sm:%s1921]
                  %2097 = vst [vmem:[%s1929 + $0x298] sm:%s1921] %v2096
                  %v2098 = vld [vmem:[%s1928 + $0x4e0] sm:%s1921]
                  %2099 = vst [vmem:[%s1929 + $0x2a0] sm:%s1921] %v2098
                  %v2100 = vld [vmem:[%s1928 + $0x4e8] sm:%s1921]
                  %2101 = vst [vmem:[%s1929 + $0x2a8] sm:%s1921] %v2100
                  %v2102 = vld [vmem:[%s1928 + $0x4f0] sm:%s1921]
                  %2103 = vst [vmem:[%s1929 + $0x2b0] sm:%s1921] %v2102
                  %v2104 = vld [vmem:[%s1928 + $0x4f8] sm:%s1921]
                  %2105 = vst [vmem:[%s1929 + $0x2b8] sm:%s1921] %v2104
                  %v2106 = vld [vmem:[%s1928 + $0x500] sm:%s1921]
                  %2107 = vst [vmem:[%s1929 + $0x2c0] sm:%s1921] %v2106
                  %v2108 = vld [vmem:[%s1928 + $0x508] sm:%s1921]
                  %2109 = vst [vmem:[%s1929 + $0x2c8] sm:%s1921] %v2108
                  %v2110 = vld [vmem:[%s1928 + $0x510] sm:%s1921]
                  %2111 = vst [vmem:[%s1929 + $0x2d0] sm:%s1921] %v2110
                  %v2112 = vld [vmem:[%s1928 + $0x518] sm:%s1921]
                  %2113 = vst [vmem:[%s1929 + $0x2d8] sm:%s1921] %v2112
                  %v2114 = vld [vmem:[%s1928 + $0x520] sm:%s1921]
                  %2115 = vst [vmem:[%s1929 + $0x2e0] sm:%s1921] %v2114
                  %v2116 = vld [vmem:[%s1928 + $0x528] sm:%s1921]
                  %2117 = vst [vmem:[%s1929 + $0x2e8] sm:%s1921] %v2116
                  %v2118 = vld [vmem:[%s1928 + $0x530] sm:%s1921]
                  %2119 = vst [vmem:[%s1929 + $0x2f0] sm:%s1921] %v2118
                  %v2120 = vld [vmem:[%s1928 + $0x538] sm:%s1921]
                  %2121 = vst [vmem:[%s1929 + $0x2f8] sm:%s1921] %v2120
                  %v2122 = vld [vmem:[%s1928 + $0x540] sm:%s1921]
                  %2123 = vst [vmem:[%s1929 + $0x300] sm:%s1921] %v2122
                  %v2124 = vld [vmem:[%s1928 + $0x548] sm:%s1921]
                  %2125 = vst [vmem:[%s1929 + $0x308] sm:%s1921] %v2124
                  %v2126 = vld [vmem:[%s1928 + $0x550] sm:%s1921]
                  %2127 = vst [vmem:[%s1929 + $0x310] sm:%s1921] %v2126
                  %v2128 = vld [vmem:[%s1928 + $0x558] sm:%s1921]
                  %2129 = vst [vmem:[%s1929 + $0x318] sm:%s1921] %v2128
                  %v2130 = vld [vmem:[%s1928 + $0x560] sm:%s1921]
                  %2131 = vst [vmem:[%s1929 + $0x320] sm:%s1921] %v2130
                  %v2132 = vld [vmem:[%s1928 + $0x568] sm:%s1921]
                  %2133 = vst [vmem:[%s1929 + $0x328] sm:%s1921] %v2132
                  %v2134 = vld [vmem:[%s1928 + $0x570] sm:%s1921]
                  %2135 = vst [vmem:[%s1929 + $0x330] sm:%s1921] %v2134
                  %v2136 = vld [vmem:[%s1928 + $0x578] sm:%s1921]
                  %2137 = vst [vmem:[%s1929 + $0x338] sm:%s1921] %v2136
                  %v2138 = vld [vmem:[%s1928 + $0x580] sm:%s1921]
                  %2139 = vst [vmem:[%s1929 + $0x340] sm:%s1921] %v2138
                  %v2140 = vld [vmem:[%s1928 + $0x588] sm:%s1921]
                  %2141 = vst [vmem:[%s1929 + $0x348] sm:%s1921] %v2140
                  %v2142 = vld [vmem:[%s1928 + $0x590] sm:%s1921]
                  %2143 = vst [vmem:[%s1929 + $0x350] sm:%s1921] %v2142
                  %v2144 = vld [vmem:[%s1928 + $0x598] sm:%s1921]
                  %2145 = vst [vmem:[%s1929 + $0x358] sm:%s1921] %v2144
                  %v2146 = vld [vmem:[%s1928 + $0x5a0] sm:%s1921]
                  %2147 = vst [vmem:[%s1929 + $0x360] sm:%s1921] %v2146
                  %v2148 = vld [vmem:[%s1928 + $0x5a8] sm:%s1921]
                  %2149 = vst [vmem:[%s1929 + $0x368] sm:%s1921] %v2148
                  %v2150 = vld [vmem:[%s1928 + $0x5b0] sm:%s1921]
                  %2151 = vst [vmem:[%s1929 + $0x370] sm:%s1921] %v2150
                  %v2152 = vld [vmem:[%s1928 + $0x5b8] sm:%s1921]
                  %2153 = vst [vmem:[%s1929 + $0x378] sm:%s1921] %v2152
                  %v2154 = vld [vmem:[%s1928 + $0x5c0] sm:%s1921]
                  %2155 = vst [vmem:[%s1929 + $0x380] sm:%s1921] %v2154
                  %v2156 = vld [vmem:[%s1928 + $0x5c8] sm:%s1921]
                  %2157 = vst [vmem:[%s1929 + $0x388] sm:%s1921] %v2156
                  %v2158 = vld [vmem:[%s1928 + $0x5d0] sm:%s1921]
                  %2159 = vst [vmem:[%s1929 + $0x390] sm:%s1921] %v2158
                  %v2160 = vld [vmem:[%s1928 + $0x5d8] sm:%s1921]
                  %2161 = vst [vmem:[%s1929 + $0x398] sm:%s1921] %v2160
                  %v2162 = vld [vmem:[%s1928 + $0x5e0] sm:%s1921]
                  %2163 = vst [vmem:[%s1929 + $0x3a0] sm:%s1921] %v2162
                  %v2164 = vld [vmem:[%s1928 + $0x5e8] sm:%s1921]
                  %2165 = vst [vmem:[%s1929 + $0x3a8] sm:%s1921] %v2164
                  %v2166 = vld [vmem:[%s1928 + $0x5f0] sm:%s1921]
                  %2167 = vst [vmem:[%s1929 + $0x3b0] sm:%s1921] %v2166
                  %v2168 = vld [vmem:[%s1928 + $0x5f8] sm:%s1921]
                  %2169 = vst [vmem:[%s1929 + $0x3b8] sm:%s1921] %v2168
                  %v2170 = vld [vmem:[%s1928 + $0x600] sm:%s1921]
                  %2171 = vst [vmem:[%s1929 + $0x3c0] sm:%s1921] %v2170
                  %v2172 = vld [vmem:[%s1928 + $0x608] sm:%s1921]
                  %2173 = vst [vmem:[%s1929 + $0x3c8] sm:%s1921] %v2172
                  %v2174 = vld [vmem:[%s1928 + $0x610] sm:%s1921]
                  %2175 = vst [vmem:[%s1929 + $0x3d0] sm:%s1921] %v2174
                  %v2176 = vld [vmem:[%s1928 + $0x618] sm:%s1921]
                  %2177 = vst [vmem:[%s1929 + $0x3d8] sm:%s1921] %v2176
                  %v2178 = vld [vmem:[%s1928 + $0x620] sm:%s1921]
                  %2179 = vst [vmem:[%s1929 + $0x3e0] sm:%s1921] %v2178
                  %v2180 = vld [vmem:[%s1928 + $0x628] sm:%s1921]
                  %2181 = vst [vmem:[%s1929 + $0x3e8] sm:%s1921] %v2180
                  %v2182 = vld [vmem:[%s1928 + $0x630] sm:%s1921]
                  %2183 = vst [vmem:[%s1929 + $0x3f0] sm:%s1921] %v2182
                  %v2184 = vld [vmem:[%s1928 + $0x638] sm:%s1921]
                  %2185 = vst [vmem:[%s1929 + $0x3f8] sm:%s1921] %v2184
                  %v2186 = vld [vmem:[%s1928 + $0x640] sm:%s1921]
                  %2187 = vst [vmem:[%s1929 + $0x400] sm:%s1921] %v2186
                  %v2188 = vld [vmem:[%s1928 + $0x648] sm:%s1921]
                  %2189 = vst [vmem:[%s1929 + $0x408] sm:%s1921] %v2188
                  %v2190 = vld [vmem:[%s1928 + $0x650] sm:%s1921]
                  %2191 = vst [vmem:[%s1929 + $0x410] sm:%s1921] %v2190
                  %v2192 = vld [vmem:[%s1928 + $0x658] sm:%s1921]
                  %2193 = vst [vmem:[%s1929 + $0x418] sm:%s1921] %v2192
                  %v2194 = vld [vmem:[%s1928 + $0x660] sm:%s1921]
                  %2195 = vst [vmem:[%s1929 + $0x420] sm:%s1921] %v2194
                  %v2196 = vld [vmem:[%s1928 + $0x668] sm:%s1921]
                  %2197 = vst [vmem:[%s1929 + $0x428] sm:%s1921] %v2196
                  %v2198 = vld [vmem:[%s1928 + $0x670] sm:%s1921]
                  %2199 = vst [vmem:[%s1929 + $0x430] sm:%s1921] %v2198
                  %v2200 = vld [vmem:[%s1928 + $0x678] sm:%s1921]
                  %2201 = vst [vmem:[%s1929 + $0x438] sm:%s1921] %v2200
                  %v2202 = vld [vmem:[%s1928 + $0x680] sm:%s1921]
                  %2203 = vst [vmem:[%s1929 + $0x440] sm:%s1921] %v2202
                  %v2204 = vld [vmem:[%s1928 + $0x688] sm:%s1921]
                  %2205 = vst [vmem:[%s1929 + $0x448] sm:%s1921] %v2204
                  %v2206 = vld [vmem:[%s1928 + $0x690] sm:%s1921]
                  %2207 = vst [vmem:[%s1929 + $0x450] sm:%s1921] %v2206
                  %v2208 = vld [vmem:[%s1928 + $0x698] sm:%s1921]
                  %2209 = vst [vmem:[%s1929 + $0x458] sm:%s1921] %v2208
                  %v2210 = vld [vmem:[%s1928 + $0x6a0] sm:%s1921]
                  %2211 = vst [vmem:[%s1929 + $0x460] sm:%s1921] %v2210
                  %v2212 = vld [vmem:[%s1928 + $0x6a8] sm:%s1921]
                  %2213 = vst [vmem:[%s1929 + $0x468] sm:%s1921] %v2212
                  %v2214 = vld [vmem:[%s1928 + $0x6b0] sm:%s1921]
                  %2215 = vst [vmem:[%s1929 + $0x470] sm:%s1921] %v2214
                  %v2216 = vld [vmem:[%s1928 + $0x6b8] sm:%s1921]
                  %2217 = vst [vmem:[%s1929 + $0x478] sm:%s1921] %v2216
                  %v2218 = vld [vmem:[%s1928 + $0x900] sm:%s1921]
                  %2219 = vst [vmem:[%s1929 + $0x480] sm:%s1921] %v2218
                  %v2220 = vld [vmem:[%s1928 + $0x908] sm:%s1921]
                  %2221 = vst [vmem:[%s1929 + $0x488] sm:%s1921] %v2220
                  %v2222 = vld [vmem:[%s1928 + $0x910] sm:%s1921]
                  %2223 = vst [vmem:[%s1929 + $0x490] sm:%s1921] %v2222
                  %v2224 = vld [vmem:[%s1928 + $0x918] sm:%s1921]
                  %2225 = vst [vmem:[%s1929 + $0x498] sm:%s1921] %v2224
                  %v2226 = vld [vmem:[%s1928 + $0x920] sm:%s1921]
                  %2227 = vst [vmem:[%s1929 + $0x4a0] sm:%s1921] %v2226
                  %v2228 = vld [vmem:[%s1928 + $0x928] sm:%s1921]
                  %2229 = vst [vmem:[%s1929 + $0x4a8] sm:%s1921] %v2228
                  %v2230 = vld [vmem:[%s1928 + $0x930] sm:%s1921]
                  %2231 = vst [vmem:[%s1929 + $0x4b0] sm:%s1921] %v2230
                  %v2232 = vld [vmem:[%s1928 + $0x938] sm:%s1921]
                  %2233 = vst [vmem:[%s1929 + $0x4b8] sm:%s1921] %v2232
                  %v2234 = vld [vmem:[%s1928 + $0x940] sm:%s1921]
                  %2235 = vst [vmem:[%s1929 + $0x4c0] sm:%s1921] %v2234
                  %v2236 = vld [vmem:[%s1928 + $0x948] sm:%s1921]
                  %2237 = vst [vmem:[%s1929 + $0x4c8] sm:%s1921] %v2236
                  %v2238 = vld [vmem:[%s1928 + $0x950] sm:%s1921]
                  %2239 = vst [vmem:[%s1929 + $0x4d0] sm:%s1921] %v2238
                  %v2240 = vld [vmem:[%s1928 + $0x958] sm:%s1921]
                  %2241 = vst [vmem:[%s1929 + $0x4d8] sm:%s1921] %v2240
                  %v2242 = vld [vmem:[%s1928 + $0x960] sm:%s1921]
                  %2243 = vst [vmem:[%s1929 + $0x4e0] sm:%s1921] %v2242
                  %v2244 = vld [vmem:[%s1928 + $0x968] sm:%s1921]
                  %2245 = vst [vmem:[%s1929 + $0x4e8] sm:%s1921] %v2244
                  %v2246 = vld [vmem:[%s1928 + $0x970] sm:%s1921]
                  %2247 = vst [vmem:[%s1929 + $0x4f0] sm:%s1921] %v2246
                  %v2248 = vld [vmem:[%s1928 + $0x978] sm:%s1921]
                  %2249 = vst [vmem:[%s1929 + $0x4f8] sm:%s1921] %v2248
                  %v2250 = vld [vmem:[%s1928 + $0x980] sm:%s1921]
                  %2251 = vst [vmem:[%s1929 + $0x500] sm:%s1921] %v2250
                  %v2252 = vld [vmem:[%s1928 + $0x988] sm:%s1921]
                  %2253 = vst [vmem:[%s1929 + $0x508] sm:%s1921] %v2252
                  %v2254 = vld [vmem:[%s1928 + $0x990] sm:%s1921]
                  %2255 = vst [vmem:[%s1929 + $0x510] sm:%s1921] %v2254
                  %v2256 = vld [vmem:[%s1928 + $0x998] sm:%s1921]
                  %2257 = vst [vmem:[%s1929 + $0x518] sm:%s1921] %v2256
                  %v2258 = vld [vmem:[%s1928 + $0x9a0] sm:%s1921]
                  %2259 = vst [vmem:[%s1929 + $0x520] sm:%s1921] %v2258
                  %v2260 = vld [vmem:[%s1928 + $0x9a8] sm:%s1921]
                  %2261 = vst [vmem:[%s1929 + $0x528] sm:%s1921] %v2260
                  %v2262 = vld [vmem:[%s1928 + $0x9b0] sm:%s1921]
                  %2263 = vst [vmem:[%s1929 + $0x530] sm:%s1921] %v2262
                  %v2264 = vld [vmem:[%s1928 + $0x9b8] sm:%s1921]
                  %2265 = vst [vmem:[%s1929 + $0x538] sm:%s1921] %v2264
                  %v2266 = vld [vmem:[%s1928 + $0x9c0] sm:%s1921]
                  %2267 = vst [vmem:[%s1929 + $0x540] sm:%s1921] %v2266
                  %v2268 = vld [vmem:[%s1928 + $0x9c8] sm:%s1921]
                  %2269 = vst [vmem:[%s1929 + $0x548] sm:%s1921] %v2268
                  %v2270 = vld [vmem:[%s1928 + $0x9d0] sm:%s1921]
                  %2271 = vst [vmem:[%s1929 + $0x550] sm:%s1921] %v2270
                  %v2272 = vld [vmem:[%s1928 + $0x9d8] sm:%s1921]
                  %2273 = vst [vmem:[%s1929 + $0x558] sm:%s1921] %v2272
                  %v2274 = vld [vmem:[%s1928 + $0x9e0] sm:%s1921]
                  %2275 = vst [vmem:[%s1929 + $0x560] sm:%s1921] %v2274
                  %v2276 = vld [vmem:[%s1928 + $0x9e8] sm:%s1921]
                  %2277 = vst [vmem:[%s1929 + $0x568] sm:%s1921] %v2276
                  %v2278 = vld [vmem:[%s1928 + $0x9f0] sm:%s1921]
                  %2279 = vst [vmem:[%s1929 + $0x570] sm:%s1921] %v2278
                  %v2280 = vld [vmem:[%s1928 + $0x9f8] sm:%s1921]
                  %2281 = vst [vmem:[%s1929 + $0x578] sm:%s1921] %v2280
                  %v2282 = vld [vmem:[%s1928 + $0xa00] sm:%s1921]
                  %2283 = vst [vmem:[%s1929 + $0x580] sm:%s1921] %v2282
                  %v2284 = vld [vmem:[%s1928 + $0xa08] sm:%s1921]
                  %2285 = vst [vmem:[%s1929 + $0x588] sm:%s1921] %v2284
                  %v2286 = vld [vmem:[%s1928 + $0xa10] sm:%s1921]
                  %2287 = vst [vmem:[%s1929 + $0x590] sm:%s1921] %v2286
                  %v2288 = vld [vmem:[%s1928 + $0xa18] sm:%s1921]
                  %2289 = vst [vmem:[%s1929 + $0x598] sm:%s1921] %v2288
                  %v2290 = vld [vmem:[%s1928 + $0xa20] sm:%s1921]
                  %2291 = vst [vmem:[%s1929 + $0x5a0] sm:%s1921] %v2290
                  %v2292 = vld [vmem:[%s1928 + $0xa28] sm:%s1921]
                  %2293 = vst [vmem:[%s1929 + $0x5a8] sm:%s1921] %v2292
                  %v2294 = vld [vmem:[%s1928 + $0xa30] sm:%s1921]
                  %2295 = vst [vmem:[%s1929 + $0x5b0] sm:%s1921] %v2294
                  %v2296 = vld [vmem:[%s1928 + $0xa38] sm:%s1921]
                  %2297 = vst [vmem:[%s1929 + $0x5b8] sm:%s1921] %v2296
                  %v2298 = vld [vmem:[%s1928 + $0xa40] sm:%s1921]
                  %2299 = vst [vmem:[%s1929 + $0x5c0] sm:%s1921] %v2298
                  %v2300 = vld [vmem:[%s1928 + $0xa48] sm:%s1921]
                  %2301 = vst [vmem:[%s1929 + $0x5c8] sm:%s1921] %v2300
                  %v2302 = vld [vmem:[%s1928 + $0xa50] sm:%s1921]
                  %2303 = vst [vmem:[%s1929 + $0x5d0] sm:%s1921] %v2302
                  %v2304 = vld [vmem:[%s1928 + $0xa58] sm:%s1921]
                  %2305 = vst [vmem:[%s1929 + $0x5d8] sm:%s1921] %v2304
                  %v2306 = vld [vmem:[%s1928 + $0xa60] sm:%s1921]
                  %2307 = vst [vmem:[%s1929 + $0x5e0] sm:%s1921] %v2306
                  %v2308 = vld [vmem:[%s1928 + $0xa68] sm:%s1921]
                  %2309 = vst [vmem:[%s1929 + $0x5e8] sm:%s1921] %v2308
                  %v2310 = vld [vmem:[%s1928 + $0xa70] sm:%s1921]
                  %2311 = vst [vmem:[%s1929 + $0x5f0] sm:%s1921] %v2310
                  %v2312 = vld [vmem:[%s1928 + $0xa78] sm:%s1921]
                  %2313 = vst [vmem:[%s1929 + $0x5f8] sm:%s1921] %v2312
                  %v2314 = vld [vmem:[%s1928 + $0xa80] sm:%s1921]
                  %2315 = vst [vmem:[%s1929 + $0x600] sm:%s1921] %v2314
                  %v2316 = vld [vmem:[%s1928 + $0xa88] sm:%s1921]
                  %2317 = vst [vmem:[%s1929 + $0x608] sm:%s1921] %v2316
                  %v2318 = vld [vmem:[%s1928 + $0xa90] sm:%s1921]
                  %2319 = vst [vmem:[%s1929 + $0x610] sm:%s1921] %v2318
                  %v2320 = vld [vmem:[%s1928 + $0xa98] sm:%s1921]
                  %2321 = vst [vmem:[%s1929 + $0x618] sm:%s1921] %v2320
                  %v2322 = vld [vmem:[%s1928 + $0xaa0] sm:%s1921]
                  %2323 = vst [vmem:[%s1929 + $0x620] sm:%s1921] %v2322
                  %v2324 = vld [vmem:[%s1928 + $0xaa8] sm:%s1921]
                  %2325 = vst [vmem:[%s1929 + $0x628] sm:%s1921] %v2324
                  %v2326 = vld [vmem:[%s1928 + $0xab0] sm:%s1921]
                  %2327 = vst [vmem:[%s1929 + $0x630] sm:%s1921] %v2326
                  %v2328 = vld [vmem:[%s1928 + $0xab8] sm:%s1921]
                  %2329 = vst [vmem:[%s1929 + $0x638] sm:%s1921] %v2328
                  %v2330 = vld [vmem:[%s1928 + $0xac0] sm:%s1921]
                  %2331 = vst [vmem:[%s1929 + $0x640] sm:%s1921] %v2330
                  %v2332 = vld [vmem:[%s1928 + $0xac8] sm:%s1921]
                  %2333 = vst [vmem:[%s1929 + $0x648] sm:%s1921] %v2332
                  %v2334 = vld [vmem:[%s1928 + $0xad0] sm:%s1921]
                  %2335 = vst [vmem:[%s1929 + $0x650] sm:%s1921] %v2334
                  %v2336 = vld [vmem:[%s1928 + $0xad8] sm:%s1921]
                  %2337 = vst [vmem:[%s1929 + $0x658] sm:%s1921] %v2336
                  %v2338 = vld [vmem:[%s1928 + $0xae0] sm:%s1921]
                  %2339 = vst [vmem:[%s1929 + $0x660] sm:%s1921] %v2338
                  %v2340 = vld [vmem:[%s1928 + $0xae8] sm:%s1921]
                  %2341 = vst [vmem:[%s1929 + $0x668] sm:%s1921] %v2340
                  %v2342 = vld [vmem:[%s1928 + $0xaf0] sm:%s1921]
                  %2343 = vst [vmem:[%s1929 + $0x670] sm:%s1921] %v2342
                  %v2344 = vld [vmem:[%s1928 + $0xaf8] sm:%s1921]
                  %2345 = vst [vmem:[%s1929 + $0x678] sm:%s1921] %v2344
                  %v2346 = vld [vmem:[%s1928 + $0xb00] sm:%s1921]
                  %2347 = vst [vmem:[%s1929 + $0x680] sm:%s1921] %v2346
                  %v2348 = vld [vmem:[%s1928 + $0xb08] sm:%s1921]
                  %2349 = vst [vmem:[%s1929 + $0x688] sm:%s1921] %v2348
                  %v2350 = vld [vmem:[%s1928 + $0xb10] sm:%s1921]
                  %2351 = vst [vmem:[%s1929 + $0x690] sm:%s1921] %v2350
                  %v2352 = vld [vmem:[%s1928 + $0xb18] sm:%s1921]
                  %2353 = vst [vmem:[%s1929 + $0x698] sm:%s1921] %v2352
                  %v2354 = vld [vmem:[%s1928 + $0xb20] sm:%s1921]
                  %2355 = vst [vmem:[%s1929 + $0x6a0] sm:%s1921] %v2354
                  %v2356 = vld [vmem:[%s1928 + $0xb28] sm:%s1921]
                  %2357 = vst [vmem:[%s1929 + $0x6a8] sm:%s1921] %v2356
                  %v2358 = vld [vmem:[%s1928 + $0xb30] sm:%s1921]
                  %2359 = vst [vmem:[%s1929 + $0x6b0] sm:%s1921] %v2358
                  %v2360 = vld [vmem:[%s1928 + $0xb38] sm:%s1921]
                  %2361 = vst [vmem:[%s1929 + $0x6b8] sm:%s1921] %v2360
                  %v2362 = vld [vmem:[%s1928 + $0xd80] sm:%s1921]
                  %2363 = vst [vmem:[%s1929 + $0x6c0] sm:%s1921] %v2362
                  %v2364 = vld [vmem:[%s1928 + $0xd88] sm:%s1921]
                  %2365 = vst [vmem:[%s1929 + $0x6c8] sm:%s1921] %v2364
                  %v2366 = vld [vmem:[%s1928 + $0xd90] sm:%s1921]
                  %2367 = vst [vmem:[%s1929 + $0x6d0] sm:%s1921] %v2366
                  %v2368 = vld [vmem:[%s1928 + $0xd98] sm:%s1921]
                  %2369 = vst [vmem:[%s1929 + $0x6d8] sm:%s1921] %v2368
                  %v2370 = vld [vmem:[%s1928 + $0xda0] sm:%s1921]
                  %2371 = vst [vmem:[%s1929 + $0x6e0] sm:%s1921] %v2370
                  %v2372 = vld [vmem:[%s1928 + $0xda8] sm:%s1921]
                  %2373 = vst [vmem:[%s1929 + $0x6e8] sm:%s1921] %v2372
                  %v2374 = vld [vmem:[%s1928 + $0xdb0] sm:%s1921]
                  %2375 = vst [vmem:[%s1929 + $0x6f0] sm:%s1921] %v2374
                  %v2376 = vld [vmem:[%s1928 + $0xdb8] sm:%s1921]
                  %2377 = vst [vmem:[%s1929 + $0x6f8] sm:%s1921] %v2376
                  %v2378 = vld [vmem:[%s1928 + $0xdc0] sm:%s1921]
                  %2379 = vst [vmem:[%s1929 + $0x700] sm:%s1921] %v2378
                  %v2380 = vld [vmem:[%s1928 + $0xdc8] sm:%s1921]
                  %2381 = vst [vmem:[%s1929 + $0x708] sm:%s1921] %v2380
                  %v2382 = vld [vmem:[%s1928 + $0xdd0] sm:%s1921]
                  %2383 = vst [vmem:[%s1929 + $0x710] sm:%s1921] %v2382
                  %v2384 = vld [vmem:[%s1928 + $0xdd8] sm:%s1921]
                  %2385 = vst [vmem:[%s1929 + $0x718] sm:%s1921] %v2384
                  %v2386 = vld [vmem:[%s1928 + $0xde0] sm:%s1921]
                  %2387 = vst [vmem:[%s1929 + $0x720] sm:%s1921] %v2386
                  %v2388 = vld [vmem:[%s1928 + $0xde8] sm:%s1921]
                  %2389 = vst [vmem:[%s1929 + $0x728] sm:%s1921] %v2388
                  %v2390 = vld [vmem:[%s1928 + $0xdf0] sm:%s1921]
                  %2391 = vst [vmem:[%s1929 + $0x730] sm:%s1921] %v2390
                  %v2392 = vld [vmem:[%s1928 + $0xdf8] sm:%s1921]
                  %2393 = vst [vmem:[%s1929 + $0x738] sm:%s1921] %v2392
                  %v2394 = vld [vmem:[%s1928 + $0xe00] sm:%s1921]
                  %2395 = vst [vmem:[%s1929 + $0x740] sm:%s1921] %v2394
                  %v2396 = vld [vmem:[%s1928 + $0xe08] sm:%s1921]
                  %2397 = vst [vmem:[%s1929 + $0x748] sm:%s1921] %v2396
                  %v2398 = vld [vmem:[%s1928 + $0xe10] sm:%s1921]
                  %2399 = vst [vmem:[%s1929 + $0x750] sm:%s1921] %v2398
                  %v2400 = vld [vmem:[%s1928 + $0xe18] sm:%s1921]
                  %2401 = vst [vmem:[%s1929 + $0x758] sm:%s1921] %v2400
                  %v2402 = vld [vmem:[%s1928 + $0xe20] sm:%s1921]
                  %2403 = vst [vmem:[%s1929 + $0x760] sm:%s1921] %v2402
                  %v2404 = vld [vmem:[%s1928 + $0xe28] sm:%s1921]
                  %2405 = vst [vmem:[%s1929 + $0x768] sm:%s1921] %v2404
                  %v2406 = vld [vmem:[%s1928 + $0xe30] sm:%s1921]
                  %2407 = vst [vmem:[%s1929 + $0x770] sm:%s1921] %v2406
                  %v2408 = vld [vmem:[%s1928 + $0xe38] sm:%s1921]
                  %2409 = vst [vmem:[%s1929 + $0x778] sm:%s1921] %v2408
                  %v2410 = vld [vmem:[%s1928 + $0xe40] sm:%s1921]
                  %2411 = vst [vmem:[%s1929 + $0x780] sm:%s1921] %v2410
                  %v2412 = vld [vmem:[%s1928 + $0xe48] sm:%s1921]
                  %2413 = vst [vmem:[%s1929 + $0x788] sm:%s1921] %v2412
                  %v2414 = vld [vmem:[%s1928 + $0xe50] sm:%s1921]
                  %2415 = vst [vmem:[%s1929 + $0x790] sm:%s1921] %v2414
                  %v2416 = vld [vmem:[%s1928 + $0xe58] sm:%s1921]
                  %2417 = vst [vmem:[%s1929 + $0x798] sm:%s1921] %v2416
                  %v2418 = vld [vmem:[%s1928 + $0xe60] sm:%s1921]
                  %2419 = vst [vmem:[%s1929 + $0x7a0] sm:%s1921] %v2418
                  %v2420 = vld [vmem:[%s1928 + $0xe68] sm:%s1921]
                  %2421 = vst [vmem:[%s1929 + $0x7a8] sm:%s1921] %v2420
                  %v2422 = vld [vmem:[%s1928 + $0xe70] sm:%s1921]
                  %2423 = vst [vmem:[%s1929 + $0x7b0] sm:%s1921] %v2422
                  %v2424 = vld [vmem:[%s1928 + $0xe78] sm:%s1921]
                  %2425 = vst [vmem:[%s1929 + $0x7b8] sm:%s1921] %v2424
                  %v2426 = vld [vmem:[%s1928 + $0xe80] sm:%s1921]
                  %2427 = vst [vmem:[%s1929 + $0x7c0] sm:%s1921] %v2426
                  %v2428 = vld [vmem:[%s1928 + $0xe88] sm:%s1921]
                  %2429 = vst [vmem:[%s1929 + $0x7c8] sm:%s1921] %v2428
                  %v2430 = vld [vmem:[%s1928 + $0xe90] sm:%s1921]
                  %2431 = vst [vmem:[%s1929 + $0x7d0] sm:%s1921] %v2430
                  %v2432 = vld [vmem:[%s1928 + $0xe98] sm:%s1921]
                  %2433 = vst [vmem:[%s1929 + $0x7d8] sm:%s1921] %v2432
                  %v2434 = vld [vmem:[%s1928 + $0xea0] sm:%s1921]
                  %2435 = vst [vmem:[%s1929 + $0x7e0] sm:%s1921] %v2434
                  %v2436 = vld [vmem:[%s1928 + $0xea8] sm:%s1921]
                  %2437 = vst [vmem:[%s1929 + $0x7e8] sm:%s1921] %v2436
                  %v2438 = vld [vmem:[%s1928 + $0xeb0] sm:%s1921]
                  %2439 = vst [vmem:[%s1929 + $0x7f0] sm:%s1921] %v2438
                  %v2440 = vld [vmem:[%s1928 + $0xeb8] sm:%s1921]
                  %2441 = vst [vmem:[%s1929 + $0x7f8] sm:%s1921] %v2440
                  %v2442 = vld [vmem:[%s1928 + $0xec0] sm:%s1921]
                  %2443 = vst [vmem:[%s1929 + $0x800] sm:%s1921] %v2442
                  %v2444 = vld [vmem:[%s1928 + $0xec8] sm:%s1921]
                  %2445 = vst [vmem:[%s1929 + $0x808] sm:%s1921] %v2444
                  %v2446 = vld [vmem:[%s1928 + $0xed0] sm:%s1921]
                  %2447 = vst [vmem:[%s1929 + $0x810] sm:%s1921] %v2446
                  %v2448 = vld [vmem:[%s1928 + $0xed8] sm:%s1921]
                  %2449 = vst [vmem:[%s1929 + $0x818] sm:%s1921] %v2448
                  %v2450 = vld [vmem:[%s1928 + $0xee0] sm:%s1921]
                  %2451 = vst [vmem:[%s1929 + $0x820] sm:%s1921] %v2450
                  %v2452 = vld [vmem:[%s1928 + $0xee8] sm:%s1921]
                  %2453 = vst [vmem:[%s1929 + $0x828] sm:%s1921] %v2452
                  %v2454 = vld [vmem:[%s1928 + $0xef0] sm:%s1921]
                  %2455 = vst [vmem:[%s1929 + $0x830] sm:%s1921] %v2454
                  %v2456 = vld [vmem:[%s1928 + $0xef8] sm:%s1921]
                  %2457 = vst [vmem:[%s1929 + $0x838] sm:%s1921] %v2456
                  %v2458 = vld [vmem:[%s1928 + $0xf00] sm:%s1921]
                  %2459 = vst [vmem:[%s1929 + $0x840] sm:%s1921] %v2458
                  %v2460 = vld [vmem:[%s1928 + $0xf08] sm:%s1921]
                  %2461 = vst [vmem:[%s1929 + $0x848] sm:%s1921] %v2460
                  %v2462 = vld [vmem:[%s1928 + $0xf10] sm:%s1921]
                  %2463 = vst [vmem:[%s1929 + $0x850] sm:%s1921] %v2462
                  %v2464 = vld [vmem:[%s1928 + $0xf18] sm:%s1921]
                  %2465 = vst [vmem:[%s1929 + $0x858] sm:%s1921] %v2464
                  %v2466 = vld [vmem:[%s1928 + $0xf20] sm:%s1921]
                  %2467 = vst [vmem:[%s1929 + $0x860] sm:%s1921] %v2466
                  %v2468 = vld [vmem:[%s1928 + $0xf28] sm:%s1921]
                  %2469 = vst [vmem:[%s1929 + $0x868] sm:%s1921] %v2468
                  %v2470 = vld [vmem:[%s1928 + $0xf30] sm:%s1921]
                  %2471 = vst [vmem:[%s1929 + $0x870] sm:%s1921] %v2470
                  %v2472 = vld [vmem:[%s1928 + $0xf38] sm:%s1921]
                  %2473 = vst [vmem:[%s1929 + $0x878] sm:%s1921] %v2472
                  %v2474 = vld [vmem:[%s1928 + $0xf40] sm:%s1921]
                  %2475 = vst [vmem:[%s1929 + $0x880] sm:%s1921] %v2474
                  %v2476 = vld [vmem:[%s1928 + $0xf48] sm:%s1921]
                  %2477 = vst [vmem:[%s1929 + $0x888] sm:%s1921] %v2476
                  %v2478 = vld [vmem:[%s1928 + $0xf50] sm:%s1921]
                  %2479 = vst [vmem:[%s1929 + $0x890] sm:%s1921] %v2478
                  %v2480 = vld [vmem:[%s1928 + $0xf58] sm:%s1921]
                  %2481 = vst [vmem:[%s1929 + $0x898] sm:%s1921] %v2480
                  %v2482 = vld [vmem:[%s1928 + $0xf60] sm:%s1921]
                  %2483 = vst [vmem:[%s1929 + $0x8a0] sm:%s1921] %v2482
                  %v2484 = vld [vmem:[%s1928 + $0xf68] sm:%s1921]
                  %2485 = vst [vmem:[%s1929 + $0x8a8] sm:%s1921] %v2484
                  %v2486 = vld [vmem:[%s1928 + $0xf70] sm:%s1921]
                  %2487 = vst [vmem:[%s1929 + $0x8b0] sm:%s1921] %v2486
                  %v2488 = vld [vmem:[%s1928 + $0xf78] sm:%s1921]
                  %2489 = vst [vmem:[%s1929 + $0x8b8] sm:%s1921] %v2488
                  %v2490 = vld [vmem:[%s1928 + $0xf80] sm:%s1921]
                  %2491 = vst [vmem:[%s1929 + $0x8c0] sm:%s1921] %v2490
                  %v2492 = vld [vmem:[%s1928 + $0xf88] sm:%s1921]
                  %2493 = vst [vmem:[%s1929 + $0x8c8] sm:%s1921] %v2492
                  %v2494 = vld [vmem:[%s1928 + $0xf90] sm:%s1921]
                  %2495 = vst [vmem:[%s1929 + $0x8d0] sm:%s1921] %v2494
                  %v2496 = vld [vmem:[%s1928 + $0xf98] sm:%s1921]
                  %2497 = vst [vmem:[%s1929 + $0x8d8] sm:%s1921] %v2496
                  %v2498 = vld [vmem:[%s1928 + $0xfa0] sm:%s1921]
                  %2499 = vst [vmem:[%s1929 + $0x8e0] sm:%s1921] %v2498
                  %v2500 = vld [vmem:[%s1928 + $0xfa8] sm:%s1921]
                  %2501 = vst [vmem:[%s1929 + $0x8e8] sm:%s1921] %v2500
                  %v2502 = vld [vmem:[%s1928 + $0xfb0] sm:%s1921]
                  %2503 = vst [vmem:[%s1929 + $0x8f0] sm:%s1921] %v2502
                  %v2504 = vld [vmem:[%s1928 + $0xfb8] sm:%s1921]
                  %2505 = vst [vmem:[%s1929 + $0x8f8] sm:%s1921] %v2504
                $region74: #{combine_forward.3} parent=61 // loop_footer
                  %s1927 = sadd.s32 1, %s1923
                $region75: #{combine_forward.3} parent=61 // loop_footer_branch
                  %1922 = sbr.rel target = $region71
                $region76: #{combine_forward.3} parent=61 // loop_exit
                  _
              $region62: #{combine_forward.3} parent=35 // pred_fallthru
                _
            $region36: #{combine_forward.3} parent=31 // pred_fallthru
              _
            // Predicated region
            $region37: #{combine_forward.3} parent=31 // pred_check
              _
            $region38: #{combine_forward.3} parent=31 // pred_check_branch
              %143 = sbr.rel target = $region40
            $region39: #{combine_forward.3} parent=31 // pred_region
              %s145 = ssub.s32 256, 1
              loop: start=0, step=1, limit=1
              $region41: #{combine_forward.3} parent=39 // loop_pre_header
                _
              $region42: #{combine_forward.3} parent=39 // loop_header
                %s147 = sphi 0, %s151
                %p148 = scmp.ge.s32.totalorder %s147, 1
                %s152 = sphi %s137, %s137
                %s153 = sphi %s134, %s134
              $region43: #{combine_forward.3} parent=39 // loop_header_branch
                %150 = sbr.rel (%p148) target = $region47
              $region44: #{combine_forward.3} parent=39 // loop_body
                %v154 = vld [vmem:[%s152] sm:%s145]
                %155 = vst [vmem:[%s153] sm:%s145] %v154
                %v156 = vld [vmem:[%s152 + $0x8] sm:%s145]
                %157 = vst [vmem:[%s153 + $0x8] sm:%s145] %v156
                %v158 = vld [vmem:[%s152 + $0x10] sm:%s145]
                %159 = vst [vmem:[%s153 + $0x10] sm:%s145] %v158
                %v160 = vld [vmem:[%s152 + $0x18] sm:%s145]
                %161 = vst [vmem:[%s153 + $0x18] sm:%s145] %v160
                %v162 = vld [vmem:[%s152 + $0x20] sm:%s145]
                %163 = vst [vmem:[%s153 + $0x20] sm:%s145] %v162
                %v164 = vld [vmem:[%s152 + $0x28] sm:%s145]
                %165 = vst [vmem:[%s153 + $0x28] sm:%s145] %v164
                %v166 = vld [vmem:[%s152 + $0x30] sm:%s145]
                %167 = vst [vmem:[%s153 + $0x30] sm:%s145] %v166
                %v168 = vld [vmem:[%s152 + $0x38] sm:%s145]
                %169 = vst [vmem:[%s153 + $0x38] sm:%s145] %v168
                %v170 = vld [vmem:[%s152 + $0x40] sm:%s145]
                %171 = vst [vmem:[%s153 + $0x40] sm:%s145] %v170
                %v172 = vld [vmem:[%s152 + $0x48] sm:%s145]
                %173 = vst [vmem:[%s153 + $0x48] sm:%s145] %v172
                %v174 = vld [vmem:[%s152 + $0x50] sm:%s145]
                %175 = vst [vmem:[%s153 + $0x50] sm:%s145] %v174
                %v176 = vld [vmem:[%s152 + $0x58] sm:%s145]
                %177 = vst [vmem:[%s153 + $0x58] sm:%s145] %v176
                %v178 = vld [vmem:[%s152 + $0x60] sm:%s145]
                %179 = vst [vmem:[%s153 + $0x60] sm:%s145] %v178
                %v180 = vld [vmem:[%s152 + $0x68] sm:%s145]
                %181 = vst [vmem:[%s153 + $0x68] sm:%s145] %v180
                %v182 = vld [vmem:[%s152 + $0x70] sm:%s145]
                %183 = vst [vmem:[%s153 + $0x70] sm:%s145] %v182
                %v184 = vld [vmem:[%s152 + $0x78] sm:%s145]
                %185 = vst [vmem:[%s153 + $0x78] sm:%s145] %v184
                %v186 = vld [vmem:[%s152 + $0x80] sm:%s145]
                %187 = vst [vmem:[%s153 + $0x80] sm:%s145] %v186
                %v188 = vld [vmem:[%s152 + $0x88] sm:%s145]
                %189 = vst [vmem:[%s153 + $0x88] sm:%s145] %v188
                %v190 = vld [vmem:[%s152 + $0x90] sm:%s145]
                %191 = vst [vmem:[%s153 + $0x90] sm:%s145] %v190
                %v192 = vld [vmem:[%s152 + $0x98] sm:%s145]
                %193 = vst [vmem:[%s153 + $0x98] sm:%s145] %v192
                %v194 = vld [vmem:[%s152 + $0xa0] sm:%s145]
                %195 = vst [vmem:[%s153 + $0xa0] sm:%s145] %v194
                %v196 = vld [vmem:[%s152 + $0xa8] sm:%s145]
                %197 = vst [vmem:[%s153 + $0xa8] sm:%s145] %v196
                %v198 = vld [vmem:[%s152 + $0xb0] sm:%s145]
                %199 = vst [vmem:[%s153 + $0xb0] sm:%s145] %v198
                %v200 = vld [vmem:[%s152 + $0xb8] sm:%s145]
                %201 = vst [vmem:[%s153 + $0xb8] sm:%s145] %v200
                %v202 = vld [vmem:[%s152 + $0xc0] sm:%s145]
                %203 = vst [vmem:[%s153 + $0xc0] sm:%s145] %v202
                %v204 = vld [vmem:[%s152 + $0xc8] sm:%s145]
                %205 = vst [vmem:[%s153 + $0xc8] sm:%s145] %v204
                %v206 = vld [vmem:[%s152 + $0xd0] sm:%s145]
                %207 = vst [vmem:[%s153 + $0xd0] sm:%s145] %v206
                %v208 = vld [vmem:[%s152 + $0xd8] sm:%s145]
                %209 = vst [vmem:[%s153 + $0xd8] sm:%s145] %v208
                %v210 = vld [vmem:[%s152 + $0xe0] sm:%s145]
                %211 = vst [vmem:[%s153 + $0xe0] sm:%s145] %v210
                %v212 = vld [vmem:[%s152 + $0xe8] sm:%s145]
                %213 = vst [vmem:[%s153 + $0xe8] sm:%s145] %v212
                %v214 = vld [vmem:[%s152 + $0xf0] sm:%s145]
                %215 = vst [vmem:[%s153 + $0xf0] sm:%s145] %v214
                %v216 = vld [vmem:[%s152 + $0xf8] sm:%s145]
                %217 = vst [vmem:[%s153 + $0xf8] sm:%s145] %v216
                %v218 = vld [vmem:[%s152 + $0x100] sm:%s145]
                %219 = vst [vmem:[%s153 + $0x100] sm:%s145] %v218
                %v220 = vld [vmem:[%s152 + $0x108] sm:%s145]
                %221 = vst [vmem:[%s153 + $0x108] sm:%s145] %v220
                %v222 = vld [vmem:[%s152 + $0x110] sm:%s145]
                %223 = vst [vmem:[%s153 + $0x110] sm:%s145] %v222
                %v224 = vld [vmem:[%s152 + $0x118] sm:%s145]
                %225 = vst [vmem:[%s153 + $0x118] sm:%s145] %v224
                %v226 = vld [vmem:[%s152 + $0x120] sm:%s145]
                %227 = vst [vmem:[%s153 + $0x120] sm:%s145] %v226
                %v228 = vld [vmem:[%s152 + $0x128] sm:%s145]
                %229 = vst [vmem:[%s153 + $0x128] sm:%s145] %v228
                %v230 = vld [vmem:[%s152 + $0x130] sm:%s145]
                %231 = vst [vmem:[%s153 + $0x130] sm:%s145] %v230
                %v232 = vld [vmem:[%s152 + $0x138] sm:%s145]
                %233 = vst [vmem:[%s153 + $0x138] sm:%s145] %v232
                %v234 = vld [vmem:[%s152 + $0x140] sm:%s145]
                %235 = vst [vmem:[%s153 + $0x140] sm:%s145] %v234
                %v236 = vld [vmem:[%s152 + $0x148] sm:%s145]
                %237 = vst [vmem:[%s153 + $0x148] sm:%s145] %v236
                %v238 = vld [vmem:[%s152 + $0x150] sm:%s145]
                %239 = vst [vmem:[%s153 + $0x150] sm:%s145] %v238
                %v240 = vld [vmem:[%s152 + $0x158] sm:%s145]
                %241 = vst [vmem:[%s153 + $0x158] sm:%s145] %v240
                %v242 = vld [vmem:[%s152 + $0x160] sm:%s145]
                %243 = vst [vmem:[%s153 + $0x160] sm:%s145] %v242
                %v244 = vld [vmem:[%s152 + $0x168] sm:%s145]
                %245 = vst [vmem:[%s153 + $0x168] sm:%s145] %v244
                %v246 = vld [vmem:[%s152 + $0x170] sm:%s145]
                %247 = vst [vmem:[%s153 + $0x170] sm:%s145] %v246
                %v248 = vld [vmem:[%s152 + $0x178] sm:%s145]
                %249 = vst [vmem:[%s153 + $0x178] sm:%s145] %v248
                %v250 = vld [vmem:[%s152 + $0x180] sm:%s145]
                %251 = vst [vmem:[%s153 + $0x180] sm:%s145] %v250
                %v252 = vld [vmem:[%s152 + $0x188] sm:%s145]
                %253 = vst [vmem:[%s153 + $0x188] sm:%s145] %v252
                %v254 = vld [vmem:[%s152 + $0x190] sm:%s145]
                %255 = vst [vmem:[%s153 + $0x190] sm:%s145] %v254
                %v256 = vld [vmem:[%s152 + $0x198] sm:%s145]
                %257 = vst [vmem:[%s153 + $0x198] sm:%s145] %v256
                %v258 = vld [vmem:[%s152 + $0x1a0] sm:%s145]
                %259 = vst [vmem:[%s153 + $0x1a0] sm:%s145] %v258
                %v260 = vld [vmem:[%s152 + $0x1a8] sm:%s145]
                %261 = vst [vmem:[%s153 + $0x1a8] sm:%s145] %v260
                %v262 = vld [vmem:[%s152 + $0x1b0] sm:%s145]
                %263 = vst [vmem:[%s153 + $0x1b0] sm:%s145] %v262
                %v264 = vld [vmem:[%s152 + $0x1b8] sm:%s145]
                %265 = vst [vmem:[%s153 + $0x1b8] sm:%s145] %v264
                %v266 = vld [vmem:[%s152 + $0x1c0] sm:%s145]
                %267 = vst [vmem:[%s153 + $0x1c0] sm:%s145] %v266
                %v268 = vld [vmem:[%s152 + $0x1c8] sm:%s145]
                %269 = vst [vmem:[%s153 + $0x1c8] sm:%s145] %v268
                %v270 = vld [vmem:[%s152 + $0x1d0] sm:%s145]
                %271 = vst [vmem:[%s153 + $0x1d0] sm:%s145] %v270
                %v272 = vld [vmem:[%s152 + $0x1d8] sm:%s145]
                %273 = vst [vmem:[%s153 + $0x1d8] sm:%s145] %v272
                %v274 = vld [vmem:[%s152 + $0x1e0] sm:%s145]
                %275 = vst [vmem:[%s153 + $0x1e0] sm:%s145] %v274
                %v276 = vld [vmem:[%s152 + $0x1e8] sm:%s145]
                %277 = vst [vmem:[%s153 + $0x1e8] sm:%s145] %v276
                %v278 = vld [vmem:[%s152 + $0x1f0] sm:%s145]
                %279 = vst [vmem:[%s153 + $0x1f0] sm:%s145] %v278
                %v280 = vld [vmem:[%s152 + $0x1f8] sm:%s145]
                %281 = vst [vmem:[%s153 + $0x1f8] sm:%s145] %v280
                %v282 = vld [vmem:[%s152 + $0x200] sm:%s145]
                %283 = vst [vmem:[%s153 + $0x200] sm:%s145] %v282
                %v284 = vld [vmem:[%s152 + $0x208] sm:%s145]
                %285 = vst [vmem:[%s153 + $0x208] sm:%s145] %v284
                %v286 = vld [vmem:[%s152 + $0x210] sm:%s145]
                %287 = vst [vmem:[%s153 + $0x210] sm:%s145] %v286
                %v288 = vld [vmem:[%s152 + $0x218] sm:%s145]
                %289 = vst [vmem:[%s153 + $0x218] sm:%s145] %v288
                %v290 = vld [vmem:[%s152 + $0x220] sm:%s145]
                %291 = vst [vmem:[%s153 + $0x220] sm:%s145] %v290
                %v292 = vld [vmem:[%s152 + $0x228] sm:%s145]
                %293 = vst [vmem:[%s153 + $0x228] sm:%s145] %v292
                %v294 = vld [vmem:[%s152 + $0x230] sm:%s145]
                %295 = vst [vmem:[%s153 + $0x230] sm:%s145] %v294
                %v296 = vld [vmem:[%s152 + $0x238] sm:%s145]
                %297 = vst [vmem:[%s153 + $0x238] sm:%s145] %v296
                %v298 = vld [vmem:[%s152 + $0x480] sm:%s145]
                %299 = vst [vmem:[%s153 + $0x240] sm:%s145] %v298
                %v300 = vld [vmem:[%s152 + $0x488] sm:%s145]
                %301 = vst [vmem:[%s153 + $0x248] sm:%s145] %v300
                %v302 = vld [vmem:[%s152 + $0x490] sm:%s145]
                %303 = vst [vmem:[%s153 + $0x250] sm:%s145] %v302
                %v304 = vld [vmem:[%s152 + $0x498] sm:%s145]
                %305 = vst [vmem:[%s153 + $0x258] sm:%s145] %v304
                %v306 = vld [vmem:[%s152 + $0x4a0] sm:%s145]
                %307 = vst [vmem:[%s153 + $0x260] sm:%s145] %v306
                %v308 = vld [vmem:[%s152 + $0x4a8] sm:%s145]
                %309 = vst [vmem:[%s153 + $0x268] sm:%s145] %v308
                %v310 = vld [vmem:[%s152 + $0x4b0] sm:%s145]
                %311 = vst [vmem:[%s153 + $0x270] sm:%s145] %v310
                %v312 = vld [vmem:[%s152 + $0x4b8] sm:%s145]
                %313 = vst [vmem:[%s153 + $0x278] sm:%s145] %v312
                %v314 = vld [vmem:[%s152 + $0x4c0] sm:%s145]
                %315 = vst [vmem:[%s153 + $0x280] sm:%s145] %v314
                %v316 = vld [vmem:[%s152 + $0x4c8] sm:%s145]
                %317 = vst [vmem:[%s153 + $0x288] sm:%s145] %v316
                %v318 = vld [vmem:[%s152 + $0x4d0] sm:%s145]
                %319 = vst [vmem:[%s153 + $0x290] sm:%s145] %v318
                %v320 = vld [vmem:[%s152 + $0x4d8] sm:%s145]
                %321 = vst [vmem:[%s153 + $0x298] sm:%s145] %v320
                %v322 = vld [vmem:[%s152 + $0x4e0] sm:%s145]
                %323 = vst [vmem:[%s153 + $0x2a0] sm:%s145] %v322
                %v324 = vld [vmem:[%s152 + $0x4e8] sm:%s145]
                %325 = vst [vmem:[%s153 + $0x2a8] sm:%s145] %v324
                %v326 = vld [vmem:[%s152 + $0x4f0] sm:%s145]
                %327 = vst [vmem:[%s153 + $0x2b0] sm:%s145] %v326
                %v328 = vld [vmem:[%s152 + $0x4f8] sm:%s145]
                %329 = vst [vmem:[%s153 + $0x2b8] sm:%s145] %v328
                %v330 = vld [vmem:[%s152 + $0x500] sm:%s145]
                %331 = vst [vmem:[%s153 + $0x2c0] sm:%s145] %v330
                %v332 = vld [vmem:[%s152 + $0x508] sm:%s145]
                %333 = vst [vmem:[%s153 + $0x2c8] sm:%s145] %v332
                %v334 = vld [vmem:[%s152 + $0x510] sm:%s145]
                %335 = vst [vmem:[%s153 + $0x2d0] sm:%s145] %v334
                %v336 = vld [vmem:[%s152 + $0x518] sm:%s145]
                %337 = vst [vmem:[%s153 + $0x2d8] sm:%s145] %v336
                %v338 = vld [vmem:[%s152 + $0x520] sm:%s145]
                %339 = vst [vmem:[%s153 + $0x2e0] sm:%s145] %v338
                %v340 = vld [vmem:[%s152 + $0x528] sm:%s145]
                %341 = vst [vmem:[%s153 + $0x2e8] sm:%s145] %v340
                %v342 = vld [vmem:[%s152 + $0x530] sm:%s145]
                %343 = vst [vmem:[%s153 + $0x2f0] sm:%s145] %v342
                %v344 = vld [vmem:[%s152 + $0x538] sm:%s145]
                %345 = vst [vmem:[%s153 + $0x2f8] sm:%s145] %v344
                %v346 = vld [vmem:[%s152 + $0x540] sm:%s145]
                %347 = vst [vmem:[%s153 + $0x300] sm:%s145] %v346
                %v348 = vld [vmem:[%s152 + $0x548] sm:%s145]
                %349 = vst [vmem:[%s153 + $0x308] sm:%s145] %v348
                %v350 = vld [vmem:[%s152 + $0x550] sm:%s145]
                %351 = vst [vmem:[%s153 + $0x310] sm:%s145] %v350
                %v352 = vld [vmem:[%s152 + $0x558] sm:%s145]
                %353 = vst [vmem:[%s153 + $0x318] sm:%s145] %v352
                %v354 = vld [vmem:[%s152 + $0x560] sm:%s145]
                %355 = vst [vmem:[%s153 + $0x320] sm:%s145] %v354
                %v356 = vld [vmem:[%s152 + $0x568] sm:%s145]
                %357 = vst [vmem:[%s153 + $0x328] sm:%s145] %v356
                %v358 = vld [vmem:[%s152 + $0x570] sm:%s145]
                %359 = vst [vmem:[%s153 + $0x330] sm:%s145] %v358
                %v360 = vld [vmem:[%s152 + $0x578] sm:%s145]
                %361 = vst [vmem:[%s153 + $0x338] sm:%s145] %v360
                %v362 = vld [vmem:[%s152 + $0x580] sm:%s145]
                %363 = vst [vmem:[%s153 + $0x340] sm:%s145] %v362
                %v364 = vld [vmem:[%s152 + $0x588] sm:%s145]
                %365 = vst [vmem:[%s153 + $0x348] sm:%s145] %v364
                %v366 = vld [vmem:[%s152 + $0x590] sm:%s145]
                %367 = vst [vmem:[%s153 + $0x350] sm:%s145] %v366
                %v368 = vld [vmem:[%s152 + $0x598] sm:%s145]
                %369 = vst [vmem:[%s153 + $0x358] sm:%s145] %v368
                %v370 = vld [vmem:[%s152 + $0x5a0] sm:%s145]
                %371 = vst [vmem:[%s153 + $0x360] sm:%s145] %v370
                %v372 = vld [vmem:[%s152 + $0x5a8] sm:%s145]
                %373 = vst [vmem:[%s153 + $0x368] sm:%s145] %v372
                %v374 = vld [vmem:[%s152 + $0x5b0] sm:%s145]
                %375 = vst [vmem:[%s153 + $0x370] sm:%s145] %v374
                %v376 = vld [vmem:[%s152 + $0x5b8] sm:%s145]
                %377 = vst [vmem:[%s153 + $0x378] sm:%s145] %v376
                %v378 = vld [vmem:[%s152 + $0x5c0] sm:%s145]
                %379 = vst [vmem:[%s153 + $0x380] sm:%s145] %v378
                %v380 = vld [vmem:[%s152 + $0x5c8] sm:%s145]
                %381 = vst [vmem:[%s153 + $0x388] sm:%s145] %v380
                %v382 = vld [vmem:[%s152 + $0x5d0] sm:%s145]
                %383 = vst [vmem:[%s153 + $0x390] sm:%s145] %v382
                %v384 = vld [vmem:[%s152 + $0x5d8] sm:%s145]
                %385 = vst [vmem:[%s153 + $0x398] sm:%s145] %v384
                %v386 = vld [vmem:[%s152 + $0x5e0] sm:%s145]
                %387 = vst [vmem:[%s153 + $0x3a0] sm:%s145] %v386
                %v388 = vld [vmem:[%s152 + $0x5e8] sm:%s145]
                %389 = vst [vmem:[%s153 + $0x3a8] sm:%s145] %v388
                %v390 = vld [vmem:[%s152 + $0x5f0] sm:%s145]
                %391 = vst [vmem:[%s153 + $0x3b0] sm:%s145] %v390
                %v392 = vld [vmem:[%s152 + $0x5f8] sm:%s145]
                %393 = vst [vmem:[%s153 + $0x3b8] sm:%s145] %v392
                %v394 = vld [vmem:[%s152 + $0x600] sm:%s145]
                %395 = vst [vmem:[%s153 + $0x3c0] sm:%s145] %v394
                %v396 = vld [vmem:[%s152 + $0x608] sm:%s145]
                %397 = vst [vmem:[%s153 + $0x3c8] sm:%s145] %v396
                %v398 = vld [vmem:[%s152 + $0x610] sm:%s145]
                %399 = vst [vmem:[%s153 + $0x3d0] sm:%s145] %v398
                %v400 = vld [vmem:[%s152 + $0x618] sm:%s145]
                %401 = vst [vmem:[%s153 + $0x3d8] sm:%s145] %v400
                %v402 = vld [vmem:[%s152 + $0x620] sm:%s145]
                %403 = vst [vmem:[%s153 + $0x3e0] sm:%s145] %v402
                %v404 = vld [vmem:[%s152 + $0x628] sm:%s145]
                %405 = vst [vmem:[%s153 + $0x3e8] sm:%s145] %v404
                %v406 = vld [vmem:[%s152 + $0x630] sm:%s145]
                %407 = vst [vmem:[%s153 + $0x3f0] sm:%s145] %v406
                %v408 = vld [vmem:[%s152 + $0x638] sm:%s145]
                %409 = vst [vmem:[%s153 + $0x3f8] sm:%s145] %v408
                %v410 = vld [vmem:[%s152 + $0x640] sm:%s145]
                %411 = vst [vmem:[%s153 + $0x400] sm:%s145] %v410
                %v412 = vld [vmem:[%s152 + $0x648] sm:%s145]
                %413 = vst [vmem:[%s153 + $0x408] sm:%s145] %v412
                %v414 = vld [vmem:[%s152 + $0x650] sm:%s145]
                %415 = vst [vmem:[%s153 + $0x410] sm:%s145] %v414
                %v416 = vld [vmem:[%s152 + $0x658] sm:%s145]
                %417 = vst [vmem:[%s153 + $0x418] sm:%s145] %v416
                %v418 = vld [vmem:[%s152 + $0x660] sm:%s145]
                %419 = vst [vmem:[%s153 + $0x420] sm:%s145] %v418
                %v420 = vld [vmem:[%s152 + $0x668] sm:%s145]
                %421 = vst [vmem:[%s153 + $0x428] sm:%s145] %v420
                %v422 = vld [vmem:[%s152 + $0x670] sm:%s145]
                %423 = vst [vmem:[%s153 + $0x430] sm:%s145] %v422
                %v424 = vld [vmem:[%s152 + $0x678] sm:%s145]
                %425 = vst [vmem:[%s153 + $0x438] sm:%s145] %v424
                %v426 = vld [vmem:[%s152 + $0x680] sm:%s145]
                %427 = vst [vmem:[%s153 + $0x440] sm:%s145] %v426
                %v428 = vld [vmem:[%s152 + $0x688] sm:%s145]
                %429 = vst [vmem:[%s153 + $0x448] sm:%s145] %v428
                %v430 = vld [vmem:[%s152 + $0x690] sm:%s145]
                %431 = vst [vmem:[%s153 + $0x450] sm:%s145] %v430
                %v432 = vld [vmem:[%s152 + $0x698] sm:%s145]
                %433 = vst [vmem:[%s153 + $0x458] sm:%s145] %v432
                %v434 = vld [vmem:[%s152 + $0x6a0] sm:%s145]
                %435 = vst [vmem:[%s153 + $0x460] sm:%s145] %v434
                %v436 = vld [vmem:[%s152 + $0x6a8] sm:%s145]
                %437 = vst [vmem:[%s153 + $0x468] sm:%s145] %v436
                %v438 = vld [vmem:[%s152 + $0x6b0] sm:%s145]
                %439 = vst [vmem:[%s153 + $0x470] sm:%s145] %v438
                %v440 = vld [vmem:[%s152 + $0x6b8] sm:%s145]
                %441 = vst [vmem:[%s153 + $0x478] sm:%s145] %v440
                %v442 = vld [vmem:[%s152 + $0x900] sm:%s145]
                %443 = vst [vmem:[%s153 + $0x480] sm:%s145] %v442
                %v444 = vld [vmem:[%s152 + $0x908] sm:%s145]
                %445 = vst [vmem:[%s153 + $0x488] sm:%s145] %v444
                %v446 = vld [vmem:[%s152 + $0x910] sm:%s145]
                %447 = vst [vmem:[%s153 + $0x490] sm:%s145] %v446
                %v448 = vld [vmem:[%s152 + $0x918] sm:%s145]
                %449 = vst [vmem:[%s153 + $0x498] sm:%s145] %v448
                %v450 = vld [vmem:[%s152 + $0x920] sm:%s145]
                %451 = vst [vmem:[%s153 + $0x4a0] sm:%s145] %v450
                %v452 = vld [vmem:[%s152 + $0x928] sm:%s145]
                %453 = vst [vmem:[%s153 + $0x4a8] sm:%s145] %v452
                %v454 = vld [vmem:[%s152 + $0x930] sm:%s145]
                %455 = vst [vmem:[%s153 + $0x4b0] sm:%s145] %v454
                %v456 = vld [vmem:[%s152 + $0x938] sm:%s145]
                %457 = vst [vmem:[%s153 + $0x4b8] sm:%s145] %v456
                %v458 = vld [vmem:[%s152 + $0x940] sm:%s145]
                %459 = vst [vmem:[%s153 + $0x4c0] sm:%s145] %v458
                %v460 = vld [vmem:[%s152 + $0x948] sm:%s145]
                %461 = vst [vmem:[%s153 + $0x4c8] sm:%s145] %v460
                %v462 = vld [vmem:[%s152 + $0x950] sm:%s145]
                %463 = vst [vmem:[%s153 + $0x4d0] sm:%s145] %v462
                %v464 = vld [vmem:[%s152 + $0x958] sm:%s145]
                %465 = vst [vmem:[%s153 + $0x4d8] sm:%s145] %v464
                %v466 = vld [vmem:[%s152 + $0x960] sm:%s145]
                %467 = vst [vmem:[%s153 + $0x4e0] sm:%s145] %v466
                %v468 = vld [vmem:[%s152 + $0x968] sm:%s145]
                %469 = vst [vmem:[%s153 + $0x4e8] sm:%s145] %v468
                %v470 = vld [vmem:[%s152 + $0x970] sm:%s145]
                %471 = vst [vmem:[%s153 + $0x4f0] sm:%s145] %v470
                %v472 = vld [vmem:[%s152 + $0x978] sm:%s145]
                %473 = vst [vmem:[%s153 + $0x4f8] sm:%s145] %v472
                %v474 = vld [vmem:[%s152 + $0x980] sm:%s145]
                %475 = vst [vmem:[%s153 + $0x500] sm:%s145] %v474
                %v476 = vld [vmem:[%s152 + $0x988] sm:%s145]
                %477 = vst [vmem:[%s153 + $0x508] sm:%s145] %v476
                %v478 = vld [vmem:[%s152 + $0x990] sm:%s145]
                %479 = vst [vmem:[%s153 + $0x510] sm:%s145] %v478
                %v480 = vld [vmem:[%s152 + $0x998] sm:%s145]
                %481 = vst [vmem:[%s153 + $0x518] sm:%s145] %v480
                %v482 = vld [vmem:[%s152 + $0x9a0] sm:%s145]
                %483 = vst [vmem:[%s153 + $0x520] sm:%s145] %v482
                %v484 = vld [vmem:[%s152 + $0x9a8] sm:%s145]
                %485 = vst [vmem:[%s153 + $0x528] sm:%s145] %v484
                %v486 = vld [vmem:[%s152 + $0x9b0] sm:%s145]
                %487 = vst [vmem:[%s153 + $0x530] sm:%s145] %v486
                %v488 = vld [vmem:[%s152 + $0x9b8] sm:%s145]
                %489 = vst [vmem:[%s153 + $0x538] sm:%s145] %v488
                %v490 = vld [vmem:[%s152 + $0x9c0] sm:%s145]
                %491 = vst [vmem:[%s153 + $0x540] sm:%s145] %v490
                %v492 = vld [vmem:[%s152 + $0x9c8] sm:%s145]
                %493 = vst [vmem:[%s153 + $0x548] sm:%s145] %v492
                %v494 = vld [vmem:[%s152 + $0x9d0] sm:%s145]
                %495 = vst [vmem:[%s153 + $0x550] sm:%s145] %v494
                %v496 = vld [vmem:[%s152 + $0x9d8] sm:%s145]
                %497 = vst [vmem:[%s153 + $0x558] sm:%s145] %v496
                %v498 = vld [vmem:[%s152 + $0x9e0] sm:%s145]
                %499 = vst [vmem:[%s153 + $0x560] sm:%s145] %v498
                %v500 = vld [vmem:[%s152 + $0x9e8] sm:%s145]
                %501 = vst [vmem:[%s153 + $0x568] sm:%s145] %v500
                %v502 = vld [vmem:[%s152 + $0x9f0] sm:%s145]
                %503 = vst [vmem:[%s153 + $0x570] sm:%s145] %v502
                %v504 = vld [vmem:[%s152 + $0x9f8] sm:%s145]
                %505 = vst [vmem:[%s153 + $0x578] sm:%s145] %v504
                %v506 = vld [vmem:[%s152 + $0xa00] sm:%s145]
                %507 = vst [vmem:[%s153 + $0x580] sm:%s145] %v506
                %v508 = vld [vmem:[%s152 + $0xa08] sm:%s145]
                %509 = vst [vmem:[%s153 + $0x588] sm:%s145] %v508
                %v510 = vld [vmem:[%s152 + $0xa10] sm:%s145]
                %511 = vst [vmem:[%s153 + $0x590] sm:%s145] %v510
                %v512 = vld [vmem:[%s152 + $0xa18] sm:%s145]
                %513 = vst [vmem:[%s153 + $0x598] sm:%s145] %v512
                %v514 = vld [vmem:[%s152 + $0xa20] sm:%s145]
                %515 = vst [vmem:[%s153 + $0x5a0] sm:%s145] %v514
                %v516 = vld [vmem:[%s152 + $0xa28] sm:%s145]
                %517 = vst [vmem:[%s153 + $0x5a8] sm:%s145] %v516
                %v518 = vld [vmem:[%s152 + $0xa30] sm:%s145]
                %519 = vst [vmem:[%s153 + $0x5b0] sm:%s145] %v518
                %v520 = vld [vmem:[%s152 + $0xa38] sm:%s145]
                %521 = vst [vmem:[%s153 + $0x5b8] sm:%s145] %v520
                %v522 = vld [vmem:[%s152 + $0xa40] sm:%s145]
                %523 = vst [vmem:[%s153 + $0x5c0] sm:%s145] %v522
                %v524 = vld [vmem:[%s152 + $0xa48] sm:%s145]
                %525 = vst [vmem:[%s153 + $0x5c8] sm:%s145] %v524
                %v526 = vld [vmem:[%s152 + $0xa50] sm:%s145]
                %527 = vst [vmem:[%s153 + $0x5d0] sm:%s145] %v526
                %v528 = vld [vmem:[%s152 + $0xa58] sm:%s145]
                %529 = vst [vmem:[%s153 + $0x5d8] sm:%s145] %v528
                %v530 = vld [vmem:[%s152 + $0xa60] sm:%s145]
                %531 = vst [vmem:[%s153 + $0x5e0] sm:%s145] %v530
                %v532 = vld [vmem:[%s152 + $0xa68] sm:%s145]
                %533 = vst [vmem:[%s153 + $0x5e8] sm:%s145] %v532
                %v534 = vld [vmem:[%s152 + $0xa70] sm:%s145]
                %535 = vst [vmem:[%s153 + $0x5f0] sm:%s145] %v534
                %v536 = vld [vmem:[%s152 + $0xa78] sm:%s145]
                %537 = vst [vmem:[%s153 + $0x5f8] sm:%s145] %v536
                %v538 = vld [vmem:[%s152 + $0xa80] sm:%s145]
                %539 = vst [vmem:[%s153 + $0x600] sm:%s145] %v538
                %v540 = vld [vmem:[%s152 + $0xa88] sm:%s145]
                %541 = vst [vmem:[%s153 + $0x608] sm:%s145] %v540
                %v542 = vld [vmem:[%s152 + $0xa90] sm:%s145]
                %543 = vst [vmem:[%s153 + $0x610] sm:%s145] %v542
                %v544 = vld [vmem:[%s152 + $0xa98] sm:%s145]
                %545 = vst [vmem:[%s153 + $0x618] sm:%s145] %v544
                %v546 = vld [vmem:[%s152 + $0xaa0] sm:%s145]
                %547 = vst [vmem:[%s153 + $0x620] sm:%s145] %v546
                %v548 = vld [vmem:[%s152 + $0xaa8] sm:%s145]
                %549 = vst [vmem:[%s153 + $0x628] sm:%s145] %v548
                %v550 = vld [vmem:[%s152 + $0xab0] sm:%s145]
                %551 = vst [vmem:[%s153 + $0x630] sm:%s145] %v550
                %v552 = vld [vmem:[%s152 + $0xab8] sm:%s145]
                %553 = vst [vmem:[%s153 + $0x638] sm:%s145] %v552
                %v554 = vld [vmem:[%s152 + $0xac0] sm:%s145]
                %555 = vst [vmem:[%s153 + $0x640] sm:%s145] %v554
                %v556 = vld [vmem:[%s152 + $0xac8] sm:%s145]
                %557 = vst [vmem:[%s153 + $0x648] sm:%s145] %v556
                %v558 = vld [vmem:[%s152 + $0xad0] sm:%s145]
                %559 = vst [vmem:[%s153 + $0x650] sm:%s145] %v558
                %v560 = vld [vmem:[%s152 + $0xad8] sm:%s145]
                %561 = vst [vmem:[%s153 + $0x658] sm:%s145] %v560
                %v562 = vld [vmem:[%s152 + $0xae0] sm:%s145]
                %563 = vst [vmem:[%s153 + $0x660] sm:%s145] %v562
                %v564 = vld [vmem:[%s152 + $0xae8] sm:%s145]
                %565 = vst [vmem:[%s153 + $0x668] sm:%s145] %v564
                %v566 = vld [vmem:[%s152 + $0xaf0] sm:%s145]
                %567 = vst [vmem:[%s153 + $0x670] sm:%s145] %v566
                %v568 = vld [vmem:[%s152 + $0xaf8] sm:%s145]
                %569 = vst [vmem:[%s153 + $0x678] sm:%s145] %v568
                %v570 = vld [vmem:[%s152 + $0xb00] sm:%s145]
                %571 = vst [vmem:[%s153 + $0x680] sm:%s145] %v570
                %v572 = vld [vmem:[%s152 + $0xb08] sm:%s145]
                %573 = vst [vmem:[%s153 + $0x688] sm:%s145] %v572
                %v574 = vld [vmem:[%s152 + $0xb10] sm:%s145]
                %575 = vst [vmem:[%s153 + $0x690] sm:%s145] %v574
                %v576 = vld [vmem:[%s152 + $0xb18] sm:%s145]
                %577 = vst [vmem:[%s153 + $0x698] sm:%s145] %v576
                %v578 = vld [vmem:[%s152 + $0xb20] sm:%s145]
                %579 = vst [vmem:[%s153 + $0x6a0] sm:%s145] %v578
                %v580 = vld [vmem:[%s152 + $0xb28] sm:%s145]
                %581 = vst [vmem:[%s153 + $0x6a8] sm:%s145] %v580
                %v582 = vld [vmem:[%s152 + $0xb30] sm:%s145]
                %583 = vst [vmem:[%s153 + $0x6b0] sm:%s145] %v582
                %v584 = vld [vmem:[%s152 + $0xb38] sm:%s145]
                %585 = vst [vmem:[%s153 + $0x6b8] sm:%s145] %v584
                %v586 = vld [vmem:[%s152 + $0xd80] sm:%s145]
                %587 = vst [vmem:[%s153 + $0x6c0] sm:%s145] %v586
                %v588 = vld [vmem:[%s152 + $0xd88] sm:%s145]
                %589 = vst [vmem:[%s153 + $0x6c8] sm:%s145] %v588
                %v590 = vld [vmem:[%s152 + $0xd90] sm:%s145]
                %591 = vst [vmem:[%s153 + $0x6d0] sm:%s145] %v590
                %v592 = vld [vmem:[%s152 + $0xd98] sm:%s145]
                %593 = vst [vmem:[%s153 + $0x6d8] sm:%s145] %v592
                %v594 = vld [vmem:[%s152 + $0xda0] sm:%s145]
                %595 = vst [vmem:[%s153 + $0x6e0] sm:%s145] %v594
                %v596 = vld [vmem:[%s152 + $0xda8] sm:%s145]
                %597 = vst [vmem:[%s153 + $0x6e8] sm:%s145] %v596
                %v598 = vld [vmem:[%s152 + $0xdb0] sm:%s145]
                %599 = vst [vmem:[%s153 + $0x6f0] sm:%s145] %v598
                %v600 = vld [vmem:[%s152 + $0xdb8] sm:%s145]
                %601 = vst [vmem:[%s153 + $0x6f8] sm:%s145] %v600
                %v602 = vld [vmem:[%s152 + $0xdc0] sm:%s145]
                %603 = vst [vmem:[%s153 + $0x700] sm:%s145] %v602
                %v604 = vld [vmem:[%s152 + $0xdc8] sm:%s145]
                %605 = vst [vmem:[%s153 + $0x708] sm:%s145] %v604
                %v606 = vld [vmem:[%s152 + $0xdd0] sm:%s145]
                %607 = vst [vmem:[%s153 + $0x710] sm:%s145] %v606
                %v608 = vld [vmem:[%s152 + $0xdd8] sm:%s145]
                %609 = vst [vmem:[%s153 + $0x718] sm:%s145] %v608
                %v610 = vld [vmem:[%s152 + $0xde0] sm:%s145]
                %611 = vst [vmem:[%s153 + $0x720] sm:%s145] %v610
                %v612 = vld [vmem:[%s152 + $0xde8] sm:%s145]
                %613 = vst [vmem:[%s153 + $0x728] sm:%s145] %v612
                %v614 = vld [vmem:[%s152 + $0xdf0] sm:%s145]
                %615 = vst [vmem:[%s153 + $0x730] sm:%s145] %v614
                %v616 = vld [vmem:[%s152 + $0xdf8] sm:%s145]
                %617 = vst [vmem:[%s153 + $0x738] sm:%s145] %v616
                %v618 = vld [vmem:[%s152 + $0xe00] sm:%s145]
                %619 = vst [vmem:[%s153 + $0x740] sm:%s145] %v618
                %v620 = vld [vmem:[%s152 + $0xe08] sm:%s145]
                %621 = vst [vmem:[%s153 + $0x748] sm:%s145] %v620
                %v622 = vld [vmem:[%s152 + $0xe10] sm:%s145]
                %623 = vst [vmem:[%s153 + $0x750] sm:%s145] %v622
                %v624 = vld [vmem:[%s152 + $0xe18] sm:%s145]
                %625 = vst [vmem:[%s153 + $0x758] sm:%s145] %v624
                %v626 = vld [vmem:[%s152 + $0xe20] sm:%s145]
                %627 = vst [vmem:[%s153 + $0x760] sm:%s145] %v626
                %v628 = vld [vmem:[%s152 + $0xe28] sm:%s145]
                %629 = vst [vmem:[%s153 + $0x768] sm:%s145] %v628
                %v630 = vld [vmem:[%s152 + $0xe30] sm:%s145]
                %631 = vst [vmem:[%s153 + $0x770] sm:%s145] %v630
                %v632 = vld [vmem:[%s152 + $0xe38] sm:%s145]
                %633 = vst [vmem:[%s153 + $0x778] sm:%s145] %v632
                %v634 = vld [vmem:[%s152 + $0xe40] sm:%s145]
                %635 = vst [vmem:[%s153 + $0x780] sm:%s145] %v634
                %v636 = vld [vmem:[%s152 + $0xe48] sm:%s145]
                %637 = vst [vmem:[%s153 + $0x788] sm:%s145] %v636
                %v638 = vld [vmem:[%s152 + $0xe50] sm:%s145]
                %639 = vst [vmem:[%s153 + $0x790] sm:%s145] %v638
                %v640 = vld [vmem:[%s152 + $0xe58] sm:%s145]
                %641 = vst [vmem:[%s153 + $0x798] sm:%s145] %v640
                %v642 = vld [vmem:[%s152 + $0xe60] sm:%s145]
                %643 = vst [vmem:[%s153 + $0x7a0] sm:%s145] %v642
                %v644 = vld [vmem:[%s152 + $0xe68] sm:%s145]
                %645 = vst [vmem:[%s153 + $0x7a8] sm:%s145] %v644
                %v646 = vld [vmem:[%s152 + $0xe70] sm:%s145]
                %647 = vst [vmem:[%s153 + $0x7b0] sm:%s145] %v646
                %v648 = vld [vmem:[%s152 + $0xe78] sm:%s145]
                %649 = vst [vmem:[%s153 + $0x7b8] sm:%s145] %v648
                %v650 = vld [vmem:[%s152 + $0xe80] sm:%s145]
                %651 = vst [vmem:[%s153 + $0x7c0] sm:%s145] %v650
                %v652 = vld [vmem:[%s152 + $0xe88] sm:%s145]
                %653 = vst [vmem:[%s153 + $0x7c8] sm:%s145] %v652
                %v654 = vld [vmem:[%s152 + $0xe90] sm:%s145]
                %655 = vst [vmem:[%s153 + $0x7d0] sm:%s145] %v654
                %v656 = vld [vmem:[%s152 + $0xe98] sm:%s145]
                %657 = vst [vmem:[%s153 + $0x7d8] sm:%s145] %v656
                %v658 = vld [vmem:[%s152 + $0xea0] sm:%s145]
                %659 = vst [vmem:[%s153 + $0x7e0] sm:%s145] %v658
                %v660 = vld [vmem:[%s152 + $0xea8] sm:%s145]
                %661 = vst [vmem:[%s153 + $0x7e8] sm:%s145] %v660
                %v662 = vld [vmem:[%s152 + $0xeb0] sm:%s145]
                %663 = vst [vmem:[%s153 + $0x7f0] sm:%s145] %v662
                %v664 = vld [vmem:[%s152 + $0xeb8] sm:%s145]
                %665 = vst [vmem:[%s153 + $0x7f8] sm:%s145] %v664
                %v666 = vld [vmem:[%s152 + $0xec0] sm:%s145]
                %667 = vst [vmem:[%s153 + $0x800] sm:%s145] %v666
                %v668 = vld [vmem:[%s152 + $0xec8] sm:%s145]
                %669 = vst [vmem:[%s153 + $0x808] sm:%s145] %v668
                %v670 = vld [vmem:[%s152 + $0xed0] sm:%s145]
                %671 = vst [vmem:[%s153 + $0x810] sm:%s145] %v670
                %v672 = vld [vmem:[%s152 + $0xed8] sm:%s145]
                %673 = vst [vmem:[%s153 + $0x818] sm:%s145] %v672
                %v674 = vld [vmem:[%s152 + $0xee0] sm:%s145]
                %675 = vst [vmem:[%s153 + $0x820] sm:%s145] %v674
                %v676 = vld [vmem:[%s152 + $0xee8] sm:%s145]
                %677 = vst [vmem:[%s153 + $0x828] sm:%s145] %v676
                %v678 = vld [vmem:[%s152 + $0xef0] sm:%s145]
                %679 = vst [vmem:[%s153 + $0x830] sm:%s145] %v678
                %v680 = vld [vmem:[%s152 + $0xef8] sm:%s145]
                %681 = vst [vmem:[%s153 + $0x838] sm:%s145] %v680
                %v682 = vld [vmem:[%s152 + $0xf00] sm:%s145]
                %683 = vst [vmem:[%s153 + $0x840] sm:%s145] %v682
                %v684 = vld [vmem:[%s152 + $0xf08] sm:%s145]
                %685 = vst [vmem:[%s153 + $0x848] sm:%s145] %v684
                %v686 = vld [vmem:[%s152 + $0xf10] sm:%s145]
                %687 = vst [vmem:[%s153 + $0x850] sm:%s145] %v686
                %v688 = vld [vmem:[%s152 + $0xf18] sm:%s145]
                %689 = vst [vmem:[%s153 + $0x858] sm:%s145] %v688
                %v690 = vld [vmem:[%s152 + $0xf20] sm:%s145]
                %691 = vst [vmem:[%s153 + $0x860] sm:%s145] %v690
                %v692 = vld [vmem:[%s152 + $0xf28] sm:%s145]
                %693 = vst [vmem:[%s153 + $0x868] sm:%s145] %v692
                %v694 = vld [vmem:[%s152 + $0xf30] sm:%s145]
                %695 = vst [vmem:[%s153 + $0x870] sm:%s145] %v694
                %v696 = vld [vmem:[%s152 + $0xf38] sm:%s145]
                %697 = vst [vmem:[%s153 + $0x878] sm:%s145] %v696
                %v698 = vld [vmem:[%s152 + $0xf40] sm:%s145]
                %699 = vst [vmem:[%s153 + $0x880] sm:%s145] %v698
                %v700 = vld [vmem:[%s152 + $0xf48] sm:%s145]
                %701 = vst [vmem:[%s153 + $0x888] sm:%s145] %v700
                %v702 = vld [vmem:[%s152 + $0xf50] sm:%s145]
                %703 = vst [vmem:[%s153 + $0x890] sm:%s145] %v702
                %v704 = vld [vmem:[%s152 + $0xf58] sm:%s145]
                %705 = vst [vmem:[%s153 + $0x898] sm:%s145] %v704
                %v706 = vld [vmem:[%s152 + $0xf60] sm:%s145]
                %707 = vst [vmem:[%s153 + $0x8a0] sm:%s145] %v706
                %v708 = vld [vmem:[%s152 + $0xf68] sm:%s145]
                %709 = vst [vmem:[%s153 + $0x8a8] sm:%s145] %v708
                %v710 = vld [vmem:[%s152 + $0xf70] sm:%s145]
                %711 = vst [vmem:[%s153 + $0x8b0] sm:%s145] %v710
                %v712 = vld [vmem:[%s152 + $0xf78] sm:%s145]
                %713 = vst [vmem:[%s153 + $0x8b8] sm:%s145] %v712
                %v714 = vld [vmem:[%s152 + $0xf80] sm:%s145]
                %715 = vst [vmem:[%s153 + $0x8c0] sm:%s145] %v714
                %v716 = vld [vmem:[%s152 + $0xf88] sm:%s145]
                %717 = vst [vmem:[%s153 + $0x8c8] sm:%s145] %v716
                %v718 = vld [vmem:[%s152 + $0xf90] sm:%s145]
                %719 = vst [vmem:[%s153 + $0x8d0] sm:%s145] %v718
                %v720 = vld [vmem:[%s152 + $0xf98] sm:%s145]
                %721 = vst [vmem:[%s153 + $0x8d8] sm:%s145] %v720
                %v722 = vld [vmem:[%s152 + $0xfa0] sm:%s145]
                %723 = vst [vmem:[%s153 + $0x8e0] sm:%s145] %v722
                %v724 = vld [vmem:[%s152 + $0xfa8] sm:%s145]
                %725 = vst [vmem:[%s153 + $0x8e8] sm:%s145] %v724
                %v726 = vld [vmem:[%s152 + $0xfb0] sm:%s145]
                %727 = vst [vmem:[%s153 + $0x8f0] sm:%s145] %v726
                %v728 = vld [vmem:[%s152 + $0xfb8] sm:%s145]
                %729 = vst [vmem:[%s153 + $0x8f8] sm:%s145] %v728
              $region45: #{combine_forward.3} parent=39 // loop_footer
                %s151 = sadd.s32 1, %s147
              $region46: #{combine_forward.3} parent=39 // loop_footer_branch
                %146 = sbr.rel target = $region42
              $region47: #{combine_forward.3} parent=39 // loop_exit
                _
            $region40: #{combine_forward.3} parent=31 // pred_fallthru
              _
          $region32: #{combine_forward.3} parent=27 // pred_fallthru
            _
          %2506 = vnop
        $region28: #{combine_forward.3} parent=23 // pred_fallthru
          _
      $region24: #{combine_forward.3} parent=5 // pred_fallthru
        _
      %p2507 = scmp.le.s32.totalorder 1, %s9
      %p2508 = scmp.lt.s32.totalorder %s9, 3
      %p2509 = pnand %p2507, %p2508
      %p2510 = pneg %p2509
      // Predicated region
      $region77: #{combine_forward.3} parent=5 // pred_check
        _
      $region78: #{combine_forward.3} parent=5 // pred_check_branch
        %2512 = sbr.rel (%p2509) target = $region80
      $region79: #{combine_forward.3} parent=5 // pred_region
        %s2513 = ssub.s32 %s9, 1
        %s2514 = sand.u32 %s22, 1
        %s2515 = sand.u32 %s22, 1
        %s2516 = smul.addr %s2515, 2304
        %s2517 = scalar_lea.vmem [#allocation2], %s2516
        // Predicated region
        $region81: #{combine_forward.3} parent=79 // pred_check
          %p2518 = pneg %p35
        $region82: #{combine_forward.3} parent=79 // pred_check_branch
          %2520 = sbr.rel (%p2518) target = $region84
        $region83: #{combine_forward.3} parent=79 // pred_region
          _
        $region84: #{combine_forward.3} parent=79 // pred_fallthru
          _
        %s2521 = sand.u32 %s22, 1
        %s2522 = sand.u32 %s22, 1
        %s2523 = smul.addr %s2522, 2304
        %s2524 = scalar_lea.vmem [#allocation2], %s2523
        %p2525 = pneg %p35
        %p2526 = pneg %p32
        %p2527 = pneg %p56
        %p2528 = pneg %p53
        %p2529 = pneg %p77
        %p2530 = pneg %p74
        %p2531 = pneg %p103
        %p2532 = pneg %p100
        %s2533 = smul.u32 72, %s14
        %p2534 = scmp.lt.s32.totalorder %s2533, 143
        %s2535 = scalar_select %p2534, %s2533, 143
        %s2536 = smul.addr %s2535, 8
        %s2537 = scalar_lea.vmem %s3, %s2536
        %s2538 = smul.u32 72, %s14
        %s2539 = smul.u32 72, %s14
        %p2540 = scmp.lt.s32.totalorder %s2539, 143
        %s2541 = scalar_select %p2540, %s2539, 143
        %s2542 = smul.addr %s2541, 8
        %s2543 = scalar_lea.vmem %s3, %s2542
        %s2544 = smul.u32 72, %s14
        %v2545 = vld [vmem:[%s2517] sm:$0xff]
        %v2546 = vld [vmem:[%s2517 + $0x8] sm:$0xff]
        %v2547 = vld [vmem:[%s2517 + $0x10] sm:$0xff]
        %v2548 = vld [vmem:[%s2517 + $0x18] sm:$0xff]
        %v2549 = vld [vmem:[%s2517 + $0x20] sm:$0xff]
        %v2550 = vld [vmem:[%s2517 + $0x28] sm:$0xff]
        %v2551 = vld [vmem:[%s2517 + $0x30] sm:$0xff]
        %v2552 = vld [vmem:[%s2517 + $0x38] sm:$0xff]
        %v2553 = vld [vmem:[%s2517 + $0x40] sm:$0xff]
        %v2554 = vld [vmem:[%s2517 + $0x48] sm:$0xff]
        %v2555 = vld [vmem:[%s2517 + $0x50] sm:$0xff]
        %v2556 = vld [vmem:[%s2517 + $0x58] sm:$0xff]
        %v2557 = vld [vmem:[%s2517 + $0x60] sm:$0xff]
        %v2558 = vld [vmem:[%s2517 + $0x68] sm:$0xff]
        %v2559 = vld [vmem:[%s2517 + $0x70] sm:$0xff]
        %v2560 = vld [vmem:[%s2517 + $0x78] sm:$0xff]
        %v2561 = vld [vmem:[%s2517 + $0x80] sm:$0xff]
        %v2562 = vld [vmem:[%s2517 + $0x88] sm:$0xff]
        %v2563 = vld [vmem:[%s2517 + $0x90] sm:$0xff]
        %v2564 = vld [vmem:[%s2517 + $0x98] sm:$0xff]
        %v2565 = vld [vmem:[%s2517 + $0xa0] sm:$0xff]
        %v2566 = vld [vmem:[%s2517 + $0xa8] sm:$0xff]
        %v2567 = vld [vmem:[%s2517 + $0xb0] sm:$0xff]
        %v2568 = vld [vmem:[%s2517 + $0xb8] sm:$0xff]
        %v2569 = vld [vmem:[%s2517 + $0xc0] sm:$0xff]
        %v2570 = vld [vmem:[%s2517 + $0xc8] sm:$0xff]
        %v2571 = vld [vmem:[%s2517 + $0xd0] sm:$0xff]
        %v2572 = vld [vmem:[%s2517 + $0xd8] sm:$0xff]
        %v2573 = vld [vmem:[%s2517 + $0xe0] sm:$0xff]
        %v2574 = vld [vmem:[%s2517 + $0xe8] sm:$0xff]
        %v2575 = vld [vmem:[%s2517 + $0xf0] sm:$0xff]
        %v2576 = vld [vmem:[%s2517 + $0xf8] sm:$0xff]
        %v2577 = vld [vmem:[%s2517 + $0x100] sm:$0xff]
        %v2578 = vld [vmem:[%s2517 + $0x108] sm:$0xff]
        %v2579 = vld [vmem:[%s2517 + $0x110] sm:$0xff]
        %v2580 = vld [vmem:[%s2517 + $0x118] sm:$0xff]
        %v2581 = vld [vmem:[%s2517 + $0x120] sm:$0xff]
        %v2582 = vld [vmem:[%s2517 + $0x128] sm:$0xff]
        %v2583 = vld [vmem:[%s2517 + $0x130] sm:$0xff]
        %v2584 = vld [vmem:[%s2517 + $0x138] sm:$0xff]
        %v2585 = vld [vmem:[%s2517 + $0x140] sm:$0xff]
        %v2586 = vld [vmem:[%s2517 + $0x148] sm:$0xff]
        %v2587 = vld [vmem:[%s2517 + $0x150] sm:$0xff]
        %v2588 = vld [vmem:[%s2517 + $0x158] sm:$0xff]
        %v2589 = vld [vmem:[%s2517 + $0x160] sm:$0xff]
        %v2590 = vld [vmem:[%s2517 + $0x168] sm:$0xff]
        %v2591 = vld [vmem:[%s2517 + $0x170] sm:$0xff]
        %v2592 = vld [vmem:[%s2517 + $0x178] sm:$0xff]
        %v2593 = vld [vmem:[%s2517 + $0x180] sm:$0xff]
        %v2594 = vld [vmem:[%s2517 + $0x188] sm:$0xff]
        %v2595 = vld [vmem:[%s2517 + $0x190] sm:$0xff]
        %v2596 = vld [vmem:[%s2517 + $0x198] sm:$0xff]
        %v2597 = vld [vmem:[%s2517 + $0x1a0] sm:$0xff]
        %v2598 = vld [vmem:[%s2517 + $0x1a8] sm:$0xff]
        %v2599 = vld [vmem:[%s2517 + $0x1b0] sm:$0xff]
        %v2600 = vld [vmem:[%s2517 + $0x1b8] sm:$0xff]
        %v2601 = vld [vmem:[%s2517 + $0x1c0] sm:$0xff]
        %v2602 = vld [vmem:[%s2517 + $0x1c8] sm:$0xff]
        %v2603 = vld [vmem:[%s2517 + $0x1d0] sm:$0xff]
        %v2604 = vld [vmem:[%s2517 + $0x1d8] sm:$0xff]
        %v2605 = vld [vmem:[%s2517 + $0x1e0] sm:$0xff]
        %v2606 = vld [vmem:[%s2517 + $0x1e8] sm:$0xff]
        %v2607 = vld [vmem:[%s2517 + $0x1f0] sm:$0xff]
        %v2608 = vld [vmem:[%s2517 + $0x1f8] sm:$0xff]
        %v2609 = vld [vmem:[%s2517 + $0x200] sm:$0xff]
        %v2610 = vld [vmem:[%s2517 + $0x208] sm:$0xff]
        %v2611 = vld [vmem:[%s2517 + $0x210] sm:$0xff]
        %v2612 = vld [vmem:[%s2517 + $0x218] sm:$0xff]
        %v2613 = vld [vmem:[%s2517 + $0x220] sm:$0xff]
        %v2614 = vld [vmem:[%s2517 + $0x228] sm:$0xff]
        %v2615 = vld [vmem:[%s2517 + $0x230] sm:$0xff]
        %v2616 = vld [vmem:[%s2517 + $0x238] sm:$0xff]
        %v2617 = vld [vmem:[%s2517 + $0x240] sm:$0xff]
        %v2618 = vld [vmem:[%s2517 + $0x248] sm:$0xff]
        %v2619 = vld [vmem:[%s2517 + $0x250] sm:$0xff]
        %v2620 = vld [vmem:[%s2517 + $0x258] sm:$0xff]
        %v2621 = vld [vmem:[%s2517 + $0x260] sm:$0xff]
        %v2622 = vld [vmem:[%s2517 + $0x268] sm:$0xff]
        %v2623 = vld [vmem:[%s2517 + $0x270] sm:$0xff]
        %v2624 = vld [vmem:[%s2517 + $0x278] sm:$0xff]
        %v2625 = vld [vmem:[%s2517 + $0x280] sm:$0xff]
        %v2626 = vld [vmem:[%s2517 + $0x288] sm:$0xff]
        %v2627 = vld [vmem:[%s2517 + $0x290] sm:$0xff]
        %v2628 = vld [vmem:[%s2517 + $0x298] sm:$0xff]
        %v2629 = vld [vmem:[%s2517 + $0x2a0] sm:$0xff]
        %v2630 = vld [vmem:[%s2517 + $0x2a8] sm:$0xff]
        %v2631 = vld [vmem:[%s2517 + $0x2b0] sm:$0xff]
        %v2632 = vld [vmem:[%s2517 + $0x2b8] sm:$0xff]
        %v2633 = vld [vmem:[%s2517 + $0x2c0] sm:$0xff]
        %v2634 = vld [vmem:[%s2517 + $0x2c8] sm:$0xff]
        %v2635 = vld [vmem:[%s2517 + $0x2d0] sm:$0xff]
        %v2636 = vld [vmem:[%s2517 + $0x2d8] sm:$0xff]
        %v2637 = vld [vmem:[%s2517 + $0x2e0] sm:$0xff]
        %v2638 = vld [vmem:[%s2517 + $0x2e8] sm:$0xff]
        %v2639 = vld [vmem:[%s2517 + $0x2f0] sm:$0xff]
        %v2640 = vld [vmem:[%s2517 + $0x2f8] sm:$0xff]
        %v2641 = vld [vmem:[%s2517 + $0x300] sm:$0xff]
        %v2642 = vld [vmem:[%s2517 + $0x308] sm:$0xff]
        %v2643 = vld [vmem:[%s2517 + $0x310] sm:$0xff]
        %v2644 = vld [vmem:[%s2517 + $0x318] sm:$0xff]
        %v2645 = vld [vmem:[%s2517 + $0x320] sm:$0xff]
        %v2646 = vld [vmem:[%s2517 + $0x328] sm:$0xff]
        %v2647 = vld [vmem:[%s2517 + $0x330] sm:$0xff]
        %v2648 = vld [vmem:[%s2517 + $0x338] sm:$0xff]
        %v2649 = vld [vmem:[%s2517 + $0x340] sm:$0xff]
        %v2650 = vld [vmem:[%s2517 + $0x348] sm:$0xff]
        %v2651 = vld [vmem:[%s2517 + $0x350] sm:$0xff]
        %v2652 = vld [vmem:[%s2517 + $0x358] sm:$0xff]
        %v2653 = vld [vmem:[%s2517 + $0x360] sm:$0xff]
        %v2654 = vld [vmem:[%s2517 + $0x368] sm:$0xff]
        %v2655 = vld [vmem:[%s2517 + $0x370] sm:$0xff]
        %v2656 = vld [vmem:[%s2517 + $0x378] sm:$0xff]
        %v2657 = vld [vmem:[%s2517 + $0x380] sm:$0xff]
        %v2658 = vld [vmem:[%s2517 + $0x388] sm:$0xff]
        %v2659 = vld [vmem:[%s2517 + $0x390] sm:$0xff]
        %v2660 = vld [vmem:[%s2517 + $0x398] sm:$0xff]
        %v2661 = vld [vmem:[%s2517 + $0x3a0] sm:$0xff]
        %v2662 = vld [vmem:[%s2517 + $0x3a8] sm:$0xff]
        %v2663 = vld [vmem:[%s2517 + $0x3b0] sm:$0xff]
        %v2664 = vld [vmem:[%s2517 + $0x3b8] sm:$0xff]
        %v2665 = vld [vmem:[%s2517 + $0x3c0] sm:$0xff]
        %v2666 = vld [vmem:[%s2517 + $0x3c8] sm:$0xff]
        %v2667 = vld [vmem:[%s2517 + $0x3d0] sm:$0xff]
        %v2668 = vld [vmem:[%s2517 + $0x3d8] sm:$0xff]
        %v2669 = vld [vmem:[%s2517 + $0x3e0] sm:$0xff]
        %v2670 = vld [vmem:[%s2517 + $0x3e8] sm:$0xff]
        %v2671 = vld [vmem:[%s2517 + $0x3f0] sm:$0xff]
        %v2672 = vld [vmem:[%s2517 + $0x3f8] sm:$0xff]
        %v2673 = vld [vmem:[%s2517 + $0x400] sm:$0xff]
        %v2674 = vld [vmem:[%s2517 + $0x408] sm:$0xff]
        %v2675 = vld [vmem:[%s2517 + $0x410] sm:$0xff]
        %v2676 = vld [vmem:[%s2517 + $0x418] sm:$0xff]
        %v2677 = vld [vmem:[%s2517 + $0x420] sm:$0xff]
        %v2678 = vld [vmem:[%s2517 + $0x428] sm:$0xff]
        %v2679 = vld [vmem:[%s2517 + $0x430] sm:$0xff]
        %v2680 = vld [vmem:[%s2517 + $0x438] sm:$0xff]
        %v2681 = vld [vmem:[%s2517 + $0x440] sm:$0xff]
        %v2682 = vld [vmem:[%s2517 + $0x448] sm:$0xff]
        %v2683 = vld [vmem:[%s2517 + $0x450] sm:$0xff]
        %v2684 = vld [vmem:[%s2517 + $0x458] sm:$0xff]
        %v2685 = vld [vmem:[%s2517 + $0x460] sm:$0xff]
        %v2686 = vld [vmem:[%s2517 + $0x468] sm:$0xff]
        %v2687 = vld [vmem:[%s2517 + $0x470] sm:$0xff]
        %v2688 = vld [vmem:[%s2517 + $0x478] sm:$0xff]
        %v2689 = vld [vmem:[%s2517 + $0x480] sm:$0xff]
        %v2690 = vld [vmem:[%s2517 + $0x488] sm:$0xff]
        %v2691 = vld [vmem:[%s2517 + $0x490] sm:$0xff]
        %v2692 = vld [vmem:[%s2517 + $0x498] sm:$0xff]
        %v2693 = vld [vmem:[%s2517 + $0x4a0] sm:$0xff]
        %v2694 = vld [vmem:[%s2517 + $0x4a8] sm:$0xff]
        %v2695 = vld [vmem:[%s2517 + $0x4b0] sm:$0xff]
        %v2696 = vld [vmem:[%s2517 + $0x4b8] sm:$0xff]
        %v2697 = vld [vmem:[%s2517 + $0x4c0] sm:$0xff]
        %v2698 = vld [vmem:[%s2517 + $0x4c8] sm:$0xff]
        %v2699 = vld [vmem:[%s2517 + $0x4d0] sm:$0xff]
        %v2700 = vld [vmem:[%s2517 + $0x4d8] sm:$0xff]
        %v2701 = vld [vmem:[%s2517 + $0x4e0] sm:$0xff]
        %v2702 = vld [vmem:[%s2517 + $0x4e8] sm:$0xff]
        %v2703 = vld [vmem:[%s2517 + $0x4f0] sm:$0xff]
        %v2704 = vld [vmem:[%s2517 + $0x4f8] sm:$0xff]
        %v2705 = vld [vmem:[%s2517 + $0x500] sm:$0xff]
        %v2706 = vld [vmem:[%s2517 + $0x508] sm:$0xff]
        %v2707 = vld [vmem:[%s2517 + $0x510] sm:$0xff]
        %v2708 = vld [vmem:[%s2517 + $0x518] sm:$0xff]
        %v2709 = vld [vmem:[%s2517 + $0x520] sm:$0xff]
        %v2710 = vld [vmem:[%s2517 + $0x528] sm:$0xff]
        %v2711 = vld [vmem:[%s2517 + $0x530] sm:$0xff]
        %v2712 = vld [vmem:[%s2517 + $0x538] sm:$0xff]
        %v2713 = vld [vmem:[%s2517 + $0x540] sm:$0xff]
        %v2714 = vld [vmem:[%s2517 + $0x548] sm:$0xff]
        %v2715 = vld [vmem:[%s2517 + $0x550] sm:$0xff]
        %v2716 = vld [vmem:[%s2517 + $0x558] sm:$0xff]
        %v2717 = vld [vmem:[%s2517 + $0x560] sm:$0xff]
        %v2718 = vld [vmem:[%s2517 + $0x568] sm:$0xff]
        %v2719 = vld [vmem:[%s2517 + $0x570] sm:$0xff]
        %v2720 = vld [vmem:[%s2517 + $0x578] sm:$0xff]
        %v2721 = vld [vmem:[%s2517 + $0x580] sm:$0xff]
        %v2722 = vld [vmem:[%s2517 + $0x588] sm:$0xff]
        %v2723 = vld [vmem:[%s2517 + $0x590] sm:$0xff]
        %v2724 = vld [vmem:[%s2517 + $0x598] sm:$0xff]
        %v2725 = vld [vmem:[%s2517 + $0x5a0] sm:$0xff]
        %v2726 = vld [vmem:[%s2517 + $0x5a8] sm:$0xff]
        %v2727 = vld [vmem:[%s2517 + $0x5b0] sm:$0xff]
        %v2728 = vld [vmem:[%s2517 + $0x5b8] sm:$0xff]
        %v2729 = vld [vmem:[%s2517 + $0x5c0] sm:$0xff]
        %v2730 = vld [vmem:[%s2517 + $0x5c8] sm:$0xff]
        %v2731 = vld [vmem:[%s2517 + $0x5d0] sm:$0xff]
        %v2732 = vld [vmem:[%s2517 + $0x5d8] sm:$0xff]
        %v2733 = vld [vmem:[%s2517 + $0x5e0] sm:$0xff]
        %v2734 = vld [vmem:[%s2517 + $0x5e8] sm:$0xff]
        %v2735 = vld [vmem:[%s2517 + $0x5f0] sm:$0xff]
        %v2736 = vld [vmem:[%s2517 + $0x5f8] sm:$0xff]
        %v2737 = vld [vmem:[%s2517 + $0x600] sm:$0xff]
        %v2738 = vld [vmem:[%s2517 + $0x608] sm:$0xff]
        %v2739 = vld [vmem:[%s2517 + $0x610] sm:$0xff]
        %v2740 = vld [vmem:[%s2517 + $0x618] sm:$0xff]
        %v2741 = vld [vmem:[%s2517 + $0x620] sm:$0xff]
        %v2742 = vld [vmem:[%s2517 + $0x628] sm:$0xff]
        %v2743 = vld [vmem:[%s2517 + $0x630] sm:$0xff]
        %v2744 = vld [vmem:[%s2517 + $0x638] sm:$0xff]
        %v2745 = vld [vmem:[%s2517 + $0x640] sm:$0xff]
        %v2746 = vld [vmem:[%s2517 + $0x648] sm:$0xff]
        %v2747 = vld [vmem:[%s2517 + $0x650] sm:$0xff]
        %v2748 = vld [vmem:[%s2517 + $0x658] sm:$0xff]
        %v2749 = vld [vmem:[%s2517 + $0x660] sm:$0xff]
        %v2750 = vld [vmem:[%s2517 + $0x668] sm:$0xff]
        %v2751 = vld [vmem:[%s2517 + $0x670] sm:$0xff]
        %v2752 = vld [vmem:[%s2517 + $0x678] sm:$0xff]
        %v2753 = vld [vmem:[%s2517 + $0x680] sm:$0xff]
        %v2754 = vld [vmem:[%s2517 + $0x688] sm:$0xff]
        %v2755 = vld [vmem:[%s2517 + $0x690] sm:$0xff]
        %v2756 = vld [vmem:[%s2517 + $0x698] sm:$0xff]
        %v2757 = vld [vmem:[%s2517 + $0x6a0] sm:$0xff]
        %v2758 = vld [vmem:[%s2517 + $0x6a8] sm:$0xff]
        %v2759 = vld [vmem:[%s2517 + $0x6b0] sm:$0xff]
        %v2760 = vld [vmem:[%s2517 + $0x6b8] sm:$0xff]
        %v2761 = vld [vmem:[%s2517 + $0x6c0] sm:$0xff]
        %v2762 = vld [vmem:[%s2517 + $0x6c8] sm:$0xff]
        %v2763 = vld [vmem:[%s2517 + $0x6d0] sm:$0xff]
        %v2764 = vld [vmem:[%s2517 + $0x6d8] sm:$0xff]
        %v2765 = vld [vmem:[%s2517 + $0x6e0] sm:$0xff]
        %v2766 = vld [vmem:[%s2517 + $0x6e8] sm:$0xff]
        %v2767 = vld [vmem:[%s2517 + $0x6f0] sm:$0xff]
        %v2768 = vld [vmem:[%s2517 + $0x6f8] sm:$0xff]
        %v2769 = vld [vmem:[%s2517 + $0x700] sm:$0xff]
        %v2770 = vld [vmem:[%s2517 + $0x708] sm:$0xff]
        %v2771 = vld [vmem:[%s2517 + $0x710] sm:$0xff]
        %v2772 = vld [vmem:[%s2517 + $0x718] sm:$0xff]
        %v2773 = vld [vmem:[%s2517 + $0x720] sm:$0xff]
        %v2774 = vld [vmem:[%s2517 + $0x728] sm:$0xff]
        %v2775 = vld [vmem:[%s2517 + $0x730] sm:$0xff]
        %v2776 = vld [vmem:[%s2517 + $0x738] sm:$0xff]
        %v2777 = vld [vmem:[%s2517 + $0x740] sm:$0xff]
        %v2778 = vld [vmem:[%s2517 + $0x748] sm:$0xff]
        %v2779 = vld [vmem:[%s2517 + $0x750] sm:$0xff]
        %v2780 = vld [vmem:[%s2517 + $0x758] sm:$0xff]
        %v2781 = vld [vmem:[%s2517 + $0x760] sm:$0xff]
        %v2782 = vld [vmem:[%s2517 + $0x768] sm:$0xff]
        %v2783 = vld [vmem:[%s2517 + $0x770] sm:$0xff]
        %v2784 = vld [vmem:[%s2517 + $0x778] sm:$0xff]
        %v2785 = vld [vmem:[%s2517 + $0x780] sm:$0xff]
        %v2786 = vld [vmem:[%s2517 + $0x788] sm:$0xff]
        %v2787 = vld [vmem:[%s2517 + $0x790] sm:$0xff]
        %v2788 = vld [vmem:[%s2517 + $0x798] sm:$0xff]
        %v2789 = vld [vmem:[%s2517 + $0x7a0] sm:$0xff]
        %v2790 = vld [vmem:[%s2517 + $0x7a8] sm:$0xff]
        %v2791 = vld [vmem:[%s2517 + $0x7b0] sm:$0xff]
        %v2792 = vld [vmem:[%s2517 + $0x7b8] sm:$0xff]
        %v2793 = vld [vmem:[%s2517 + $0x7c0] sm:$0xff]
        %v2794 = vld [vmem:[%s2517 + $0x7c8] sm:$0xff]
        %v2795 = vld [vmem:[%s2517 + $0x7d0] sm:$0xff]
        %v2796 = vld [vmem:[%s2517 + $0x7d8] sm:$0xff]
        %v2797 = vld [vmem:[%s2517 + $0x7e0] sm:$0xff]
        %v2798 = vld [vmem:[%s2517 + $0x7e8] sm:$0xff]
        %v2799 = vld [vmem:[%s2517 + $0x7f0] sm:$0xff]
        %v2800 = vld [vmem:[%s2517 + $0x7f8] sm:$0xff]
        %v2801 = vld [vmem:[%s2517 + $0x800] sm:$0xff]
        %v2802 = vld [vmem:[%s2517 + $0x808] sm:$0xff]
        %v2803 = vld [vmem:[%s2517 + $0x810] sm:$0xff]
        %v2804 = vld [vmem:[%s2517 + $0x818] sm:$0xff]
        %v2805 = vld [vmem:[%s2517 + $0x820] sm:$0xff]
        %v2806 = vld [vmem:[%s2517 + $0x828] sm:$0xff]
        %v2807 = vld [vmem:[%s2517 + $0x830] sm:$0xff]
        %v2808 = vld [vmem:[%s2517 + $0x838] sm:$0xff]
        %v2809 = vld [vmem:[%s2517 + $0x840] sm:$0xff]
        %v2810 = vld [vmem:[%s2517 + $0x848] sm:$0xff]
        %v2811 = vld [vmem:[%s2517 + $0x850] sm:$0xff]
        %v2812 = vld [vmem:[%s2517 + $0x858] sm:$0xff]
        %v2813 = vld [vmem:[%s2517 + $0x860] sm:$0xff]
        %v2814 = vld [vmem:[%s2517 + $0x868] sm:$0xff]
        %v2815 = vld [vmem:[%s2517 + $0x870] sm:$0xff]
        %v2816 = vld [vmem:[%s2517 + $0x878] sm:$0xff]
        %v2817 = vld [vmem:[%s2517 + $0x880] sm:$0xff]
        %v2818 = vld [vmem:[%s2517 + $0x888] sm:$0xff]
        %v2819 = vld [vmem:[%s2517 + $0x890] sm:$0xff]
        %v2820 = vld [vmem:[%s2517 + $0x898] sm:$0xff]
        %v2821 = vld [vmem:[%s2517 + $0x8a0] sm:$0xff]
        %v2822 = vld [vmem:[%s2517 + $0x8a8] sm:$0xff]
        %v2823 = vld [vmem:[%s2517 + $0x8b0] sm:$0xff]
        %v2824 = vld [vmem:[%s2517 + $0x8b8] sm:$0xff]
        %v2825 = vld [vmem:[%s2517 + $0x8c0] sm:$0xff]
        %v2826 = vld [vmem:[%s2517 + $0x8c8] sm:$0xff]
        %v2827 = vld [vmem:[%s2517 + $0x8d0] sm:$0xff]
        %v2828 = vld [vmem:[%s2517 + $0x8d8] sm:$0xff]
        %v2829 = vld [vmem:[%s2517 + $0x8e0] sm:$0xff]
        %v2830 = vld [vmem:[%s2517 + $0x8e8] sm:$0xff]
        %v2831 = vld [vmem:[%s2517 + $0x8f0] sm:$0xff]
        %v2832 = vld [vmem:[%s2517 + $0x8f8] sm:$0xff]
        %v2833 = vld [vmem:[%s1] sm:$0xff]
        %v2834 = vld [vmem:[%s1 + $0x8] sm:$0xff]
        %v2835 = vld [vmem:[%s1 + $0x10] sm:$0xff]
        %v2836 = vld [vmem:[%s1 + $0x18] sm:$0xff]
        %vm2837 = vcmask 261120
        %v2839 = vsel %vm2837, %v2545, 0
        %v2842 = vsel %vm2837, %v2546, 0
        %v2845 = vsel %vm2837, %v2547, 0
        %v2848 = vsel %vm2837, %v2548, 0
        %v2851 = vsel %vm2837, %v2549, 0
        %v2854 = vsel %vm2837, %v2550, 0
        %v2857 = vsel %vm2837, %v2551, 0
        %v2860 = vsel %vm2837, %v2552, 0
        %v2863 = vsel %vm2837, %v2553, 0
        %v2866 = vsel %vm2837, %v2554, 0
        %v2869 = vsel %vm2837, %v2555, 0
        %v2872 = vsel %vm2837, %v2556, 0
        %v2875 = vsel %vm2837, %v2557, 0
        %v2878 = vsel %vm2837, %v2558, 0
        %v2881 = vsel %vm2837, %v2559, 0
        %v2884 = vsel %vm2837, %v2560, 0
        %v2887 = vsel %vm2837, %v2561, 0
        %v2890 = vsel %vm2837, %v2562, 0
        %v2893 = vsel %vm2837, %v2563, 0
        %v2896 = vsel %vm2837, %v2564, 0
        %v2899 = vsel %vm2837, %v2565, 0
        %v2902 = vsel %vm2837, %v2566, 0
        %v2905 = vsel %vm2837, %v2567, 0
        %v2908 = vsel %vm2837, %v2568, 0
        %v2911 = vsel %vm2837, %v2569, 0
        %v2914 = vsel %vm2837, %v2570, 0
        %v2917 = vsel %vm2837, %v2571, 0
        %v2920 = vsel %vm2837, %v2572, 0
        %v2923 = vsel %vm2837, %v2573, 0
        %v2926 = vsel %vm2837, %v2574, 0
        %v2929 = vsel %vm2837, %v2575, 0
        %v2932 = vsel %vm2837, %v2576, 0
        %v2935 = vsel %vm2837, %v2577, 0
        %v2938 = vsel %vm2837, %v2578, 0
        %v2941 = vsel %vm2837, %v2579, 0
        %v2944 = vsel %vm2837, %v2580, 0
        %v2947 = vsel %vm2837, %v2581, 0
        %v2950 = vsel %vm2837, %v2582, 0
        %v2953 = vsel %vm2837, %v2583, 0
        %v2956 = vsel %vm2837, %v2584, 0
        %v2959 = vsel %vm2837, %v2585, 0
        %v2962 = vsel %vm2837, %v2586, 0
        %v2965 = vsel %vm2837, %v2587, 0
        %v2968 = vsel %vm2837, %v2588, 0
        %v2971 = vsel %vm2837, %v2589, 0
        %v2974 = vsel %vm2837, %v2590, 0
        %v2977 = vsel %vm2837, %v2591, 0
        %v2980 = vsel %vm2837, %v2592, 0
        %v2983 = vsel %vm2837, %v2593, 0
        %v2986 = vsel %vm2837, %v2594, 0
        %v2989 = vsel %vm2837, %v2595, 0
        %v2992 = vsel %vm2837, %v2596, 0
        %v2995 = vsel %vm2837, %v2597, 0
        %v2998 = vsel %vm2837, %v2598, 0
        %v3001 = vsel %vm2837, %v2599, 0
        %v3004 = vsel %vm2837, %v2600, 0
        %v3007 = vsel %vm2837, %v2601, 0
        %v3010 = vsel %vm2837, %v2602, 0
        %v3013 = vsel %vm2837, %v2603, 0
        %v3016 = vsel %vm2837, %v2604, 0
        %v3019 = vsel %vm2837, %v2605, 0
        %v3022 = vsel %vm2837, %v2606, 0
        %v3025 = vsel %vm2837, %v2607, 0
        %v3028 = vsel %vm2837, %v2608, 0
        %v3031 = vsel %vm2837, %v2609, 0
        %v3034 = vsel %vm2837, %v2610, 0
        %v3037 = vsel %vm2837, %v2611, 0
        %v3040 = vsel %vm2837, %v2612, 0
        %v3043 = vsel %vm2837, %v2613, 0
        %v3046 = vsel %vm2837, %v2614, 0
        %v3049 = vsel %vm2837, %v2615, 0
        %v3052 = vsel %vm2837, %v2616, 0
        %v3055 = vsel %vm2837, %v2617, 0
        %v3058 = vsel %vm2837, %v2618, 0
        %v3061 = vsel %vm2837, %v2619, 0
        %v3064 = vsel %vm2837, %v2620, 0
        %v3067 = vsel %vm2837, %v2621, 0
        %v3070 = vsel %vm2837, %v2622, 0
        %v3073 = vsel %vm2837, %v2623, 0
        %v3076 = vsel %vm2837, %v2624, 0
        %v3079 = vsel %vm2837, %v2625, 0
        %v3082 = vsel %vm2837, %v2626, 0
        %v3085 = vsel %vm2837, %v2627, 0
        %v3088 = vsel %vm2837, %v2628, 0
        %v3091 = vsel %vm2837, %v2629, 0
        %v3094 = vsel %vm2837, %v2630, 0
        %v3097 = vsel %vm2837, %v2631, 0
        %v3100 = vsel %vm2837, %v2632, 0
        %v3103 = vsel %vm2837, %v2633, 0
        %v3106 = vsel %vm2837, %v2634, 0
        %v3109 = vsel %vm2837, %v2635, 0
        %v3112 = vsel %vm2837, %v2636, 0
        %v3115 = vsel %vm2837, %v2637, 0
        %v3118 = vsel %vm2837, %v2638, 0
        %v3121 = vsel %vm2837, %v2639, 0
        %v3124 = vsel %vm2837, %v2640, 0
        %v3127 = vsel %vm2837, %v2641, 0
        %v3130 = vsel %vm2837, %v2642, 0
        %v3133 = vsel %vm2837, %v2643, 0
        %v3136 = vsel %vm2837, %v2644, 0
        %v3139 = vsel %vm2837, %v2645, 0
        %v3142 = vsel %vm2837, %v2646, 0
        %v3145 = vsel %vm2837, %v2647, 0
        %v3148 = vsel %vm2837, %v2648, 0
        %v3151 = vsel %vm2837, %v2649, 0
        %v3154 = vsel %vm2837, %v2650, 0
        %v3157 = vsel %vm2837, %v2651, 0
        %v3160 = vsel %vm2837, %v2652, 0
        %v3163 = vsel %vm2837, %v2653, 0
        %v3166 = vsel %vm2837, %v2654, 0
        %v3169 = vsel %vm2837, %v2655, 0
        %v3172 = vsel %vm2837, %v2656, 0
        %v3175 = vsel %vm2837, %v2657, 0
        %v3178 = vsel %vm2837, %v2658, 0
        %v3181 = vsel %vm2837, %v2659, 0
        %v3184 = vsel %vm2837, %v2660, 0
        %v3187 = vsel %vm2837, %v2661, 0
        %v3190 = vsel %vm2837, %v2662, 0
        %v3193 = vsel %vm2837, %v2663, 0
        %v3196 = vsel %vm2837, %v2664, 0
        %v3199 = vsel %vm2837, %v2665, 0
        %v3202 = vsel %vm2837, %v2666, 0
        %v3205 = vsel %vm2837, %v2667, 0
        %v3208 = vsel %vm2837, %v2668, 0
        %v3211 = vsel %vm2837, %v2669, 0
        %v3214 = vsel %vm2837, %v2670, 0
        %v3217 = vsel %vm2837, %v2671, 0
        %v3220 = vsel %vm2837, %v2672, 0
        %v3223 = vsel %vm2837, %v2673, 0
        %v3226 = vsel %vm2837, %v2674, 0
        %v3229 = vsel %vm2837, %v2675, 0
        %v3232 = vsel %vm2837, %v2676, 0
        %v3235 = vsel %vm2837, %v2677, 0
        %v3238 = vsel %vm2837, %v2678, 0
        %v3241 = vsel %vm2837, %v2679, 0
        %v3244 = vsel %vm2837, %v2680, 0
        %v3247 = vsel %vm2837, %v2681, 0
        %v3250 = vsel %vm2837, %v2682, 0
        %v3253 = vsel %vm2837, %v2683, 0
        %v3256 = vsel %vm2837, %v2684, 0
        %v3259 = vsel %vm2837, %v2685, 0
        %v3262 = vsel %vm2837, %v2686, 0
        %v3265 = vsel %vm2837, %v2687, 0
        %v3268 = vsel %vm2837, %v2688, 0
        %v3271 = vsel %vm2837, %v2689, 0
        %v3274 = vsel %vm2837, %v2690, 0
        %v3277 = vsel %vm2837, %v2691, 0
        %v3280 = vsel %vm2837, %v2692, 0
        %v3283 = vsel %vm2837, %v2693, 0
        %v3286 = vsel %vm2837, %v2694, 0
        %v3289 = vsel %vm2837, %v2695, 0
        %v3292 = vsel %vm2837, %v2696, 0
        %v3295 = vsel %vm2837, %v2697, 0
        %v3298 = vsel %vm2837, %v2698, 0
        %v3301 = vsel %vm2837, %v2699, 0
        %v3304 = vsel %vm2837, %v2700, 0
        %v3307 = vsel %vm2837, %v2701, 0
        %v3310 = vsel %vm2837, %v2702, 0
        %v3313 = vsel %vm2837, %v2703, 0
        %v3316 = vsel %vm2837, %v2704, 0
        %v3319 = vsel %vm2837, %v2705, 0
        %v3322 = vsel %vm2837, %v2706, 0
        %v3325 = vsel %vm2837, %v2707, 0
        %v3328 = vsel %vm2837, %v2708, 0
        %v3331 = vsel %vm2837, %v2709, 0
        %v3334 = vsel %vm2837, %v2710, 0
        %v3337 = vsel %vm2837, %v2711, 0
        %v3340 = vsel %vm2837, %v2712, 0
        %v3343 = vsel %vm2837, %v2713, 0
        %v3346 = vsel %vm2837, %v2714, 0
        %v3349 = vsel %vm2837, %v2715, 0
        %v3352 = vsel %vm2837, %v2716, 0
        %v3355 = vsel %vm2837, %v2717, 0
        %v3358 = vsel %vm2837, %v2718, 0
        %v3361 = vsel %vm2837, %v2719, 0
        %v3364 = vsel %vm2837, %v2720, 0
        %v3367 = vsel %vm2837, %v2721, 0
        %v3370 = vsel %vm2837, %v2722, 0
        %v3373 = vsel %vm2837, %v2723, 0
        %v3376 = vsel %vm2837, %v2724, 0
        %v3379 = vsel %vm2837, %v2725, 0
        %v3382 = vsel %vm2837, %v2726, 0
        %v3385 = vsel %vm2837, %v2727, 0
        %v3388 = vsel %vm2837, %v2728, 0
        %v3391 = vsel %vm2837, %v2729, 0
        %v3394 = vsel %vm2837, %v2730, 0
        %v3397 = vsel %vm2837, %v2731, 0
        %v3400 = vsel %vm2837, %v2732, 0
        %v3403 = vsel %vm2837, %v2733, 0
        %v3406 = vsel %vm2837, %v2734, 0
        %v3409 = vsel %vm2837, %v2735, 0
        %v3412 = vsel %vm2837, %v2736, 0
        %v3415 = vsel %vm2837, %v2737, 0
        %v3418 = vsel %vm2837, %v2738, 0
        %v3421 = vsel %vm2837, %v2739, 0
        %v3424 = vsel %vm2837, %v2740, 0
        %v3427 = vsel %vm2837, %v2741, 0
        %v3430 = vsel %vm2837, %v2742, 0
        %v3433 = vsel %vm2837, %v2743, 0
        %v3436 = vsel %vm2837, %v2744, 0
        %v3439 = vsel %vm2837, %v2745, 0
        %v3442 = vsel %vm2837, %v2746, 0
        %v3445 = vsel %vm2837, %v2747, 0
        %v3448 = vsel %vm2837, %v2748, 0
        %v3451 = vsel %vm2837, %v2749, 0
        %v3454 = vsel %vm2837, %v2750, 0
        %v3457 = vsel %vm2837, %v2751, 0
        %v3460 = vsel %vm2837, %v2752, 0
        %v3463 = vsel %vm2837, %v2753, 0
        %v3466 = vsel %vm2837, %v2754, 0
        %v3469 = vsel %vm2837, %v2755, 0
        %v3472 = vsel %vm2837, %v2756, 0
        %v3475 = vsel %vm2837, %v2757, 0
        %v3478 = vsel %vm2837, %v2758, 0
        %v3481 = vsel %vm2837, %v2759, 0
        %v3484 = vsel %vm2837, %v2760, 0
        %v3487 = vsel %vm2837, %v2761, 0
        %v3490 = vsel %vm2837, %v2762, 0
        %v3493 = vsel %vm2837, %v2763, 0
        %v3496 = vsel %vm2837, %v2764, 0
        %v3499 = vsel %vm2837, %v2765, 0
        %v3502 = vsel %vm2837, %v2766, 0
        %v3505 = vsel %vm2837, %v2767, 0
        %v3508 = vsel %vm2837, %v2768, 0
        %v3511 = vsel %vm2837, %v2769, 0
        %v3514 = vsel %vm2837, %v2770, 0
        %v3517 = vsel %vm2837, %v2771, 0
        %v3520 = vsel %vm2837, %v2772, 0
        %v3523 = vsel %vm2837, %v2773, 0
        %v3526 = vsel %vm2837, %v2774, 0
        %v3529 = vsel %vm2837, %v2775, 0
        %v3532 = vsel %vm2837, %v2776, 0
        %v3535 = vsel %vm2837, %v2777, 0
        %v3538 = vsel %vm2837, %v2778, 0
        %v3541 = vsel %vm2837, %v2779, 0
        %v3544 = vsel %vm2837, %v2780, 0
        %v3547 = vsel %vm2837, %v2781, 0
        %v3550 = vsel %vm2837, %v2782, 0
        %v3553 = vsel %vm2837, %v2783, 0
        %v3556 = vsel %vm2837, %v2784, 0
        %v3559 = vsel %vm2837, %v2785, 0
        %v3562 = vsel %vm2837, %v2786, 0
        %v3565 = vsel %vm2837, %v2787, 0
        %v3568 = vsel %vm2837, %v2788, 0
        %v3571 = vsel %vm2837, %v2789, 0
        %v3574 = vsel %vm2837, %v2790, 0
        %v3577 = vsel %vm2837, %v2791, 0
        %v3580 = vsel %vm2837, %v2792, 0
        %v3583 = vsel %vm2837, %v2793, 0
        %v3586 = vsel %vm2837, %v2794, 0
        %v3589 = vsel %vm2837, %v2795, 0
        %v3592 = vsel %vm2837, %v2796, 0
        %v3595 = vsel %vm2837, %v2797, 0
        %v3598 = vsel %vm2837, %v2798, 0
        %v3601 = vsel %vm2837, %v2799, 0
        %v3604 = vsel %vm2837, %v2800, 0
        %v3607 = vsel %vm2837, %v2801, 0
        %v3610 = vsel %vm2837, %v2802, 0
        %v3613 = vsel %vm2837, %v2803, 0
        %v3616 = vsel %vm2837, %v2804, 0
        %v3619 = vsel %vm2837, %v2805, 0
        %v3622 = vsel %vm2837, %v2806, 0
        %v3625 = vsel %vm2837, %v2807, 0
        %v3628 = vsel %vm2837, %v2808, 0
        %v3631 = vsel %vm2837, %v2809, 0
        %v3634 = vsel %vm2837, %v2810, 0
        %v3637 = vsel %vm2837, %v2811, 0
        %v3640 = vsel %vm2837, %v2812, 0
        %v3643 = vsel %vm2837, %v2813, 0
        %v3646 = vsel %vm2837, %v2814, 0
        %v3649 = vsel %vm2837, %v2815, 0
        %v3652 = vsel %vm2837, %v2816, 0
        %v3655 = vsel %vm2837, %v2817, 0
        %v3658 = vsel %vm2837, %v2818, 0
        %v3661 = vsel %vm2837, %v2819, 0
        %v3664 = vsel %vm2837, %v2820, 0
        %v3667 = vsel %vm2837, %v2821, 0
        %v3670 = vsel %vm2837, %v2822, 0
        %v3673 = vsel %vm2837, %v2823, 0
        %v3676 = vsel %vm2837, %v2824, 0
        %v3679 = vsel %vm2837, %v2825, 0
        %v3682 = vsel %vm2837, %v2826, 0
        %v3685 = vsel %vm2837, %v2827, 0
        %v3688 = vsel %vm2837, %v2828, 0
        %v3691 = vsel %vm2837, %v2829, 0
        %v3694 = vsel %vm2837, %v2830, 0
        %v3697 = vsel %vm2837, %v2831, 0
        %v3700 = vsel %vm2837, %v2832, 0
        %3702 = vmatpush.msra.mxu0 0.0
        %3703 = vmatpush.msra.mxu0 0.0
        %3704 = vmatpush.msra.mxu0 0.0
        %3705 = vmatpush.msra.mxu0 0.0
        %3706 = vmatpush.msra.mxu0 0.0
        %3707 = vmatpush.msra.mxu0 0.0
        %3708 = vmatpush.msra.mxu0 0.0
        %3709 = vmatpush.msra.mxu0 0.0
        %3710 = vmatpush.msra.mxu0 0.0
        %3711 = vmatpush.msra.mxu0 0.0
        %3712 = vmatpush.msra.mxu0 0.0
        %3713 = vmatpush.msra.mxu0 0.0
        %3714 = vmatpush.msra.mxu0 %v2836
        %3715 = vmatpush.msra.mxu0 %v2835
        %3716 = vmatpush.msra.mxu0 %v2834
        %3717 = vmatpush.msra.mxu0 %v2833
        %3718 = vmatmul.f32.gmra.mxu0 %v2839
        %v3719 = vpop.f32.mrf.mxu0
        %v3720 = vadd.f32 0.0, %v3719
        %3721 = vmatmul.f32.gmra.mxu0 %v2842
        %v3722 = vpop.f32.mrf.mxu0
        %v3723 = vadd.f32 0.0, %v3722
        %3724 = vmatmul.f32.gmra.mxu0 %v2845
        %v3725 = vpop.f32.mrf.mxu0
        %v3726 = vadd.f32 0.0, %v3725
        %3727 = vmatmul.f32.gmra.mxu0 %v2848
        %v3728 = vpop.f32.mrf.mxu0
        %v3729 = vadd.f32 0.0, %v3728
        %3730 = vmatmul.f32.gmra.mxu0 %v2851
        %v3731 = vpop.f32.mrf.mxu0
        %v3732 = vadd.f32 0.0, %v3731
        %3733 = vmatmul.f32.gmra.mxu0 %v2854
        %v3734 = vpop.f32.mrf.mxu0
        %v3735 = vadd.f32 0.0, %v3734
        %3736 = vmatmul.f32.gmra.mxu0 %v2857
        %v3737 = vpop.f32.mrf.mxu0
        %v3738 = vadd.f32 0.0, %v3737
        %3739 = vmatmul.f32.gmra.mxu0 %v2860
        %v3740 = vpop.f32.mrf.mxu0
        %v3741 = vadd.f32 0.0, %v3740
        %3742 = vmatmul.f32.gmra.mxu0 %v2863
        %v3743 = vpop.f32.mrf.mxu0
        %v3744 = vadd.f32 0.0, %v3743
        %3745 = vmatmul.f32.gmra.mxu0 %v2866
        %v3746 = vpop.f32.mrf.mxu0
        %v3747 = vadd.f32 0.0, %v3746
        %3748 = vmatmul.f32.gmra.mxu0 %v2869
        %v3749 = vpop.f32.mrf.mxu0
        %v3750 = vadd.f32 0.0, %v3749
        %3751 = vmatmul.f32.gmra.mxu0 %v2872
        %v3752 = vpop.f32.mrf.mxu0
        %v3753 = vadd.f32 0.0, %v3752
        %3754 = vmatmul.f32.gmra.mxu0 %v2875
        %v3755 = vpop.f32.mrf.mxu0
        %v3756 = vadd.f32 0.0, %v3755
        %3757 = vmatmul.f32.gmra.mxu0 %v2878
        %v3758 = vpop.f32.mrf.mxu0
        %v3759 = vadd.f32 0.0, %v3758
        %3760 = vmatmul.f32.gmra.mxu0 %v2881
        %v3761 = vpop.f32.mrf.mxu0
        %v3762 = vadd.f32 0.0, %v3761
        %3763 = vmatmul.f32.gmra.mxu0 %v2884
        %v3764 = vpop.f32.mrf.mxu0
        %v3765 = vadd.f32 0.0, %v3764
        %3766 = vmatmul.f32.gmra.mxu0 %v2887
        %v3767 = vpop.f32.mrf.mxu0
        %v3768 = vadd.f32 0.0, %v3767
        %3769 = vmatmul.f32.gmra.mxu0 %v2890
        %v3770 = vpop.f32.mrf.mxu0
        %v3771 = vadd.f32 0.0, %v3770
        %3772 = vmatmul.f32.gmra.mxu0 %v2893
        %v3773 = vpop.f32.mrf.mxu0
        %v3774 = vadd.f32 0.0, %v3773
        %3775 = vmatmul.f32.gmra.mxu0 %v2896
        %v3776 = vpop.f32.mrf.mxu0
        %v3777 = vadd.f32 0.0, %v3776
        %3778 = vmatmul.f32.gmra.mxu0 %v2899
        %v3779 = vpop.f32.mrf.mxu0
        %v3780 = vadd.f32 0.0, %v3779
        %3781 = vmatmul.f32.gmra.mxu0 %v2902
        %v3782 = vpop.f32.mrf.mxu0
        %v3783 = vadd.f32 0.0, %v3782
        %3784 = vmatmul.f32.gmra.mxu0 %v2905
        %v3785 = vpop.f32.mrf.mxu0
        %v3786 = vadd.f32 0.0, %v3785
        %3787 = vmatmul.f32.gmra.mxu0 %v2908
        %v3788 = vpop.f32.mrf.mxu0
        %v3789 = vadd.f32 0.0, %v3788
        %3790 = vmatmul.f32.gmra.mxu0 %v2911
        %v3791 = vpop.f32.mrf.mxu0
        %v3792 = vadd.f32 0.0, %v3791
        %3793 = vmatmul.f32.gmra.mxu0 %v2914
        %v3794 = vpop.f32.mrf.mxu0
        %v3795 = vadd.f32 0.0, %v3794
        %3796 = vmatmul.f32.gmra.mxu0 %v2917
        %v3797 = vpop.f32.mrf.mxu0
        %v3798 = vadd.f32 0.0, %v3797
        %3799 = vmatmul.f32.gmra.mxu0 %v2920
        %v3800 = vpop.f32.mrf.mxu0
        %v3801 = vadd.f32 0.0, %v3800
        %3802 = vmatmul.f32.gmra.mxu0 %v2923
        %v3803 = vpop.f32.mrf.mxu0
        %v3804 = vadd.f32 0.0, %v3803
        %3805 = vmatmul.f32.gmra.mxu0 %v2926
        %v3806 = vpop.f32.mrf.mxu0
        %v3807 = vadd.f32 0.0, %v3806
        %3808 = vmatmul.f32.gmra.mxu0 %v2929
        %v3809 = vpop.f32.mrf.mxu0
        %v3810 = vadd.f32 0.0, %v3809
        %3811 = vmatmul.f32.gmra.mxu0 %v2932
        %v3812 = vpop.f32.mrf.mxu0
        %v3813 = vadd.f32 0.0, %v3812
        %3814 = vmatmul.f32.gmra.mxu0 %v2935
        %v3815 = vpop.f32.mrf.mxu0
        %v3816 = vadd.f32 0.0, %v3815
        %3817 = vmatmul.f32.gmra.mxu0 %v2938
        %v3818 = vpop.f32.mrf.mxu0
        %v3819 = vadd.f32 0.0, %v3818
        %3820 = vmatmul.f32.gmra.mxu0 %v2941
        %v3821 = vpop.f32.mrf.mxu0
        %v3822 = vadd.f32 0.0, %v3821
        %3823 = vmatmul.f32.gmra.mxu0 %v2944
        %v3824 = vpop.f32.mrf.mxu0
        %v3825 = vadd.f32 0.0, %v3824
        %3826 = vmatmul.f32.gmra.mxu0 %v2947
        %v3827 = vpop.f32.mrf.mxu0
        %v3828 = vadd.f32 0.0, %v3827
        %3829 = vmatmul.f32.gmra.mxu0 %v2950
        %v3830 = vpop.f32.mrf.mxu0
        %v3831 = vadd.f32 0.0, %v3830
        %3832 = vmatmul.f32.gmra.mxu0 %v2953
        %v3833 = vpop.f32.mrf.mxu0
        %v3834 = vadd.f32 0.0, %v3833
        %3835 = vmatmul.f32.gmra.mxu0 %v2956
        %v3836 = vpop.f32.mrf.mxu0
        %v3837 = vadd.f32 0.0, %v3836
        %3838 = vmatmul.f32.gmra.mxu0 %v2959
        %v3839 = vpop.f32.mrf.mxu0
        %v3840 = vadd.f32 0.0, %v3839
        %3841 = vmatmul.f32.gmra.mxu0 %v2962
        %v3842 = vpop.f32.mrf.mxu0
        %v3843 = vadd.f32 0.0, %v3842
        %3844 = vmatmul.f32.gmra.mxu0 %v2965
        %v3845 = vpop.f32.mrf.mxu0
        %v3846 = vadd.f32 0.0, %v3845
        %3847 = vmatmul.f32.gmra.mxu0 %v2968
        %v3848 = vpop.f32.mrf.mxu0
        %v3849 = vadd.f32 0.0, %v3848
        %3850 = vmatmul.f32.gmra.mxu0 %v2971
        %v3851 = vpop.f32.mrf.mxu0
        %v3852 = vadd.f32 0.0, %v3851
        %3853 = vmatmul.f32.gmra.mxu0 %v2974
        %v3854 = vpop.f32.mrf.mxu0
        %v3855 = vadd.f32 0.0, %v3854
        %3856 = vmatmul.f32.gmra.mxu0 %v2977
        %v3857 = vpop.f32.mrf.mxu0
        %v3858 = vadd.f32 0.0, %v3857
        %3859 = vmatmul.f32.gmra.mxu0 %v2980
        %v3860 = vpop.f32.mrf.mxu0
        %v3861 = vadd.f32 0.0, %v3860
        %3862 = vmatmul.f32.gmra.mxu0 %v2983
        %v3863 = vpop.f32.mrf.mxu0
        %v3864 = vadd.f32 0.0, %v3863
        %3865 = vmatmul.f32.gmra.mxu0 %v2986
        %v3866 = vpop.f32.mrf.mxu0
        %v3867 = vadd.f32 0.0, %v3866
        %3868 = vmatmul.f32.gmra.mxu0 %v2989
        %v3869 = vpop.f32.mrf.mxu0
        %v3870 = vadd.f32 0.0, %v3869
        %3871 = vmatmul.f32.gmra.mxu0 %v2992
        %v3872 = vpop.f32.mrf.mxu0
        %v3873 = vadd.f32 0.0, %v3872
        %3874 = vmatmul.f32.gmra.mxu0 %v2995
        %v3875 = vpop.f32.mrf.mxu0
        %v3876 = vadd.f32 0.0, %v3875
        %3877 = vmatmul.f32.gmra.mxu0 %v2998
        %v3878 = vpop.f32.mrf.mxu0
        %v3879 = vadd.f32 0.0, %v3878
        %3880 = vmatmul.f32.gmra.mxu0 %v3001
        %v3881 = vpop.f32.mrf.mxu0
        %v3882 = vadd.f32 0.0, %v3881
        %3883 = vmatmul.f32.gmra.mxu0 %v3004
        %v3884 = vpop.f32.mrf.mxu0
        %v3885 = vadd.f32 0.0, %v3884
        %3886 = vmatmul.f32.gmra.mxu0 %v3007
        %v3887 = vpop.f32.mrf.mxu0
        %v3888 = vadd.f32 0.0, %v3887
        %3889 = vmatmul.f32.gmra.mxu0 %v3010
        %v3890 = vpop.f32.mrf.mxu0
        %v3891 = vadd.f32 0.0, %v3890
        %3892 = vmatmul.f32.gmra.mxu0 %v3013
        %v3893 = vpop.f32.mrf.mxu0
        %v3894 = vadd.f32 0.0, %v3893
        %3895 = vmatmul.f32.gmra.mxu0 %v3016
        %v3896 = vpop.f32.mrf.mxu0
        %v3897 = vadd.f32 0.0, %v3896
        %3898 = vmatmul.f32.gmra.mxu0 %v3019
        %v3899 = vpop.f32.mrf.mxu0
        %v3900 = vadd.f32 0.0, %v3899
        %3901 = vmatmul.f32.gmra.mxu0 %v3022
        %v3902 = vpop.f32.mrf.mxu0
        %v3903 = vadd.f32 0.0, %v3902
        %3904 = vmatmul.f32.gmra.mxu0 %v3025
        %v3905 = vpop.f32.mrf.mxu0
        %v3906 = vadd.f32 0.0, %v3905
        %3907 = vmatmul.f32.gmra.mxu0 %v3028
        %v3908 = vpop.f32.mrf.mxu0
        %v3909 = vadd.f32 0.0, %v3908
        %3910 = vmatmul.f32.gmra.mxu0 %v3031
        %v3911 = vpop.f32.mrf.mxu0
        %v3912 = vadd.f32 0.0, %v3911
        %3913 = vmatmul.f32.gmra.mxu0 %v3034
        %v3914 = vpop.f32.mrf.mxu0
        %v3915 = vadd.f32 0.0, %v3914
        %3916 = vmatmul.f32.gmra.mxu0 %v3037
        %v3917 = vpop.f32.mrf.mxu0
        %v3918 = vadd.f32 0.0, %v3917
        %3919 = vmatmul.f32.gmra.mxu0 %v3040
        %v3920 = vpop.f32.mrf.mxu0
        %v3921 = vadd.f32 0.0, %v3920
        %3922 = vmatmul.f32.gmra.mxu0 %v3043
        %v3923 = vpop.f32.mrf.mxu0
        %v3924 = vadd.f32 0.0, %v3923
        %3925 = vmatmul.f32.gmra.mxu0 %v3046
        %v3926 = vpop.f32.mrf.mxu0
        %v3927 = vadd.f32 0.0, %v3926
        %3928 = vmatmul.f32.gmra.mxu0 %v3049
        %v3929 = vpop.f32.mrf.mxu0
        %v3930 = vadd.f32 0.0, %v3929
        %3931 = vmatmul.f32.gmra.mxu0 %v3052
        %v3932 = vpop.f32.mrf.mxu0
        %v3933 = vadd.f32 0.0, %v3932
        %3934 = vmatmul.f32.gmra.mxu0 %v3055
        %v3935 = vpop.f32.mrf.mxu0
        %v3936 = vadd.f32 0.0, %v3935
        %3937 = vmatmul.f32.gmra.mxu0 %v3058
        %v3938 = vpop.f32.mrf.mxu0
        %v3939 = vadd.f32 0.0, %v3938
        %3940 = vmatmul.f32.gmra.mxu0 %v3061
        %v3941 = vpop.f32.mrf.mxu0
        %v3942 = vadd.f32 0.0, %v3941
        %3943 = vmatmul.f32.gmra.mxu0 %v3064
        %v3944 = vpop.f32.mrf.mxu0
        %v3945 = vadd.f32 0.0, %v3944
        %3946 = vmatmul.f32.gmra.mxu0 %v3067
        %v3947 = vpop.f32.mrf.mxu0
        %v3948 = vadd.f32 0.0, %v3947
        %3949 = vmatmul.f32.gmra.mxu0 %v3070
        %v3950 = vpop.f32.mrf.mxu0
        %v3951 = vadd.f32 0.0, %v3950
        %3952 = vmatmul.f32.gmra.mxu0 %v3073
        %v3953 = vpop.f32.mrf.mxu0
        %v3954 = vadd.f32 0.0, %v3953
        %3955 = vmatmul.f32.gmra.mxu0 %v3076
        %v3956 = vpop.f32.mrf.mxu0
        %v3957 = vadd.f32 0.0, %v3956
        %3958 = vmatmul.f32.gmra.mxu0 %v3079
        %v3959 = vpop.f32.mrf.mxu0
        %v3960 = vadd.f32 0.0, %v3959
        %3961 = vmatmul.f32.gmra.mxu0 %v3082
        %v3962 = vpop.f32.mrf.mxu0
        %v3963 = vadd.f32 0.0, %v3962
        %3964 = vmatmul.f32.gmra.mxu0 %v3085
        %v3965 = vpop.f32.mrf.mxu0
        %v3966 = vadd.f32 0.0, %v3965
        %3967 = vmatmul.f32.gmra.mxu0 %v3088
        %v3968 = vpop.f32.mrf.mxu0
        %v3969 = vadd.f32 0.0, %v3968
        %3970 = vmatmul.f32.gmra.mxu0 %v3091
        %v3971 = vpop.f32.mrf.mxu0
        %v3972 = vadd.f32 0.0, %v3971
        %3973 = vmatmul.f32.gmra.mxu0 %v3094
        %v3974 = vpop.f32.mrf.mxu0
        %v3975 = vadd.f32 0.0, %v3974
        %3976 = vmatmul.f32.gmra.mxu0 %v3097
        %v3977 = vpop.f32.mrf.mxu0
        %v3978 = vadd.f32 0.0, %v3977
        %3979 = vmatmul.f32.gmra.mxu0 %v3100
        %v3980 = vpop.f32.mrf.mxu0
        %v3981 = vadd.f32 0.0, %v3980
        %3982 = vmatmul.f32.gmra.mxu0 %v3103
        %v3983 = vpop.f32.mrf.mxu0
        %v3984 = vadd.f32 0.0, %v3983
        %3985 = vmatmul.f32.gmra.mxu0 %v3106
        %v3986 = vpop.f32.mrf.mxu0
        %v3987 = vadd.f32 0.0, %v3986
        %3988 = vmatmul.f32.gmra.mxu0 %v3109
        %v3989 = vpop.f32.mrf.mxu0
        %v3990 = vadd.f32 0.0, %v3989
        %3991 = vmatmul.f32.gmra.mxu0 %v3112
        %v3992 = vpop.f32.mrf.mxu0
        %v3993 = vadd.f32 0.0, %v3992
        %3994 = vmatmul.f32.gmra.mxu0 %v3115
        %v3995 = vpop.f32.mrf.mxu0
        %v3996 = vadd.f32 0.0, %v3995
        %3997 = vmatmul.f32.gmra.mxu0 %v3118
        %v3998 = vpop.f32.mrf.mxu0
        %v3999 = vadd.f32 0.0, %v3998
        %4000 = vmatmul.f32.gmra.mxu0 %v3121
        %v4001 = vpop.f32.mrf.mxu0
        %v4002 = vadd.f32 0.0, %v4001
        %4003 = vmatmul.f32.gmra.mxu0 %v3124
        %v4004 = vpop.f32.mrf.mxu0
        %v4005 = vadd.f32 0.0, %v4004
        %4006 = vmatmul.f32.gmra.mxu0 %v3127
        %v4007 = vpop.f32.mrf.mxu0
        %v4008 = vadd.f32 0.0, %v4007
        %4009 = vmatmul.f32.gmra.mxu0 %v3130
        %v4010 = vpop.f32.mrf.mxu0
        %v4011 = vadd.f32 0.0, %v4010
        %4012 = vmatmul.f32.gmra.mxu0 %v3133
        %v4013 = vpop.f32.mrf.mxu0
        %v4014 = vadd.f32 0.0, %v4013
        %4015 = vmatmul.f32.gmra.mxu0 %v3136
        %v4016 = vpop.f32.mrf.mxu0
        %v4017 = vadd.f32 0.0, %v4016
        %4018 = vmatmul.f32.gmra.mxu0 %v3139
        %v4019 = vpop.f32.mrf.mxu0
        %v4020 = vadd.f32 0.0, %v4019
        %4021 = vmatmul.f32.gmra.mxu0 %v3142
        %v4022 = vpop.f32.mrf.mxu0
        %v4023 = vadd.f32 0.0, %v4022
        %4024 = vmatmul.f32.gmra.mxu0 %v3145
        %v4025 = vpop.f32.mrf.mxu0
        %v4026 = vadd.f32 0.0, %v4025
        %4027 = vmatmul.f32.gmra.mxu0 %v3148
        %v4028 = vpop.f32.mrf.mxu0
        %v4029 = vadd.f32 0.0, %v4028
        %4030 = vmatmul.f32.gmra.mxu0 %v3151
        %v4031 = vpop.f32.mrf.mxu0
        %v4032 = vadd.f32 0.0, %v4031
        %4033 = vmatmul.f32.gmra.mxu0 %v3154
        %v4034 = vpop.f32.mrf.mxu0
        %v4035 = vadd.f32 0.0, %v4034
        %4036 = vmatmul.f32.gmra.mxu0 %v3157
        %v4037 = vpop.f32.mrf.mxu0
        %v4038 = vadd.f32 0.0, %v4037
        %4039 = vmatmul.f32.gmra.mxu0 %v3160
        %v4040 = vpop.f32.mrf.mxu0
        %v4041 = vadd.f32 0.0, %v4040
        %4042 = vmatmul.f32.gmra.mxu0 %v3163
        %v4043 = vpop.f32.mrf.mxu0
        %v4044 = vadd.f32 0.0, %v4043
        %4045 = vmatmul.f32.gmra.mxu0 %v3166
        %v4046 = vpop.f32.mrf.mxu0
        %v4047 = vadd.f32 0.0, %v4046
        %4048 = vmatmul.f32.gmra.mxu0 %v3169
        %v4049 = vpop.f32.mrf.mxu0
        %v4050 = vadd.f32 0.0, %v4049
        %4051 = vmatmul.f32.gmra.mxu0 %v3172
        %v4052 = vpop.f32.mrf.mxu0
        %v4053 = vadd.f32 0.0, %v4052
        %4054 = vmatmul.f32.gmra.mxu0 %v3175
        %v4055 = vpop.f32.mrf.mxu0
        %v4056 = vadd.f32 0.0, %v4055
        %4057 = vmatmul.f32.gmra.mxu0 %v3178
        %v4058 = vpop.f32.mrf.mxu0
        %v4059 = vadd.f32 0.0, %v4058
        %4060 = vmatmul.f32.gmra.mxu0 %v3181
        %v4061 = vpop.f32.mrf.mxu0
        %v4062 = vadd.f32 0.0, %v4061
        %4063 = vmatmul.f32.gmra.mxu0 %v3184
        %v4064 = vpop.f32.mrf.mxu0
        %v4065 = vadd.f32 0.0, %v4064
        %4066 = vmatmul.f32.gmra.mxu0 %v3187
        %v4067 = vpop.f32.mrf.mxu0
        %v4068 = vadd.f32 0.0, %v4067
        %4069 = vmatmul.f32.gmra.mxu0 %v3190
        %v4070 = vpop.f32.mrf.mxu0
        %v4071 = vadd.f32 0.0, %v4070
        %4072 = vmatmul.f32.gmra.mxu0 %v3193
        %v4073 = vpop.f32.mrf.mxu0
        %v4074 = vadd.f32 0.0, %v4073
        %4075 = vmatmul.f32.gmra.mxu0 %v3196
        %v4076 = vpop.f32.mrf.mxu0
        %v4077 = vadd.f32 0.0, %v4076
        %4078 = vmatmul.f32.gmra.mxu0 %v3199
        %v4079 = vpop.f32.mrf.mxu0
        %v4080 = vadd.f32 0.0, %v4079
        %4081 = vmatmul.f32.gmra.mxu0 %v3202
        %v4082 = vpop.f32.mrf.mxu0
        %v4083 = vadd.f32 0.0, %v4082
        %4084 = vmatmul.f32.gmra.mxu0 %v3205
        %v4085 = vpop.f32.mrf.mxu0
        %v4086 = vadd.f32 0.0, %v4085
        %4087 = vmatmul.f32.gmra.mxu0 %v3208
        %v4088 = vpop.f32.mrf.mxu0
        %v4089 = vadd.f32 0.0, %v4088
        %4090 = vmatmul.f32.gmra.mxu0 %v3211
        %v4091 = vpop.f32.mrf.mxu0
        %v4092 = vadd.f32 0.0, %v4091
        %4093 = vmatmul.f32.gmra.mxu0 %v3214
        %v4094 = vpop.f32.mrf.mxu0
        %v4095 = vadd.f32 0.0, %v4094
        %4096 = vmatmul.f32.gmra.mxu0 %v3217
        %v4097 = vpop.f32.mrf.mxu0
        %v4098 = vadd.f32 0.0, %v4097
        %4099 = vmatmul.f32.gmra.mxu0 %v3220
        %v4100 = vpop.f32.mrf.mxu0
        %v4101 = vadd.f32 0.0, %v4100
        %4102 = vmatmul.f32.gmra.mxu0 %v3223
        %v4103 = vpop.f32.mrf.mxu0
        %v4104 = vadd.f32 0.0, %v4103
        %4105 = vmatmul.f32.gmra.mxu0 %v3226
        %v4106 = vpop.f32.mrf.mxu0
        %v4107 = vadd.f32 0.0, %v4106
        %4108 = vmatmul.f32.gmra.mxu0 %v3229
        %v4109 = vpop.f32.mrf.mxu0
        %v4110 = vadd.f32 0.0, %v4109
        %4111 = vmatmul.f32.gmra.mxu0 %v3232
        %v4112 = vpop.f32.mrf.mxu0
        %v4113 = vadd.f32 0.0, %v4112
        %4114 = vmatmul.f32.gmra.mxu0 %v3235
        %v4115 = vpop.f32.mrf.mxu0
        %v4116 = vadd.f32 0.0, %v4115
        %4117 = vmatmul.f32.gmra.mxu0 %v3238
        %v4118 = vpop.f32.mrf.mxu0
        %v4119 = vadd.f32 0.0, %v4118
        %4120 = vmatmul.f32.gmra.mxu0 %v3241
        %v4121 = vpop.f32.mrf.mxu0
        %v4122 = vadd.f32 0.0, %v4121
        %4123 = vmatmul.f32.gmra.mxu0 %v3244
        %v4124 = vpop.f32.mrf.mxu0
        %v4125 = vadd.f32 0.0, %v4124
        %4126 = vmatmul.f32.gmra.mxu0 %v3247
        %v4127 = vpop.f32.mrf.mxu0
        %v4128 = vadd.f32 0.0, %v4127
        %4129 = vmatmul.f32.gmra.mxu0 %v3250
        %v4130 = vpop.f32.mrf.mxu0
        %v4131 = vadd.f32 0.0, %v4130
        %4132 = vmatmul.f32.gmra.mxu0 %v3253
        %v4133 = vpop.f32.mrf.mxu0
        %v4134 = vadd.f32 0.0, %v4133
        %4135 = vmatmul.f32.gmra.mxu0 %v3256
        %v4136 = vpop.f32.mrf.mxu0
        %v4137 = vadd.f32 0.0, %v4136
        %4138 = vmatmul.f32.gmra.mxu0 %v3259
        %v4139 = vpop.f32.mrf.mxu0
        %v4140 = vadd.f32 0.0, %v4139
        %4141 = vmatmul.f32.gmra.mxu0 %v3262
        %v4142 = vpop.f32.mrf.mxu0
        %v4143 = vadd.f32 0.0, %v4142
        %4144 = vmatmul.f32.gmra.mxu0 %v3265
        %v4145 = vpop.f32.mrf.mxu0
        %v4146 = vadd.f32 0.0, %v4145
        %4147 = vmatmul.f32.gmra.mxu0 %v3268
        %v4148 = vpop.f32.mrf.mxu0
        %v4149 = vadd.f32 0.0, %v4148
        %4150 = vmatmul.f32.gmra.mxu0 %v3271
        %v4151 = vpop.f32.mrf.mxu0
        %v4152 = vadd.f32 0.0, %v4151
        %4153 = vmatmul.f32.gmra.mxu0 %v3274
        %v4154 = vpop.f32.mrf.mxu0
        %v4155 = vadd.f32 0.0, %v4154
        %4156 = vmatmul.f32.gmra.mxu0 %v3277
        %v4157 = vpop.f32.mrf.mxu0
        %v4158 = vadd.f32 0.0, %v4157
        %4159 = vmatmul.f32.gmra.mxu0 %v3280
        %v4160 = vpop.f32.mrf.mxu0
        %v4161 = vadd.f32 0.0, %v4160
        %4162 = vmatmul.f32.gmra.mxu0 %v3283
        %v4163 = vpop.f32.mrf.mxu0
        %v4164 = vadd.f32 0.0, %v4163
        %4165 = vmatmul.f32.gmra.mxu0 %v3286
        %v4166 = vpop.f32.mrf.mxu0
        %v4167 = vadd.f32 0.0, %v4166
        %4168 = vmatmul.f32.gmra.mxu0 %v3289
        %v4169 = vpop.f32.mrf.mxu0
        %v4170 = vadd.f32 0.0, %v4169
        %4171 = vmatmul.f32.gmra.mxu0 %v3292
        %v4172 = vpop.f32.mrf.mxu0
        %v4173 = vadd.f32 0.0, %v4172
        %4174 = vmatmul.f32.gmra.mxu0 %v3295
        %v4175 = vpop.f32.mrf.mxu0
        %v4176 = vadd.f32 0.0, %v4175
        %4177 = vmatmul.f32.gmra.mxu0 %v3298
        %v4178 = vpop.f32.mrf.mxu0
        %v4179 = vadd.f32 0.0, %v4178
        %4180 = vmatmul.f32.gmra.mxu0 %v3301
        %v4181 = vpop.f32.mrf.mxu0
        %v4182 = vadd.f32 0.0, %v4181
        %4183 = vmatmul.f32.gmra.mxu0 %v3304
        %v4184 = vpop.f32.mrf.mxu0
        %v4185 = vadd.f32 0.0, %v4184
        %4186 = vmatmul.f32.gmra.mxu0 %v3307
        %v4187 = vpop.f32.mrf.mxu0
        %v4188 = vadd.f32 0.0, %v4187
        %4189 = vmatmul.f32.gmra.mxu0 %v3310
        %v4190 = vpop.f32.mrf.mxu0
        %v4191 = vadd.f32 0.0, %v4190
        %4192 = vmatmul.f32.gmra.mxu0 %v3313
        %v4193 = vpop.f32.mrf.mxu0
        %v4194 = vadd.f32 0.0, %v4193
        %4195 = vmatmul.f32.gmra.mxu0 %v3316
        %v4196 = vpop.f32.mrf.mxu0
        %v4197 = vadd.f32 0.0, %v4196
        %4198 = vmatmul.f32.gmra.mxu0 %v3319
        %v4199 = vpop.f32.mrf.mxu0
        %v4200 = vadd.f32 0.0, %v4199
        %4201 = vmatmul.f32.gmra.mxu0 %v3322
        %v4202 = vpop.f32.mrf.mxu0
        %v4203 = vadd.f32 0.0, %v4202
        %4204 = vmatmul.f32.gmra.mxu0 %v3325
        %v4205 = vpop.f32.mrf.mxu0
        %v4206 = vadd.f32 0.0, %v4205
        %4207 = vmatmul.f32.gmra.mxu0 %v3328
        %v4208 = vpop.f32.mrf.mxu0
        %v4209 = vadd.f32 0.0, %v4208
        %4210 = vmatmul.f32.gmra.mxu0 %v3331
        %v4211 = vpop.f32.mrf.mxu0
        %v4212 = vadd.f32 0.0, %v4211
        %4213 = vmatmul.f32.gmra.mxu0 %v3334
        %v4214 = vpop.f32.mrf.mxu0
        %v4215 = vadd.f32 0.0, %v4214
        %4216 = vmatmul.f32.gmra.mxu0 %v3337
        %v4217 = vpop.f32.mrf.mxu0
        %v4218 = vadd.f32 0.0, %v4217
        %4219 = vmatmul.f32.gmra.mxu0 %v3340
        %v4220 = vpop.f32.mrf.mxu0
        %v4221 = vadd.f32 0.0, %v4220
        %4222 = vmatmul.f32.gmra.mxu0 %v3343
        %v4223 = vpop.f32.mrf.mxu0
        %v4224 = vadd.f32 0.0, %v4223
        %4225 = vmatmul.f32.gmra.mxu0 %v3346
        %v4226 = vpop.f32.mrf.mxu0
        %v4227 = vadd.f32 0.0, %v4226
        %4228 = vmatmul.f32.gmra.mxu0 %v3349
        %v4229 = vpop.f32.mrf.mxu0
        %v4230 = vadd.f32 0.0, %v4229
        %4231 = vmatmul.f32.gmra.mxu0 %v3352
        %v4232 = vpop.f32.mrf.mxu0
        %v4233 = vadd.f32 0.0, %v4232
        %4234 = vmatmul.f32.gmra.mxu0 %v3355
        %v4235 = vpop.f32.mrf.mxu0
        %v4236 = vadd.f32 0.0, %v4235
        %4237 = vmatmul.f32.gmra.mxu0 %v3358
        %v4238 = vpop.f32.mrf.mxu0
        %v4239 = vadd.f32 0.0, %v4238
        %4240 = vmatmul.f32.gmra.mxu0 %v3361
        %v4241 = vpop.f32.mrf.mxu0
        %v4242 = vadd.f32 0.0, %v4241
        %4243 = vmatmul.f32.gmra.mxu0 %v3364
        %v4244 = vpop.f32.mrf.mxu0
        %v4245 = vadd.f32 0.0, %v4244
        %4246 = vmatmul.f32.gmra.mxu0 %v3367
        %v4247 = vpop.f32.mrf.mxu0
        %v4248 = vadd.f32 0.0, %v4247
        %4249 = vmatmul.f32.gmra.mxu0 %v3370
        %v4250 = vpop.f32.mrf.mxu0
        %v4251 = vadd.f32 0.0, %v4250
        %4252 = vmatmul.f32.gmra.mxu0 %v3373
        %v4253 = vpop.f32.mrf.mxu0
        %v4254 = vadd.f32 0.0, %v4253
        %4255 = vmatmul.f32.gmra.mxu0 %v3376
        %v4256 = vpop.f32.mrf.mxu0
        %v4257 = vadd.f32 0.0, %v4256
        %4258 = vmatmul.f32.gmra.mxu0 %v3379
        %v4259 = vpop.f32.mrf.mxu0
        %v4260 = vadd.f32 0.0, %v4259
        %4261 = vmatmul.f32.gmra.mxu0 %v3382
        %v4262 = vpop.f32.mrf.mxu0
        %v4263 = vadd.f32 0.0, %v4262
        %4264 = vmatmul.f32.gmra.mxu0 %v3385
        %v4265 = vpop.f32.mrf.mxu0
        %v4266 = vadd.f32 0.0, %v4265
        %4267 = vmatmul.f32.gmra.mxu0 %v3388
        %v4268 = vpop.f32.mrf.mxu0
        %v4269 = vadd.f32 0.0, %v4268
        %4270 = vmatmul.f32.gmra.mxu0 %v3391
        %v4271 = vpop.f32.mrf.mxu0
        %v4272 = vadd.f32 0.0, %v4271
        %4273 = vmatmul.f32.gmra.mxu0 %v3394
        %v4274 = vpop.f32.mrf.mxu0
        %v4275 = vadd.f32 0.0, %v4274
        %4276 = vmatmul.f32.gmra.mxu0 %v3397
        %v4277 = vpop.f32.mrf.mxu0
        %v4278 = vadd.f32 0.0, %v4277
        %4279 = vmatmul.f32.gmra.mxu0 %v3400
        %v4280 = vpop.f32.mrf.mxu0
        %v4281 = vadd.f32 0.0, %v4280
        %4282 = vmatmul.f32.gmra.mxu0 %v3403
        %v4283 = vpop.f32.mrf.mxu0
        %v4284 = vadd.f32 0.0, %v4283
        %4285 = vmatmul.f32.gmra.mxu0 %v3406
        %v4286 = vpop.f32.mrf.mxu0
        %v4287 = vadd.f32 0.0, %v4286
        %4288 = vmatmul.f32.gmra.mxu0 %v3409
        %v4289 = vpop.f32.mrf.mxu0
        %v4290 = vadd.f32 0.0, %v4289
        %4291 = vmatmul.f32.gmra.mxu0 %v3412
        %v4292 = vpop.f32.mrf.mxu0
        %v4293 = vadd.f32 0.0, %v4292
        %4294 = vmatmul.f32.gmra.mxu0 %v3415
        %v4295 = vpop.f32.mrf.mxu0
        %v4296 = vadd.f32 0.0, %v4295
        %4297 = vmatmul.f32.gmra.mxu0 %v3418
        %v4298 = vpop.f32.mrf.mxu0
        %v4299 = vadd.f32 0.0, %v4298
        %4300 = vmatmul.f32.gmra.mxu0 %v3421
        %v4301 = vpop.f32.mrf.mxu0
        %v4302 = vadd.f32 0.0, %v4301
        %4303 = vmatmul.f32.gmra.mxu0 %v3424
        %v4304 = vpop.f32.mrf.mxu0
        %v4305 = vadd.f32 0.0, %v4304
        %4306 = vmatmul.f32.gmra.mxu0 %v3427
        %v4307 = vpop.f32.mrf.mxu0
        %v4308 = vadd.f32 0.0, %v4307
        %4309 = vmatmul.f32.gmra.mxu0 %v3430
        %v4310 = vpop.f32.mrf.mxu0
        %v4311 = vadd.f32 0.0, %v4310
        %4312 = vmatmul.f32.gmra.mxu0 %v3433
        %v4313 = vpop.f32.mrf.mxu0
        %v4314 = vadd.f32 0.0, %v4313
        %4315 = vmatmul.f32.gmra.mxu0 %v3436
        %v4316 = vpop.f32.mrf.mxu0
        %v4317 = vadd.f32 0.0, %v4316
        %4318 = vmatmul.f32.gmra.mxu0 %v3439
        %v4319 = vpop.f32.mrf.mxu0
        %v4320 = vadd.f32 0.0, %v4319
        %4321 = vmatmul.f32.gmra.mxu0 %v3442
        %v4322 = vpop.f32.mrf.mxu0
        %v4323 = vadd.f32 0.0, %v4322
        %4324 = vmatmul.f32.gmra.mxu0 %v3445
        %v4325 = vpop.f32.mrf.mxu0
        %v4326 = vadd.f32 0.0, %v4325
        %4327 = vmatmul.f32.gmra.mxu0 %v3448
        %v4328 = vpop.f32.mrf.mxu0
        %v4329 = vadd.f32 0.0, %v4328
        %4330 = vmatmul.f32.gmra.mxu0 %v3451
        %v4331 = vpop.f32.mrf.mxu0
        %v4332 = vadd.f32 0.0, %v4331
        %4333 = vmatmul.f32.gmra.mxu0 %v3454
        %v4334 = vpop.f32.mrf.mxu0
        %v4335 = vadd.f32 0.0, %v4334
        %4336 = vmatmul.f32.gmra.mxu0 %v3457
        %v4337 = vpop.f32.mrf.mxu0
        %v4338 = vadd.f32 0.0, %v4337
        %4339 = vmatmul.f32.gmra.mxu0 %v3460
        %v4340 = vpop.f32.mrf.mxu0
        %v4341 = vadd.f32 0.0, %v4340
        %4342 = vmatmul.f32.gmra.mxu0 %v3463
        %v4343 = vpop.f32.mrf.mxu0
        %v4344 = vadd.f32 0.0, %v4343
        %4345 = vmatmul.f32.gmra.mxu0 %v3466
        %v4346 = vpop.f32.mrf.mxu0
        %v4347 = vadd.f32 0.0, %v4346
        %4348 = vmatmul.f32.gmra.mxu0 %v3469
        %v4349 = vpop.f32.mrf.mxu0
        %v4350 = vadd.f32 0.0, %v4349
        %4351 = vmatmul.f32.gmra.mxu0 %v3472
        %v4352 = vpop.f32.mrf.mxu0
        %v4353 = vadd.f32 0.0, %v4352
        %4354 = vmatmul.f32.gmra.mxu0 %v3475
        %v4355 = vpop.f32.mrf.mxu0
        %v4356 = vadd.f32 0.0, %v4355
        %4357 = vmatmul.f32.gmra.mxu0 %v3478
        %v4358 = vpop.f32.mrf.mxu0
        %v4359 = vadd.f32 0.0, %v4358
        %4360 = vmatmul.f32.gmra.mxu0 %v3481
        %v4361 = vpop.f32.mrf.mxu0
        %v4362 = vadd.f32 0.0, %v4361
        %4363 = vmatmul.f32.gmra.mxu0 %v3484
        %v4364 = vpop.f32.mrf.mxu0
        %v4365 = vadd.f32 0.0, %v4364
        %4366 = vmatmul.f32.gmra.mxu0 %v3487
        %v4367 = vpop.f32.mrf.mxu0
        %v4368 = vadd.f32 0.0, %v4367
        %4369 = vmatmul.f32.gmra.mxu0 %v3490
        %v4370 = vpop.f32.mrf.mxu0
        %v4371 = vadd.f32 0.0, %v4370
        %4372 = vmatmul.f32.gmra.mxu0 %v3493
        %v4373 = vpop.f32.mrf.mxu0
        %v4374 = vadd.f32 0.0, %v4373
        %4375 = vmatmul.f32.gmra.mxu0 %v3496
        %v4376 = vpop.f32.mrf.mxu0
        %v4377 = vadd.f32 0.0, %v4376
        %4378 = vmatmul.f32.gmra.mxu0 %v3499
        %v4379 = vpop.f32.mrf.mxu0
        %v4380 = vadd.f32 0.0, %v4379
        %4381 = vmatmul.f32.gmra.mxu0 %v3502
        %v4382 = vpop.f32.mrf.mxu0
        %v4383 = vadd.f32 0.0, %v4382
        %4384 = vmatmul.f32.gmra.mxu0 %v3505
        %v4385 = vpop.f32.mrf.mxu0
        %v4386 = vadd.f32 0.0, %v4385
        %4387 = vmatmul.f32.gmra.mxu0 %v3508
        %v4388 = vpop.f32.mrf.mxu0
        %v4389 = vadd.f32 0.0, %v4388
        %4390 = vmatmul.f32.gmra.mxu0 %v3511
        %v4391 = vpop.f32.mrf.mxu0
        %v4392 = vadd.f32 0.0, %v4391
        %4393 = vmatmul.f32.gmra.mxu0 %v3514
        %v4394 = vpop.f32.mrf.mxu0
        %v4395 = vadd.f32 0.0, %v4394
        %4396 = vmatmul.f32.gmra.mxu0 %v3517
        %v4397 = vpop.f32.mrf.mxu0
        %v4398 = vadd.f32 0.0, %v4397
        %4399 = vmatmul.f32.gmra.mxu0 %v3520
        %v4400 = vpop.f32.mrf.mxu0
        %v4401 = vadd.f32 0.0, %v4400
        %4402 = vmatmul.f32.gmra.mxu0 %v3523
        %v4403 = vpop.f32.mrf.mxu0
        %v4404 = vadd.f32 0.0, %v4403
        %4405 = vmatmul.f32.gmra.mxu0 %v3526
        %v4406 = vpop.f32.mrf.mxu0
        %v4407 = vadd.f32 0.0, %v4406
        %4408 = vmatmul.f32.gmra.mxu0 %v3529
        %v4409 = vpop.f32.mrf.mxu0
        %v4410 = vadd.f32 0.0, %v4409
        %4411 = vmatmul.f32.gmra.mxu0 %v3532
        %v4412 = vpop.f32.mrf.mxu0
        %v4413 = vadd.f32 0.0, %v4412
        %4414 = vmatmul.f32.gmra.mxu0 %v3535
        %v4415 = vpop.f32.mrf.mxu0
        %v4416 = vadd.f32 0.0, %v4415
        %4417 = vmatmul.f32.gmra.mxu0 %v3538
        %v4418 = vpop.f32.mrf.mxu0
        %v4419 = vadd.f32 0.0, %v4418
        %4420 = vmatmul.f32.gmra.mxu0 %v3541
        %v4421 = vpop.f32.mrf.mxu0
        %v4422 = vadd.f32 0.0, %v4421
        %4423 = vmatmul.f32.gmra.mxu0 %v3544
        %v4424 = vpop.f32.mrf.mxu0
        %v4425 = vadd.f32 0.0, %v4424
        %4426 = vmatmul.f32.gmra.mxu0 %v3547
        %v4427 = vpop.f32.mrf.mxu0
        %v4428 = vadd.f32 0.0, %v4427
        %4429 = vmatmul.f32.gmra.mxu0 %v3550
        %v4430 = vpop.f32.mrf.mxu0
        %v4431 = vadd.f32 0.0, %v4430
        %4432 = vmatmul.f32.gmra.mxu0 %v3553
        %v4433 = vpop.f32.mrf.mxu0
        %v4434 = vadd.f32 0.0, %v4433
        %4435 = vmatmul.f32.gmra.mxu0 %v3556
        %v4436 = vpop.f32.mrf.mxu0
        %v4437 = vadd.f32 0.0, %v4436
        %4438 = vmatmul.f32.gmra.mxu0 %v3559
        %v4439 = vpop.f32.mrf.mxu0
        %v4440 = vadd.f32 0.0, %v4439
        %4441 = vmatmul.f32.gmra.mxu0 %v3562
        %v4442 = vpop.f32.mrf.mxu0
        %v4443 = vadd.f32 0.0, %v4442
        %4444 = vmatmul.f32.gmra.mxu0 %v3565
        %v4445 = vpop.f32.mrf.mxu0
        %v4446 = vadd.f32 0.0, %v4445
        %4447 = vmatmul.f32.gmra.mxu0 %v3568
        %v4448 = vpop.f32.mrf.mxu0
        %v4449 = vadd.f32 0.0, %v4448
        %4450 = vmatmul.f32.gmra.mxu0 %v3571
        %v4451 = vpop.f32.mrf.mxu0
        %v4452 = vadd.f32 0.0, %v4451
        %4453 = vmatmul.f32.gmra.mxu0 %v3574
        %v4454 = vpop.f32.mrf.mxu0
        %v4455 = vadd.f32 0.0, %v4454
        %4456 = vmatmul.f32.gmra.mxu0 %v3577
        %v4457 = vpop.f32.mrf.mxu0
        %v4458 = vadd.f32 0.0, %v4457
        %4459 = vmatmul.f32.gmra.mxu0 %v3580
        %v4460 = vpop.f32.mrf.mxu0
        %v4461 = vadd.f32 0.0, %v4460
        %4462 = vmatmul.f32.gmra.mxu0 %v3583
        %v4463 = vpop.f32.mrf.mxu0
        %v4464 = vadd.f32 0.0, %v4463
        %4465 = vmatmul.f32.gmra.mxu0 %v3586
        %v4466 = vpop.f32.mrf.mxu0
        %v4467 = vadd.f32 0.0, %v4466
        %4468 = vmatmul.f32.gmra.mxu0 %v3589
        %v4469 = vpop.f32.mrf.mxu0
        %v4470 = vadd.f32 0.0, %v4469
        %4471 = vmatmul.f32.gmra.mxu0 %v3592
        %v4472 = vpop.f32.mrf.mxu0
        %v4473 = vadd.f32 0.0, %v4472
        %4474 = vmatmul.f32.gmra.mxu0 %v3595
        %v4475 = vpop.f32.mrf.mxu0
        %v4476 = vadd.f32 0.0, %v4475
        %4477 = vmatmul.f32.gmra.mxu0 %v3598
        %v4478 = vpop.f32.mrf.mxu0
        %v4479 = vadd.f32 0.0, %v4478
        %4480 = vmatmul.f32.gmra.mxu0 %v3601
        %v4481 = vpop.f32.mrf.mxu0
        %v4482 = vadd.f32 0.0, %v4481
        %4483 = vmatmul.f32.gmra.mxu0 %v3604
        %v4484 = vpop.f32.mrf.mxu0
        %v4485 = vadd.f32 0.0, %v4484
        %4486 = vmatmul.f32.gmra.mxu0 %v3607
        %v4487 = vpop.f32.mrf.mxu0
        %v4488 = vadd.f32 0.0, %v4487
        %4489 = vmatmul.f32.gmra.mxu0 %v3610
        %v4490 = vpop.f32.mrf.mxu0
        %v4491 = vadd.f32 0.0, %v4490
        %4492 = vmatmul.f32.gmra.mxu0 %v3613
        %v4493 = vpop.f32.mrf.mxu0
        %v4494 = vadd.f32 0.0, %v4493
        %4495 = vmatmul.f32.gmra.mxu0 %v3616
        %v4496 = vpop.f32.mrf.mxu0
        %v4497 = vadd.f32 0.0, %v4496
        %4498 = vmatmul.f32.gmra.mxu0 %v3619
        %v4499 = vpop.f32.mrf.mxu0
        %v4500 = vadd.f32 0.0, %v4499
        %4501 = vmatmul.f32.gmra.mxu0 %v3622
        %v4502 = vpop.f32.mrf.mxu0
        %v4503 = vadd.f32 0.0, %v4502
        %4504 = vmatmul.f32.gmra.mxu0 %v3625
        %v4505 = vpop.f32.mrf.mxu0
        %v4506 = vadd.f32 0.0, %v4505
        %4507 = vmatmul.f32.gmra.mxu0 %v3628
        %v4508 = vpop.f32.mrf.mxu0
        %v4509 = vadd.f32 0.0, %v4508
        %4510 = vmatmul.f32.gmra.mxu0 %v3631
        %v4511 = vpop.f32.mrf.mxu0
        %v4512 = vadd.f32 0.0, %v4511
        %4513 = vmatmul.f32.gmra.mxu0 %v3634
        %v4514 = vpop.f32.mrf.mxu0
        %v4515 = vadd.f32 0.0, %v4514
        %4516 = vmatmul.f32.gmra.mxu0 %v3637
        %v4517 = vpop.f32.mrf.mxu0
        %v4518 = vadd.f32 0.0, %v4517
        %4519 = vmatmul.f32.gmra.mxu0 %v3640
        %v4520 = vpop.f32.mrf.mxu0
        %v4521 = vadd.f32 0.0, %v4520
        %4522 = vmatmul.f32.gmra.mxu0 %v3643
        %v4523 = vpop.f32.mrf.mxu0
        %v4524 = vadd.f32 0.0, %v4523
        %4525 = vmatmul.f32.gmra.mxu0 %v3646
        %v4526 = vpop.f32.mrf.mxu0
        %v4527 = vadd.f32 0.0, %v4526
        %4528 = vmatmul.f32.gmra.mxu0 %v3649
        %v4529 = vpop.f32.mrf.mxu0
        %v4530 = vadd.f32 0.0, %v4529
        %4531 = vmatmul.f32.gmra.mxu0 %v3652
        %v4532 = vpop.f32.mrf.mxu0
        %v4533 = vadd.f32 0.0, %v4532
        %4534 = vmatmul.f32.gmra.mxu0 %v3655
        %v4535 = vpop.f32.mrf.mxu0
        %v4536 = vadd.f32 0.0, %v4535
        %4537 = vmatmul.f32.gmra.mxu0 %v3658
        %v4538 = vpop.f32.mrf.mxu0
        %v4539 = vadd.f32 0.0, %v4538
        %4540 = vmatmul.f32.gmra.mxu0 %v3661
        %v4541 = vpop.f32.mrf.mxu0
        %v4542 = vadd.f32 0.0, %v4541
        %4543 = vmatmul.f32.gmra.mxu0 %v3664
        %v4544 = vpop.f32.mrf.mxu0
        %v4545 = vadd.f32 0.0, %v4544
        %4546 = vmatmul.f32.gmra.mxu0 %v3667
        %v4547 = vpop.f32.mrf.mxu0
        %v4548 = vadd.f32 0.0, %v4547
        %4549 = vmatmul.f32.gmra.mxu0 %v3670
        %v4550 = vpop.f32.mrf.mxu0
        %v4551 = vadd.f32 0.0, %v4550
        %4552 = vmatmul.f32.gmra.mxu0 %v3673
        %v4553 = vpop.f32.mrf.mxu0
        %v4554 = vadd.f32 0.0, %v4553
        %4555 = vmatmul.f32.gmra.mxu0 %v3676
        %v4556 = vpop.f32.mrf.mxu0
        %v4557 = vadd.f32 0.0, %v4556
        %4558 = vmatmul.f32.gmra.mxu0 %v3679
        %v4559 = vpop.f32.mrf.mxu0
        %v4560 = vadd.f32 0.0, %v4559
        %4561 = vmatmul.f32.gmra.mxu0 %v3682
        %v4562 = vpop.f32.mrf.mxu0
        %v4563 = vadd.f32 0.0, %v4562
        %4564 = vmatmul.f32.gmra.mxu0 %v3685
        %v4565 = vpop.f32.mrf.mxu0
        %v4566 = vadd.f32 0.0, %v4565
        %4567 = vmatmul.f32.gmra.mxu0 %v3688
        %v4568 = vpop.f32.mrf.mxu0
        %v4569 = vadd.f32 0.0, %v4568
        %4570 = vmatmul.f32.gmra.mxu0 %v3691
        %v4571 = vpop.f32.mrf.mxu0
        %v4572 = vadd.f32 0.0, %v4571
        %4573 = vmatmul.f32.gmra.mxu0 %v3694
        %v4574 = vpop.f32.mrf.mxu0
        %v4575 = vadd.f32 0.0, %v4574
        %4576 = vmatmul.f32.gmra.mxu0 %v3697
        %v4577 = vpop.f32.mrf.mxu0
        %v4578 = vadd.f32 0.0, %v4577
        %4579 = vmatmul.f32.gmra.mxu0 %v3700
        %v4580 = vpop.f32.mrf.mxu0
        %v4581 = vadd.f32 0.0, %v4580
        %4582 = vdwg.mxu0
        %v4583 = vmax.f32 %v3720, %v3936
        %v4584 = vmax.f32 %v3723, %v3939
        %v4585 = vmax.f32 %v3726, %v3942
        %v4586 = vmax.f32 %v3729, %v3945
        %v4587 = vmax.f32 %v3732, %v3948
        %v4588 = vmax.f32 %v3735, %v3951
        %v4589 = vmax.f32 %v3738, %v3954
        %v4590 = vmax.f32 %v3741, %v3957
        %v4591 = vmax.f32 %v3744, %v3960
        %v4592 = vmax.f32 %v3747, %v3963
        %v4593 = vmax.f32 %v3750, %v3966
        %v4594 = vmax.f32 %v3753, %v3969
        %v4595 = vmax.f32 %v3756, %v3972
        %v4596 = vmax.f32 %v3759, %v3975
        %v4597 = vmax.f32 %v3762, %v3978
        %v4598 = vmax.f32 %v3765, %v3981
        %v4599 = vmax.f32 %v3768, %v3984
        %v4600 = vmax.f32 %v3771, %v3987
        %v4601 = vmax.f32 %v3774, %v3990
        %v4602 = vmax.f32 %v3777, %v3993
        %v4603 = vmax.f32 %v3780, %v3996
        %v4604 = vmax.f32 %v3783, %v3999
        %v4605 = vmax.f32 %v3786, %v4002
        %v4606 = vmax.f32 %v3789, %v4005
        %v4607 = vmax.f32 %v3792, %v4008
        %v4608 = vmax.f32 %v3795, %v4011
        %v4609 = vmax.f32 %v3798, %v4014
        %v4610 = vmax.f32 %v3801, %v4017
        %v4611 = vmax.f32 %v3804, %v4020
        %v4612 = vmax.f32 %v3807, %v4023
        %v4613 = vmax.f32 %v3810, %v4026
        %v4614 = vmax.f32 %v3813, %v4029
        %v4615 = vmax.f32 %v3816, %v4032
        %v4616 = vmax.f32 %v3819, %v4035
        %v4617 = vmax.f32 %v3822, %v4038
        %v4618 = vmax.f32 %v3825, %v4041
        %v4619 = vmax.f32 %v3828, %v4044
        %v4620 = vmax.f32 %v3831, %v4047
        %v4621 = vmax.f32 %v3834, %v4050
        %v4622 = vmax.f32 %v3837, %v4053
        %v4623 = vmax.f32 %v3840, %v4056
        %v4624 = vmax.f32 %v3843, %v4059
        %v4625 = vmax.f32 %v3846, %v4062
        %v4626 = vmax.f32 %v3849, %v4065
        %v4627 = vmax.f32 %v3852, %v4068
        %v4628 = vmax.f32 %v3855, %v4071
        %v4629 = vmax.f32 %v3858, %v4074
        %v4630 = vmax.f32 %v3861, %v4077
        %v4631 = vmax.f32 %v3864, %v4080
        %v4632 = vmax.f32 %v3867, %v4083
        %v4633 = vmax.f32 %v3870, %v4086
        %v4634 = vmax.f32 %v3873, %v4089
        %v4635 = vmax.f32 %v3876, %v4092
        %v4636 = vmax.f32 %v3879, %v4095
        %v4637 = vmax.f32 %v3882, %v4098
        %v4638 = vmax.f32 %v3885, %v4101
        %v4639 = vmax.f32 %v3888, %v4104
        %v4640 = vmax.f32 %v3891, %v4107
        %v4641 = vmax.f32 %v3894, %v4110
        %v4642 = vmax.f32 %v3897, %v4113
        %v4643 = vmax.f32 %v3900, %v4116
        %v4644 = vmax.f32 %v3903, %v4119
        %v4645 = vmax.f32 %v3906, %v4122
        %v4646 = vmax.f32 %v3909, %v4125
        %v4647 = vmax.f32 %v3912, %v4128
        %v4648 = vmax.f32 %v3915, %v4131
        %v4649 = vmax.f32 %v3918, %v4134
        %v4650 = vmax.f32 %v3921, %v4137
        %v4651 = vmax.f32 %v3924, %v4140
        %v4652 = vmax.f32 %v3927, %v4143
        %v4653 = vmax.f32 %v3930, %v4146
        %v4654 = vmax.f32 %v3933, %v4149
        %v4655 = vmax.f32 %v4152, %v4368
        %v4656 = vmax.f32 %v4155, %v4371
        %v4657 = vmax.f32 %v4158, %v4374
        %v4658 = vmax.f32 %v4161, %v4377
        %v4659 = vmax.f32 %v4164, %v4380
        %v4660 = vmax.f32 %v4167, %v4383
        %v4661 = vmax.f32 %v4170, %v4386
        %v4662 = vmax.f32 %v4173, %v4389
        %v4663 = vmax.f32 %v4176, %v4392
        %v4664 = vmax.f32 %v4179, %v4395
        %v4665 = vmax.f32 %v4182, %v4398
        %v4666 = vmax.f32 %v4185, %v4401
        %v4667 = vmax.f32 %v4188, %v4404
        %v4668 = vmax.f32 %v4191, %v4407
        %v4669 = vmax.f32 %v4194, %v4410
        %v4670 = vmax.f32 %v4197, %v4413
        %v4671 = vmax.f32 %v4200, %v4416
        %v4672 = vmax.f32 %v4203, %v4419
        %v4673 = vmax.f32 %v4206, %v4422
        %v4674 = vmax.f32 %v4209, %v4425
        %v4675 = vmax.f32 %v4212, %v4428
        %v4676 = vmax.f32 %v4215, %v4431
        %v4677 = vmax.f32 %v4218, %v4434
        %v4678 = vmax.f32 %v4221, %v4437
        %v4679 = vmax.f32 %v4224, %v4440
        %v4680 = vmax.f32 %v4227, %v4443
        %v4681 = vmax.f32 %v4230, %v4446
        %v4682 = vmax.f32 %v4233, %v4449
        %v4683 = vmax.f32 %v4236, %v4452
        %v4684 = vmax.f32 %v4239, %v4455
        %v4685 = vmax.f32 %v4242, %v4458
        %v4686 = vmax.f32 %v4245, %v4461
        %v4687 = vmax.f32 %v4248, %v4464
        %v4688 = vmax.f32 %v4251, %v4467
        %v4689 = vmax.f32 %v4254, %v4470
        %v4690 = vmax.f32 %v4257, %v4473
        %v4691 = vmax.f32 %v4260, %v4476
        %v4692 = vmax.f32 %v4263, %v4479
        %v4693 = vmax.f32 %v4266, %v4482
        %v4694 = vmax.f32 %v4269, %v4485
        %v4695 = vmax.f32 %v4272, %v4488
        %v4696 = vmax.f32 %v4275, %v4491
        %v4697 = vmax.f32 %v4278, %v4494
        %v4698 = vmax.f32 %v4281, %v4497
        %v4699 = vmax.f32 %v4284, %v4500
        %v4700 = vmax.f32 %v4287, %v4503
        %v4701 = vmax.f32 %v4290, %v4506
        %v4702 = vmax.f32 %v4293, %v4509
        %v4703 = vmax.f32 %v4296, %v4512
        %v4704 = vmax.f32 %v4299, %v4515
        %v4705 = vmax.f32 %v4302, %v4518
        %v4706 = vmax.f32 %v4305, %v4521
        %v4707 = vmax.f32 %v4308, %v4524
        %v4708 = vmax.f32 %v4311, %v4527
        %v4709 = vmax.f32 %v4314, %v4530
        %v4710 = vmax.f32 %v4317, %v4533
        %v4711 = vmax.f32 %v4320, %v4536
        %v4712 = vmax.f32 %v4323, %v4539
        %v4713 = vmax.f32 %v4326, %v4542
        %v4714 = vmax.f32 %v4329, %v4545
        %v4715 = vmax.f32 %v4332, %v4548
        %v4716 = vmax.f32 %v4335, %v4551
        %v4717 = vmax.f32 %v4338, %v4554
        %v4718 = vmax.f32 %v4341, %v4557
        %v4719 = vmax.f32 %v4344, %v4560
        %v4720 = vmax.f32 %v4347, %v4563
        %v4721 = vmax.f32 %v4350, %v4566
        %v4722 = vmax.f32 %v4353, %v4569
        %v4723 = vmax.f32 %v4356, %v4572
        %v4724 = vmax.f32 %v4359, %v4575
        %v4725 = vmax.f32 %v4362, %v4578
        %v4726 = vmax.f32 %v4365, %v4581
        %v4727 = vmax.f32 %v4583, %v4655
        %v4728 = vmax.f32 %v4584, %v4656
        %v4729 = vmax.f32 %v4585, %v4657
        %v4730 = vmax.f32 %v4586, %v4658
        %v4731 = vmax.f32 %v4587, %v4659
        %v4732 = vmax.f32 %v4588, %v4660
        %v4733 = vmax.f32 %v4589, %v4661
        %v4734 = vmax.f32 %v4590, %v4662
        %v4735 = vmax.f32 %v4591, %v4663
        %v4736 = vmax.f32 %v4592, %v4664
        %v4737 = vmax.f32 %v4593, %v4665
        %v4738 = vmax.f32 %v4594, %v4666
        %v4739 = vmax.f32 %v4595, %v4667
        %v4740 = vmax.f32 %v4596, %v4668
        %v4741 = vmax.f32 %v4597, %v4669
        %v4742 = vmax.f32 %v4598, %v4670
        %v4743 = vmax.f32 %v4599, %v4671
        %v4744 = vmax.f32 %v4600, %v4672
        %v4745 = vmax.f32 %v4601, %v4673
        %v4746 = vmax.f32 %v4602, %v4674
        %v4747 = vmax.f32 %v4603, %v4675
        %v4748 = vmax.f32 %v4604, %v4676
        %v4749 = vmax.f32 %v4605, %v4677
        %v4750 = vmax.f32 %v4606, %v4678
        %v4751 = vmax.f32 %v4607, %v4679
        %v4752 = vmax.f32 %v4608, %v4680
        %v4753 = vmax.f32 %v4609, %v4681
        %v4754 = vmax.f32 %v4610, %v4682
        %v4755 = vmax.f32 %v4611, %v4683
        %v4756 = vmax.f32 %v4612, %v4684
        %v4757 = vmax.f32 %v4613, %v4685
        %v4758 = vmax.f32 %v4614, %v4686
        %v4759 = vmax.f32 %v4615, %v4687
        %v4760 = vmax.f32 %v4616, %v4688
        %v4761 = vmax.f32 %v4617, %v4689
        %v4762 = vmax.f32 %v4618, %v4690
        %v4763 = vmax.f32 %v4619, %v4691
        %v4764 = vmax.f32 %v4620, %v4692
        %v4765 = vmax.f32 %v4621, %v4693
        %v4766 = vmax.f32 %v4622, %v4694
        %v4767 = vmax.f32 %v4623, %v4695
        %v4768 = vmax.f32 %v4624, %v4696
        %v4769 = vmax.f32 %v4625, %v4697
        %v4770 = vmax.f32 %v4626, %v4698
        %v4771 = vmax.f32 %v4627, %v4699
        %v4772 = vmax.f32 %v4628, %v4700
        %v4773 = vmax.f32 %v4629, %v4701
        %v4774 = vmax.f32 %v4630, %v4702
        %v4775 = vmax.f32 %v4631, %v4703
        %v4776 = vmax.f32 %v4632, %v4704
        %v4777 = vmax.f32 %v4633, %v4705
        %v4778 = vmax.f32 %v4634, %v4706
        %v4779 = vmax.f32 %v4635, %v4707
        %v4780 = vmax.f32 %v4636, %v4708
        %v4781 = vmax.f32 %v4637, %v4709
        %v4782 = vmax.f32 %v4638, %v4710
        %v4783 = vmax.f32 %v4639, %v4711
        %v4784 = vmax.f32 %v4640, %v4712
        %v4785 = vmax.f32 %v4641, %v4713
        %v4786 = vmax.f32 %v4642, %v4714
        %v4787 = vmax.f32 %v4643, %v4715
        %v4788 = vmax.f32 %v4644, %v4716
        %v4789 = vmax.f32 %v4645, %v4717
        %v4790 = vmax.f32 %v4646, %v4718
        %v4791 = vmax.f32 %v4647, %v4719
        %v4792 = vmax.f32 %v4648, %v4720
        %v4793 = vmax.f32 %v4649, %v4721
        %v4794 = vmax.f32 %v4650, %v4722
        %v4795 = vmax.f32 %v4651, %v4723
        %v4796 = vmax.f32 %v4652, %v4724
        %v4797 = vmax.f32 %v4653, %v4725
        %v4798 = vmax.f32 %v4654, %v4726
        %v4799 = vld [vmem:[%s2] sm:$0x1]
        %v4801 = vperm.slane %v4799, 0
        %v4803 = vadd.f32 %v4727, %v4801
        %v4804 = vadd.f32 %v4728, %v4801
        %v4805 = vadd.f32 %v4729, %v4801
        %v4806 = vadd.f32 %v4730, %v4801
        %v4807 = vadd.f32 %v4731, %v4801
        %v4808 = vadd.f32 %v4732, %v4801
        %v4809 = vadd.f32 %v4733, %v4801
        %v4810 = vadd.f32 %v4734, %v4801
        %v4811 = vadd.f32 %v4735, %v4801
        %v4812 = vadd.f32 %v4736, %v4801
        %v4813 = vadd.f32 %v4737, %v4801
        %v4814 = vadd.f32 %v4738, %v4801
        %v4815 = vadd.f32 %v4739, %v4801
        %v4816 = vadd.f32 %v4740, %v4801
        %v4817 = vadd.f32 %v4741, %v4801
        %v4818 = vadd.f32 %v4742, %v4801
        %v4819 = vadd.f32 %v4743, %v4801
        %v4820 = vadd.f32 %v4744, %v4801
        %v4821 = vadd.f32 %v4745, %v4801
        %v4822 = vadd.f32 %v4746, %v4801
        %v4823 = vadd.f32 %v4747, %v4801
        %v4824 = vadd.f32 %v4748, %v4801
        %v4825 = vadd.f32 %v4749, %v4801
        %v4826 = vadd.f32 %v4750, %v4801
        %v4827 = vadd.f32 %v4751, %v4801
        %v4828 = vadd.f32 %v4752, %v4801
        %v4829 = vadd.f32 %v4753, %v4801
        %v4830 = vadd.f32 %v4754, %v4801
        %v4831 = vadd.f32 %v4755, %v4801
        %v4832 = vadd.f32 %v4756, %v4801
        %v4833 = vadd.f32 %v4757, %v4801
        %v4834 = vadd.f32 %v4758, %v4801
        %v4835 = vadd.f32 %v4759, %v4801
        %v4836 = vadd.f32 %v4760, %v4801
        %v4837 = vadd.f32 %v4761, %v4801
        %v4838 = vadd.f32 %v4762, %v4801
        %v4839 = vadd.f32 %v4763, %v4801
        %v4840 = vadd.f32 %v4764, %v4801
        %v4841 = vadd.f32 %v4765, %v4801
        %v4842 = vadd.f32 %v4766, %v4801
        %v4843 = vadd.f32 %v4767, %v4801
        %v4844 = vadd.f32 %v4768, %v4801
        %v4845 = vadd.f32 %v4769, %v4801
        %v4846 = vadd.f32 %v4770, %v4801
        %v4847 = vadd.f32 %v4771, %v4801
        %v4848 = vadd.f32 %v4772, %v4801
        %v4849 = vadd.f32 %v4773, %v4801
        %v4850 = vadd.f32 %v4774, %v4801
        %v4851 = vadd.f32 %v4775, %v4801
        %v4852 = vadd.f32 %v4776, %v4801
        %v4853 = vadd.f32 %v4777, %v4801
        %v4854 = vadd.f32 %v4778, %v4801
        %v4855 = vadd.f32 %v4779, %v4801
        %v4856 = vadd.f32 %v4780, %v4801
        %v4857 = vadd.f32 %v4781, %v4801
        %v4858 = vadd.f32 %v4782, %v4801
        %v4859 = vadd.f32 %v4783, %v4801
        %v4860 = vadd.f32 %v4784, %v4801
        %v4861 = vadd.f32 %v4785, %v4801
        %v4862 = vadd.f32 %v4786, %v4801
        %v4863 = vadd.f32 %v4787, %v4801
        %v4864 = vadd.f32 %v4788, %v4801
        %v4865 = vadd.f32 %v4789, %v4801
        %v4866 = vadd.f32 %v4790, %v4801
        %v4867 = vadd.f32 %v4791, %v4801
        %v4868 = vadd.f32 %v4792, %v4801
        %v4869 = vadd.f32 %v4793, %v4801
        %v4870 = vadd.f32 %v4794, %v4801
        %v4871 = vadd.f32 %v4795, %v4801
        %v4872 = vadd.f32 %v4796, %v4801
        %v4873 = vadd.f32 %v4797, %v4801
        %v4874 = vadd.f32 %v4798, %v4801
        %v4875 = vmax.f32 %v4803, 0.0
        %v4876 = vmax.f32 %v4804, 0.0
        %v4877 = vmax.f32 %v4805, 0.0
        %v4878 = vmax.f32 %v4806, 0.0
        %v4879 = vmax.f32 %v4807, 0.0
        %v4880 = vmax.f32 %v4808, 0.0
        %v4881 = vmax.f32 %v4809, 0.0
        %v4882 = vmax.f32 %v4810, 0.0
        %v4883 = vmax.f32 %v4811, 0.0
        %v4884 = vmax.f32 %v4812, 0.0
        %v4885 = vmax.f32 %v4813, 0.0
        %v4886 = vmax.f32 %v4814, 0.0
        %v4887 = vmax.f32 %v4815, 0.0
        %v4888 = vmax.f32 %v4816, 0.0
        %v4889 = vmax.f32 %v4817, 0.0
        %v4890 = vmax.f32 %v4818, 0.0
        %v4891 = vmax.f32 %v4819, 0.0
        %v4892 = vmax.f32 %v4820, 0.0
        %v4893 = vmax.f32 %v4821, 0.0
        %v4894 = vmax.f32 %v4822, 0.0
        %v4895 = vmax.f32 %v4823, 0.0
        %v4896 = vmax.f32 %v4824, 0.0
        %v4897 = vmax.f32 %v4825, 0.0
        %v4898 = vmax.f32 %v4826, 0.0
        %v4899 = vmax.f32 %v4827, 0.0
        %v4900 = vmax.f32 %v4828, 0.0
        %v4901 = vmax.f32 %v4829, 0.0
        %v4902 = vmax.f32 %v4830, 0.0
        %v4903 = vmax.f32 %v4831, 0.0
        %v4904 = vmax.f32 %v4832, 0.0
        %v4905 = vmax.f32 %v4833, 0.0
        %v4906 = vmax.f32 %v4834, 0.0
        %v4907 = vmax.f32 %v4835, 0.0
        %v4908 = vmax.f32 %v4836, 0.0
        %v4909 = vmax.f32 %v4837, 0.0
        %v4910 = vmax.f32 %v4838, 0.0
        %v4911 = vmax.f32 %v4839, 0.0
        %v4912 = vmax.f32 %v4840, 0.0
        %v4913 = vmax.f32 %v4841, 0.0
        %v4914 = vmax.f32 %v4842, 0.0
        %v4915 = vmax.f32 %v4843, 0.0
        %v4916 = vmax.f32 %v4844, 0.0
        %v4917 = vmax.f32 %v4845, 0.0
        %v4918 = vmax.f32 %v4846, 0.0
        %v4919 = vmax.f32 %v4847, 0.0
        %v4920 = vmax.f32 %v4848, 0.0
        %v4921 = vmax.f32 %v4849, 0.0
        %v4922 = vmax.f32 %v4850, 0.0
        %v4923 = vmax.f32 %v4851, 0.0
        %v4924 = vmax.f32 %v4852, 0.0
        %v4925 = vmax.f32 %v4853, 0.0
        %v4926 = vmax.f32 %v4854, 0.0
        %v4927 = vmax.f32 %v4855, 0.0
        %v4928 = vmax.f32 %v4856, 0.0
        %v4929 = vmax.f32 %v4857, 0.0
        %v4930 = vmax.f32 %v4858, 0.0
        %v4931 = vmax.f32 %v4859, 0.0
        %v4932 = vmax.f32 %v4860, 0.0
        %v4933 = vmax.f32 %v4861, 0.0
        %v4934 = vmax.f32 %v4862, 0.0
        %v4935 = vmax.f32 %v4863, 0.0
        %v4936 = vmax.f32 %v4864, 0.0
        %v4937 = vmax.f32 %v4865, 0.0
        %v4938 = vmax.f32 %v4866, 0.0
        %v4939 = vmax.f32 %v4867, 0.0
        %v4940 = vmax.f32 %v4868, 0.0
        %v4941 = vmax.f32 %v4869, 0.0
        %v4942 = vmax.f32 %v4870, 0.0
        %v4943 = vmax.f32 %v4871, 0.0
        %v4944 = vmax.f32 %v4872, 0.0
        %v4945 = vmax.f32 %v4873, 0.0
        %v4946 = vmax.f32 %v4874, 0.0
        %4947 = vst [vmem:[%s2543] sm:$0xff] %v4875
        %4948 = vst [vmem:[%s2543 + $0x8] sm:$0xff] %v4876
        %4949 = vst [vmem:[%s2543 + $0x10] sm:$0xff] %v4877
        %4950 = vst [vmem:[%s2543 + $0x18] sm:$0xff] %v4878
        %4951 = vst [vmem:[%s2543 + $0x20] sm:$0xff] %v4879
        %4952 = vst [vmem:[%s2543 + $0x28] sm:$0xff] %v4880
        %4953 = vst [vmem:[%s2543 + $0x30] sm:$0xff] %v4881
        %4954 = vst [vmem:[%s2543 + $0x38] sm:$0xff] %v4882
        %4955 = vst [vmem:[%s2543 + $0x40] sm:$0xff] %v4883
        %4956 = vst [vmem:[%s2543 + $0x48] sm:$0xff] %v4884
        %4957 = vst [vmem:[%s2543 + $0x50] sm:$0xff] %v4885
        %4958 = vst [vmem:[%s2543 + $0x58] sm:$0xff] %v4886
        %4959 = vst [vmem:[%s2543 + $0x60] sm:$0xff] %v4887
        %4960 = vst [vmem:[%s2543 + $0x68] sm:$0xff] %v4888
        %4961 = vst [vmem:[%s2543 + $0x70] sm:$0xff] %v4889
        %4962 = vst [vmem:[%s2543 + $0x78] sm:$0xff] %v4890
        %4963 = vst [vmem:[%s2543 + $0x80] sm:$0xff] %v4891
        %4964 = vst [vmem:[%s2543 + $0x88] sm:$0xff] %v4892
        %4965 = vst [vmem:[%s2543 + $0x90] sm:$0xff] %v4893
        %4966 = vst [vmem:[%s2543 + $0x98] sm:$0xff] %v4894
        %4967 = vst [vmem:[%s2543 + $0xa0] sm:$0xff] %v4895
        %4968 = vst [vmem:[%s2543 + $0xa8] sm:$0xff] %v4896
        %4969 = vst [vmem:[%s2543 + $0xb0] sm:$0xff] %v4897
        %4970 = vst [vmem:[%s2543 + $0xb8] sm:$0xff] %v4898
        %4971 = vst [vmem:[%s2543 + $0xc0] sm:$0xff] %v4899
        %4972 = vst [vmem:[%s2543 + $0xc8] sm:$0xff] %v4900
        %4973 = vst [vmem:[%s2543 + $0xd0] sm:$0xff] %v4901
        %4974 = vst [vmem:[%s2543 + $0xd8] sm:$0xff] %v4902
        %4975 = vst [vmem:[%s2543 + $0xe0] sm:$0xff] %v4903
        %4976 = vst [vmem:[%s2543 + $0xe8] sm:$0xff] %v4904
        %4977 = vst [vmem:[%s2543 + $0xf0] sm:$0xff] %v4905
        %4978 = vst [vmem:[%s2543 + $0xf8] sm:$0xff] %v4906
        %4979 = vst [vmem:[%s2543 + $0x100] sm:$0xff] %v4907
        %4980 = vst [vmem:[%s2543 + $0x108] sm:$0xff] %v4908
        %4981 = vst [vmem:[%s2543 + $0x110] sm:$0xff] %v4909
        %4982 = vst [vmem:[%s2543 + $0x118] sm:$0xff] %v4910
        %4983 = vst [vmem:[%s2543 + $0x120] sm:$0xff] %v4911
        %4984 = vst [vmem:[%s2543 + $0x128] sm:$0xff] %v4912
        %4985 = vst [vmem:[%s2543 + $0x130] sm:$0xff] %v4913
        %4986 = vst [vmem:[%s2543 + $0x138] sm:$0xff] %v4914
        %4987 = vst [vmem:[%s2543 + $0x140] sm:$0xff] %v4915
        %4988 = vst [vmem:[%s2543 + $0x148] sm:$0xff] %v4916
        %4989 = vst [vmem:[%s2543 + $0x150] sm:$0xff] %v4917
        %4990 = vst [vmem:[%s2543 + $0x158] sm:$0xff] %v4918
        %4991 = vst [vmem:[%s2543 + $0x160] sm:$0xff] %v4919
        %4992 = vst [vmem:[%s2543 + $0x168] sm:$0xff] %v4920
        %4993 = vst [vmem:[%s2543 + $0x170] sm:$0xff] %v4921
        %4994 = vst [vmem:[%s2543 + $0x178] sm:$0xff] %v4922
        %4995 = vst [vmem:[%s2543 + $0x180] sm:$0xff] %v4923
        %4996 = vst [vmem:[%s2543 + $0x188] sm:$0xff] %v4924
        %4997 = vst [vmem:[%s2543 + $0x190] sm:$0xff] %v4925
        %4998 = vst [vmem:[%s2543 + $0x198] sm:$0xff] %v4926
        %4999 = vst [vmem:[%s2543 + $0x1a0] sm:$0xff] %v4927
        %5000 = vst [vmem:[%s2543 + $0x1a8] sm:$0xff] %v4928
        %5001 = vst [vmem:[%s2543 + $0x1b0] sm:$0xff] %v4929
        %5002 = vst [vmem:[%s2543 + $0x1b8] sm:$0xff] %v4930
        %5003 = vst [vmem:[%s2543 + $0x1c0] sm:$0xff] %v4931
        %5004 = vst [vmem:[%s2543 + $0x1c8] sm:$0xff] %v4932
        %5005 = vst [vmem:[%s2543 + $0x1d0] sm:$0xff] %v4933
        %5006 = vst [vmem:[%s2543 + $0x1d8] sm:$0xff] %v4934
        %5007 = vst [vmem:[%s2543 + $0x1e0] sm:$0xff] %v4935
        %5008 = vst [vmem:[%s2543 + $0x1e8] sm:$0xff] %v4936
        %5009 = vst [vmem:[%s2543 + $0x1f0] sm:$0xff] %v4937
        %5010 = vst [vmem:[%s2543 + $0x1f8] sm:$0xff] %v4938
        %5011 = vst [vmem:[%s2543 + $0x200] sm:$0xff] %v4939
        %5012 = vst [vmem:[%s2543 + $0x208] sm:$0xff] %v4940
        %5013 = vst [vmem:[%s2543 + $0x210] sm:$0xff] %v4941
        %5014 = vst [vmem:[%s2543 + $0x218] sm:$0xff] %v4942
        %5015 = vst [vmem:[%s2543 + $0x220] sm:$0xff] %v4943
        %5016 = vst [vmem:[%s2543 + $0x228] sm:$0xff] %v4944
        %5017 = vst [vmem:[%s2543 + $0x230] sm:$0xff] %v4945
        %5018 = vst [vmem:[%s2543 + $0x238] sm:$0xff] %v4946
        %s5019 = smul.u32 72, %s14
        %p5020 = scmp.lt.s32.totalorder %s5019, 143
        %s5021 = scalar_select %p5020, %s5019, 143
        %s5022 = smul.addr %s5021, 8
        %s5023 = scalar_lea.vmem %s3, %s5022
        // Predicated region
        $region85: #{combine_forward.3} parent=79 // pred_check
          %p5024 = pneg %p100
        $region86: #{combine_forward.3} parent=79 // pred_check_branch
          %5026 = sbr.rel (%p5024) target = $region88
        $region87: #{combine_forward.3} parent=79 // pred_region
          %s5027 = smul.u32 72, %s14
        $region88: #{combine_forward.3} parent=79 // pred_fallthru
          _
      $region80: #{combine_forward.3} parent=5 // pred_fallthru
        _
      %p5028 = scmp.le.s32.totalorder 2, %s9
      // Predicated region
      $region89: #{combine_forward.3} parent=5 // pred_check
        %p5029 = pneg %p5028
      $region90: #{combine_forward.3} parent=5 // pred_check_branch
        %5031 = sbr.rel (%p5029) target = $region92
      $region91: #{combine_forward.3} parent=5 // pred_region
        %s5032 = ssub.s32 %s9, 2
        // Predicated region
        $region93: #{combine_forward.3} parent=91 // pred_check
          %p5033 = pneg %p106
        $region94: #{combine_forward.3} parent=91 // pred_check_branch
          %5035 = sbr.rel (%p5033) target = $region96
        $region95: #{combine_forward.3} parent=91 // pred_region
          %s5036 = smul.u32 72, %s15
          %p5037 = scmp.lt.s32.totalorder %s5036, 143
          %s5038 = scalar_select %p5037, %s5036, 143
          %s5039 = smul.addr %s5038, 8
          %s5040 = scalar_lea.vmem %s3, %s5039
        $region96: #{combine_forward.3} parent=91 // pred_fallthru
          _
      $region92: #{combine_forward.3} parent=5 // pred_fallthru
        _
    $region6: #{combine_forward.3} parent=1 // loop_footer
      %s13 = sadd.s32 1, %s9
    $region7: #{combine_forward.3} parent=1 // loop_footer_branch
      %8 = sbr.rel target = $region3
    $region8: #{combine_forward.3} parent=1 // loop_exit
      _

// kernel: combine_forward.4
$region0: #{combine_forward.4}
  #allocation0 [shape = 'u32[]', space=smem, size = 0x4, offset = 0x4, fixed_abs, tag = 'smem constant byte address 0x4 - core index']
  #allocation1 [shape = 'u32[72,128]{1,0:T(1,128)}', space=vmem, size = 0x9000, scoped, tag = 'internal scratch']
  %s0 = inlined_call_operand.vmem [shape: f32[4,128,256], index: 0, kind: input, shape index: {}]
  %s1 = inlined_call_operand.vmem [shape: f32[256,32], index: 1, kind: input, shape index: {}]
  %s2 = inlined_call_operand.vmem [shape: f32[1,32], index: 2, kind: input, shape index: {}]
  %s3 = inlined_call_operand.vmem [shape: f32[128,32], index: 3, kind: output, shape index: {}]
  %s4 = sld [smem:[#allocation0]]
  $region68: #{combine_forward.4} parent=0
    _
  %s6 = ssub.s32 1, %s4
  %s7 = scalar_select 0, %s6, %s4
  $region1: #{combine_forward.4} parent=0
    #allocation2 [shape = 'u8[524288]{0}', space=vmem, size = 0x80000, scoped, tag = 'input window, operand 0']
    loop: start=0, step=1, limit=4
    $region2: #{combine_forward.4} parent=1 // loop_pre_header
      _
    $region3: #{combine_forward.4} parent=1 // loop_header
      %s9 = sphi 0, %s13
      %p10 = scmp.ge.s32.totalorder %s9, 4
      %s19 = sphi 0, %s21
      %s22 = sphi 0, %s19
      %s23 = sphi 0, %s22
      %s39 = sphi 0, %s23
      %s43 = sphi 0, %s43
      %s45 = sphi 0, %s43
      %s46 = sphi 0, %s45
      %s60 = sphi 0, %s46
      %s64 = sphi 0, %s64
      %s66 = sphi 0, %s64
      %s67 = sphi 0, %s66
      %s81 = sphi 0, %s67
      %s87 = sphi 0, %s89
      %s90 = sphi 0, %s87
      %s91 = sphi 0, %s90
      %s107 = sphi 0, %s91
    $region4: #{combine_forward.4} parent=1 // loop_header_branch
      %12 = sbr.rel (%p10) target = $region8
    $region5: #{combine_forward.4} parent=1 // loop_body
      %s14 = ssub.s32 %s9, 1
      %s15 = ssub.s32 %s9, 2
      %s16 = sadd.s32 %s9, 1
      %s17 = ssub.s32 %s9, %s16
      %p18 = scmp.eq.s32.totalorder %s17, 0
      %s20 = sadd.s32 %s19, 1
      %s21 = scalar_select %p18, %s19, %s20
      %p24 = pneg %p18
      %p25 = scmp.eq.s32.totalorder %s9, 1
      %p26 = por %p24, %p25
      %p27 = scmp.ne.s32.totalorder %s19, %s22
      %p28 = scmp.eq.s32.totalorder %s9, 0
      %p29 = por %p27, %p28
      %p30 = scmp.ne.s32.totalorder %s19, %s22
      %p31 = scmp.eq.s32.totalorder %s14, 1
      %p32 = por %p30, %p31
      %p33 = scmp.ne.s32.totalorder %s22, %s23
      %p34 = scmp.eq.s32.totalorder %s14, 0
      %p35 = por %p33, %p34
      %p36 = scmp.ne.s32.totalorder %s22, %s23
      %p37 = scmp.eq.s32.totalorder %s15, 1
      %p38 = por %p36, %p37
      %p40 = scmp.ne.s32.totalorder %s23, %s39
      %p41 = scmp.eq.s32.totalorder %s15, 0
      %p42 = por %p40, %p41
      %s44 = sadd.s32 %s43, 1
      %p47 = scmp.eq.s32.totalorder %s9, 1
      %p48 = scmp.ne.s32.totalorder %s43, %s45
      %p49 = scmp.eq.s32.totalorder %s9, 0
      %p50 = por %p48, %p49
      %p51 = scmp.ne.s32.totalorder %s43, %s45
      %p52 = scmp.eq.s32.totalorder %s14, 1
      %p53 = por %p51, %p52
      %p54 = scmp.ne.s32.totalorder %s45, %s46
      %p55 = scmp.eq.s32.totalorder %s14, 0
      %p56 = por %p54, %p55
      %p57 = scmp.ne.s32.totalorder %s45, %s46
      %p58 = scmp.eq.s32.totalorder %s15, 1
      %p59 = por %p57, %p58
      %p61 = scmp.ne.s32.totalorder %s46, %s60
      %p62 = scmp.eq.s32.totalorder %s15, 0
      %p63 = por %p61, %p62
      %s65 = sadd.s32 %s64, 1
      %p68 = scmp.eq.s32.totalorder %s9, 1
      %p69 = scmp.ne.s32.totalorder %s64, %s66
      %p70 = scmp.eq.s32.totalorder %s9, 0
      %p71 = por %p69, %p70
      %p72 = scmp.ne.s32.totalorder %s64, %s66
      %p73 = scmp.eq.s32.totalorder %s14, 1
      %p74 = por %p72, %p73
      %p75 = scmp.ne.s32.totalorder %s66, %s67
      %p76 = scmp.eq.s32.totalorder %s14, 0
      %p77 = por %p75, %p76
      %p78 = scmp.ne.s32.totalorder %s66, %s67
      %p79 = scmp.eq.s32.totalorder %s15, 1
      %p80 = por %p78, %p79
      %p82 = scmp.ne.s32.totalorder %s67, %s81
      %p83 = scmp.eq.s32.totalorder %s15, 0
      %p84 = por %p82, %p83
      %s85 = ssub.s32 %s9, %s16
      %p86 = scmp.eq.s32.totalorder %s85, 0
      %s88 = sadd.s32 %s87, 1
      %s89 = scalar_select %p86, %s87, %s88
      %p92 = pneg %p86
      %p93 = scmp.eq.s32.totalorder %s9, 1
      %p94 = por %p92, %p93
      %p95 = scmp.ne.s32.totalorder %s87, %s90
      %p96 = scmp.eq.s32.totalorder %s9, 0
      %p97 = por %p95, %p96
      %p98 = scmp.ne.s32.totalorder %s87, %s90
      %p99 = scmp.eq.s32.totalorder %s14, 1
      %p100 = por %p98, %p99
      %p101 = scmp.ne.s32.totalorder %s90, %s91
      %p102 = scmp.eq.s32.totalorder %s14, 0
      %p103 = por %p101, %p102
      %p104 = scmp.ne.s32.totalorder %s90, %s91
      %p105 = scmp.eq.s32.totalorder %s15, 1
      %p106 = por %p104, %p105
      %p108 = scmp.ne.s32.totalorder %s91, %s107
      %p109 = scmp.eq.s32.totalorder %s15, 0
      %p110 = por %p108, %p109
      %p111 = scmp.le.s32.totalorder 1, %s9
      %p112 = scmp.lt.s32.totalorder %s9, 3
      %p113 = pnand %p111, %p112
      %p114 = pneg %p113
      // Predicated region
      $region9: #{combine_forward.4} parent=5 // pred_check
        _
      $region10: #{combine_forward.4} parent=5 // pred_check_branch
        %116 = sbr.rel (%p113) target = $region12
      $region11: #{combine_forward.4} parent=5 // pred_region
        %s117 = ssub.s32 %s9, 1
        // Predicated region
        $region13: #{combine_forward.4} parent=11 // pred_check
          %p118 = pneg %p56
        $region14: #{combine_forward.4} parent=11 // pred_check_branch
          %120 = sbr.rel (%p118) target = $region16
        $region15: #{combine_forward.4} parent=11 // pred_region
          _
        $region16: #{combine_forward.4} parent=11 // pred_fallthru
          _
        // Predicated region
        $region17: #{combine_forward.4} parent=11 // pred_check
          %p121 = pneg %p77
        $region18: #{combine_forward.4} parent=11 // pred_check_branch
          %123 = sbr.rel (%p121) target = $region20
        $region19: #{combine_forward.4} parent=11 // pred_region
          _
        $region20: #{combine_forward.4} parent=11 // pred_fallthru
          _
      $region12: #{combine_forward.4} parent=5 // pred_fallthru
        _
      %p124 = scmp.lt.s32.totalorder %s9, 2
      // Predicated region
      $region21: #{combine_forward.4} parent=5 // pred_check
        %p125 = pneg %p124
      $region22: #{combine_forward.4} parent=5 // pred_check_branch
        %127 = sbr.rel (%p125) target = $region24
      $region23: #{combine_forward.4} parent=5 // pred_region
        // Predicated region
        $region25: #{combine_forward.4} parent=23 // pred_check
          %p128 = pneg %p29
        $region26: #{combine_forward.4} parent=23 // pred_check_branch
          %130 = sbr.rel (%p128) target = $region28
        $region27: #{combine_forward.4} parent=23 // pred_region
          %s131 = sand.u32 %s19, 1
          %s132 = sand.u32 %s19, 1
          %s133 = smul.addr %s132, 512
          %s134 = scalar_lea.vmem [#allocation2], %s133
          %s135 = smul.u32 8, %s9
          %s136 = smul.addr %s135, 2
          %s137 = smul.addr %s136, 8
          %s138 = scalar_lea.vmem %s0, %s137
          // Predicated region
          $region29: #{combine_forward.4} parent=27 // pred_check
            _
          $region30: #{combine_forward.4} parent=27 // pred_check_branch
            %140 = sbr.rel (0) target = $region32
          $region31: #{combine_forward.4} parent=27 // pred_region
            // Predicated region
            $region33: #{combine_forward.4} parent=31 // pred_check
              _
            $region34: #{combine_forward.4} parent=31 // pred_check_branch
              %142 = sbr.rel (0) target = $region36
            $region35: #{combine_forward.4} parent=31 // pred_region
              loop: start=0, step=1, limit=1
              $region37: #{combine_forward.4} parent=35 // loop_pre_header
                _
              $region38: #{combine_forward.4} parent=35 // loop_header
                %s144 = sphi 0, %s148
                %p145 = scmp.ge.s32.totalorder %s144, 1
                %s149 = sphi %s138, %s138
                %s150 = sphi %s134, %s134
              $region39: #{combine_forward.4} parent=35 // loop_header_branch
                %147 = sbr.rel (%p145) target = $region43
              $region40: #{combine_forward.4} parent=35 // loop_body
                %v151 = vld [vmem:[%s149] sm:$0xff]
                %152 = vst [vmem:[%s150] sm:$0xff] %v151
                %v153 = vld [vmem:[%s149 + $0x8] sm:$0xff]
                %154 = vst [vmem:[%s150 + $0x8] sm:$0xff] %v153
                %v155 = vld [vmem:[%s149 + $0x10] sm:$0xff]
                %156 = vst [vmem:[%s150 + $0x10] sm:$0xff] %v155
                %v157 = vld [vmem:[%s149 + $0x18] sm:$0xff]
                %158 = vst [vmem:[%s150 + $0x18] sm:$0xff] %v157
                %v159 = vld [vmem:[%s149 + $0x20] sm:$0xff]
                %160 = vst [vmem:[%s150 + $0x20] sm:$0xff] %v159
                %v161 = vld [vmem:[%s149 + $0x28] sm:$0xff]
                %162 = vst [vmem:[%s150 + $0x28] sm:$0xff] %v161
                %v163 = vld [vmem:[%s149 + $0x30] sm:$0xff]
                %164 = vst [vmem:[%s150 + $0x30] sm:$0xff] %v163
                %v165 = vld [vmem:[%s149 + $0x38] sm:$0xff]
                %166 = vst [vmem:[%s150 + $0x38] sm:$0xff] %v165
                %v167 = vld [vmem:[%s149 + $0x40] sm:$0xff]
                %168 = vst [vmem:[%s150 + $0x40] sm:$0xff] %v167
                %v169 = vld [vmem:[%s149 + $0x48] sm:$0xff]
                %170 = vst [vmem:[%s150 + $0x48] sm:$0xff] %v169
                %v171 = vld [vmem:[%s149 + $0x50] sm:$0xff]
                %172 = vst [vmem:[%s150 + $0x50] sm:$0xff] %v171
                %v173 = vld [vmem:[%s149 + $0x58] sm:$0xff]
                %174 = vst [vmem:[%s150 + $0x58] sm:$0xff] %v173
                %v175 = vld [vmem:[%s149 + $0x60] sm:$0xff]
                %176 = vst [vmem:[%s150 + $0x60] sm:$0xff] %v175
                %v177 = vld [vmem:[%s149 + $0x68] sm:$0xff]
                %178 = vst [vmem:[%s150 + $0x68] sm:$0xff] %v177
                %v179 = vld [vmem:[%s149 + $0x70] sm:$0xff]
                %180 = vst [vmem:[%s150 + $0x70] sm:$0xff] %v179
                %v181 = vld [vmem:[%s149 + $0x78] sm:$0xff]
                %182 = vst [vmem:[%s150 + $0x78] sm:$0xff] %v181
                %v183 = vld [vmem:[%s149 + $0x100] sm:$0xff]
                %184 = vst [vmem:[%s150 + $0x80] sm:$0xff] %v183
                %v185 = vld [vmem:[%s149 + $0x108] sm:$0xff]
                %186 = vst [vmem:[%s150 + $0x88] sm:$0xff] %v185
                %v187 = vld [vmem:[%s149 + $0x110] sm:$0xff]
                %188 = vst [vmem:[%s150 + $0x90] sm:$0xff] %v187
                %v189 = vld [vmem:[%s149 + $0x118] sm:$0xff]
                %190 = vst [vmem:[%s150 + $0x98] sm:$0xff] %v189
                %v191 = vld [vmem:[%s149 + $0x120] sm:$0xff]
                %192 = vst [vmem:[%s150 + $0xa0] sm:$0xff] %v191
                %v193 = vld [vmem:[%s149 + $0x128] sm:$0xff]
                %194 = vst [vmem:[%s150 + $0xa8] sm:$0xff] %v193
                %v195 = vld [vmem:[%s149 + $0x130] sm:$0xff]
                %196 = vst [vmem:[%s150 + $0xb0] sm:$0xff] %v195
                %v197 = vld [vmem:[%s149 + $0x138] sm:$0xff]
                %198 = vst [vmem:[%s150 + $0xb8] sm:$0xff] %v197
                %v199 = vld [vmem:[%s149 + $0x140] sm:$0xff]
                %200 = vst [vmem:[%s150 + $0xc0] sm:$0xff] %v199
                %v201 = vld [vmem:[%s149 + $0x148] sm:$0xff]
                %202 = vst [vmem:[%s150 + $0xc8] sm:$0xff] %v201
                %v203 = vld [vmem:[%s149 + $0x150] sm:$0xff]
                %204 = vst [vmem:[%s150 + $0xd0] sm:$0xff] %v203
                %v205 = vld [vmem:[%s149 + $0x158] sm:$0xff]
                %206 = vst [vmem:[%s150 + $0xd8] sm:$0xff] %v205
                %v207 = vld [vmem:[%s149 + $0x160] sm:$0xff]
                %208 = vst [vmem:[%s150 + $0xe0] sm:$0xff] %v207
                %v209 = vld [vmem:[%s149 + $0x168] sm:$0xff]
                %210 = vst [vmem:[%s150 + $0xe8] sm:$0xff] %v209
                %v211 = vld [vmem:[%s149 + $0x170] sm:$0xff]
                %212 = vst [vmem:[%s150 + $0xf0] sm:$0xff] %v211
                %v213 = vld [vmem:[%s149 + $0x178] sm:$0xff]
                %214 = vst [vmem:[%s150 + $0xf8] sm:$0xff] %v213
                %v215 = vld [vmem:[%s149 + $0x200] sm:$0xff]
                %216 = vst [vmem:[%s150 + $0x100] sm:$0xff] %v215
                %v217 = vld [vmem:[%s149 + $0x208] sm:$0xff]
                %218 = vst [vmem:[%s150 + $0x108] sm:$0xff] %v217
                %v219 = vld [vmem:[%s149 + $0x210] sm:$0xff]
                %220 = vst [vmem:[%s150 + $0x110] sm:$0xff] %v219
                %v221 = vld [vmem:[%s149 + $0x218] sm:$0xff]
                %222 = vst [vmem:[%s150 + $0x118] sm:$0xff] %v221
                %v223 = vld [vmem:[%s149 + $0x220] sm:$0xff]
                %224 = vst [vmem:[%s150 + $0x120] sm:$0xff] %v223
                %v225 = vld [vmem:[%s149 + $0x228] sm:$0xff]
                %226 = vst [vmem:[%s150 + $0x128] sm:$0xff] %v225
                %v227 = vld [vmem:[%s149 + $0x230] sm:$0xff]
                %228 = vst [vmem:[%s150 + $0x130] sm:$0xff] %v227
                %v229 = vld [vmem:[%s149 + $0x238] sm:$0xff]
                %230 = vst [vmem:[%s150 + $0x138] sm:$0xff] %v229
                %v231 = vld [vmem:[%s149 + $0x240] sm:$0xff]
                %232 = vst [vmem:[%s150 + $0x140] sm:$0xff] %v231
                %v233 = vld [vmem:[%s149 + $0x248] sm:$0xff]
                %234 = vst [vmem:[%s150 + $0x148] sm:$0xff] %v233
                %v235 = vld [vmem:[%s149 + $0x250] sm:$0xff]
                %236 = vst [vmem:[%s150 + $0x150] sm:$0xff] %v235
                %v237 = vld [vmem:[%s149 + $0x258] sm:$0xff]
                %238 = vst [vmem:[%s150 + $0x158] sm:$0xff] %v237
                %v239 = vld [vmem:[%s149 + $0x260] sm:$0xff]
                %240 = vst [vmem:[%s150 + $0x160] sm:$0xff] %v239
                %v241 = vld [vmem:[%s149 + $0x268] sm:$0xff]
                %242 = vst [vmem:[%s150 + $0x168] sm:$0xff] %v241
                %v243 = vld [vmem:[%s149 + $0x270] sm:$0xff]
                %244 = vst [vmem:[%s150 + $0x170] sm:$0xff] %v243
                %v245 = vld [vmem:[%s149 + $0x278] sm:$0xff]
                %246 = vst [vmem:[%s150 + $0x178] sm:$0xff] %v245
                %v247 = vld [vmem:[%s149 + $0x300] sm:$0xff]
                %248 = vst [vmem:[%s150 + $0x180] sm:$0xff] %v247
                %v249 = vld [vmem:[%s149 + $0x308] sm:$0xff]
                %250 = vst [vmem:[%s150 + $0x188] sm:$0xff] %v249
                %v251 = vld [vmem:[%s149 + $0x310] sm:$0xff]
                %252 = vst [vmem:[%s150 + $0x190] sm:$0xff] %v251
                %v253 = vld [vmem:[%s149 + $0x318] sm:$0xff]
                %254 = vst [vmem:[%s150 + $0x198] sm:$0xff] %v253
                %v255 = vld [vmem:[%s149 + $0x320] sm:$0xff]
                %256 = vst [vmem:[%s150 + $0x1a0] sm:$0xff] %v255
                %v257 = vld [vmem:[%s149 + $0x328] sm:$0xff]
                %258 = vst [vmem:[%s150 + $0x1a8] sm:$0xff] %v257
                %v259 = vld [vmem:[%s149 + $0x330] sm:$0xff]
                %260 = vst [vmem:[%s150 + $0x1b0] sm:$0xff] %v259
                %v261 = vld [vmem:[%s149 + $0x338] sm:$0xff]
                %262 = vst [vmem:[%s150 + $0x1b8] sm:$0xff] %v261
                %v263 = vld [vmem:[%s149 + $0x340] sm:$0xff]
                %264 = vst [vmem:[%s150 + $0x1c0] sm:$0xff] %v263
                %v265 = vld [vmem:[%s149 + $0x348] sm:$0xff]
                %266 = vst [vmem:[%s150 + $0x1c8] sm:$0xff] %v265
                %v267 = vld [vmem:[%s149 + $0x350] sm:$0xff]
                %268 = vst [vmem:[%s150 + $0x1d0] sm:$0xff] %v267
                %v269 = vld [vmem:[%s149 + $0x358] sm:$0xff]
                %270 = vst [vmem:[%s150 + $0x1d8] sm:$0xff] %v269
                %v271 = vld [vmem:[%s149 + $0x360] sm:$0xff]
                %272 = vst [vmem:[%s150 + $0x1e0] sm:$0xff] %v271
                %v273 = vld [vmem:[%s149 + $0x368] sm:$0xff]
                %274 = vst [vmem:[%s150 + $0x1e8] sm:$0xff] %v273
                %v275 = vld [vmem:[%s149 + $0x370] sm:$0xff]
                %276 = vst [vmem:[%s150 + $0x1f0] sm:$0xff] %v275
                %v277 = vld [vmem:[%s149 + $0x378] sm:$0xff]
                %278 = vst [vmem:[%s150 + $0x1f8] sm:$0xff] %v277
              $region41: #{combine_forward.4} parent=35 // loop_footer
                %s148 = sadd.s32 1, %s144
              $region42: #{combine_forward.4} parent=35 // loop_footer_branch
                %143 = sbr.rel target = $region38
              $region43: #{combine_forward.4} parent=35 // loop_exit
                _
            $region36: #{combine_forward.4} parent=31 // pred_fallthru
              _
            // Predicated region
            $region44: #{combine_forward.4} parent=31 // pred_check
              _
            $region45: #{combine_forward.4} parent=31 // pred_check_branch
              %280 = sbr.rel target = $region47
            $region46: #{combine_forward.4} parent=31 // pred_region
              _
            $region47: #{combine_forward.4} parent=31 // pred_fallthru
              _
          $region32: #{combine_forward.4} parent=27 // pred_fallthru
            _
          %281 = vnop
        $region28: #{combine_forward.4} parent=23 // pred_fallthru
          _
      $region24: #{combine_forward.4} parent=5 // pred_fallthru
        _
      %p282 = scmp.le.s32.totalorder 1, %s9
      %p283 = scmp.lt.s32.totalorder %s9, 3
      %p284 = pnand %p282, %p283
      %p285 = pneg %p284
      // Predicated region
      $region48: #{combine_forward.4} parent=5 // pred_check
        _
      $region49: #{combine_forward.4} parent=5 // pred_check_branch
        %287 = sbr.rel (%p284) target = $region51
      $region50: #{combine_forward.4} parent=5 // pred_region
        %s288 = ssub.s32 %s9, 1
        %s289 = sand.u32 %s22, 1
        %s290 = sand.u32 %s22, 1
        %s291 = smul.addr %s290, 512
        %s292 = scalar_lea.vmem [#allocation2], %s291
        // Predicated region
        $region52: #{combine_forward.4} parent=50 // pred_check
          %p293 = pneg %p35
        $region53: #{combine_forward.4} parent=50 // pred_check_branch
          %295 = sbr.rel (%p293) target = $region55
        $region54: #{combine_forward.4} parent=50 // pred_region
          _
        $region55: #{combine_forward.4} parent=50 // pred_fallthru
          _
        %s296 = sand.u32 %s22, 1
        %s297 = sand.u32 %s22, 1
        %s298 = smul.addr %s297, 512
        %s299 = scalar_lea.vmem [#allocation2], %s298
        %p300 = pneg %p35
        %p301 = pneg %p32
        %p302 = pneg %p56
        %p303 = pneg %p53
        %p304 = pneg %p77
        %p305 = pneg %p74
        %p306 = pneg %p103
        %p307 = pneg %p100
        %s308 = smul.u32 8, %s14
        %p309 = scmp.lt.s32.totalorder %s308, 15
        %s310 = scalar_select %p309, %s308, 15
        %s311 = smul.addr %s310, 8
        %s312 = scalar_lea.vmem %s3, %s311
        %s313 = smul.u32 8, %s14
        %s314 = smul.u32 8, %s14
        %p315 = scmp.lt.s32.totalorder %s314, 15
        %s316 = scalar_select %p315, %s314, 15
        %s317 = smul.addr %s316, 8
        %s318 = scalar_lea.vmem %s3, %s317
        %s319 = smul.u32 8, %s14
        %v320 = vld [vmem:[%s292] sm:$0xff]
        %v321 = vld [vmem:[%s292 + $0x8] sm:$0xff]
        %v322 = vld [vmem:[%s292 + $0x10] sm:$0xff]
        %v323 = vld [vmem:[%s292 + $0x18] sm:$0xff]
        %v324 = vld [vmem:[%s292 + $0x20] sm:$0xff]
        %v325 = vld [vmem:[%s292 + $0x28] sm:$0xff]
        %v326 = vld [vmem:[%s292 + $0x30] sm:$0xff]
        %v327 = vld [vmem:[%s292 + $0x38] sm:$0xff]
        %v328 = vld [vmem:[%s292 + $0x40] sm:$0xff]
        %v329 = vld [vmem:[%s292 + $0x48] sm:$0xff]
        %v330 = vld [vmem:[%s292 + $0x50] sm:$0xff]
        %v331 = vld [vmem:[%s292 + $0x58] sm:$0xff]
        %v332 = vld [vmem:[%s292 + $0x60] sm:$0xff]
        %v333 = vld [vmem:[%s292 + $0x68] sm:$0xff]
        %v334 = vld [vmem:[%s292 + $0x70] sm:$0xff]
        %v335 = vld [vmem:[%s292 + $0x78] sm:$0xff]
        %v336 = vld [vmem:[%s292 + $0x80] sm:$0xff]
        %v337 = vld [vmem:[%s292 + $0x88] sm:$0xff]
        %v338 = vld [vmem:[%s292 + $0x90] sm:$0xff]
        %v339 = vld [vmem:[%s292 + $0x98] sm:$0xff]
        %v340 = vld [vmem:[%s292 + $0xa0] sm:$0xff]
        %v341 = vld [vmem:[%s292 + $0xa8] sm:$0xff]
        %v342 = vld [vmem:[%s292 + $0xb0] sm:$0xff]
        %v343 = vld [vmem:[%s292 + $0xb8] sm:$0xff]
        %v344 = vld [vmem:[%s292 + $0xc0] sm:$0xff]
        %v345 = vld [vmem:[%s292 + $0xc8] sm:$0xff]
        %v346 = vld [vmem:[%s292 + $0xd0] sm:$0xff]
        %v347 = vld [vmem:[%s292 + $0xd8] sm:$0xff]
        %v348 = vld [vmem:[%s292 + $0xe0] sm:$0xff]
        %v349 = vld [vmem:[%s292 + $0xe8] sm:$0xff]
        %v350 = vld [vmem:[%s292 + $0xf0] sm:$0xff]
        %v351 = vld [vmem:[%s292 + $0xf8] sm:$0xff]
        %v352 = vld [vmem:[%s292 + $0x100] sm:$0xff]
        %v353 = vld [vmem:[%s292 + $0x108] sm:$0xff]
        %v354 = vld [vmem:[%s292 + $0x110] sm:$0xff]
        %v355 = vld [vmem:[%s292 + $0x118] sm:$0xff]
        %v356 = vld [vmem:[%s292 + $0x120] sm:$0xff]
        %v357 = vld [vmem:[%s292 + $0x128] sm:$0xff]
        %v358 = vld [vmem:[%s292 + $0x130] sm:$0xff]
        %v359 = vld [vmem:[%s292 + $0x138] sm:$0xff]
        %v360 = vld [vmem:[%s292 + $0x140] sm:$0xff]
        %v361 = vld [vmem:[%s292 + $0x148] sm:$0xff]
        %v362 = vld [vmem:[%s292 + $0x150] sm:$0xff]
        %v363 = vld [vmem:[%s292 + $0x158] sm:$0xff]
        %v364 = vld [vmem:[%s292 + $0x160] sm:$0xff]
        %v365 = vld [vmem:[%s292 + $0x168] sm:$0xff]
        %v366 = vld [vmem:[%s292 + $0x170] sm:$0xff]
        %v367 = vld [vmem:[%s292 + $0x178] sm:$0xff]
        %v368 = vld [vmem:[%s292 + $0x180] sm:$0xff]
        %v369 = vld [vmem:[%s292 + $0x188] sm:$0xff]
        %v370 = vld [vmem:[%s292 + $0x190] sm:$0xff]
        %v371 = vld [vmem:[%s292 + $0x198] sm:$0xff]
        %v372 = vld [vmem:[%s292 + $0x1a0] sm:$0xff]
        %v373 = vld [vmem:[%s292 + $0x1a8] sm:$0xff]
        %v374 = vld [vmem:[%s292 + $0x1b0] sm:$0xff]
        %v375 = vld [vmem:[%s292 + $0x1b8] sm:$0xff]
        %v376 = vld [vmem:[%s292 + $0x1c0] sm:$0xff]
        %v377 = vld [vmem:[%s292 + $0x1c8] sm:$0xff]
        %v378 = vld [vmem:[%s292 + $0x1d0] sm:$0xff]
        %v379 = vld [vmem:[%s292 + $0x1d8] sm:$0xff]
        %v380 = vld [vmem:[%s292 + $0x1e0] sm:$0xff]
        %v381 = vld [vmem:[%s292 + $0x1e8] sm:$0xff]
        %v382 = vld [vmem:[%s292 + $0x1f0] sm:$0xff]
        %v383 = vld [vmem:[%s292 + $0x1f8] sm:$0xff]
        %v384 = vld [vmem:[%s1] sm:$0xff]
        %v385 = vld [vmem:[%s1 + $0x8] sm:$0xff]
        %v386 = vld [vmem:[%s1 + $0x10] sm:$0xff]
        %v387 = vld [vmem:[%s1 + $0x18] sm:$0xff]
        %v388 = vld [vmem:[%s1 + $0x20] sm:$0xff]
        %v389 = vld [vmem:[%s1 + $0x28] sm:$0xff]
        %v390 = vld [vmem:[%s1 + $0x30] sm:$0xff]
        %v391 = vld [vmem:[%s1 + $0x38] sm:$0xff]
        %v392 = vld [vmem:[%s1 + $0x40] sm:$0xff]
        %v393 = vld [vmem:[%s1 + $0x48] sm:$0xff]
        %v394 = vld [vmem:[%s1 + $0x50] sm:$0xff]
        %v395 = vld [vmem:[%s1 + $0x58] sm:$0xff]
        %v396 = vld [vmem:[%s1 + $0x60] sm:$0xff]
        %v397 = vld [vmem:[%s1 + $0x68] sm:$0xff]
        %v398 = vld [vmem:[%s1 + $0x70] sm:$0xff]
        %v399 = vld [vmem:[%s1 + $0x78] sm:$0xff]
        %v400 = vld [vmem:[%s1 + $0x80] sm:$0xff]
        %v401 = vld [vmem:[%s1 + $0x88] sm:$0xff]
        %v402 = vld [vmem:[%s1 + $0x90] sm:$0xff]
        %v403 = vld [vmem:[%s1 + $0x98] sm:$0xff]
        %v404 = vld [vmem:[%s1 + $0xa0] sm:$0xff]
        %v405 = vld [vmem:[%s1 + $0xa8] sm:$0xff]
        %v406 = vld [vmem:[%s1 + $0xb0] sm:$0xff]
        %v407 = vld [vmem:[%s1 + $0xb8] sm:$0xff]
        %v408 = vld [vmem:[%s1 + $0xc0] sm:$0xff]
        %v409 = vld [vmem:[%s1 + $0xc8] sm:$0xff]
        %v410 = vld [vmem:[%s1 + $0xd0] sm:$0xff]
        %v411 = vld [vmem:[%s1 + $0xd8] sm:$0xff]
        %v412 = vld [vmem:[%s1 + $0xe0] sm:$0xff]
        %v413 = vld [vmem:[%s1 + $0xe8] sm:$0xff]
        %v414 = vld [vmem:[%s1 + $0xf0] sm:$0xff]
        %v415 = vld [vmem:[%s1 + $0xf8] sm:$0xff]
        %416 = vmatpush.msra.mxu0 %v399
        %417 = vmatpush.msra.mxu0 %v398
        %418 = vmatpush.msra.mxu0 %v397
        %419 = vmatpush.msra.mxu0 %v396
        %420 = vmatpush.msra.mxu0 %v395
        %421 = vmatpush.msra.mxu0 %v394
        %422 = vmatpush.msra.mxu0 %v393
        %423 = vmatpush.msra.mxu0 %v392
        %424 = vmatpush.msra.mxu0 %v391
        %425 = vmatpush.msra.mxu0 %v390
        %426 = vmatpush.msra.mxu0 %v389
        %427 = vmatpush.msra.mxu0 %v388
        %428 = vmatpush.msra.mxu0 %v387
        %429 = vmatpush.msra.mxu0 %v386
        %430 = vmatpush.msra.mxu0 %v385
        %431 = vmatpush.msra.mxu0 %v384
        %432 = vmatmul.f32.gmra.mxu0 %v320
        %v433 = vpop.f32.mrf.mxu0
        %v434 = vadd.f32 0.0, %v433
        %435 = vmatmul.f32.gmra.mxu0 %v322
        %v436 = vpop.f32.mrf.mxu0
        %v437 = vadd.f32 0.0, %v436
        %438 = vmatmul.f32.gmra.mxu0 %v324
        %v439 = vpop.f32.mrf.mxu0
        %v440 = vadd.f32 0.0, %v439
        %441 = vmatmul.f32.gmra.mxu0 %v326
        %v442 = vpop.f32.mrf.mxu0
        %v443 = vadd.f32 0.0, %v442
        %444 = vmatmul.f32.gmra.mxu0 %v328
        %v445 = vpop.f32.mrf.mxu0
        %v446 = vadd.f32 0.0, %v445
        %447 = vmatmul.f32.gmra.mxu0 %v330
        %v448 = vpop.f32.mrf.mxu0
        %v449 = vadd.f32 0.0, %v448
        %450 = vmatmul.f32.gmra.mxu0 %v332
        %v451 = vpop.f32.mrf.mxu0
        %v452 = vadd.f32 0.0, %v451
        %453 = vmatmul.f32.gmra.mxu0 %v334
        %v454 = vpop.f32.mrf.mxu0
        %v455 = vadd.f32 0.0, %v454
        %456 = vmatmul.f32.gmra.mxu0 %v336
        %v457 = vpop.f32.mrf.mxu0
        %v458 = vadd.f32 0.0, %v457
        %459 = vmatmul.f32.gmra.mxu0 %v338
        %v460 = vpop.f32.mrf.mxu0
        %v461 = vadd.f32 0.0, %v460
        %462 = vmatmul.f32.gmra.mxu0 %v340
        %v463 = vpop.f32.mrf.mxu0
        %v464 = vadd.f32 0.0, %v463
        %465 = vmatmul.f32.gmra.mxu0 %v342
        %v466 = vpop.f32.mrf.mxu0
        %v467 = vadd.f32 0.0, %v466
        %468 = vmatmul.f32.gmra.mxu0 %v344
        %v469 = vpop.f32.mrf.mxu0
        %v470 = vadd.f32 0.0, %v469
        %471 = vmatmul.f32.gmra.mxu0 %v346
        %v472 = vpop.f32.mrf.mxu0
        %v473 = vadd.f32 0.0, %v472
        %474 = vmatmul.f32.gmra.mxu0 %v348
        %v475 = vpop.f32.mrf.mxu0
        %v476 = vadd.f32 0.0, %v475
        %477 = vmatmul.f32.gmra.mxu0 %v350
        %v478 = vpop.f32.mrf.mxu0
        %v479 = vadd.f32 0.0, %v478
        %480 = vmatmul.f32.gmra.mxu0 %v352
        %v481 = vpop.f32.mrf.mxu0
        %v482 = vadd.f32 0.0, %v481
        %483 = vmatmul.f32.gmra.mxu0 %v354
        %v484 = vpop.f32.mrf.mxu0
        %v485 = vadd.f32 0.0, %v484
        %486 = vmatmul.f32.gmra.mxu0 %v356
        %v487 = vpop.f32.mrf.mxu0
        %v488 = vadd.f32 0.0, %v487
        %489 = vmatmul.f32.gmra.mxu0 %v358
        %v490 = vpop.f32.mrf.mxu0
        %v491 = vadd.f32 0.0, %v490
        %492 = vmatmul.f32.gmra.mxu0 %v360
        %v493 = vpop.f32.mrf.mxu0
        %v494 = vadd.f32 0.0, %v493
        %495 = vmatmul.f32.gmra.mxu0 %v362
        %v496 = vpop.f32.mrf.mxu0
        %v497 = vadd.f32 0.0, %v496
        %498 = vmatmul.f32.gmra.mxu0 %v364
        %v499 = vpop.f32.mrf.mxu0
        %v500 = vadd.f32 0.0, %v499
        %501 = vmatmul.f32.gmra.mxu0 %v366
        %v502 = vpop.f32.mrf.mxu0
        %v503 = vadd.f32 0.0, %v502
        %504 = vmatmul.f32.gmra.mxu0 %v368
        %v505 = vpop.f32.mrf.mxu0
        %v506 = vadd.f32 0.0, %v505
        %507 = vmatmul.f32.gmra.mxu0 %v370
        %v508 = vpop.f32.mrf.mxu0
        %v509 = vadd.f32 0.0, %v508
        %510 = vmatmul.f32.gmra.mxu0 %v372
        %v511 = vpop.f32.mrf.mxu0
        %v512 = vadd.f32 0.0, %v511
        %513 = vmatmul.f32.gmra.mxu0 %v374
        %v514 = vpop.f32.mrf.mxu0
        %v515 = vadd.f32 0.0, %v514
        %516 = vmatmul.f32.gmra.mxu0 %v376
        %v517 = vpop.f32.mrf.mxu0
        %v518 = vadd.f32 0.0, %v517
        %519 = vmatmul.f32.gmra.mxu0 %v378
        %v520 = vpop.f32.mrf.mxu0
        %v521 = vadd.f32 0.0, %v520
        %522 = vmatmul.f32.gmra.mxu0 %v380
        %v523 = vpop.f32.mrf.mxu0
        %v524 = vadd.f32 0.0, %v523
        %525 = vmatmul.f32.gmra.mxu0 %v382
        %v526 = vpop.f32.mrf.mxu0
        %v527 = vadd.f32 0.0, %v526
        %528 = vdwg.mxu0
        %529 = vmatpush.msra.mxu0 %v415
        %530 = vmatpush.msra.mxu0 %v414
        %531 = vmatpush.msra.mxu0 %v413
        %532 = vmatpush.msra.mxu0 %v412
        %533 = vmatpush.msra.mxu0 %v411
        %534 = vmatpush.msra.mxu0 %v410
        %535 = vmatpush.msra.mxu0 %v409
        %536 = vmatpush.msra.mxu0 %v408
        %537 = vmatpush.msra.mxu0 %v407
        %538 = vmatpush.msra.mxu0 %v406
        %539 = vmatpush.msra.mxu0 %v405
        %540 = vmatpush.msra.mxu0 %v404
        %541 = vmatpush.msra.mxu0 %v403
        %542 = vmatpush.msra.mxu0 %v402
        %543 = vmatpush.msra.mxu0 %v401
        %544 = vmatpush.msra.mxu0 %v400
        %545 = vmatmul.f32.gmra.mxu0 %v321
        %v546 = vpop.f32.mrf.mxu0
        %v547 = vadd.f32 %v434, %v546
        %548 = vmatmul.f32.gmra.mxu0 %v323
        %v549 = vpop.f32.mrf.mxu0
        %v550 = vadd.f32 %v437, %v549
        %551 = vmatmul.f32.gmra.mxu0 %v325
        %v552 = vpop.f32.mrf.mxu0
        %v553 = vadd.f32 %v440, %v552
        %554 = vmatmul.f32.gmra.mxu0 %v327
        %v555 = vpop.f32.mrf.mxu0
        %v556 = vadd.f32 %v443, %v555
        %557 = vmatmul.f32.gmra.mxu0 %v329
        %v558 = vpop.f32.mrf.mxu0
        %v559 = vadd.f32 %v446, %v558
        %560 = vmatmul.f32.gmra.mxu0 %v331
        %v561 = vpop.f32.mrf.mxu0
        %v562 = vadd.f32 %v449, %v561
        %563 = vmatmul.f32.gmra.mxu0 %v333
        %v564 = vpop.f32.mrf.mxu0
        %v565 = vadd.f32 %v452, %v564
        %566 = vmatmul.f32.gmra.mxu0 %v335
        %v567 = vpop.f32.mrf.mxu0
        %v568 = vadd.f32 %v455, %v567
        %569 = vmatmul.f32.gmra.mxu0 %v337
        %v570 = vpop.f32.mrf.mxu0
        %v571 = vadd.f32 %v458, %v570
        %572 = vmatmul.f32.gmra.mxu0 %v339
        %v573 = vpop.f32.mrf.mxu0
        %v574 = vadd.f32 %v461, %v573
        %575 = vmatmul.f32.gmra.mxu0 %v341
        %v576 = vpop.f32.mrf.mxu0
        %v577 = vadd.f32 %v464, %v576
        %578 = vmatmul.f32.gmra.mxu0 %v343
        %v579 = vpop.f32.mrf.mxu0
        %v580 = vadd.f32 %v467, %v579
        %581 = vmatmul.f32.gmra.mxu0 %v345
        %v582 = vpop.f32.mrf.mxu0
        %v583 = vadd.f32 %v470, %v582
        %584 = vmatmul.f32.gmra.mxu0 %v347
        %v585 = vpop.f32.mrf.mxu0
        %v586 = vadd.f32 %v473, %v585
        %587 = vmatmul.f32.gmra.mxu0 %v349
        %v588 = vpop.f32.mrf.mxu0
        %v589 = vadd.f32 %v476, %v588
        %590 = vmatmul.f32.gmra.mxu0 %v351
        %v591 = vpop.f32.mrf.mxu0
        %v592 = vadd.f32 %v479, %v591
        %593 = vmatmul.f32.gmra.mxu0 %v353
        %v594 = vpop.f32.mrf.mxu0
        %v595 = vadd.f32 %v482, %v594
        %596 = vmatmul.f32.gmra.mxu0 %v355
        %v597 = vpop.f32.mrf.mxu0
        %v598 = vadd.f32 %v485, %v597
        %599 = vmatmul.f32.gmra.mxu0 %v357
        %v600 = vpop.f32.mrf.mxu0
        %v601 = vadd.f32 %v488, %v600
        %602 = vmatmul.f32.gmra.mxu0 %v359
        %v603 = vpop.f32.mrf.mxu0
        %v604 = vadd.f32 %v491, %v603
        %605 = vmatmul.f32.gmra.mxu0 %v361
        %v606 = vpop.f32.mrf.mxu0
        %v607 = vadd.f32 %v494, %v606
        %608 = vmatmul.f32.gmra.mxu0 %v363
        %v609 = vpop.f32.mrf.mxu0
        %v610 = vadd.f32 %v497, %v609
        %611 = vmatmul.f32.gmra.mxu0 %v365
        %v612 = vpop.f32.mrf.mxu0
        %v613 = vadd.f32 %v500, %v612
        %614 = vmatmul.f32.gmra.mxu0 %v367
        %v615 = vpop.f32.mrf.mxu0
        %v616 = vadd.f32 %v503, %v615
        %617 = vmatmul.f32.gmra.mxu0 %v369
        %v618 = vpop.f32.mrf.mxu0
        %v619 = vadd.f32 %v506, %v618
        %620 = vmatmul.f32.gmra.mxu0 %v371
        %v621 = vpop.f32.mrf.mxu0
        %v622 = vadd.f32 %v509, %v621
        %623 = vmatmul.f32.gmra.mxu0 %v373
        %v624 = vpop.f32.mrf.mxu0
        %v625 = vadd.f32 %v512, %v624
        %626 = vmatmul.f32.gmra.mxu0 %v375
        %v627 = vpop.f32.mrf.mxu0
        %v628 = vadd.f32 %v515, %v627
        %629 = vmatmul.f32.gmra.mxu0 %v377
        %v630 = vpop.f32.mrf.mxu0
        %v631 = vadd.f32 %v518, %v630
        %632 = vmatmul.f32.gmra.mxu0 %v379
        %v633 = vpop.f32.mrf.mxu0
        %v634 = vadd.f32 %v521, %v633
        %635 = vmatmul.f32.gmra.mxu0 %v381
        %v636 = vpop.f32.mrf.mxu0
        %v637 = vadd.f32 %v524, %v636
        %638 = vmatmul.f32.gmra.mxu0 %v383
        %v639 = vpop.f32.mrf.mxu0
        %v640 = vadd.f32 %v527, %v639
        %641 = vdwg.mxu0
        %v642 = vmax.f32 %v547, %v571
        %v643 = vmax.f32 %v550, %v574
        %v644 = vmax.f32 %v553, %v577
        %v645 = vmax.f32 %v556, %v580
        %v646 = vmax.f32 %v559, %v583
        %v647 = vmax.f32 %v562, %v586
        %v648 = vmax.f32 %v565, %v589
        %v649 = vmax.f32 %v568, %v592
        %v650 = vmax.f32 %v595, %v619
        %v651 = vmax.f32 %v598, %v622
        %v652 = vmax.f32 %v601, %v625
        %v653 = vmax.f32 %v604, %v628
        %v654 = vmax.f32 %v607, %v631
        %v655 = vmax.f32 %v610, %v634
        %v656 = vmax.f32 %v613, %v637
        %v657 = vmax.f32 %v616, %v640
        %v658 = vmax.f32 %v642, %v650
        %v659 = vmax.f32 %v643, %v651
        %v660 = vmax.f32 %v644, %v652
        %v661 = vmax.f32 %v645, %v653
        %v662 = vmax.f32 %v646, %v654
        %v663 = vmax.f32 %v647, %v655
        %v664 = vmax.f32 %v648, %v656
        %v665 = vmax.f32 %v649, %v657
        %v666 = vld [vmem:[%s2] sm:$0x1]
        %v668 = vperm.slane %v666, 0
        %v670 = vadd.f32 %v658, %v668
        %v671 = vadd.f32 %v659, %v668
        %v672 = vadd.f32 %v660, %v668
        %v673 = vadd.f32 %v661, %v668
        %v674 = vadd.f32 %v662, %v668
        %v675 = vadd.f32 %v663, %v668
        %v676 = vadd.f32 %v664, %v668
        %v677 = vadd.f32 %v665, %v668
        %v678 = vmax.f32 %v670, 0.0
        %v679 = vmax.f32 %v671, 0.0
        %v680 = vmax.f32 %v672, 0.0
        %v681 = vmax.f32 %v673, 0.0
        %v682 = vmax.f32 %v674, 0.0
        %v683 = vmax.f32 %v675, 0.0
        %v684 = vmax.f32 %v676, 0.0
        %v685 = vmax.f32 %v677, 0.0
        %vm686 = vcmask 261120
        %687 = vst.msk [vmem:[%s318] sm:$0xff] %vm686, %v678
        %688 = vst.msk [vmem:[%s318 + $0x8] sm:$0xff] %vm686, %v679
        %689 = vst.msk [vmem:[%s318 + $0x10] sm:$0xff] %vm686, %v680
        %690 = vst.msk [vmem:[%s318 + $0x18] sm:$0xff] %vm686, %v681
        %691 = vst.msk [vmem:[%s318 + $0x20] sm:$0xff] %vm686, %v682
        %692 = vst.msk [vmem:[%s318 + $0x28] sm:$0xff] %vm686, %v683
        %693 = vst.msk [vmem:[%s318 + $0x30] sm:$0xff] %vm686, %v684
        %694 = vst.msk [vmem:[%s318 + $0x38] sm:$0xff] %vm686, %v685
        %s695 = smul.u32 8, %s14
        %p696 = scmp.lt.s32.totalorder %s695, 15
        %s697 = scalar_select %p696, %s695, 15
        %s698 = smul.addr %s697, 8
        %s699 = scalar_lea.vmem %s3, %s698
        // Predicated region
        $region56: #{combine_forward.4} parent=50 // pred_check
          %p700 = pneg %p100
        $region57: #{combine_forward.4} parent=50 // pred_check_branch
          %702 = sbr.rel (%p700) target = $region59
        $region58: #{combine_forward.4} parent=50 // pred_region
          %s703 = smul.u32 8, %s14
        $region59: #{combine_forward.4} parent=50 // pred_fallthru
          _
      $region51: #{combine_forward.4} parent=5 // pred_fallthru
        _
      %p704 = scmp.le.s32.totalorder 2, %s9
      // Predicated region
      $region60: #{combine_forward.4} parent=5 // pred_check
        %p705 = pneg %p704
      $region61: #{combine_forward.4} parent=5 // pred_check_branch
        %707 = sbr.rel (%p705) target = $region63
      $region62: #{combine_forward.4} parent=5 // pred_region
        %s708 = ssub.s32 %s9, 2
        // Predicated region
        $region64: #{combine_forward.4} parent=62 // pred_check
          %p709 = pneg %p106
        $region65: #{combine_forward.4} parent=62 // pred_check_branch
          %711 = sbr.rel (%p709) target = $region67
        $region66: #{combine_forward.4} parent=62 // pred_region
          %s712 = smul.u32 8, %s15
          %p713 = scmp.lt.s32.totalorder %s712, 15
          %s714 = scalar_select %p713, %s712, 15
          %s715 = smul.addr %s714, 8
          %s716 = scalar_lea.vmem %s3, %s715
        $region67: #{combine_forward.4} parent=62 // pred_fallthru
          _
      $region63: #{combine_forward.4} parent=5 // pred_fallthru
        _
    $region6: #{combine_forward.4} parent=1 // loop_footer
      %s13 = sadd.s32 1, %s9
    $region7: #{combine_forward.4} parent=1 // loop_footer_branch
      %8 = sbr.rel target = $region3
    $region8: #{combine_forward.4} parent=1 // loop_exit
      _

// kernel: combine_forward.5
$region0: #{combine_forward.5}
  #allocation0 [shape = 'u32[]', space=smem, size = 0x4, offset = 0x4, fixed_abs, tag = 'smem constant byte address 0x4 - core index']
  #allocation1 [shape = 'u32[72,128]{1,0:T(1,128)}', space=vmem, size = 0x9000, scoped, tag = 'internal scratch']
  #allocation2 [shape = 'f32[8,256]{1,0:T(8,128)}', space=vmem, size = 0x2000, scoped, tag = 'scratch operand']
  %s0 = inlined_call_operand.vmem [shape: f32[8,512], index: 0, kind: input, shape index: {}]
  %s1 = inlined_call_operand.vmem [shape: f32[512,256], index: 1, kind: input, shape index: {}]
  %s2 = inlined_call_operand.vmem [shape: f32[1,256], index: 2, kind: input, shape index: {}]
  %s3 = inlined_call_operand.vmem [shape: f32[64,256], index: 3, kind: input, shape index: {}]
  %s4 = inlined_call_operand.vmem [shape: f32[64,128], index: 4, kind: input, shape index: {}]
  %s5 = inlined_call_operand.vmem [shape: f32[1,128], index: 5, kind: input, shape index: {}]
  %s6 = inlined_call_operand.hbm [shape: f32[2,128], index: 6, kind: output, shape index: {}]
  %s7 = sld [smem:[#allocation0]]
  $region34: #{combine_forward.5} parent=0
    _
  %s9 = ssub.s32 1, %s7
  %s10 = scalar_select 0, %s9, %s7
  $region1: #{combine_forward.5} parent=0
    #allocation3 [shape = 'u8[1024]{0}', space=vmem, size = 0x400, scoped, tag = 'output window, operand 0, single buffered']
    #allocation4 [shape = 's32[1]{0}', space=sflag, size = 0x4, scoped, tag = 'scoped memory for combine_forward.5']
    %11 = vsyncpa [#allocation4], 0
    // Predicated region
    $region2: #{combine_forward.5} parent=1 // pred_check
      _
    $region3: #{combine_forward.5} parent=1 // pred_check_branch
      %13 = sbr.rel (0) target = $region5
    $region4: #{combine_forward.5} parent=1 // pred_region
      _
    $region5: #{combine_forward.5} parent=1 // pred_fallthru
      _
    // Predicated region
    $region6: #{combine_forward.5} parent=1 // pred_check
      _
    $region7: #{combine_forward.5} parent=1 // pred_check_branch
      %15 = sbr.rel (0) target = $region9
    $region8: #{combine_forward.5} parent=1 // pred_region
      _
    $region9: #{combine_forward.5} parent=1 // pred_fallthru
      _
    // Predicated region
    $region10: #{combine_forward.5} parent=1 // pred_check
      _
    $region11: #{combine_forward.5} parent=1 // pred_check_branch
      %17 = sbr.rel (0) target = $region13
    $region12: #{combine_forward.5} parent=1 // pred_region
      _
    $region13: #{combine_forward.5} parent=1 // pred_fallthru
      _
    // Predicated region
    $region14: #{combine_forward.5} parent=1 // pred_check
      _
    $region15: #{combine_forward.5} parent=1 // pred_check_branch
      %19 = sbr.rel (0) target = $region17
    $region16: #{combine_forward.5} parent=1 // pred_region
      _
    $region17: #{combine_forward.5} parent=1 // pred_fallthru
      _
    // Predicated region
    $region18: #{combine_forward.5} parent=1 // pred_check
      _
    $region19: #{combine_forward.5} parent=1 // pred_check_branch
      %21 = sbr.rel (0) target = $region21
    $region20: #{combine_forward.5} parent=1 // pred_region
      _
    $region21: #{combine_forward.5} parent=1 // pred_fallthru
      _
    // Predicated region
    $region22: #{combine_forward.5} parent=1 // pred_check
      _
    $region23: #{combine_forward.5} parent=1 // pred_check_branch
      %23 = sbr.rel (0) target = $region25
    $region24: #{combine_forward.5} parent=1 // pred_region
      _
    $region25: #{combine_forward.5} parent=1 // pred_fallthru
      _
    %v24 = vld [vmem:[%s0] sm:$0xff]
    %v25 = vld [vmem:[%s0 + $0x8] sm:$0xff]
    %v26 = vld [vmem:[%s0 + $0x10] sm:$0xff]
    %v27 = vld [vmem:[%s0 + $0x18] sm:$0xff]
    %v28 = vld [vmem:[%s1] sm:$0xff]
    %v29 = vld [vmem:[%s1 + $0x8] sm:$0xff]
    %v30 = vld [vmem:[%s1 + $0x10] sm:$0xff]
    %v31 = vld [vmem:[%s1 + $0x18] sm:$0xff]
    %v32 = vld [vmem:[%s1 + $0x20] sm:$0xff]
    %v33 = vld [vmem:[%s1 + $0x28] sm:$0xff]
    %v34 = vld [vmem:[%s1 + $0x30] sm:$0xff]
    %v35 = vld [vmem:[%s1 + $0x38] sm:$0xff]
    %v36 = vld [vmem:[%s1 + $0x40] sm:$0xff]
    %v37 = vld [vmem:[%s1 + $0x48] sm:$0xff]
    %v38 = vld [vmem:[%s1 + $0x50] sm:$0xff]
    %v39 = vld [vmem:[%s1 + $0x58] sm:$0xff]
    %v40 = vld [vmem:[%s1 + $0x60] sm:$0xff]
    %v41 = vld [vmem:[%s1 + $0x68] sm:$0xff]
    %v42 = vld [vmem:[%s1 + $0x70] sm:$0xff]
    %v43 = vld [vmem:[%s1 + $0x78] sm:$0xff]
    %v44 = vld [vmem:[%s1 + $0x80] sm:$0xff]
    %v45 = vld [vmem:[%s1 + $0x88] sm:$0xff]
    %v46 = vld [vmem:[%s1 + $0x90] sm:$0xff]
    %v47 = vld [vmem:[%s1 + $0x98] sm:$0xff]
    %v48 = vld [vmem:[%s1 + $0xa0] sm:$0xff]
    %v49 = vld [vmem:[%s1 + $0xa8] sm:$0xff]
    %v50 = vld [vmem:[%s1 + $0xb0] sm:$0xff]
    %v51 = vld [vmem:[%s1 + $0xb8] sm:$0xff]
    %v52 = vld [vmem:[%s1 + $0xc0] sm:$0xff]
    %v53 = vld [vmem:[%s1 + $0xc8] sm:$0xff]
    %v54 = vld [vmem:[%s1 + $0xd0] sm:$0xff]
    %v55 = vld [vmem:[%s1 + $0xd8] sm:$0xff]
    %v56 = vld [vmem:[%s1 + $0xe0] sm:$0xff]
    %v57 = vld [vmem:[%s1 + $0xe8] sm:$0xff]
    %v58 = vld [vmem:[%s1 + $0xf0] sm:$0xff]
    %v59 = vld [vmem:[%s1 + $0xf8] sm:$0xff]
    %v60 = vld [vmem:[%s1 + $0x100] sm:$0xff]
    %v61 = vld [vmem:[%s1 + $0x108] sm:$0xff]
    %v62 = vld [vmem:[%s1 + $0x110] sm:$0xff]
    %v63 = vld [vmem:[%s1 + $0x118] sm:$0xff]
    %v64 = vld [vmem:[%s1 + $0x120] sm:$0xff]
    %v65 = vld [vmem:[%s1 + $0x128] sm:$0xff]
    %v66 = vld [vmem:[%s1 + $0x130] sm:$0xff]
    %v67 = vld [vmem:[%s1 + $0x138] sm:$0xff]
    %v68 = vld [vmem:[%s1 + $0x140] sm:$0xff]
    %v69 = vld [vmem:[%s1 + $0x148] sm:$0xff]
    %v70 = vld [vmem:[%s1 + $0x150] sm:$0xff]
    %v71 = vld [vmem:[%s1 + $0x158] sm:$0xff]
    %v72 = vld [vmem:[%s1 + $0x160] sm:$0xff]
    %v73 = vld [vmem:[%s1 + $0x168] sm:$0xff]
    %v74 = vld [vmem:[%s1 + $0x170] sm:$0xff]
    %v75 = vld [vmem:[%s1 + $0x178] sm:$0xff]
    %v76 = vld [vmem:[%s1 + $0x180] sm:$0xff]
    %v77 = vld [vmem:[%s1 + $0x188] sm:$0xff]
    %v78 = vld [vmem:[%s1 + $0x190] sm:$0xff]
    %v79 = vld [vmem:[%s1 + $0x198] sm:$0xff]
    %v80 = vld [vmem:[%s1 + $0x1a0] sm:$0xff]
    %v81 = vld [vmem:[%s1 + $0x1a8] sm:$0xff]
    %v82 = vld [vmem:[%s1 + $0x1b0] sm:$0xff]
    %v83 = vld [vmem:[%s1 + $0x1b8] sm:$0xff]
    %v84 = vld [vmem:[%s1 + $0x1c0] sm:$0xff]
    %v85 = vld [vmem:[%s1 + $0x1c8] sm:$0xff]
    %v86 = vld [vmem:[%s1 + $0x1d0] sm:$0xff]
    %v87 = vld [vmem:[%s1 + $0x1d8] sm:$0xff]
    %v88 = vld [vmem:[%s1 + $0x1e0] sm:$0xff]
    %v89 = vld [vmem:[%s1 + $0x1e8] sm:$0xff]
    %v90 = vld [vmem:[%s1 + $0x1f0] sm:$0xff]
    %v91 = vld [vmem:[%s1 + $0x1f8] sm:$0xff]
    %v92 = vld [vmem:[%s1 + $0x200] sm:$0xff]
    %v93 = vld [vmem:[%s1 + $0x208] sm:$0xff]
    %v94 = vld [vmem:[%s1 + $0x210] sm:$0xff]
    %v95 = vld [vmem:[%s1 + $0x218] sm:$0xff]
    %v96 = vld [vmem:[%s1 + $0x220] sm:$0xff]
    %v97 = vld [vmem:[%s1 + $0x228] sm:$0xff]
    %v98 = vld [vmem:[%s1 + $0x230] sm:$0xff]
    %v99 = vld [vmem:[%s1 + $0x238] sm:$0xff]
    %v100 = vld [vmem:[%s1 + $0x240] sm:$0xff]
    %v101 = vld [vmem:[%s1 + $0x248] sm:$0xff]
    %v102 = vld [vmem:[%s1 + $0x250] sm:$0xff]
    %v103 = vld [vmem:[%s1 + $0x258] sm:$0xff]
    %v104 = vld [vmem:[%s1 + $0x260] sm:$0xff]
    %v105 = vld [vmem:[%s1 + $0x268] sm:$0xff]
    %v106 = vld [vmem:[%s1 + $0x270] sm:$0xff]
    %v107 = vld [vmem:[%s1 + $0x278] sm:$0xff]
    %v108 = vld [vmem:[%s1 + $0x280] sm:$0xff]
    %v109 = vld [vmem:[%s1 + $0x288] sm:$0xff]
    %v110 = vld [vmem:[%s1 + $0x290] sm:$0xff]
    %v111 = vld [vmem:[%s1 + $0x298] sm:$0xff]
    %v112 = vld [vmem:[%s1 + $0x2a0] sm:$0xff]
    %v113 = vld [vmem:[%s1 + $0x2a8] sm:$0xff]
    %v114 = vld [vmem:[%s1 + $0x2b0] sm:$0xff]
    %v115 = vld [vmem:[%s1 + $0x2b8] sm:$0xff]
    %v116 = vld [vmem:[%s1 + $0x2c0] sm:$0xff]
    %v117 = vld [vmem:[%s1 + $0x2c8] sm:$0xff]
    %v118 = vld [vmem:[%s1 + $0x2d0] sm:$0xff]
    %v119 = vld [vmem:[%s1 + $0x2d8] sm:$0xff]
    %v120 = vld [vmem:[%s1 + $0x2e0] sm:$0xff]
    %v121 = vld [vmem:[%s1 + $0x2e8] sm:$0xff]
    %v122 = vld [vmem:[%s1 + $0x2f0] sm:$0xff]
    %v123 = vld [vmem:[%s1 + $0x2f8] sm:$0xff]
    %v124 = vld [vmem:[%s1 + $0x300] sm:$0xff]
    %v125 = vld [vmem:[%s1 + $0x308] sm:$0xff]
    %v126 = vld [vmem:[%s1 + $0x310] sm:$0xff]
    %v127 = vld [vmem:[%s1 + $0x318] sm:$0xff]
    %v128 = vld [vmem:[%s1 + $0x320] sm:$0xff]
    %v129 = vld [vmem:[%s1 + $0x328] sm:$0xff]
    %v130 = vld [vmem:[%s1 + $0x330] sm:$0xff]
    %v131 = vld [vmem:[%s1 + $0x338] sm:$0xff]
    %v132 = vld [vmem:[%s1 + $0x340] sm:$0xff]
    %v133 = vld [vmem:[%s1 + $0x348] sm:$0xff]
    %v134 = vld [vmem:[%s1 + $0x350] sm:$0xff]
    %v135 = vld [vmem:[%s1 + $0x358] sm:$0xff]
    %v136 = vld [vmem:[%s1 + $0x360] sm:$0xff]
    %v137 = vld [vmem:[%s1 + $0x368] sm:$0xff]
    %v138 = vld [vmem:[%s1 + $0x370] sm:$0xff]
    %v139 = vld [vmem:[%s1 + $0x378] sm:$0xff]
    %v140 = vld [vmem:[%s1 + $0x380] sm:$0xff]
    %v141 = vld [vmem:[%s1 + $0x388] sm:$0xff]
    %v142 = vld [vmem:[%s1 + $0x390] sm:$0xff]
    %v143 = vld [vmem:[%s1 + $0x398] sm:$0xff]
    %v144 = vld [vmem:[%s1 + $0x3a0] sm:$0xff]
    %v145 = vld [vmem:[%s1 + $0x3a8] sm:$0xff]
    %v146 = vld [vmem:[%s1 + $0x3b0] sm:$0xff]
    %v147 = vld [vmem:[%s1 + $0x3b8] sm:$0xff]
    %v148 = vld [vmem:[%s1 + $0x3c0] sm:$0xff]
    %v149 = vld [vmem:[%s1 + $0x3c8] sm:$0xff]
    %v150 = vld [vmem:[%s1 + $0x3d0] sm:$0xff]
    %v151 = vld [vmem:[%s1 + $0x3d8] sm:$0xff]
    %v152 = vld [vmem:[%s1 + $0x3e0] sm:$0xff]
    %v153 = vld [vmem:[%s1 + $0x3e8] sm:$0xff]
    %v154 = vld [vmem:[%s1 + $0x3f0] sm:$0xff]
    %v155 = vld [vmem:[%s1 + $0x3f8] sm:$0xff]
    %v156 = vld [vmem:[%s2] sm:$0x3]
    %v158 = vperm.slane %v156, 0
    %v159 = vperm.slane %v156, 1
    %162 = vmatpush.msra.mxu0 %v58
    %163 = vmatpush.msra.mxu0 %v56
    %164 = vmatpush.msra.mxu0 %v54
    %165 = vmatpush.msra.mxu0 %v52
    %166 = vmatpush.msra.mxu0 %v50
    %167 = vmatpush.msra.mxu0 %v48
    %168 = vmatpush.msra.mxu0 %v46
    %169 = vmatpush.msra.mxu0 %v44
    %170 = vmatpush.msra.mxu0 %v42
    %171 = vmatpush.msra.mxu0 %v40
    %172 = vmatpush.msra.mxu0 %v38
    %173 = vmatpush.msra.mxu0 %v36
    %174 = vmatpush.msra.mxu0 %v34
    %175 = vmatpush.msra.mxu0 %v32
    %176 = vmatpush.msra.mxu0 %v30
    %177 = vmatpush.msra.mxu0 %v28
    %178 = vmatmul.f32.gmra.mxu0 %v24
    %v179 = vpop.f32.mrf.mxu0
    %v180 = vadd.f32 %v158, %v179
    %181 = vdwg.mxu0
    %182 = vmatpush.msra.mxu0 %v90
    %183 = vmatpush.msra.mxu0 %v88
    %184 = vmatpush.msra.mxu0 %v86
    %185 = vmatpush.msra.mxu0 %v84
    %186 = vmatpush.msra.mxu0 %v82
    %187 = vmatpush.msra.mxu0 %v80
    %188 = vmatpush.msra.mxu0 %v78
    %189 = vmatpush.msra.mxu0 %v76
    %190 = vmatpush.msra.mxu0 %v74
    %191 = vmatpush.msra.mxu0 %v72
    %192 = vmatpush.msra.mxu0 %v70
    %193 = vmatpush.msra.mxu0 %v68
    %194 = vmatpush.msra.mxu0 %v66
    %195 = vmatpush.msra.mxu0 %v64
    %196 = vmatpush.msra.mxu0 %v62
    %197 = vmatpush.msra.mxu0 %v60
    %198 = vmatmul.f32.gmra.mxu0 %v25
    %v199 = vpop.f32.mrf.mxu0
    %v200 = vadd.f32 %v180, %v199
    %201 = vdwg.mxu0
    %202 = vmatpush.msra.mxu0 %v122
    %203 = vmatpush.msra.mxu0 %v120
    %204 = vmatpush.msra.mxu0 %v118
    %205 = vmatpush.msra.mxu0 %v116
    %206 = vmatpush.msra.mxu0 %v114
    %207 = vmatpush.msra.mxu0 %v112
    %208 = vmatpush.msra.mxu0 %v110
    %209 = vmatpush.msra.mxu0 %v108
    %210 = vmatpush.msra.mxu0 %v106
    %211 = vmatpush.msra.mxu0 %v104
    %212 = vmatpush.msra.mxu0 %v102
    %213 = vmatpush.msra.mxu0 %v100
    %214 = vmatpush.msra.mxu0 %v98
    %215 = vmatpush.msra.mxu0 %v96
    %216 = vmatpush.msra.mxu0 %v94
    %217 = vmatpush.msra.mxu0 %v92
    %218 = vmatmul.f32.gmra.mxu0 %v26
    %v219 = vpop.f32.mrf.mxu0
    %v220 = vadd.f32 %v200, %v219
    %221 = vdwg.mxu0
    %222 = vmatpush.msra.mxu0 %v154
    %223 = vmatpush.msra.mxu0 %v152
    %224 = vmatpush.msra.mxu0 %v150
    %225 = vmatpush.msra.mxu0 %v148
    %226 = vmatpush.msra.mxu0 %v146
    %227 = vmatpush.msra.mxu0 %v144
    %228 = vmatpush.msra.mxu0 %v142
    %229 = vmatpush.msra.mxu0 %v140
    %230 = vmatpush.msra.mxu0 %v138
    %231 = vmatpush.msra.mxu0 %v136
    %232 = vmatpush.msra.mxu0 %v134
    %233 = vmatpush.msra.mxu0 %v132
    %234 = vmatpush.msra.mxu0 %v130
    %235 = vmatpush.msra.mxu0 %v128
    %236 = vmatpush.msra.mxu0 %v126
    %237 = vmatpush.msra.mxu0 %v124
    %238 = vmatmul.f32.gmra.mxu0 %v27
    %v239 = vpop.f32.mrf.mxu0
    %v240 = vadd.f32 %v220, %v239
    %241 = vdwg.mxu0
    %242 = vmatpush.msra.mxu0 %v59
    %243 = vmatpush.msra.mxu0 %v57
    %244 = vmatpush.msra.mxu0 %v55
    %245 = vmatpush.msra.mxu0 %v53
    %246 = vmatpush.msra.mxu0 %v51
    %247 = vmatpush.msra.mxu0 %v49
    %248 = vmatpush.msra.mxu0 %v47
    %249 = vmatpush.msra.mxu0 %v45
    %250 = vmatpush.msra.mxu0 %v43
    %251 = vmatpush.msra.mxu0 %v41
    %252 = vmatpush.msra.mxu0 %v39
    %253 = vmatpush.msra.mxu0 %v37
    %254 = vmatpush.msra.mxu0 %v35
    %255 = vmatpush.msra.mxu0 %v33
    %256 = vmatpush.msra.mxu0 %v31
    %257 = vmatpush.msra.mxu0 %v29
    %258 = vmatmul.f32.gmra.mxu0 %v24
    %v259 = vpop.f32.mrf.mxu0
    %v260 = vadd.f32 %v159, %v259
    %261 = vdwg.mxu0
    %262 = vmatpush.msra.mxu0 %v91
    %263 = vmatpush.msra.mxu0 %v89
    %264 = vmatpush.msra.mxu0 %v87
    %265 = vmatpush.msra.mxu0 %v85
    %266 = vmatpush.msra.mxu0 %v83
    %267 = vmatpush.msra.mxu0 %v81
    %268 = vmatpush.msra.mxu0 %v79
    %269 = vmatpush.msra.mxu0 %v77
    %270 = vmatpush.msra.mxu0 %v75
    %271 = vmatpush.msra.mxu0 %v73
    %272 = vmatpush.msra.mxu0 %v71
    %273 = vmatpush.msra.mxu0 %v69
    %274 = vmatpush.msra.mxu0 %v67
    %275 = vmatpush.msra.mxu0 %v65
    %276 = vmatpush.msra.mxu0 %v63
    %277 = vmatpush.msra.mxu0 %v61
    %278 = vmatmul.f32.gmra.mxu0 %v25
    %v279 = vpop.f32.mrf.mxu0
    %v280 = vadd.f32 %v260, %v279
    %281 = vdwg.mxu0
    %282 = vmatpush.msra.mxu0 %v123
    %283 = vmatpush.msra.mxu0 %v121
    %284 = vmatpush.msra.mxu0 %v119
    %285 = vmatpush.msra.mxu0 %v117
    %286 = vmatpush.msra.mxu0 %v115
    %287 = vmatpush.msra.mxu0 %v113
    %288 = vmatpush.msra.mxu0 %v111
    %289 = vmatpush.msra.mxu0 %v109
    %290 = vmatpush.msra.mxu0 %v107
    %291 = vmatpush.msra.mxu0 %v105
    %292 = vmatpush.msra.mxu0 %v103
    %293 = vmatpush.msra.mxu0 %v101
    %294 = vmatpush.msra.mxu0 %v99
    %295 = vmatpush.msra.mxu0 %v97
    %296 = vmatpush.msra.mxu0 %v95
    %297 = vmatpush.msra.mxu0 %v93
    %298 = vmatmul.f32.gmra.mxu0 %v26
    %v299 = vpop.f32.mrf.mxu0
    %v300 = vadd.f32 %v280, %v299
    %301 = vdwg.mxu0
    %302 = vmatpush.msra.mxu0 %v155
    %303 = vmatpush.msra.mxu0 %v153
    %304 = vmatpush.msra.mxu0 %v151
    %305 = vmatpush.msra.mxu0 %v149
    %306 = vmatpush.msra.mxu0 %v147
    %307 = vmatpush.msra.mxu0 %v145
    %308 = vmatpush.msra.mxu0 %v143
    %309 = vmatpush.msra.mxu0 %v141
    %310 = vmatpush.msra.mxu0 %v139
    %311 = vmatpush.msra.mxu0 %v137
    %312 = vmatpush.msra.mxu0 %v135
    %313 = vmatpush.msra.mxu0 %v133
    %314 = vmatpush.msra.mxu0 %v131
    %315 = vmatpush.msra.mxu0 %v129
    %316 = vmatpush.msra.mxu0 %v127
    %317 = vmatpush.msra.mxu0 %v125
    %318 = vmatmul.f32.gmra.mxu0 %v27
    %v319 = vpop.f32.mrf.mxu0
    %v320 = vadd.f32 %v300, %v319
    %321 = vdwg.mxu0
    %322 = vst [vmem:[#allocation2] sm:$0xff] %v240
    %323 = vst [vmem:[#allocation2 + $0x8] sm:$0xff] %v320
    %v324 = vld [vmem:[#allocation2] sm:$0x3]
    %v325 = vld [vmem:[#allocation2 + $0x8] sm:$0x3]
    %v326 = vld [vmem:[%s3] sm:$0xff]
    %v327 = vld [vmem:[%s3 + $0x8] sm:$0xff]
    %v328 = vld [vmem:[%s3 + $0x10] sm:$0xff]
    %v329 = vld [vmem:[%s3 + $0x18] sm:$0xff]
    %v330 = vld [vmem:[%s3 + $0x20] sm:$0xff]
    %v331 = vld [vmem:[%s3 + $0x28] sm:$0xff]
    %v332 = vld [vmem:[%s3 + $0x30] sm:$0xff]
    %v333 = vld [vmem:[%s3 + $0x38] sm:$0xff]
    %v334 = vld [vmem:[%s3 + $0x40] sm:$0xff]
    %v335 = vld [vmem:[%s3 + $0x48] sm:$0xff]
    %v336 = vld [vmem:[%s3 + $0x50] sm:$0xff]
    %v337 = vld [vmem:[%s3 + $0x58] sm:$0xff]
    %v338 = vld [vmem:[%s3 + $0x60] sm:$0xff]
    %v339 = vld [vmem:[%s3 + $0x68] sm:$0xff]
    %v340 = vld [vmem:[%s3 + $0x70] sm:$0xff]
    %v341 = vld [vmem:[%s3 + $0x78] sm:$0xff]
    %vm342 = vcmask 523264
    %v344 = vsel %vm342, 0.0, 0
    %346 = vmatpush.msra.mxu0 0.0
    %347 = vmatpush.msra.mxu0 0.0
    %348 = vmatpush.msra.mxu0 0.0
    %349 = vmatpush.msra.mxu0 0.0
    %350 = vmatpush.msra.mxu0 0.0
    %351 = vmatpush.msra.mxu0 0.0
    %352 = vmatpush.msra.mxu0 0.0
    %353 = vmatpush.msra.mxu0 0.0
    %354 = vmatpush.msra.mxu0 %v340
    %355 = vmatpush.msra.mxu0 %v338
    %356 = vmatpush.msra.mxu0 %v336
    %357 = vmatpush.msra.mxu0 %v334
    %358 = vmatpush.msra.mxu0 %v332
    %359 = vmatpush.msra.mxu0 %v330
    %360 = vmatpush.msra.mxu0 %v328
    %361 = vmatpush.msra.mxu0 %v326
    %362 = vmatmul.f32.gmra.mxu0 %v344
    %v363 = vpop.f32.mrf.mxu0
    %v364 = vadd.f32 0.0, %v363
    %365 = vdwg.mxu0
    %366 = vmatpush.msra.mxu0 0.0
    %367 = vmatpush.msra.mxu0 0.0
    %368 = vmatpush.msra.mxu0 0.0
    %369 = vmatpush.msra.mxu0 0.0
    %370 = vmatpush.msra.mxu0 0.0
    %371 = vmatpush.msra.mxu0 0.0
    %372 = vmatpush.msra.mxu0 0.0
    %373 = vmatpush.msra.mxu0 0.0
    %374 = vmatpush.msra.mxu0 %v341
    %375 = vmatpush.msra.mxu0 %v339
    %376 = vmatpush.msra.mxu0 %v337
    %377 = vmatpush.msra.mxu0 %v335
    %378 = vmatpush.msra.mxu0 %v333
    %379 = vmatpush.msra.mxu0 %v331
    %380 = vmatpush.msra.mxu0 %v329
    %381 = vmatpush.msra.mxu0 %v327
    %382 = vmatmul.f32.gmra.mxu0 %v344
    %v383 = vpop.f32.mrf.mxu0
    %v384 = vadd.f32 0.0, %v383
    %385 = vdwg.mxu0
    %v386 = vadd.f32 %v324, %v364
    %v387 = vadd.f32 %v325, %v384
    %v388 = vxor.u32 %v386, 2147483648
    %v389 = vmul.f32 %v388, 1.442695
    %v390 = vpow.pop %v389
    %v391 = vadd.f32 %v390, 1.0
    %v392 = vrcp.pop %v391
    %v393 = vmul.f32 %v391, %v392
    %v394 = vsub.f32 1.0, %v393
    %v395 = vmul.f32 %v392, %v394
    %v396 = vadd.f32 %v392, %v395
    %vm397 = vweird.f32 %v391
    %vm398 = vweird.f32 %v392
    %vm399 = vmor %vm397, %vm398
    %v400 = vsel %vm399, %v392, %v396
    %v401 = vand.u32 2147483647, %v391
    %vm402 = vcmp.eq.f32.partialorder %v401, 8.507059e+37
    %v403 = vand.u32 %v391, 2147483648
    %v404 = vor.u32 1.1754944e-38, %v403
    %v405 = vsel %vm402, %v404, %v400
    %v406 = vmul.f32 1.0, %v405
    %v407 = vtanh.pop %v387
    %v408 = vxor.u32 %v387, 2147483648
    %v409 = vmul.f32 %v408, 1.442695
    %v410 = vpow.pop %v409
    %v411 = vadd.f32 %v410, 1.0
    %v412 = vrcp.pop %v411
    %v413 = vmul.f32 %v411, %v412
    %v414 = vsub.f32 1.0, %v413
    %v415 = vmul.f32 %v412, %v414
    %v416 = vadd.f32 %v412, %v415
    %vm417 = vweird.f32 %v411
    %vm418 = vweird.f32 %v412
    %vm419 = vmor %vm417, %vm418
    %v420 = vsel %vm419, %v412, %v416
    %v421 = vand.u32 2147483647, %v411
    %vm422 = vcmp.eq.f32.partialorder %v421, 8.507059e+37
    %v423 = vand.u32 %v411, 2147483648
    %v424 = vor.u32 1.1754944e-38, %v423
    %v425 = vsel %vm422, %v424, %v420
    %v426 = vmul.f32 1.0, %v425
    %v427 = vmul.f32 %v406, 0.0
    %v428 = vmul.f32 %v406, %v407
    %430 = vrot.lane.b32.xlu0 %v428, 64
    %v431 = vpop.permute.xlu0 %430
    %v433 = vadd.f32 %v427, %v431
    %v434 = vtanh.pop %v433
    %v435 = vmul.f32 %v426, %v434
    %v436 = vld [vmem:[#allocation2] sm:$0xc]
    %v437 = vld [vmem:[#allocation2 + $0x8] sm:$0xc]
    %439 = vrot.lane.b32.xlu0 %v435, 64
    %v440 = vpop.permute.xlu0 %439
    %v441 = vsel %vm342, %v440, 0
    %443 = vmatpush.msra.mxu0 0.0
    %444 = vmatpush.msra.mxu0 0.0
    %445 = vmatpush.msra.mxu0 0.0
    %446 = vmatpush.msra.mxu0 0.0
    %447 = vmatpush.msra.mxu0 0.0
    %448 = vmatpush.msra.mxu0 0.0
    %449 = vmatpush.msra.mxu0 0.0
    %450 = vmatpush.msra.mxu0 0.0
    %451 = vmatpush.msra.mxu0 %v340
    %452 = vmatpush.msra.mxu0 %v338
    %453 = vmatpush.msra.mxu0 %v336
    %454 = vmatpush.msra.mxu0 %v334
    %455 = vmatpush.msra.mxu0 %v332
    %456 = vmatpush.msra.mxu0 %v330
    %457 = vmatpush.msra.mxu0 %v328
    %458 = vmatpush.msra.mxu0 %v326
    %459 = vmatmul.f32.gmra.mxu0 %v441
    %v460 = vpop.f32.mrf.mxu0
    %v461 = vadd.f32 0.0, %v460
    %462 = vdwg.mxu0
    %463 = vmatpush.msra.mxu0 0.0
    %464 = vmatpush.msra.mxu0 0.0
    %465 = vmatpush.msra.mxu0 0.0
    %466 = vmatpush.msra.mxu0 0.0
    %467 = vmatpush.msra.mxu0 0.0
    %468 = vmatpush.msra.mxu0 0.0
    %469 = vmatpush.msra.mxu0 0.0
    %470 = vmatpush.msra.mxu0 0.0
    %471 = vmatpush.msra.mxu0 %v341
    %472 = vmatpush.msra.mxu0 %v339
    %473 = vmatpush.msra.mxu0 %v337
    %474 = vmatpush.msra.mxu0 %v335
    %475 = vmatpush.msra.mxu0 %v333
    %476 = vmatpush.msra.mxu0 %v331
    %477 = vmatpush.msra.mxu0 %v329
    %478 = vmatpush.msra.mxu0 %v327
    %479 = vmatmul.f32.gmra.mxu0 %v441
    %v480 = vpop.f32.mrf.mxu0
    %v481 = vadd.f32 0.0, %v480
    %482 = vdwg.mxu0
    %v485 = vrot.slane %v461, 6
    %v486 = vrot.slane %v481, 6
    %v489 = vadd.f32 %v436, %v485
    %v490 = vadd.f32 %v437, %v486
    %v491 = vxor.u32 %v489, 2147483648
    %v492 = vmul.f32 %v491, 1.442695
    %v493 = vpow.pop %v492
    %v494 = vadd.f32 %v493, 1.0
    %v495 = vrcp.pop %v494
    %v496 = vmul.f32 %v494, %v495
    %v497 = vsub.f32 1.0, %v496
    %v498 = vmul.f32 %v495, %v497
    %v499 = vadd.f32 %v495, %v498
    %vm500 = vweird.f32 %v494
    %vm501 = vweird.f32 %v495
    %vm502 = vmor %vm500, %vm501
    %v503 = vsel %vm502, %v495, %v499
    %v504 = vand.u32 2147483647, %v494
    %vm505 = vcmp.eq.f32.partialorder %v504, 8.507059e+37
    %v506 = vand.u32 %v494, 2147483648
    %v507 = vor.u32 1.1754944e-38, %v506
    %v508 = vsel %vm505, %v507, %v503
    %v509 = vmul.f32 1.0, %v508
    %v510 = vtanh.pop %v490
    %v511 = vxor.u32 %v490, 2147483648
    %v512 = vmul.f32 %v511, 1.442695
    %v513 = vpow.pop %v512
    %v514 = vadd.f32 %v513, 1.0
    %v515 = vrcp.pop %v514
    %v516 = vmul.f32 %v514, %v515
    %v517 = vsub.f32 1.0, %v516
    %v518 = vmul.f32 %v515, %v517
    %v519 = vadd.f32 %v515, %v518
    %vm520 = vweird.f32 %v514
    %vm521 = vweird.f32 %v515
    %vm522 = vmor %vm520, %vm521
    %v523 = vsel %vm522, %v515, %v519
    %v524 = vand.u32 2147483647, %v514
    %vm525 = vcmp.eq.f32.partialorder %v524, 8.507059e+37
    %v526 = vand.u32 %v514, 2147483648
    %v527 = vor.u32 1.1754944e-38, %v526
    %v528 = vsel %vm525, %v527, %v523
    %v529 = vmul.f32 1.0, %v528
    %v531 = vrot.slane %v433, 6
    %v533 = vmul.f32 %v509, %v531
    %v534 = vmul.f32 %v509, %v510
    %536 = vrot.lane.b32.xlu0 %v534, 64
    %v537 = vpop.permute.xlu0 %536
    %v539 = vadd.f32 %v533, %v537
    %v540 = vtanh.pop %v539
    %v541 = vmul.f32 %v529, %v540
    %v542 = vld [vmem:[#allocation2] sm:$0x30]
    %v543 = vld [vmem:[#allocation2 + $0x8] sm:$0x30]
    %v545 = vrot.slane %v541, 2
    %546 = vrot.lane.b32.xlu0 %v545, 64
    %v547 = vpop.permute.xlu0 %546
    %v548 = vsel %vm342, %v547, 0
    %550 = vmatpush.msra.mxu0 0.0
    %551 = vmatpush.msra.mxu0 0.0
    %552 = vmatpush.msra.mxu0 0.0
    %553 = vmatpush.msra.mxu0 0.0
    %554 = vmatpush.msra.mxu0 0.0
    %555 = vmatpush.msra.mxu0 0.0
    %556 = vmatpush.msra.mxu0 0.0
    %557 = vmatpush.msra.mxu0 0.0
    %558 = vmatpush.msra.mxu0 %v340
    %559 = vmatpush.msra.mxu0 %v338
    %560 = vmatpush.msra.mxu0 %v336
    %561 = vmatpush.msra.mxu0 %v334
    %562 = vmatpush.msra.mxu0 %v332
    %563 = vmatpush.msra.mxu0 %v330
    %564 = vmatpush.msra.mxu0 %v328
    %565 = vmatpush.msra.mxu0 %v326
    %566 = vmatmul.f32.gmra.mxu0 %v548
    %v567 = vpop.f32.mrf.mxu0
    %v568 = vadd.f32 0.0, %v567
    %569 = vdwg.mxu0
    %570 = vmatpush.msra.mxu0 0.0
    %571 = vmatpush.msra.mxu0 0.0
    %572 = vmatpush.msra.mxu0 0.0
    %573 = vmatpush.msra.mxu0 0.0
    %574 = vmatpush.msra.mxu0 0.0
    %575 = vmatpush.msra.mxu0 0.0
    %576 = vmatpush.msra.mxu0 0.0
    %577 = vmatpush.msra.mxu0 0.0
    %578 = vmatpush.msra.mxu0 %v341
    %579 = vmatpush.msra.mxu0 %v339
    %580 = vmatpush.msra.mxu0 %v337
    %581 = vmatpush.msra.mxu0 %v335
    %582 = vmatpush.msra.mxu0 %v333
    %583 = vmatpush.msra.mxu0 %v331
    %584 = vmatpush.msra.mxu0 %v329
    %585 = vmatpush.msra.mxu0 %v327
    %586 = vmatmul.f32.gmra.mxu0 %v548
    %v587 = vpop.f32.mrf.mxu0
    %v588 = vadd.f32 0.0, %v587
    %589 = vdwg.mxu0
    %v592 = vrot.slane %v568, 4
    %v593 = vrot.slane %v588, 4
    %v596 = vadd.f32 %v542, %v592
    %v597 = vadd.f32 %v543, %v593
    %v598 = vxor.u32 %v596, 2147483648
    %v599 = vmul.f32 %v598, 1.442695
    %v600 = vpow.pop %v599
    %v601 = vadd.f32 %v600, 1.0
    %v602 = vrcp.pop %v601
    %v603 = vmul.f32 %v601, %v602
    %v604 = vsub.f32 1.0, %v603
    %v605 = vmul.f32 %v602, %v604
    %v606 = vadd.f32 %v602, %v605
    %vm607 = vweird.f32 %v601
    %vm608 = vweird.f32 %v602
    %vm609 = vmor %vm607, %vm608
    %v610 = vsel %vm609, %v602, %v606
    %v611 = vand.u32 2147483647, %v601
    %vm612 = vcmp.eq.f32.partialorder %v611, 8.507059e+37
    %v613 = vand.u32 %v601, 2147483648
    %v614 = vor.u32 1.1754944e-38, %v613
    %v615 = vsel %vm612, %v614, %v610
    %v616 = vmul.f32 1.0, %v615
    %v617 = vtanh.pop %v597
    %v618 = vxor.u32 %v597, 2147483648
    %v619 = vmul.f32 %v618, 1.442695
    %v620 = vpow.pop %v619
    %v621 = vadd.f32 %v620, 1.0
    %v622 = vrcp.pop %v621
    %v623 = vmul.f32 %v621, %v622
    %v624 = vsub.f32 1.0, %v623
    %v625 = vmul.f32 %v622, %v624
    %v626 = vadd.f32 %v622, %v625
    %vm627 = vweird.f32 %v621
    %vm628 = vweird.f32 %v622
    %vm629 = vmor %vm627, %vm628
    %v630 = vsel %vm629, %v622, %v626
    %v631 = vand.u32 2147483647, %v621
    %vm632 = vcmp.eq.f32.partialorder %v631, 8.507059e+37
    %v633 = vand.u32 %v621, 2147483648
    %v634 = vor.u32 1.1754944e-38, %v633
    %v635 = vsel %vm632, %v634, %v630
    %v636 = vmul.f32 1.0, %v635
    %v638 = vrot.slane %v539, 6
    %v640 = vmul.f32 %v616, %v638
    %v641 = vmul.f32 %v616, %v617
    %643 = vrot.lane.b32.xlu0 %v641, 64
    %v644 = vpop.permute.xlu0 %643
    %v646 = vadd.f32 %v640, %v644
    %v647 = vtanh.pop %v646
    %v648 = vmul.f32 %v636, %v647
    %v649 = vld [vmem:[#allocation2] sm:$0xc0]
    %v650 = vld [vmem:[#allocation2 + $0x8] sm:$0xc0]
    %v652 = vrot.slane %v648, 4
    %653 = vrot.lane.b32.xlu0 %v652, 64
    %v654 = vpop.permute.xlu0 %653
    %v655 = vsel %vm342, %v654, 0
    %657 = vmatpush.msra.mxu0 0.0
    %658 = vmatpush.msra.mxu0 0.0
    %659 = vmatpush.msra.mxu0 0.0
    %660 = vmatpush.msra.mxu0 0.0
    %661 = vmatpush.msra.mxu0 0.0
    %662 = vmatpush.msra.mxu0 0.0
    %663 = vmatpush.msra.mxu0 0.0
    %664 = vmatpush.msra.mxu0 0.0
    %665 = vmatpush.msra.mxu0 %v340
    %666 = vmatpush.msra.mxu0 %v338
    %667 = vmatpush.msra.mxu0 %v336
    %668 = vmatpush.msra.mxu0 %v334
    %669 = vmatpush.msra.mxu0 %v332
    %670 = vmatpush.msra.mxu0 %v330
    %671 = vmatpush.msra.mxu0 %v328
    %672 = vmatpush.msra.mxu0 %v326
    %673 = vmatmul.f32.gmra.mxu0 %v655
    %v674 = vpop.f32.mrf.mxu0
    %v675 = vadd.f32 0.0, %v674
    %676 = vdwg.mxu0
    %677 = vmatpush.msra.mxu0 0.0
    %678 = vmatpush.msra.mxu0 0.0
    %679 = vmatpush.msra.mxu0 0.0
    %680 = vmatpush.msra.mxu0 0.0
    %681 = vmatpush.msra.mxu0 0.0
    %682 = vmatpush.msra.mxu0 0.0
    %683 = vmatpush.msra.mxu0 0.0
    %684 = vmatpush.msra.mxu0 0.0
    %685 = vmatpush.msra.mxu0 %v341
    %686 = vmatpush.msra.mxu0 %v339
    %687 = vmatpush.msra.mxu0 %v337
    %688 = vmatpush.msra.mxu0 %v335
    %689 = vmatpush.msra.mxu0 %v333
    %690 = vmatpush.msra.mxu0 %v331
    %691 = vmatpush.msra.mxu0 %v329
    %692 = vmatpush.msra.mxu0 %v327
    %693 = vmatmul.f32.gmra.mxu0 %v655
    %v694 = vpop.f32.mrf.mxu0
    %v695 = vadd.f32 0.0, %v694
    %696 = vdwg.mxu0
    %v699 = vrot.slane %v675, 2
    %v700 = vrot.slane %v695, 2
    %v703 = vadd.f32 %v649, %v699
    %v704 = vadd.f32 %v650, %v700
    %v705 = vxor.u32 %v703, 2147483648
    %v706 = vmul.f32 %v705, 1.442695
    %v707 = vpow.pop %v706
    %v708 = vadd.f32 %v707, 1.0
    %v709 = vrcp.pop %v708
    %v710 = vmul.f32 %v708, %v709
    %v711 = vsub.f32 1.0, %v710
    %v712 = vmul.f32 %v709, %v711
    %v713 = vadd.f32 %v709, %v712
    %vm714 = vweird.f32 %v708
    %vm715 = vweird.f32 %v709
    %vm716 = vmor %vm714, %vm715
    %v717 = vsel %vm716, %v709, %v713
    %v718 = vand.u32 2147483647, %v708
    %vm719 = vcmp.eq.f32.partialorder %v718, 8.507059e+37
    %v720 = vand.u32 %v708, 2147483648
    %v721 = vor.u32 1.1754944e-38, %v720
    %v722 = vsel %vm719, %v721, %v717
    %v723 = vmul.f32 1.0, %v722
    %v724 = vtanh.pop %v704
    %v725 = vxor.u32 %v704, 2147483648
    %v726 = vmul.f32 %v725, 1.442695
    %v727 = vpow.pop %v726
    %v728 = vadd.f32 %v727, 1.0
    %v729 = vrcp.pop %v728
    %v730 = vmul.f32 %v728, %v729
    %v731 = vsub.f32 1.0, %v730
    %v732 = vmul.f32 %v729, %v731
    %v733 = vadd.f32 %v729, %v732
    %vm734 = vweird.f32 %v728
    %vm735 = vweird.f32 %v729
    %vm736 = vmor %vm734, %vm735
    %v737 = vsel %vm736, %v729, %v733
    %v738 = vand.u32 2147483647, %v728
    %vm739 = vcmp.eq.f32.partialorder %v738, 8.507059e+37
    %v740 = vand.u32 %v728, 2147483648
    %v741 = vor.u32 1.1754944e-38, %v740
    %v742 = vsel %vm739, %v741, %v737
    %v743 = vmul.f32 1.0, %v742
    %v745 = vrot.slane %v646, 6
    %v747 = vmul.f32 %v723, %v745
    %v748 = vmul.f32 %v723, %v724
    %750 = vrot.lane.b32.xlu0 %v748, 64
    %v751 = vpop.permute.xlu0 %750
    %v753 = vadd.f32 %v747, %v751
    %v754 = vtanh.pop %v753
    %v755 = vmul.f32 %v743, %v754
    %v756 = vld [vmem:[%s4] sm:$0xff]
    %v757 = vld [vmem:[%s4 + $0x8] sm:$0xff]
    %v758 = vld [vmem:[%s4 + $0x10] sm:$0xff]
    %v759 = vld [vmem:[%s4 + $0x18] sm:$0xff]
    %v760 = vld [vmem:[%s4 + $0x20] sm:$0xff]
    %v761 = vld [vmem:[%s4 + $0x28] sm:$0xff]
    %v762 = vld [vmem:[%s4 + $0x30] sm:$0xff]
    %v763 = vld [vmem:[%s4 + $0x38] sm:$0xff]
    %v764 = vld [vmem:[%s5] sm:$0x1]
    %v766 = vperm.slane %v764, 0
    %v769 = vrot.slane %v755, 6
    %770 = vrot.lane.b32.xlu0 %v769, 64
    %v771 = vpop.permute.xlu0 %770
    %v772 = vsel %vm342, %v771, 0
    %774 = vmatpush.msra.mxu0 0.0
    %775 = vmatpush.msra.mxu0 0.0
    %776 = vmatpush.msra.mxu0 0.0
    %777 = vmatpush.msra.mxu0 0.0
    %778 = vmatpush.msra.mxu0 0.0
    %779 = vmatpush.msra.mxu0 0.0
    %780 = vmatpush.msra.mxu0 0.0
    %781 = vmatpush.msra.mxu0 0.0
    %782 = vmatpush.msra.mxu0 %v763
    %783 = vmatpush.msra.mxu0 %v762
    %784 = vmatpush.msra.mxu0 %v761
    %785 = vmatpush.msra.mxu0 %v760
    %786 = vmatpush.msra.mxu0 %v759
    %787 = vmatpush.msra.mxu0 %v758
    %788 = vmatpush.msra.mxu0 %v757
    %789 = vmatpush.msra.mxu0 %v756
    %790 = vmatmul.f32.gmra.mxu0 %v772
    %v791 = vpop.f32.mrf.mxu0
    %v792 = vadd.f32 %v766, %v791
    %793 = vdwg.mxu0
    %vm794 = vcmask 1041408
    %v795 = vsel %vm794, %v792, -inf
    %796 = vmax.xlane.f32.xlu0 %v795
    %v797 = vpop.xlane.xlu0 %796
    %v798 = vsub.f32 %v792, %v797
    %v799 = vmul.f32 %v798, 1.442695
    %v800 = vpow.pop %v799
    %v801 = vsel %vm794, %v800, 0.0
    %802 = vadd.xlane.f32.xlu0 %v801
    %v803 = vpop.xlane.xlu0 %802
    %v804 = vlog2.pop %v803
    %v805 = vmul.f32 %v804, 0.6931472
    %v806 = vsub.f32 %v798, %v805
    %807 = vst [vmem:[#allocation3] sm:$0x3] %v806
    // Predicated region
    $region26: #{combine_forward.5} parent=1 // pred_check
      _
    $region27: #{combine_forward.5} parent=1 // pred_check_branch
      %809 = sbr.rel (0) target = $region29
    $region28: #{combine_forward.5} parent=1 // pred_region
      %811 = vsyncadd [#allocation4], 0
      %s813 = sshll.u32 [#allocation3], 4
      %s814 = int_to_ptr.vmem [resolvable:$true] %s813
      %s815 = sshll.u32 %s6, 4
      %s816 = int_to_ptr.hbm [resolvable:$true] %s815
      %818 = dma.vmem_to_hbm [thread:$0]  %s814, 32, %s816, [#allocation4]
    $region29: #{combine_forward.5} parent=1 // pred_fallthru
      _
    // Predicated region
    $region30: #{combine_forward.5} parent=1 // pred_check
      _
    $region31: #{combine_forward.5} parent=1 // pred_check_branch
      %820 = sbr.rel (0) target = $region33
    $region32: #{combine_forward.5} parent=1 // pred_region
      %822 = dma.done [#allocation4], 32
    $region33: #{combine_forward.5} parent=1 // pred_fallthru
      _
    %823 = vsyncpa [#allocation4], 1

</llo_original>
